<compile_context>
chip_gen: v7x
topology: tpu7x:2x2x1
jax: 0.10.0
libtpu: 0.0.40
codegen_flags: <defaults>
</compile_context>

<pallas_src>
import jax
import jax.numpy as jnp
from jax.experimental import pallas as pl
from jax.experimental.pallas import tpu as pltpu


# ---------------------------------------------------------------------------
# Pallas kernel: 3x3 "same" conv + bias + ReLU (+ optional fused max-pool),
# computed as a single im2col matmul per row tile.
# ---------------------------------------------------------------------------
_ACC_BUDGET_BYTES = 128 * 1024     # keep the f32 accumulator ~vreg-file sized


def _pick_row_tile(H, W, Cout, pool, NB):
    th = H
    while th > max(pool, 1) and NB * th * W * Cout * 4 > _ACC_BUDGET_BYTES:
        th //= 2
    assert H % th == 0 and th % max(pool, 1) == 0
    return th


def _make_conv_kernel(*, NB, TH, W, KH, KW, Cin, Cout, pool, relu):
    K = KH * KW * Cin

    def kernel(x_ref, w_ref, b_ref, o_ref):
        # x_ref: (NB, H+2, W+2, Cin) bf16 resident padded image
        # w_ref: (KH*KW*Cin, Cout) bf16   b_ref: (1, Cout) f32
        # o_ref: (NB, TH//pool, W//pool, Cout)
        r = pl.program_id(1)
        row0 = pl.multiple_of(r * TH, TH)

        # im2col over all taps: K = KH*KW*Cin contraction for one MXU matmul.
        taps = []
        for dy in range(KH):
            for dx in range(KW):
                taps.append(x_ref[:, pl.ds(row0 + dy, TH), pl.ds(dx, W), :])
        patch = jnp.concatenate(taps, axis=-1).reshape(NB * TH * W, K)

        acc = jnp.dot(patch, w_ref[...], preferred_element_type=jnp.float32)
        acc = acc + b_ref[...]
        if relu:
            acc = jnp.maximum(acc, 0.0)

        y = acc.reshape(NB, TH, W, Cout)
        if pool > 1:
            # fused max-pool epilogue (W groups, then H groups)
            y = y.reshape(NB, TH, W // pool, pool, Cout).max(axis=3)
            y = y.reshape(NB, TH // pool, pool, W // pool, Cout).max(axis=2)
        o_ref[...] = y.astype(o_ref.dtype)

    return kernel


def conv3x3(x, w, b, *, pool=1, relu=True, out_dtype=jnp.bfloat16):
    """3x3 'same' conv (+bias, +ReLU, +fused max-pool). x:(N,H,W,Cin) w:(3,3,Cin,Cout)."""
    N, H, W, Cin = x.shape
    KH, KW, wcin, Cout = w.shape
    assert (KH, KW) == (3, 3) and wcin == Cin
    assert H % pool == 0 and W % pool == 0

    # bf16 MXU operands; accumulation stays f32 inside the kernel.
    xp = jnp.pad(x.astype(jnp.bfloat16), ((0, 0), (1, 1), (1, 1), (0, 0)))
    # TODO(synk): the zero halo is still materialised by XLA; folding it into the
    # kernel (predicated edge taps) would save one feature-map HBM round trip.
    wf = w.astype(jnp.bfloat16).reshape(KH * KW * Cin, Cout)
    bf = b.astype(jnp.float32).reshape(1, Cout)

    NB = N if H <= 32 else 1                 # fold batch into matmul M on small maps
    TH = _pick_row_tile(H, W, Cout, pool, NB)
    Hp, Wp = H + 2, W + 2

    kernel = _make_conv_kernel(NB=NB, TH=TH, W=W, KH=KH, KW=KW,
                               Cin=Cin, Cout=Cout, pool=pool, relu=relu)
    return pl.pallas_call(
        kernel,
        out_shape=jax.ShapeDtypeStruct((N, H // pool, W // pool, Cout), out_dtype),
        grid=(N // NB, H // TH),
        in_specs=[
            pl.BlockSpec((NB, Hp, Wp, Cin), lambda nb, r: (nb, 0, 0, 0)),
            pl.BlockSpec((KH * KW * Cin, Cout), lambda nb, r: (0, 0)),
            pl.BlockSpec((1, Cout), lambda nb, r: (0, 0)),
        ],
        out_specs=pl.BlockSpec((NB, TH // pool, W // pool, Cout),
                               lambda nb, r: (nb, r, 0, 0)),
        compiler_params=pltpu.CompilerParams(
            dimension_semantics=("parallel", "parallel"),
            vmem_limit_bytes=32 * 1024 * 1024),
    )(xp, wf, bf)


# ---------------------------------------------------------------------------
# Model definition (static config kept out of the param pytree so it jits).
# ---------------------------------------------------------------------------
NUM_BANDS = 4
NUM_CLASSES = 2
ENC_CFG = [(NUM_BANDS, 32, 16, 2), (16, 64, 16, 2), (16, 128, 32, 2),
           (32, 128, 32, 4), (32, 256, 64, 4)]              # (in, ex, out, scale)
DEC_CFG = [(64, 64, 4), (64 + 32, 64, 4), (64 + 32, 64, 2), (64 + 16, 32, 2)]
UP_LAST_CFG = (32 + 16, 32, 2)


def init_params(key):
    k_iter = iter(jax.random.split(key, 64))

    def conv_p(cin, cout, k):
        kw_, kb_ = jax.random.split(next(k_iter))
        w = jax.random.normal(kw_, (k, k, cin, cout), jnp.float32) / jnp.sqrt(k * k * cin)
        b = jax.random.normal(kb_, (cout,), jnp.float32) * 0.01
        return {"w": w, "b": b}

    encoder = [{"conv1": conv_p(i, e, 3), "conv2": conv_p(e, o, 3)}
               for (i, e, o, _s) in ENC_CFG]
    decoder = [{"conv": conv_p(i, o, 3)} for (i, o, _s) in DEC_CFG]
    up_last = {"conv": conv_p(UP_LAST_CFG[0], UP_LAST_CFG[1], 3)}
    out_ch = 1 if NUM_CLASSES == 2 else NUM_CLASSES
    outp = conv_p(32, out_ch, 1)
    return {"encoder": encoder, "decoder": decoder, "up_last": up_last, "outp": outp}


def _nearest_up(x, s):
    # TODO(synk): fuse the nearest-neighbour upsample into the following conv's
    # in-kernel row/col replication to remove this (small) HBM round trip.
    return jnp.repeat(jnp.repeat(x, s, axis=1), s, axis=2)


def unet_forward(params, x_nchw):
    x = jnp.transpose(x_nchw, (0, 2, 3, 1)).astype(jnp.bfloat16)     # NCHW -> NHWC
    skips = []
    for p, (_i, _e, _o, s) in zip(params["encoder"], ENC_CFG):
        x = conv3x3(x, p["conv1"]["w"], p["conv1"]["b"])
        x = conv3x3(x, p["conv2"]["w"], p["conv2"]["b"], pool=s)     # fused max-pool
        skips.append(x)
    skips = list(reversed(skips[:-1]))
    for p, skip, (_i, _o, s) in zip(params["decoder"], skips, DEC_CFG):
        x = conv3x3(_nearest_up(x, s), p["conv"]["w"], p["conv"]["b"])
        # torch.cat(dim=1): channel concat, done at the small pre-upsample
        # resolution in bf16 (cheaper than two lane-padded conv inputs).
        x = jnp.concatenate([x, skip], axis=-1)
    x = conv3x3(_nearest_up(x, UP_LAST_CFG[2]),
                params["up_last"]["conv"]["w"], params["up_last"]["conv"]["b"])

    # Final 1x1 conv + sigmoid/softmax: tiny and lane-hostile (Cout=1) -> plain JAX f32.
    w1 = params["outp"]["w"][0, 0].astype(jnp.float32)               # (32, out_ch)
    b1 = params["outp"]["b"].astype(jnp.float32)
    logits = jnp.einsum("nhwc,co->nhwo", x.astype(jnp.float32), w1) + b1
    prob = jax.nn.sigmoid(logits) if NUM_CLASSES == 2 else jax.nn.softmax(logits, axis=-1)
    return jnp.transpose(prob, (0, 3, 1, 2))                         # NHWC -> NCHW


# ---------------------------------------------------------------------------
def _conv_reference(x, w, b, relu=True):
    out = jax.lax.conv_general_dilated(
        x, w, window_strides=(1, 1), padding=[(1, 1), (1, 1)],
        dimension_numbers=("NHWC", "HWIO", "NHWC"),
        precision=jax.lax.Precision.HIGHEST) + b
    return jnp.maximum(out, 0.0) if relu else out


if __name__ == "__main__":
    key = jax.random.PRNGKey(0)
    pkey, xkey, ckey = jax.random.split(key, 3)

    # --- correctness check of the Pallas conv kernel (and fused pool) vs lax.conv ---
    cx = jax.random.normal(ckey, (2, 32, 32, 4), jnp.float32)
    cw = jax.random.normal(jax.random.fold_in(ckey, 1), (3, 3, 4, 8), jnp.float32) * 0.1
    cb = jax.random.normal(jax.random.fold_in(ckey, 2), (8,), jnp.float32) * 0.1
    # reference uses the same bf16-rounded operands the kernel feeds to the MXU
    cxr = cx.astype(jnp.bfloat16).astype(jnp.float32)
    cwr = cw.astype(jnp.bfloat16).astype(jnp.float32)
    ref = _conv_reference(cxr, cwr, cb)
    got = conv3x3(cx, cw, cb, out_dtype=jnp.float32)
    assert jnp.allclose(got, ref, atol=2e-2, rtol=2e-2), "conv kernel mismatch"
    ref_pool = ref.reshape(2, 16, 2, 16, 2, 8).max(axis=(2, 4))
    got_pool = conv3x3(cx, cw, cb, pool=2, out_dtype=jnp.float32)
    assert jnp.allclose(got_pool, ref_pool, atol=2e-2, rtol=2e-2), "fused pool mismatch"

    # --- full model: total down-sampling factor is 2*2*2*4*4 = 128, so the
    #     smallest valid spatial size is 128x128 ---
    params = init_params(pkey)
    x = jax.random.normal(xkey, (2, NUM_BANDS, 128, 128), jnp.float32)   # NCHW like torch
    fwd = jax.jit(unet_forward)
    out = jax.block_until_ready(fwd(params, x))

    assert out.shape == (2, 1, 128, 128), out.shape
    assert bool(jnp.all((out >= 0.0) & (out <= 1.0)))
    print("KERNEL_OK")
</pallas_src>

<mosaic_0001>
module attributes {stable_mosaic.version = 11 : i64} {
  func.func @kernel(%arg0: i32, %arg1: i32, %arg2: memref<2x34x34x4xbf16, #tpu.memory_space<vmem>>, %arg3: memref<36x8xbf16, #tpu.memory_space<vmem>>, %arg4: memref<1x8xf32, #tpu.memory_space<vmem>>, %arg5: memref<2x32x32x8xf32, #tpu.memory_space<vmem>>) attributes {dimension_semantics = [#tpu.dimension_semantics<parallel>, #tpu.dimension_semantics<parallel>], iteration_bounds = array<i64: 1, 1>, scalar_prefetch = 0 : i64, scratch_operands = 0 : i64, tpu.core_type = #tpu.core_type<tc>, window_params = [{transform_indices = @transform_0, window_bounds = array<i64: 2, 34, 34, 4>}, {pipeline_mode = #tpu.pipeline_mode<synchronous>, transform_indices = @transform_1, window_bounds = array<i64: 36, 8>}, {pipeline_mode = #tpu.pipeline_mode<synchronous>, transform_indices = @transform_2, window_bounds = array<i64: 1, 8>}, {transform_indices = @transform_3, window_bounds = array<i64: 2, 32, 32, 8>}]} {
    %c32_i32 = arith.constant 32 : i32
    %0 = arith.muli %arg1, %c32_i32 : i32
    %1 = tpu.assume_multiple %0, 32 : i32
    %c0_i32 = arith.constant 0 : i32
    %2 = arith.addi %1, %c0_i32 : i32
    %c0 = arith.constant 0 : index
    %3 = arith.index_cast %2 : i32 to index
    %c0_0 = arith.constant 0 : index
    %c0_1 = arith.constant 0 : index
    %4 = vector.load %arg2[%c0, %3, %c0_0, %c0_1] : memref<2x34x34x4xbf16, #tpu.memory_space<vmem>>, vector<2x32x32x4xbf16>
    %c0_i32_2 = arith.constant 0 : i32
    %5 = arith.addi %1, %c0_i32_2 : i32
    %c0_3 = arith.constant 0 : index
    %6 = arith.index_cast %5 : i32 to index
    %c1 = arith.constant 1 : index
    %c0_4 = arith.constant 0 : index
    %7 = vector.load %arg2[%c0_3, %6, %c1, %c0_4] : memref<2x34x34x4xbf16, #tpu.memory_space<vmem>>, vector<2x32x32x4xbf16>
    %c0_i32_5 = arith.constant 0 : i32
    %8 = arith.addi %1, %c0_i32_5 : i32
    %c0_6 = arith.constant 0 : index
    %9 = arith.index_cast %8 : i32 to index
    %c2 = arith.constant 2 : index
    %c0_7 = arith.constant 0 : index
    %10 = vector.load %arg2[%c0_6, %9, %c2, %c0_7] : memref<2x34x34x4xbf16, #tpu.memory_space<vmem>>, vector<2x32x32x4xbf16>
    %c1_i32 = arith.constant 1 : i32
    %11 = arith.addi %1, %c1_i32 : i32
    %c0_8 = arith.constant 0 : index
    %12 = arith.index_cast %11 : i32 to index
    %c0_9 = arith.constant 0 : index
    %c0_10 = arith.constant 0 : index
    %13 = vector.load %arg2[%c0_8, %12, %c0_9, %c0_10] : memref<2x34x34x4xbf16, #tpu.memory_space<vmem>>, vector<2x32x32x4xbf16>
    %c1_i32_11 = arith.constant 1 : i32
    %14 = arith.addi %1, %c1_i32_11 : i32
    %c0_12 = arith.constant 0 : index
    %15 = arith.index_cast %14 : i32 to index
    %c1_13 = arith.constant 1 : index
    %c0_14 = arith.constant 0 : index
    %16 = vector.load %arg2[%c0_12, %15, %c1_13, %c0_14] : memref<2x34x34x4xbf16, #tpu.memory_space<vmem>>, vector<2x32x32x4xbf16>
    %c1_i32_15 = arith.constant 1 : i32
    %17 = arith.addi %1, %c1_i32_15 : i32
    %c0_16 = arith.constant 0 : index
    %18 = arith.index_cast %17 : i32 to index
    %c2_17 = arith.constant 2 : index
    %c0_18 = arith.constant 0 : index
    %19 = vector.load %arg2[%c0_16, %18, %c2_17, %c0_18] : memref<2x34x34x4xbf16, #tpu.memory_space<vmem>>, vector<2x32x32x4xbf16>
    %c2_i32 = arith.constant 2 : i32
    %20 = arith.addi %1, %c2_i32 : i32
    %c0_19 = arith.constant 0 : index
    %21 = arith.index_cast %20 : i32 to index
    %c0_20 = arith.constant 0 : index
    %c0_21 = arith.constant 0 : index
    %22 = vector.load %arg2[%c0_19, %21, %c0_20, %c0_21] : memref<2x34x34x4xbf16, #tpu.memory_space<vmem>>, vector<2x32x32x4xbf16>
    %c2_i32_22 = arith.constant 2 : i32
    %23 = arith.addi %1, %c2_i32_22 : i32
    %c0_23 = arith.constant 0 : index
    %24 = arith.index_cast %23 : i32 to index
    %c1_24 = arith.constant 1 : index
    %c0_25 = arith.constant 0 : index
    %25 = vector.load %arg2[%c0_23, %24, %c1_24, %c0_25] : memref<2x34x34x4xbf16, #tpu.memory_space<vmem>>, vector<2x32x32x4xbf16>
    %c2_i32_26 = arith.constant 2 : i32
    %26 = arith.addi %1, %c2_i32_26 : i32
    %c0_27 = arith.constant 0 : index
    %27 = arith.index_cast %26 : i32 to index
    %c2_28 = arith.constant 2 : index
    %c0_29 = arith.constant 0 : index
    %28 = vector.load %arg2[%c0_27, %27, %c2_28, %c0_29] : memref<2x34x34x4xbf16, #tpu.memory_space<vmem>>, vector<2x32x32x4xbf16>
    %29 = tpu.concatenate %4, %7, %10, %13, %16, %19, %22, %25, %28 in 3 : vector<2x32x32x4xbf16>, vector<2x32x32x4xbf16>, vector<2x32x32x4xbf16>, vector<2x32x32x4xbf16>, vector<2x32x32x4xbf16>, vector<2x32x32x4xbf16>, vector<2x32x32x4xbf16>, vector<2x32x32x4xbf16>, vector<2x32x32x4xbf16> -> vector<2x32x32x36xbf16>
    %30 = vector.shape_cast %29 : vector<2x32x32x36xbf16> to vector<2048x36xbf16>
    %c0_30 = arith.constant 0 : index
    %c0_31 = arith.constant 0 : index
    %31 = vector.load %arg3[%c0_30, %c0_31] : memref<36x8xbf16, #tpu.memory_space<vmem>>, vector<36x8xbf16>
    %cst = arith.constant dense<0.000000e+00> : vector<2048x8xf32>
    %32 = tpu.matmul %30, %31, %cst {dimension_numbers = #tpu.dot_dimension_numbers<[1], [0], [0], [1], [0, 0, 1, 1], [], []>} : vector<2048x36xbf16>, vector<36x8xbf16>, vector<2048x8xf32> -> vector<2048x8xf32>
    %c0_32 = arith.constant 0 : index
    %c0_33 = arith.constant 0 : index
    %33 = vector.load %arg4[%c0_32, %c0_33] : memref<1x8xf32, #tpu.memory_space<vmem>>, vector<1x8xf32>
    %34 = vector.broadcast %33 : vector<1x8xf32> to vector<2048x8xf32>
    %35 = arith.addf %32, %34 : vector<2048x8xf32>
    %cst_34 = arith.constant 0.000000e+00 : f32
    %36 = vector.broadcast %cst_34 : f32 to vector<2048x8xf32>
    %37 = arith.maximumf %35, %36 : vector<2048x8xf32>
    %38 = vector.shape_cast %37 : vector<2048x8xf32> to vector<2x32x32x8xf32>
    %c0_35 = arith.constant 0 : index
    %c0_36 = arith.constant 0 : index
    %c0_37 = arith.constant 0 : index
    %c0_38 = arith.constant 0 : index
    %39 = vector.load %arg5[%c0_35, %c0_36, %c0_37, %c0_38] : memref<2x32x32x8xf32, #tpu.memory_space<vmem>>, vector<2x32x32x8xf32>
    tpu.vector_store %arg5[%c0_35, %c0_36, %c0_37, %c0_38], %38 {strides = array<i32>} : memref<2x32x32x8xf32, #tpu.memory_space<vmem>>, vector<2x32x32x8xf32>,
    return
  }
  func.func @transform_0(%arg0: i32, %arg1: i32) -> (i32, i32, i32, i32) {
    %c0_i32 = arith.constant 0 : i32
    %c0_i32_0 = arith.constant 0 : i32
    %c0_i32_1 = arith.constant 0 : i32
    %c0_i32_2 = arith.constant 0 : i32
    return %arg0, %c0_i32, %c0_i32_0, %c0_i32_1 : i32, i32, i32, i32
  }
  func.func @transform_1(%arg0: i32, %arg1: i32) -> (i32, i32) {
    %c0_i32 = arith.constant 0 : i32
    %c0_i32_0 = arith.constant 0 : i32
    %c0_i32_1 = arith.constant 0 : i32
    return %c0_i32, %c0_i32_0 : i32, i32
  }
  func.func @transform_2(%arg0: i32, %arg1: i32) -> (i32, i32) {
    %c0_i32 = arith.constant 0 : i32
    %c0_i32_0 = arith.constant 0 : i32
    %c0_i32_1 = arith.constant 0 : i32
    return %c0_i32, %c0_i32_0 : i32, i32
  }
  func.func @transform_3(%arg0: i32, %arg1: i32) -> (i32, i32, i32, i32) {
    %c0_i32 = arith.constant 0 : i32
    %c0_i32_0 = arith.constant 0 : i32
    %c0_i32_1 = arith.constant 0 : i32
    return %arg0, %arg1, %c0_i32, %c0_i32_0 : i32, i32, i32, i32
  }
}

</mosaic_0001>

<llo_original>
// kernel: tpu_custom_call.1
$region0: #{tpu_custom_call.1}
  #allocation0 [shape = 'u32[]', space=smem, size = 0x4, offset = 0x4, fixed_abs, tag = 'smem constant byte address 0x4 - core index']
  #allocation1 [shape = 'u32[144,128]{1,0:T(1,128)}', space=vmem, size = 0x12000, scoped, tag = 'internal scratch']
  %s0 = inlined_call_operand.vmem [shape: bf16[2,34,34,4], index: 0, kind: input, shape index: {}]
  %s1 = inlined_call_operand.vmem [shape: bf16[36,8], index: 1, kind: input, shape index: {}]
  %s2 = inlined_call_operand.vmem [shape: f32[1,8], index: 2, kind: input, shape index: {}]
  %s3 = inlined_call_operand.vmem [shape: f32[2,32,32,8], index: 3, kind: output, shape index: {}]
  %s4 = sld [smem:[#allocation0]]
  $region22: #{tpu_custom_call.1} parent=0
    _
  %s6 = ssub.s32 1, %s4
  %s7 = scalar_select 0, %s6, %s4
  // Predicated region
  $region2: #{tpu_custom_call.1} parent=0 // pred_check
    _
  $region3: #{tpu_custom_call.1} parent=0 // pred_check_branch
    %9 = sbr.rel (0) target = $region5
  $region4: #{tpu_custom_call.1} parent=0 // pred_region
    _
  $region5: #{tpu_custom_call.1} parent=0 // pred_fallthru
    _
  // Predicated region
  $region6: #{tpu_custom_call.1} parent=0 // pred_check
    _
  $region7: #{tpu_custom_call.1} parent=0 // pred_check_branch
    %11 = sbr.rel (0) target = $region9
  $region8: #{tpu_custom_call.1} parent=0 // pred_region
    _
  $region9: #{tpu_custom_call.1} parent=0 // pred_fallthru
    _
  // Predicated region
  $region10: #{tpu_custom_call.1} parent=0 // pred_check
    _
  $region11: #{tpu_custom_call.1} parent=0 // pred_check_branch
    %13 = sbr.rel (0) target = $region13
  $region12: #{tpu_custom_call.1} parent=0 // pred_region
    _
  $region13: #{tpu_custom_call.1} parent=0 // pred_fallthru
    _
  %s15 = smul.u32 0, 32
  %s16 = smul.u32 %s15, 5
  %s17 = smul.addr %s16, 4
  %s18 = scalar_lea.vmem %s0, %s17
  %v19 = vld [vmem:[%s18] sm:$0xf]
  %v20 = vld [vmem:[%s18 + $0x4] sm:$0xf]
  %v21 = vld [vmem:[%s18 + $0x8] sm:$0xf]
  %v22 = vld [vmem:[%s18 + $0xc] sm:$0xf]
  %v23 = vld [vmem:[%s18 + $0x14] sm:$0xf]
  %v24 = vld [vmem:[%s18 + $0x18] sm:$0xf]
  %v25 = vld [vmem:[%s18 + $0x1c] sm:$0xf]
  %v26 = vld [vmem:[%s18 + $0x20] sm:$0xf]
  %v27 = vld [vmem:[%s18 + $0x28] sm:$0xf]
  %v28 = vld [vmem:[%s18 + $0x2c] sm:$0xf]
  %v29 = vld [vmem:[%s18 + $0x30] sm:$0xf]
  %v30 = vld [vmem:[%s18 + $0x34] sm:$0xf]
  %v31 = vld [vmem:[%s18 + $0x3c] sm:$0xf]
  %v32 = vld [vmem:[%s18 + $0x40] sm:$0xf]
  %v33 = vld [vmem:[%s18 + $0x44] sm:$0xf]
  %v34 = vld [vmem:[%s18 + $0x48] sm:$0xf]
  %v35 = vld [vmem:[%s18 + $0x50] sm:$0xf]
  %v36 = vld [vmem:[%s18 + $0x54] sm:$0xf]
  %v37 = vld [vmem:[%s18 + $0x58] sm:$0xf]
  %v38 = vld [vmem:[%s18 + $0x5c] sm:$0xf]
  %v39 = vld [vmem:[%s18 + $0x64] sm:$0xf]
  %v40 = vld [vmem:[%s18 + $0x68] sm:$0xf]
  %v41 = vld [vmem:[%s18 + $0x6c] sm:$0xf]
  %v42 = vld [vmem:[%s18 + $0x70] sm:$0xf]
  %v43 = vld [vmem:[%s18 + $0x78] sm:$0xf]
  %v44 = vld [vmem:[%s18 + $0x7c] sm:$0xf]
  %v45 = vld [vmem:[%s18 + $0x80] sm:$0xf]
  %v46 = vld [vmem:[%s18 + $0x84] sm:$0xf]
  %v47 = vld [vmem:[%s18 + $0x8c] sm:$0xf]
  %v48 = vld [vmem:[%s18 + $0x90] sm:$0xf]
  %v49 = vld [vmem:[%s18 + $0x94] sm:$0xf]
  %v50 = vld [vmem:[%s18 + $0x98] sm:$0xf]
  %v51 = vld [vmem:[%s18 + $0xa0] sm:$0xf]
  %v52 = vld [vmem:[%s18 + $0xa4] sm:$0xf]
  %v53 = vld [vmem:[%s18 + $0xa8] sm:$0xf]
  %v54 = vld [vmem:[%s18 + $0xac] sm:$0xf]
  %v55 = vld [vmem:[%s18 + $0xb4] sm:$0xf]
  %v56 = vld [vmem:[%s18 + $0xb8] sm:$0xf]
  %v57 = vld [vmem:[%s18 + $0xbc] sm:$0xf]
  %v58 = vld [vmem:[%s18 + $0xc0] sm:$0xf]
  %v59 = vld [vmem:[%s18 + $0xc8] sm:$0xf]
  %v60 = vld [vmem:[%s18 + $0xcc] sm:$0xf]
  %v61 = vld [vmem:[%s18 + $0xd0] sm:$0xf]
  %v62 = vld [vmem:[%s18 + $0xd4] sm:$0xf]
  %v63 = vld [vmem:[%s18 + $0xdc] sm:$0xf]
  %v64 = vld [vmem:[%s18 + $0xe0] sm:$0xf]
  %v65 = vld [vmem:[%s18 + $0xe4] sm:$0xf]
  %v66 = vld [vmem:[%s18 + $0xe8] sm:$0xf]
  %v67 = vld [vmem:[%s18 + $0xf0] sm:$0xf]
  %v68 = vld [vmem:[%s18 + $0xf4] sm:$0xf]
  %v69 = vld [vmem:[%s18 + $0xf8] sm:$0xf]
  %v70 = vld [vmem:[%s18 + $0xfc] sm:$0xf]
  %v71 = vld [vmem:[%s18 + $0x104] sm:$0xf]
  %v72 = vld [vmem:[%s18 + $0x108] sm:$0xf]
  %v73 = vld [vmem:[%s18 + $0x10c] sm:$0xf]
  %v74 = vld [vmem:[%s18 + $0x110] sm:$0xf]
  %v75 = vld [vmem:[%s18 + $0x118] sm:$0xf]
  %v76 = vld [vmem:[%s18 + $0x11c] sm:$0xf]
  %v77 = vld [vmem:[%s18 + $0x120] sm:$0xf]
  %v78 = vld [vmem:[%s18 + $0x124] sm:$0xf]
  %v79 = vld [vmem:[%s18 + $0x12c] sm:$0xf]
  %v80 = vld [vmem:[%s18 + $0x130] sm:$0xf]
  %v81 = vld [vmem:[%s18 + $0x134] sm:$0xf]
  %v82 = vld [vmem:[%s18 + $0x138] sm:$0xf]
  %v83 = vld [vmem:[%s18 + $0x140] sm:$0xf]
  %v84 = vld [vmem:[%s18 + $0x144] sm:$0xf]
  %v85 = vld [vmem:[%s18 + $0x148] sm:$0xf]
  %v86 = vld [vmem:[%s18 + $0x14c] sm:$0xf]
  %v87 = vld [vmem:[%s18 + $0x154] sm:$0xf]
  %v88 = vld [vmem:[%s18 + $0x158] sm:$0xf]
  %v89 = vld [vmem:[%s18 + $0x15c] sm:$0xf]
  %v90 = vld [vmem:[%s18 + $0x160] sm:$0xf]
  %v91 = vld [vmem:[%s18 + $0x168] sm:$0xf]
  %v92 = vld [vmem:[%s18 + $0x16c] sm:$0xf]
  %v93 = vld [vmem:[%s18 + $0x170] sm:$0xf]
  %v94 = vld [vmem:[%s18 + $0x174] sm:$0xf]
  %v95 = vld [vmem:[%s18 + $0x17c] sm:$0xf]
  %v96 = vld [vmem:[%s18 + $0x180] sm:$0xf]
  %v97 = vld [vmem:[%s18 + $0x184] sm:$0xf]
  %v98 = vld [vmem:[%s18 + $0x188] sm:$0xf]
  %v99 = vld [vmem:[%s18 + $0x190] sm:$0xf]
  %v100 = vld [vmem:[%s18 + $0x194] sm:$0xf]
  %v101 = vld [vmem:[%s18 + $0x198] sm:$0xf]
  %v102 = vld [vmem:[%s18 + $0x19c] sm:$0xf]
  %v103 = vld [vmem:[%s18 + $0x1a4] sm:$0xf]
  %v104 = vld [vmem:[%s18 + $0x1a8] sm:$0xf]
  %v105 = vld [vmem:[%s18 + $0x1ac] sm:$0xf]
  %v106 = vld [vmem:[%s18 + $0x1b0] sm:$0xf]
  %v107 = vld [vmem:[%s18 + $0x1b8] sm:$0xf]
  %v108 = vld [vmem:[%s18 + $0x1bc] sm:$0xf]
  %v109 = vld [vmem:[%s18 + $0x1c0] sm:$0xf]
  %v110 = vld [vmem:[%s18 + $0x1c4] sm:$0xf]
  %v111 = vld [vmem:[%s18 + $0x1cc] sm:$0xf]
  %v112 = vld [vmem:[%s18 + $0x1d0] sm:$0xf]
  %v113 = vld [vmem:[%s18 + $0x1d4] sm:$0xf]
  %v114 = vld [vmem:[%s18 + $0x1d8] sm:$0xf]
  %v115 = vld [vmem:[%s18 + $0x1e0] sm:$0xf]
  %v116 = vld [vmem:[%s18 + $0x1e4] sm:$0xf]
  %v117 = vld [vmem:[%s18 + $0x1e8] sm:$0xf]
  %v118 = vld [vmem:[%s18 + $0x1ec] sm:$0xf]
  %v119 = vld [vmem:[%s18 + $0x1f4] sm:$0xf]
  %v120 = vld [vmem:[%s18 + $0x1f8] sm:$0xf]
  %v121 = vld [vmem:[%s18 + $0x1fc] sm:$0xf]
  %v122 = vld [vmem:[%s18 + $0x200] sm:$0xf]
  %v123 = vld [vmem:[%s18 + $0x208] sm:$0xf]
  %v124 = vld [vmem:[%s18 + $0x20c] sm:$0xf]
  %v125 = vld [vmem:[%s18 + $0x210] sm:$0xf]
  %v126 = vld [vmem:[%s18 + $0x214] sm:$0xf]
  %v127 = vld [vmem:[%s18 + $0x21c] sm:$0xf]
  %v128 = vld [vmem:[%s18 + $0x220] sm:$0xf]
  %v129 = vld [vmem:[%s18 + $0x224] sm:$0xf]
  %v130 = vld [vmem:[%s18 + $0x228] sm:$0xf]
  %v131 = vld [vmem:[%s18 + $0x230] sm:$0xf]
  %v132 = vld [vmem:[%s18 + $0x234] sm:$0xf]
  %v133 = vld [vmem:[%s18 + $0x238] sm:$0xf]
  %v134 = vld [vmem:[%s18 + $0x23c] sm:$0xf]
  %v135 = vld [vmem:[%s18 + $0x244] sm:$0xf]
  %v136 = vld [vmem:[%s18 + $0x248] sm:$0xf]
  %v137 = vld [vmem:[%s18 + $0x24c] sm:$0xf]
  %v138 = vld [vmem:[%s18 + $0x250] sm:$0xf]
  %v139 = vld [vmem:[%s18 + $0x258] sm:$0xf]
  %v140 = vld [vmem:[%s18 + $0x25c] sm:$0xf]
  %v141 = vld [vmem:[%s18 + $0x260] sm:$0xf]
  %v142 = vld [vmem:[%s18 + $0x264] sm:$0xf]
  %v143 = vld [vmem:[%s18 + $0x26c] sm:$0xf]
  %v144 = vld [vmem:[%s18 + $0x270] sm:$0xf]
  %v145 = vld [vmem:[%s18 + $0x274] sm:$0xf]
  %v146 = vld [vmem:[%s18 + $0x278] sm:$0xf]
  %v147 = vld [vmem:[%s18 + $0x2a8] sm:$0xf]
  %v148 = vld [vmem:[%s18 + $0x2ac] sm:$0xf]
  %v149 = vld [vmem:[%s18 + $0x2b0] sm:$0xf]
  %v150 = vld [vmem:[%s18 + $0x2b4] sm:$0xf]
  %v151 = vld [vmem:[%s18 + $0x2bc] sm:$0xf]
  %v152 = vld [vmem:[%s18 + $0x2c0] sm:$0xf]
  %v153 = vld [vmem:[%s18 + $0x2c4] sm:$0xf]
  %v154 = vld [vmem:[%s18 + $0x2c8] sm:$0xf]
  %v155 = vld [vmem:[%s18 + $0x2d0] sm:$0xf]
  %v156 = vld [vmem:[%s18 + $0x2d4] sm:$0xf]
  %v157 = vld [vmem:[%s18 + $0x2d8] sm:$0xf]
  %v158 = vld [vmem:[%s18 + $0x2dc] sm:$0xf]
  %v159 = vld [vmem:[%s18 + $0x2e4] sm:$0xf]
  %v160 = vld [vmem:[%s18 + $0x2e8] sm:$0xf]
  %v161 = vld [vmem:[%s18 + $0x2ec] sm:$0xf]
  %v162 = vld [vmem:[%s18 + $0x2f0] sm:$0xf]
  %v163 = vld [vmem:[%s18 + $0x2f8] sm:$0xf]
  %v164 = vld [vmem:[%s18 + $0x2fc] sm:$0xf]
  %v165 = vld [vmem:[%s18 + $0x300] sm:$0xf]
  %v166 = vld [vmem:[%s18 + $0x304] sm:$0xf]
  %v167 = vld [vmem:[%s18 + $0x30c] sm:$0xf]
  %v168 = vld [vmem:[%s18 + $0x310] sm:$0xf]
  %v169 = vld [vmem:[%s18 + $0x314] sm:$0xf]
  %v170 = vld [vmem:[%s18 + $0x318] sm:$0xf]
  %v171 = vld [vmem:[%s18 + $0x320] sm:$0xf]
  %v172 = vld [vmem:[%s18 + $0x324] sm:$0xf]
  %v173 = vld [vmem:[%s18 + $0x328] sm:$0xf]
  %v174 = vld [vmem:[%s18 + $0x32c] sm:$0xf]
  %v175 = vld [vmem:[%s18 + $0x334] sm:$0xf]
  %v176 = vld [vmem:[%s18 + $0x338] sm:$0xf]
  %v177 = vld [vmem:[%s18 + $0x33c] sm:$0xf]
  %v178 = vld [vmem:[%s18 + $0x340] sm:$0xf]
  %v179 = vld [vmem:[%s18 + $0x348] sm:$0xf]
  %v180 = vld [vmem:[%s18 + $0x34c] sm:$0xf]
  %v181 = vld [vmem:[%s18 + $0x350] sm:$0xf]
  %v182 = vld [vmem:[%s18 + $0x354] sm:$0xf]
  %v183 = vld [vmem:[%s18 + $0x35c] sm:$0xf]
  %v184 = vld [vmem:[%s18 + $0x360] sm:$0xf]
  %v185 = vld [vmem:[%s18 + $0x364] sm:$0xf]
  %v186 = vld [vmem:[%s18 + $0x368] sm:$0xf]
  %v187 = vld [vmem:[%s18 + $0x370] sm:$0xf]
  %v188 = vld [vmem:[%s18 + $0x374] sm:$0xf]
  %v189 = vld [vmem:[%s18 + $0x378] sm:$0xf]
  %v190 = vld [vmem:[%s18 + $0x37c] sm:$0xf]
  %v191 = vld [vmem:[%s18 + $0x384] sm:$0xf]
  %v192 = vld [vmem:[%s18 + $0x388] sm:$0xf]
  %v193 = vld [vmem:[%s18 + $0x38c] sm:$0xf]
  %v194 = vld [vmem:[%s18 + $0x390] sm:$0xf]
  %v195 = vld [vmem:[%s18 + $0x398] sm:$0xf]
  %v196 = vld [vmem:[%s18 + $0x39c] sm:$0xf]
  %v197 = vld [vmem:[%s18 + $0x3a0] sm:$0xf]
  %v198 = vld [vmem:[%s18 + $0x3a4] sm:$0xf]
  %v199 = vld [vmem:[%s18 + $0x3ac] sm:$0xf]
  %v200 = vld [vmem:[%s18 + $0x3b0] sm:$0xf]
  %v201 = vld [vmem:[%s18 + $0x3b4] sm:$0xf]
  %v202 = vld [vmem:[%s18 + $0x3b8] sm:$0xf]
  %v203 = vld [vmem:[%s18 + $0x3c0] sm:$0xf]
  %v204 = vld [vmem:[%s18 + $0x3c4] sm:$0xf]
  %v205 = vld [vmem:[%s18 + $0x3c8] sm:$0xf]
  %v206 = vld [vmem:[%s18 + $0x3cc] sm:$0xf]
  %v207 = vld [vmem:[%s18 + $0x3d4] sm:$0xf]
  %v208 = vld [vmem:[%s18 + $0x3d8] sm:$0xf]
  %v209 = vld [vmem:[%s18 + $0x3dc] sm:$0xf]
  %v210 = vld [vmem:[%s18 + $0x3e0] sm:$0xf]
  %v211 = vld [vmem:[%s18 + $0x3e8] sm:$0xf]
  %v212 = vld [vmem:[%s18 + $0x3ec] sm:$0xf]
  %v213 = vld [vmem:[%s18 + $0x3f0] sm:$0xf]
  %v214 = vld [vmem:[%s18 + $0x3f4] sm:$0xf]
  %v215 = vld [vmem:[%s18 + $0x3fc] sm:$0xf]
  %v216 = vld [vmem:[%s18 + $0x400] sm:$0xf]
  %v217 = vld [vmem:[%s18 + $0x404] sm:$0xf]
  %v218 = vld [vmem:[%s18 + $0x408] sm:$0xf]
  %v219 = vld [vmem:[%s18 + $0x410] sm:$0xf]
  %v220 = vld [vmem:[%s18 + $0x414] sm:$0xf]
  %v221 = vld [vmem:[%s18 + $0x418] sm:$0xf]
  %v222 = vld [vmem:[%s18 + $0x41c] sm:$0xf]
  %v223 = vld [vmem:[%s18 + $0x424] sm:$0xf]
  %v224 = vld [vmem:[%s18 + $0x428] sm:$0xf]
  %v225 = vld [vmem:[%s18 + $0x42c] sm:$0xf]
  %v226 = vld [vmem:[%s18 + $0x430] sm:$0xf]
  %v227 = vld [vmem:[%s18 + $0x438] sm:$0xf]
  %v228 = vld [vmem:[%s18 + $0x43c] sm:$0xf]
  %v229 = vld [vmem:[%s18 + $0x440] sm:$0xf]
  %v230 = vld [vmem:[%s18 + $0x444] sm:$0xf]
  %v231 = vld [vmem:[%s18 + $0x44c] sm:$0xf]
  %v232 = vld [vmem:[%s18 + $0x450] sm:$0xf]
  %v233 = vld [vmem:[%s18 + $0x454] sm:$0xf]
  %v234 = vld [vmem:[%s18 + $0x458] sm:$0xf]
  %v235 = vld [vmem:[%s18 + $0x460] sm:$0xf]
  %v236 = vld [vmem:[%s18 + $0x464] sm:$0xf]
  %v237 = vld [vmem:[%s18 + $0x468] sm:$0xf]
  %v238 = vld [vmem:[%s18 + $0x46c] sm:$0xf]
  %v239 = vld [vmem:[%s18 + $0x474] sm:$0xf]
  %v240 = vld [vmem:[%s18 + $0x478] sm:$0xf]
  %v241 = vld [vmem:[%s18 + $0x47c] sm:$0xf]
  %v242 = vld [vmem:[%s18 + $0x480] sm:$0xf]
  %v243 = vld [vmem:[%s18 + $0x488] sm:$0xf]
  %v244 = vld [vmem:[%s18 + $0x48c] sm:$0xf]
  %v245 = vld [vmem:[%s18 + $0x490] sm:$0xf]
  %v246 = vld [vmem:[%s18 + $0x494] sm:$0xf]
  %v247 = vld [vmem:[%s18 + $0x49c] sm:$0xf]
  %v248 = vld [vmem:[%s18 + $0x4a0] sm:$0xf]
  %v249 = vld [vmem:[%s18 + $0x4a4] sm:$0xf]
  %v250 = vld [vmem:[%s18 + $0x4a8] sm:$0xf]
  %v251 = vld [vmem:[%s18 + $0x4b0] sm:$0xf]
  %v252 = vld [vmem:[%s18 + $0x4b4] sm:$0xf]
  %v253 = vld [vmem:[%s18 + $0x4b8] sm:$0xf]
  %v254 = vld [vmem:[%s18 + $0x4bc] sm:$0xf]
  %v255 = vld [vmem:[%s18 + $0x4c4] sm:$0xf]
  %v256 = vld [vmem:[%s18 + $0x4c8] sm:$0xf]
  %v257 = vld [vmem:[%s18 + $0x4cc] sm:$0xf]
  %v258 = vld [vmem:[%s18 + $0x4d0] sm:$0xf]
  %v259 = vld [vmem:[%s18 + $0x4d8] sm:$0xf]
  %v260 = vld [vmem:[%s18 + $0x4dc] sm:$0xf]
  %v261 = vld [vmem:[%s18 + $0x4e0] sm:$0xf]
  %v262 = vld [vmem:[%s18 + $0x4e4] sm:$0xf]
  %v263 = vld [vmem:[%s18 + $0x4ec] sm:$0xf]
  %v264 = vld [vmem:[%s18 + $0x4f0] sm:$0xf]
  %v265 = vld [vmem:[%s18 + $0x4f4] sm:$0xf]
  %v266 = vld [vmem:[%s18 + $0x4f8] sm:$0xf]
  %v267 = vld [vmem:[%s18 + $0x500] sm:$0xf]
  %v268 = vld [vmem:[%s18 + $0x504] sm:$0xf]
  %v269 = vld [vmem:[%s18 + $0x508] sm:$0xf]
  %v270 = vld [vmem:[%s18 + $0x50c] sm:$0xf]
  %v271 = vld [vmem:[%s18 + $0x514] sm:$0xf]
  %v272 = vld [vmem:[%s18 + $0x518] sm:$0xf]
  %v273 = vld [vmem:[%s18 + $0x51c] sm:$0xf]
  %v274 = vld [vmem:[%s18 + $0x520] sm:$0xf]
  %v275 = vld [vmem:[%s18 + $0x10] sm:$0x1]
  %v276 = vld [vmem:[%s18 + $0x24] sm:$0x1]
  %v277 = vld [vmem:[%s18 + $0x38] sm:$0x1]
  %v278 = vld [vmem:[%s18 + $0x4c] sm:$0x1]
  %v279 = vld [vmem:[%s18 + $0x60] sm:$0x1]
  %v280 = vld [vmem:[%s18 + $0x74] sm:$0x1]
  %v281 = vld [vmem:[%s18 + $0x88] sm:$0x1]
  %v282 = vld [vmem:[%s18 + $0x9c] sm:$0x1]
  %v283 = vld [vmem:[%s18 + $0xb0] sm:$0x1]
  %v284 = vld [vmem:[%s18 + $0xc4] sm:$0x1]
  %v285 = vld [vmem:[%s18 + $0xd8] sm:$0x1]
  %v286 = vld [vmem:[%s18 + $0xec] sm:$0x1]
  %v287 = vld [vmem:[%s18 + $0x100] sm:$0x1]
  %v288 = vld [vmem:[%s18 + $0x114] sm:$0x1]
  %v289 = vld [vmem:[%s18 + $0x128] sm:$0x1]
  %v290 = vld [vmem:[%s18 + $0x13c] sm:$0x1]
  %v291 = vld [vmem:[%s18 + $0x150] sm:$0x1]
  %v292 = vld [vmem:[%s18 + $0x164] sm:$0x1]
  %v293 = vld [vmem:[%s18 + $0x178] sm:$0x1]
  %v294 = vld [vmem:[%s18 + $0x18c] sm:$0x1]
  %v295 = vld [vmem:[%s18 + $0x1a0] sm:$0x1]
  %v296 = vld [vmem:[%s18 + $0x1b4] sm:$0x1]
  %v297 = vld [vmem:[%s18 + $0x1c8] sm:$0x1]
  %v298 = vld [vmem:[%s18 + $0x1dc] sm:$0x1]
  %v299 = vld [vmem:[%s18 + $0x1f0] sm:$0x1]
  %v300 = vld [vmem:[%s18 + $0x204] sm:$0x1]
  %v301 = vld [vmem:[%s18 + $0x218] sm:$0x1]
  %v302 = vld [vmem:[%s18 + $0x22c] sm:$0x1]
  %v303 = vld [vmem:[%s18 + $0x240] sm:$0x1]
  %v304 = vld [vmem:[%s18 + $0x254] sm:$0x1]
  %v305 = vld [vmem:[%s18 + $0x268] sm:$0x1]
  %v306 = vld [vmem:[%s18 + $0x27c] sm:$0x1]
  %v307 = vld [vmem:[%s18 + $0x2b8] sm:$0x1]
  %v308 = vld [vmem:[%s18 + $0x2cc] sm:$0x1]
  %v309 = vld [vmem:[%s18 + $0x2e0] sm:$0x1]
  %v310 = vld [vmem:[%s18 + $0x2f4] sm:$0x1]
  %v311 = vld [vmem:[%s18 + $0x308] sm:$0x1]
  %v312 = vld [vmem:[%s18 + $0x31c] sm:$0x1]
  %v313 = vld [vmem:[%s18 + $0x330] sm:$0x1]
  %v314 = vld [vmem:[%s18 + $0x344] sm:$0x1]
  %v315 = vld [vmem:[%s18 + $0x358] sm:$0x1]
  %v316 = vld [vmem:[%s18 + $0x36c] sm:$0x1]
  %v317 = vld [vmem:[%s18 + $0x380] sm:$0x1]
  %v318 = vld [vmem:[%s18 + $0x394] sm:$0x1]
  %v319 = vld [vmem:[%s18 + $0x3a8] sm:$0x1]
  %v320 = vld [vmem:[%s18 + $0x3bc] sm:$0x1]
  %v321 = vld [vmem:[%s18 + $0x3d0] sm:$0x1]
  %v322 = vld [vmem:[%s18 + $0x3e4] sm:$0x1]
  %v323 = vld [vmem:[%s18 + $0x3f8] sm:$0x1]
  %v324 = vld [vmem:[%s18 + $0x40c] sm:$0x1]
  %v325 = vld [vmem:[%s18 + $0x420] sm:$0x1]
  %v326 = vld [vmem:[%s18 + $0x434] sm:$0x1]
  %v327 = vld [vmem:[%s18 + $0x448] sm:$0x1]
  %v328 = vld [vmem:[%s18 + $0x45c] sm:$0x1]
  %v329 = vld [vmem:[%s18 + $0x470] sm:$0x1]
  %v330 = vld [vmem:[%s18 + $0x484] sm:$0x1]
  %v331 = vld [vmem:[%s18 + $0x498] sm:$0x1]
  %v332 = vld [vmem:[%s18 + $0x4ac] sm:$0x1]
  %v333 = vld [vmem:[%s18 + $0x4c0] sm:$0x1]
  %v334 = vld [vmem:[%s18 + $0x4d4] sm:$0x1]
  %v335 = vld [vmem:[%s18 + $0x4e8] sm:$0x1]
  %v336 = vld [vmem:[%s18 + $0x4fc] sm:$0x1]
  %v337 = vld [vmem:[%s18 + $0x510] sm:$0x1]
  %v338 = vld [vmem:[%s18 + $0x524] sm:$0x1]
  %v339 = vld [vmem:[%s18] sm:$0xe]
  %v340 = vld [vmem:[%s18 + $0x14] sm:$0xe]
  %v341 = vld [vmem:[%s18 + $0x28] sm:$0xe]
  %v342 = vld [vmem:[%s18 + $0x3c] sm:$0xe]
  %v343 = vld [vmem:[%s18 + $0x50] sm:$0xe]
  %v344 = vld [vmem:[%s18 + $0x64] sm:$0xe]
  %v345 = vld [vmem:[%s18 + $0x78] sm:$0xe]
  %v346 = vld [vmem:[%s18 + $0x8c] sm:$0xe]
  %v347 = vld [vmem:[%s18 + $0xa0] sm:$0xe]
  %v348 = vld [vmem:[%s18 + $0xb4] sm:$0xe]
  %v349 = vld [vmem:[%s18 + $0xc8] sm:$0xe]
  %v350 = vld [vmem:[%s18 + $0xdc] sm:$0xe]
  %v351 = vld [vmem:[%s18 + $0xf0] sm:$0xe]
  %v352 = vld [vmem:[%s18 + $0x104] sm:$0xe]
  %v353 = vld [vmem:[%s18 + $0x118] sm:$0xe]
  %v354 = vld [vmem:[%s18 + $0x12c] sm:$0xe]
  %v355 = vld [vmem:[%s18 + $0x140] sm:$0xe]
  %v356 = vld [vmem:[%s18 + $0x154] sm:$0xe]
  %v357 = vld [vmem:[%s18 + $0x168] sm:$0xe]
  %v358 = vld [vmem:[%s18 + $0x17c] sm:$0xe]
  %v359 = vld [vmem:[%s18 + $0x190] sm:$0xe]
  %v360 = vld [vmem:[%s18 + $0x1a4] sm:$0xe]
  %v361 = vld [vmem:[%s18 + $0x1b8] sm:$0xe]
  %v362 = vld [vmem:[%s18 + $0x1cc] sm:$0xe]
  %v363 = vld [vmem:[%s18 + $0x1e0] sm:$0xe]
  %v364 = vld [vmem:[%s18 + $0x1f4] sm:$0xe]
  %v365 = vld [vmem:[%s18 + $0x208] sm:$0xe]
  %v366 = vld [vmem:[%s18 + $0x21c] sm:$0xe]
  %v367 = vld [vmem:[%s18 + $0x230] sm:$0xe]
  %v368 = vld [vmem:[%s18 + $0x244] sm:$0xe]
  %v369 = vld [vmem:[%s18 + $0x258] sm:$0xe]
  %v370 = vld [vmem:[%s18 + $0x26c] sm:$0xe]
  %v371 = vld [vmem:[%s18 + $0x2a8] sm:$0xe]
  %v372 = vld [vmem:[%s18 + $0x2bc] sm:$0xe]
  %v373 = vld [vmem:[%s18 + $0x2d0] sm:$0xe]
  %v374 = vld [vmem:[%s18 + $0x2e4] sm:$0xe]
  %v375 = vld [vmem:[%s18 + $0x2f8] sm:$0xe]
  %v376 = vld [vmem:[%s18 + $0x30c] sm:$0xe]
  %v377 = vld [vmem:[%s18 + $0x320] sm:$0xe]
  %v378 = vld [vmem:[%s18 + $0x334] sm:$0xe]
  %v379 = vld [vmem:[%s18 + $0x348] sm:$0xe]
  %v380 = vld [vmem:[%s18 + $0x35c] sm:$0xe]
  %v381 = vld [vmem:[%s18 + $0x370] sm:$0xe]
  %v382 = vld [vmem:[%s18 + $0x384] sm:$0xe]
  %v383 = vld [vmem:[%s18 + $0x398] sm:$0xe]
  %v384 = vld [vmem:[%s18 + $0x3ac] sm:$0xe]
  %v385 = vld [vmem:[%s18 + $0x3c0] sm:$0xe]
  %v386 = vld [vmem:[%s18 + $0x3d4] sm:$0xe]
  %v387 = vld [vmem:[%s18 + $0x3e8] sm:$0xe]
  %v388 = vld [vmem:[%s18 + $0x3fc] sm:$0xe]
  %v389 = vld [vmem:[%s18 + $0x410] sm:$0xe]
  %v390 = vld [vmem:[%s18 + $0x424] sm:$0xe]
  %v391 = vld [vmem:[%s18 + $0x438] sm:$0xe]
  %v392 = vld [vmem:[%s18 + $0x44c] sm:$0xe]
  %v393 = vld [vmem:[%s18 + $0x460] sm:$0xe]
  %v394 = vld [vmem:[%s18 + $0x474] sm:$0xe]
  %v395 = vld [vmem:[%s18 + $0x488] sm:$0xe]
  %v396 = vld [vmem:[%s18 + $0x49c] sm:$0xe]
  %v397 = vld [vmem:[%s18 + $0x4b0] sm:$0xe]
  %v398 = vld [vmem:[%s18 + $0x4c4] sm:$0xe]
  %v399 = vld [vmem:[%s18 + $0x4d8] sm:$0xe]
  %v400 = vld [vmem:[%s18 + $0x4ec] sm:$0xe]
  %v401 = vld [vmem:[%s18 + $0x500] sm:$0xe]
  %v402 = vld [vmem:[%s18 + $0x514] sm:$0xe]
  %s403 = sadd.s32 %s15, 1
  %s404 = smul.u32 %s403, 5
  %s405 = smul.addr %s404, 4
  %s406 = scalar_lea.vmem %s0, %s405
  %v407 = vld [vmem:[%s406] sm:$0xf]
  %v408 = vld [vmem:[%s406 + $0x4] sm:$0xf]
  %v409 = vld [vmem:[%s406 + $0x8] sm:$0xf]
  %v410 = vld [vmem:[%s406 + $0xc] sm:$0xf]
  %v411 = vld [vmem:[%s406 + $0x14] sm:$0xf]
  %v412 = vld [vmem:[%s406 + $0x18] sm:$0xf]
  %v413 = vld [vmem:[%s406 + $0x1c] sm:$0xf]
  %v414 = vld [vmem:[%s406 + $0x20] sm:$0xf]
  %v415 = vld [vmem:[%s406 + $0x28] sm:$0xf]
  %v416 = vld [vmem:[%s406 + $0x2c] sm:$0xf]
  %v417 = vld [vmem:[%s406 + $0x30] sm:$0xf]
  %v418 = vld [vmem:[%s406 + $0x34] sm:$0xf]
  %v419 = vld [vmem:[%s406 + $0x3c] sm:$0xf]
  %v420 = vld [vmem:[%s406 + $0x40] sm:$0xf]
  %v421 = vld [vmem:[%s406 + $0x44] sm:$0xf]
  %v422 = vld [vmem:[%s406 + $0x48] sm:$0xf]
  %v423 = vld [vmem:[%s406 + $0x50] sm:$0xf]
  %v424 = vld [vmem:[%s406 + $0x54] sm:$0xf]
  %v425 = vld [vmem:[%s406 + $0x58] sm:$0xf]
  %v426 = vld [vmem:[%s406 + $0x5c] sm:$0xf]
  %v427 = vld [vmem:[%s406 + $0x64] sm:$0xf]
  %v428 = vld [vmem:[%s406 + $0x68] sm:$0xf]
  %v429 = vld [vmem:[%s406 + $0x6c] sm:$0xf]
  %v430 = vld [vmem:[%s406 + $0x70] sm:$0xf]
  %v431 = vld [vmem:[%s406 + $0x78] sm:$0xf]
  %v432 = vld [vmem:[%s406 + $0x7c] sm:$0xf]
  %v433 = vld [vmem:[%s406 + $0x80] sm:$0xf]
  %v434 = vld [vmem:[%s406 + $0x84] sm:$0xf]
  %v435 = vld [vmem:[%s406 + $0x8c] sm:$0xf]
  %v436 = vld [vmem:[%s406 + $0x90] sm:$0xf]
  %v437 = vld [vmem:[%s406 + $0x94] sm:$0xf]
  %v438 = vld [vmem:[%s406 + $0x98] sm:$0xf]
  %v439 = vld [vmem:[%s406 + $0xa0] sm:$0xf]
  %v440 = vld [vmem:[%s406 + $0xa4] sm:$0xf]
  %v441 = vld [vmem:[%s406 + $0xa8] sm:$0xf]
  %v442 = vld [vmem:[%s406 + $0xac] sm:$0xf]
  %v443 = vld [vmem:[%s406 + $0xb4] sm:$0xf]
  %v444 = vld [vmem:[%s406 + $0xb8] sm:$0xf]
  %v445 = vld [vmem:[%s406 + $0xbc] sm:$0xf]
  %v446 = vld [vmem:[%s406 + $0xc0] sm:$0xf]
  %v447 = vld [vmem:[%s406 + $0xc8] sm:$0xf]
  %v448 = vld [vmem:[%s406 + $0xcc] sm:$0xf]
  %v449 = vld [vmem:[%s406 + $0xd0] sm:$0xf]
  %v450 = vld [vmem:[%s406 + $0xd4] sm:$0xf]
  %v451 = vld [vmem:[%s406 + $0xdc] sm:$0xf]
  %v452 = vld [vmem:[%s406 + $0xe0] sm:$0xf]
  %v453 = vld [vmem:[%s406 + $0xe4] sm:$0xf]
  %v454 = vld [vmem:[%s406 + $0xe8] sm:$0xf]
  %v455 = vld [vmem:[%s406 + $0xf0] sm:$0xf]
  %v456 = vld [vmem:[%s406 + $0xf4] sm:$0xf]
  %v457 = vld [vmem:[%s406 + $0xf8] sm:$0xf]
  %v458 = vld [vmem:[%s406 + $0xfc] sm:$0xf]
  %v459 = vld [vmem:[%s406 + $0x104] sm:$0xf]
  %v460 = vld [vmem:[%s406 + $0x108] sm:$0xf]
  %v461 = vld [vmem:[%s406 + $0x10c] sm:$0xf]
  %v462 = vld [vmem:[%s406 + $0x110] sm:$0xf]
  %v463 = vld [vmem:[%s406 + $0x118] sm:$0xf]
  %v464 = vld [vmem:[%s406 + $0x11c] sm:$0xf]
  %v465 = vld [vmem:[%s406 + $0x120] sm:$0xf]
  %v466 = vld [vmem:[%s406 + $0x124] sm:$0xf]
  %v467 = vld [vmem:[%s406 + $0x12c] sm:$0xf]
  %v468 = vld [vmem:[%s406 + $0x130] sm:$0xf]
  %v469 = vld [vmem:[%s406 + $0x134] sm:$0xf]
  %v470 = vld [vmem:[%s406 + $0x138] sm:$0xf]
  %v471 = vld [vmem:[%s406 + $0x140] sm:$0xf]
  %v472 = vld [vmem:[%s406 + $0x144] sm:$0xf]
  %v473 = vld [vmem:[%s406 + $0x148] sm:$0xf]
  %v474 = vld [vmem:[%s406 + $0x14c] sm:$0xf]
  %v475 = vld [vmem:[%s406 + $0x154] sm:$0xf]
  %v476 = vld [vmem:[%s406 + $0x158] sm:$0xf]
  %v477 = vld [vmem:[%s406 + $0x15c] sm:$0xf]
  %v478 = vld [vmem:[%s406 + $0x160] sm:$0xf]
  %v479 = vld [vmem:[%s406 + $0x168] sm:$0xf]
  %v480 = vld [vmem:[%s406 + $0x16c] sm:$0xf]
  %v481 = vld [vmem:[%s406 + $0x170] sm:$0xf]
  %v482 = vld [vmem:[%s406 + $0x174] sm:$0xf]
  %v483 = vld [vmem:[%s406 + $0x17c] sm:$0xf]
  %v484 = vld [vmem:[%s406 + $0x180] sm:$0xf]
  %v485 = vld [vmem:[%s406 + $0x184] sm:$0xf]
  %v486 = vld [vmem:[%s406 + $0x188] sm:$0xf]
  %v487 = vld [vmem:[%s406 + $0x190] sm:$0xf]
  %v488 = vld [vmem:[%s406 + $0x194] sm:$0xf]
  %v489 = vld [vmem:[%s406 + $0x198] sm:$0xf]
  %v490 = vld [vmem:[%s406 + $0x19c] sm:$0xf]
  %v491 = vld [vmem:[%s406 + $0x1a4] sm:$0xf]
  %v492 = vld [vmem:[%s406 + $0x1a8] sm:$0xf]
  %v493 = vld [vmem:[%s406 + $0x1ac] sm:$0xf]
  %v494 = vld [vmem:[%s406 + $0x1b0] sm:$0xf]
  %v495 = vld [vmem:[%s406 + $0x1b8] sm:$0xf]
  %v496 = vld [vmem:[%s406 + $0x1bc] sm:$0xf]
  %v497 = vld [vmem:[%s406 + $0x1c0] sm:$0xf]
  %v498 = vld [vmem:[%s406 + $0x1c4] sm:$0xf]
  %v499 = vld [vmem:[%s406 + $0x1cc] sm:$0xf]
  %v500 = vld [vmem:[%s406 + $0x1d0] sm:$0xf]
  %v501 = vld [vmem:[%s406 + $0x1d4] sm:$0xf]
  %v502 = vld [vmem:[%s406 + $0x1d8] sm:$0xf]
  %v503 = vld [vmem:[%s406 + $0x1e0] sm:$0xf]
  %v504 = vld [vmem:[%s406 + $0x1e4] sm:$0xf]
  %v505 = vld [vmem:[%s406 + $0x1e8] sm:$0xf]
  %v506 = vld [vmem:[%s406 + $0x1ec] sm:$0xf]
  %v507 = vld [vmem:[%s406 + $0x1f4] sm:$0xf]
  %v508 = vld [vmem:[%s406 + $0x1f8] sm:$0xf]
  %v509 = vld [vmem:[%s406 + $0x1fc] sm:$0xf]
  %v510 = vld [vmem:[%s406 + $0x200] sm:$0xf]
  %v511 = vld [vmem:[%s406 + $0x208] sm:$0xf]
  %v512 = vld [vmem:[%s406 + $0x20c] sm:$0xf]
  %v513 = vld [vmem:[%s406 + $0x210] sm:$0xf]
  %v514 = vld [vmem:[%s406 + $0x214] sm:$0xf]
  %v515 = vld [vmem:[%s406 + $0x21c] sm:$0xf]
  %v516 = vld [vmem:[%s406 + $0x220] sm:$0xf]
  %v517 = vld [vmem:[%s406 + $0x224] sm:$0xf]
  %v518 = vld [vmem:[%s406 + $0x228] sm:$0xf]
  %v519 = vld [vmem:[%s406 + $0x230] sm:$0xf]
  %v520 = vld [vmem:[%s406 + $0x234] sm:$0xf]
  %v521 = vld [vmem:[%s406 + $0x238] sm:$0xf]
  %v522 = vld [vmem:[%s406 + $0x23c] sm:$0xf]
  %v523 = vld [vmem:[%s406 + $0x244] sm:$0xf]
  %v524 = vld [vmem:[%s406 + $0x248] sm:$0xf]
  %v525 = vld [vmem:[%s406 + $0x24c] sm:$0xf]
  %v526 = vld [vmem:[%s406 + $0x250] sm:$0xf]
  %v527 = vld [vmem:[%s406 + $0x258] sm:$0xf]
  %v528 = vld [vmem:[%s406 + $0x25c] sm:$0xf]
  %v529 = vld [vmem:[%s406 + $0x260] sm:$0xf]
  %v530 = vld [vmem:[%s406 + $0x264] sm:$0xf]
  %v531 = vld [vmem:[%s406 + $0x26c] sm:$0xf]
  %v532 = vld [vmem:[%s406 + $0x270] sm:$0xf]
  %v533 = vld [vmem:[%s406 + $0x274] sm:$0xf]
  %v534 = vld [vmem:[%s406 + $0x278] sm:$0xf]
  %v535 = vld [vmem:[%s406 + $0x2a8] sm:$0xf]
  %v536 = vld [vmem:[%s406 + $0x2ac] sm:$0xf]
  %v537 = vld [vmem:[%s406 + $0x2b0] sm:$0xf]
  %v538 = vld [vmem:[%s406 + $0x2b4] sm:$0xf]
  %v539 = vld [vmem:[%s406 + $0x2bc] sm:$0xf]
  %v540 = vld [vmem:[%s406 + $0x2c0] sm:$0xf]
  %v541 = vld [vmem:[%s406 + $0x2c4] sm:$0xf]
  %v542 = vld [vmem:[%s406 + $0x2c8] sm:$0xf]
  %v543 = vld [vmem:[%s406 + $0x2d0] sm:$0xf]
  %v544 = vld [vmem:[%s406 + $0x2d4] sm:$0xf]
  %v545 = vld [vmem:[%s406 + $0x2d8] sm:$0xf]
  %v546 = vld [vmem:[%s406 + $0x2dc] sm:$0xf]
  %v547 = vld [vmem:[%s406 + $0x2e4] sm:$0xf]
  %v548 = vld [vmem:[%s406 + $0x2e8] sm:$0xf]
  %v549 = vld [vmem:[%s406 + $0x2ec] sm:$0xf]
  %v550 = vld [vmem:[%s406 + $0x2f0] sm:$0xf]
  %v551 = vld [vmem:[%s406 + $0x2f8] sm:$0xf]
  %v552 = vld [vmem:[%s406 + $0x2fc] sm:$0xf]
  %v553 = vld [vmem:[%s406 + $0x300] sm:$0xf]
  %v554 = vld [vmem:[%s406 + $0x304] sm:$0xf]
  %v555 = vld [vmem:[%s406 + $0x30c] sm:$0xf]
  %v556 = vld [vmem:[%s406 + $0x310] sm:$0xf]
  %v557 = vld [vmem:[%s406 + $0x314] sm:$0xf]
  %v558 = vld [vmem:[%s406 + $0x318] sm:$0xf]
  %v559 = vld [vmem:[%s406 + $0x320] sm:$0xf]
  %v560 = vld [vmem:[%s406 + $0x324] sm:$0xf]
  %v561 = vld [vmem:[%s406 + $0x328] sm:$0xf]
  %v562 = vld [vmem:[%s406 + $0x32c] sm:$0xf]
  %v563 = vld [vmem:[%s406 + $0x334] sm:$0xf]
  %v564 = vld [vmem:[%s406 + $0x338] sm:$0xf]
  %v565 = vld [vmem:[%s406 + $0x33c] sm:$0xf]
  %v566 = vld [vmem:[%s406 + $0x340] sm:$0xf]
  %v567 = vld [vmem:[%s406 + $0x348] sm:$0xf]
  %v568 = vld [vmem:[%s406 + $0x34c] sm:$0xf]
  %v569 = vld [vmem:[%s406 + $0x350] sm:$0xf]
  %v570 = vld [vmem:[%s406 + $0x354] sm:$0xf]
  %v571 = vld [vmem:[%s406 + $0x35c] sm:$0xf]
  %v572 = vld [vmem:[%s406 + $0x360] sm:$0xf]
  %v573 = vld [vmem:[%s406 + $0x364] sm:$0xf]
  %v574 = vld [vmem:[%s406 + $0x368] sm:$0xf]
  %v575 = vld [vmem:[%s406 + $0x370] sm:$0xf]
  %v576 = vld [vmem:[%s406 + $0x374] sm:$0xf]
  %v577 = vld [vmem:[%s406 + $0x378] sm:$0xf]
  %v578 = vld [vmem:[%s406 + $0x37c] sm:$0xf]
  %v579 = vld [vmem:[%s406 + $0x384] sm:$0xf]
  %v580 = vld [vmem:[%s406 + $0x388] sm:$0xf]
  %v581 = vld [vmem:[%s406 + $0x38c] sm:$0xf]
  %v582 = vld [vmem:[%s406 + $0x390] sm:$0xf]
  %v583 = vld [vmem:[%s406 + $0x398] sm:$0xf]
  %v584 = vld [vmem:[%s406 + $0x39c] sm:$0xf]
  %v585 = vld [vmem:[%s406 + $0x3a0] sm:$0xf]
  %v586 = vld [vmem:[%s406 + $0x3a4] sm:$0xf]
  %v587 = vld [vmem:[%s406 + $0x3ac] sm:$0xf]
  %v588 = vld [vmem:[%s406 + $0x3b0] sm:$0xf]
  %v589 = vld [vmem:[%s406 + $0x3b4] sm:$0xf]
  %v590 = vld [vmem:[%s406 + $0x3b8] sm:$0xf]
  %v591 = vld [vmem:[%s406 + $0x3c0] sm:$0xf]
  %v592 = vld [vmem:[%s406 + $0x3c4] sm:$0xf]
  %v593 = vld [vmem:[%s406 + $0x3c8] sm:$0xf]
  %v594 = vld [vmem:[%s406 + $0x3cc] sm:$0xf]
  %v595 = vld [vmem:[%s406 + $0x3d4] sm:$0xf]
  %v596 = vld [vmem:[%s406 + $0x3d8] sm:$0xf]
  %v597 = vld [vmem:[%s406 + $0x3dc] sm:$0xf]
  %v598 = vld [vmem:[%s406 + $0x3e0] sm:$0xf]
  %v599 = vld [vmem:[%s406 + $0x3e8] sm:$0xf]
  %v600 = vld [vmem:[%s406 + $0x3ec] sm:$0xf]
  %v601 = vld [vmem:[%s406 + $0x3f0] sm:$0xf]
  %v602 = vld [vmem:[%s406 + $0x3f4] sm:$0xf]
  %v603 = vld [vmem:[%s406 + $0x3fc] sm:$0xf]
  %v604 = vld [vmem:[%s406 + $0x400] sm:$0xf]
  %v605 = vld [vmem:[%s406 + $0x404] sm:$0xf]
  %v606 = vld [vmem:[%s406 + $0x408] sm:$0xf]
  %v607 = vld [vmem:[%s406 + $0x410] sm:$0xf]
  %v608 = vld [vmem:[%s406 + $0x414] sm:$0xf]
  %v609 = vld [vmem:[%s406 + $0x418] sm:$0xf]
  %v610 = vld [vmem:[%s406 + $0x41c] sm:$0xf]
  %v611 = vld [vmem:[%s406 + $0x424] sm:$0xf]
  %v612 = vld [vmem:[%s406 + $0x428] sm:$0xf]
  %v613 = vld [vmem:[%s406 + $0x42c] sm:$0xf]
  %v614 = vld [vmem:[%s406 + $0x430] sm:$0xf]
  %v615 = vld [vmem:[%s406 + $0x438] sm:$0xf]
  %v616 = vld [vmem:[%s406 + $0x43c] sm:$0xf]
  %v617 = vld [vmem:[%s406 + $0x440] sm:$0xf]
  %v618 = vld [vmem:[%s406 + $0x444] sm:$0xf]
  %v619 = vld [vmem:[%s406 + $0x44c] sm:$0xf]
  %v620 = vld [vmem:[%s406 + $0x450] sm:$0xf]
  %v621 = vld [vmem:[%s406 + $0x454] sm:$0xf]
  %v622 = vld [vmem:[%s406 + $0x458] sm:$0xf]
  %v623 = vld [vmem:[%s406 + $0x460] sm:$0xf]
  %v624 = vld [vmem:[%s406 + $0x464] sm:$0xf]
  %v625 = vld [vmem:[%s406 + $0x468] sm:$0xf]
  %v626 = vld [vmem:[%s406 + $0x46c] sm:$0xf]
  %v627 = vld [vmem:[%s406 + $0x474] sm:$0xf]
  %v628 = vld [vmem:[%s406 + $0x478] sm:$0xf]
  %v629 = vld [vmem:[%s406 + $0x47c] sm:$0xf]
  %v630 = vld [vmem:[%s406 + $0x480] sm:$0xf]
  %v631 = vld [vmem:[%s406 + $0x488] sm:$0xf]
  %v632 = vld [vmem:[%s406 + $0x48c] sm:$0xf]
  %v633 = vld [vmem:[%s406 + $0x490] sm:$0xf]
  %v634 = vld [vmem:[%s406 + $0x494] sm:$0xf]
  %v635 = vld [vmem:[%s406 + $0x49c] sm:$0xf]
  %v636 = vld [vmem:[%s406 + $0x4a0] sm:$0xf]
  %v637 = vld [vmem:[%s406 + $0x4a4] sm:$0xf]
  %v638 = vld [vmem:[%s406 + $0x4a8] sm:$0xf]
  %v639 = vld [vmem:[%s406 + $0x4b0] sm:$0xf]
  %v640 = vld [vmem:[%s406 + $0x4b4] sm:$0xf]
  %v641 = vld [vmem:[%s406 + $0x4b8] sm:$0xf]
  %v642 = vld [vmem:[%s406 + $0x4bc] sm:$0xf]
  %v643 = vld [vmem:[%s406 + $0x4c4] sm:$0xf]
  %v644 = vld [vmem:[%s406 + $0x4c8] sm:$0xf]
  %v645 = vld [vmem:[%s406 + $0x4cc] sm:$0xf]
  %v646 = vld [vmem:[%s406 + $0x4d0] sm:$0xf]
  %v647 = vld [vmem:[%s406 + $0x4d8] sm:$0xf]
  %v648 = vld [vmem:[%s406 + $0x4dc] sm:$0xf]
  %v649 = vld [vmem:[%s406 + $0x4e0] sm:$0xf]
  %v650 = vld [vmem:[%s406 + $0x4e4] sm:$0xf]
  %v651 = vld [vmem:[%s406 + $0x4ec] sm:$0xf]
  %v652 = vld [vmem:[%s406 + $0x4f0] sm:$0xf]
  %v653 = vld [vmem:[%s406 + $0x4f4] sm:$0xf]
  %v654 = vld [vmem:[%s406 + $0x4f8] sm:$0xf]
  %v655 = vld [vmem:[%s406 + $0x500] sm:$0xf]
  %v656 = vld [vmem:[%s406 + $0x504] sm:$0xf]
  %v657 = vld [vmem:[%s406 + $0x508] sm:$0xf]
  %v658 = vld [vmem:[%s406 + $0x50c] sm:$0xf]
  %v659 = vld [vmem:[%s406 + $0x514] sm:$0xf]
  %v660 = vld [vmem:[%s406 + $0x518] sm:$0xf]
  %v661 = vld [vmem:[%s406 + $0x51c] sm:$0xf]
  %v662 = vld [vmem:[%s406 + $0x520] sm:$0xf]
  %v663 = vld [vmem:[%s406 + $0x10] sm:$0x1]
  %v664 = vld [vmem:[%s406 + $0x24] sm:$0x1]
  %v665 = vld [vmem:[%s406 + $0x38] sm:$0x1]
  %v666 = vld [vmem:[%s406 + $0x4c] sm:$0x1]
  %v667 = vld [vmem:[%s406 + $0x60] sm:$0x1]
  %v668 = vld [vmem:[%s406 + $0x74] sm:$0x1]
  %v669 = vld [vmem:[%s406 + $0x88] sm:$0x1]
  %v670 = vld [vmem:[%s406 + $0x9c] sm:$0x1]
  %v671 = vld [vmem:[%s406 + $0xb0] sm:$0x1]
  %v672 = vld [vmem:[%s406 + $0xc4] sm:$0x1]
  %v673 = vld [vmem:[%s406 + $0xd8] sm:$0x1]
  %v674 = vld [vmem:[%s406 + $0xec] sm:$0x1]
  %v675 = vld [vmem:[%s406 + $0x100] sm:$0x1]
  %v676 = vld [vmem:[%s406 + $0x114] sm:$0x1]
  %v677 = vld [vmem:[%s406 + $0x128] sm:$0x1]
  %v678 = vld [vmem:[%s406 + $0x13c] sm:$0x1]
  %v679 = vld [vmem:[%s406 + $0x150] sm:$0x1]
  %v680 = vld [vmem:[%s406 + $0x164] sm:$0x1]
  %v681 = vld [vmem:[%s406 + $0x178] sm:$0x1]
  %v682 = vld [vmem:[%s406 + $0x18c] sm:$0x1]
  %v683 = vld [vmem:[%s406 + $0x1a0] sm:$0x1]
  %v684 = vld [vmem:[%s406 + $0x1b4] sm:$0x1]
  %v685 = vld [vmem:[%s406 + $0x1c8] sm:$0x1]
  %v686 = vld [vmem:[%s406 + $0x1dc] sm:$0x1]
  %v687 = vld [vmem:[%s406 + $0x1f0] sm:$0x1]
  %v688 = vld [vmem:[%s406 + $0x204] sm:$0x1]
  %v689 = vld [vmem:[%s406 + $0x218] sm:$0x1]
  %v690 = vld [vmem:[%s406 + $0x22c] sm:$0x1]
  %v691 = vld [vmem:[%s406 + $0x240] sm:$0x1]
  %v692 = vld [vmem:[%s406 + $0x254] sm:$0x1]
  %v693 = vld [vmem:[%s406 + $0x268] sm:$0x1]
  %v694 = vld [vmem:[%s406 + $0x27c] sm:$0x1]
  %v695 = vld [vmem:[%s406 + $0x2b8] sm:$0x1]
  %v696 = vld [vmem:[%s406 + $0x2cc] sm:$0x1]
  %v697 = vld [vmem:[%s406 + $0x2e0] sm:$0x1]
  %v698 = vld [vmem:[%s406 + $0x2f4] sm:$0x1]
  %v699 = vld [vmem:[%s406 + $0x308] sm:$0x1]
  %v700 = vld [vmem:[%s406 + $0x31c] sm:$0x1]
  %v701 = vld [vmem:[%s406 + $0x330] sm:$0x1]
  %v702 = vld [vmem:[%s406 + $0x344] sm:$0x1]
  %v703 = vld [vmem:[%s406 + $0x358] sm:$0x1]
  %v704 = vld [vmem:[%s406 + $0x36c] sm:$0x1]
  %v705 = vld [vmem:[%s406 + $0x380] sm:$0x1]
  %v706 = vld [vmem:[%s406 + $0x394] sm:$0x1]
  %v707 = vld [vmem:[%s406 + $0x3a8] sm:$0x1]
  %v708 = vld [vmem:[%s406 + $0x3bc] sm:$0x1]
  %v709 = vld [vmem:[%s406 + $0x3d0] sm:$0x1]
  %v710 = vld [vmem:[%s406 + $0x3e4] sm:$0x1]
  %v711 = vld [vmem:[%s406 + $0x3f8] sm:$0x1]
  %v712 = vld [vmem:[%s406 + $0x40c] sm:$0x1]
  %v713 = vld [vmem:[%s406 + $0x420] sm:$0x1]
  %v714 = vld [vmem:[%s406 + $0x434] sm:$0x1]
  %v715 = vld [vmem:[%s406 + $0x448] sm:$0x1]
  %v716 = vld [vmem:[%s406 + $0x45c] sm:$0x1]
  %v717 = vld [vmem:[%s406 + $0x470] sm:$0x1]
  %v718 = vld [vmem:[%s406 + $0x484] sm:$0x1]
  %v719 = vld [vmem:[%s406 + $0x498] sm:$0x1]
  %v720 = vld [vmem:[%s406 + $0x4ac] sm:$0x1]
  %v721 = vld [vmem:[%s406 + $0x4c0] sm:$0x1]
  %v722 = vld [vmem:[%s406 + $0x4d4] sm:$0x1]
  %v723 = vld [vmem:[%s406 + $0x4e8] sm:$0x1]
  %v724 = vld [vmem:[%s406 + $0x4fc] sm:$0x1]
  %v725 = vld [vmem:[%s406 + $0x510] sm:$0x1]
  %v726 = vld [vmem:[%s406 + $0x524] sm:$0x1]
  %v727 = vld [vmem:[%s406] sm:$0xe]
  %v728 = vld [vmem:[%s406 + $0x14] sm:$0xe]
  %v729 = vld [vmem:[%s406 + $0x28] sm:$0xe]
  %v730 = vld [vmem:[%s406 + $0x3c] sm:$0xe]
  %v731 = vld [vmem:[%s406 + $0x50] sm:$0xe]
  %v732 = vld [vmem:[%s406 + $0x64] sm:$0xe]
  %v733 = vld [vmem:[%s406 + $0x78] sm:$0xe]
  %v734 = vld [vmem:[%s406 + $0x8c] sm:$0xe]
  %v735 = vld [vmem:[%s406 + $0xa0] sm:$0xe]
  %v736 = vld [vmem:[%s406 + $0xb4] sm:$0xe]
  %v737 = vld [vmem:[%s406 + $0xc8] sm:$0xe]
  %v738 = vld [vmem:[%s406 + $0xdc] sm:$0xe]
  %v739 = vld [vmem:[%s406 + $0xf0] sm:$0xe]
  %v740 = vld [vmem:[%s406 + $0x104] sm:$0xe]
  %v741 = vld [vmem:[%s406 + $0x118] sm:$0xe]
  %v742 = vld [vmem:[%s406 + $0x12c] sm:$0xe]
  %v743 = vld [vmem:[%s406 + $0x140] sm:$0xe]
  %v744 = vld [vmem:[%s406 + $0x154] sm:$0xe]
  %v745 = vld [vmem:[%s406 + $0x168] sm:$0xe]
  %v746 = vld [vmem:[%s406 + $0x17c] sm:$0xe]
  %v747 = vld [vmem:[%s406 + $0x190] sm:$0xe]
  %v748 = vld [vmem:[%s406 + $0x1a4] sm:$0xe]
  %v749 = vld [vmem:[%s406 + $0x1b8] sm:$0xe]
  %v750 = vld [vmem:[%s406 + $0x1cc] sm:$0xe]
  %v751 = vld [vmem:[%s406 + $0x1e0] sm:$0xe]
  %v752 = vld [vmem:[%s406 + $0x1f4] sm:$0xe]
  %v753 = vld [vmem:[%s406 + $0x208] sm:$0xe]
  %v754 = vld [vmem:[%s406 + $0x21c] sm:$0xe]
  %v755 = vld [vmem:[%s406 + $0x230] sm:$0xe]
  %v756 = vld [vmem:[%s406 + $0x244] sm:$0xe]
  %v757 = vld [vmem:[%s406 + $0x258] sm:$0xe]
  %v758 = vld [vmem:[%s406 + $0x26c] sm:$0xe]
  %v759 = vld [vmem:[%s406 + $0x2a8] sm:$0xe]
  %v760 = vld [vmem:[%s406 + $0x2bc] sm:$0xe]
  %v761 = vld [vmem:[%s406 + $0x2d0] sm:$0xe]
  %v762 = vld [vmem:[%s406 + $0x2e4] sm:$0xe]
  %v763 = vld [vmem:[%s406 + $0x2f8] sm:$0xe]
  %v764 = vld [vmem:[%s406 + $0x30c] sm:$0xe]
  %v765 = vld [vmem:[%s406 + $0x320] sm:$0xe]
  %v766 = vld [vmem:[%s406 + $0x334] sm:$0xe]
  %v767 = vld [vmem:[%s406 + $0x348] sm:$0xe]
  %v768 = vld [vmem:[%s406 + $0x35c] sm:$0xe]
  %v769 = vld [vmem:[%s406 + $0x370] sm:$0xe]
  %v770 = vld [vmem:[%s406 + $0x384] sm:$0xe]
  %v771 = vld [vmem:[%s406 + $0x398] sm:$0xe]
  %v772 = vld [vmem:[%s406 + $0x3ac] sm:$0xe]
  %v773 = vld [vmem:[%s406 + $0x3c0] sm:$0xe]
  %v774 = vld [vmem:[%s406 + $0x3d4] sm:$0xe]
  %v775 = vld [vmem:[%s406 + $0x3e8] sm:$0xe]
  %v776 = vld [vmem:[%s406 + $0x3fc] sm:$0xe]
  %v777 = vld [vmem:[%s406 + $0x410] sm:$0xe]
  %v778 = vld [vmem:[%s406 + $0x424] sm:$0xe]
  %v779 = vld [vmem:[%s406 + $0x438] sm:$0xe]
  %v780 = vld [vmem:[%s406 + $0x44c] sm:$0xe]
  %v781 = vld [vmem:[%s406 + $0x460] sm:$0xe]
  %v782 = vld [vmem:[%s406 + $0x474] sm:$0xe]
  %v783 = vld [vmem:[%s406 + $0x488] sm:$0xe]
  %v784 = vld [vmem:[%s406 + $0x49c] sm:$0xe]
  %v785 = vld [vmem:[%s406 + $0x4b0] sm:$0xe]
  %v786 = vld [vmem:[%s406 + $0x4c4] sm:$0xe]
  %v787 = vld [vmem:[%s406 + $0x4d8] sm:$0xe]
  %v788 = vld [vmem:[%s406 + $0x4ec] sm:$0xe]
  %v789 = vld [vmem:[%s406 + $0x500] sm:$0xe]
  %v790 = vld [vmem:[%s406 + $0x514] sm:$0xe]
  %s791 = sadd.s32 %s15, 2
  %s792 = smul.u32 %s791, 5
  %s793 = smul.addr %s792, 4
  %s794 = scalar_lea.vmem %s0, %s793
  %v795 = vld [vmem:[%s794] sm:$0xf]
  %v796 = vld [vmem:[%s794 + $0x4] sm:$0xf]
  %v797 = vld [vmem:[%s794 + $0x8] sm:$0xf]
  %v798 = vld [vmem:[%s794 + $0xc] sm:$0xf]
  %v799 = vld [vmem:[%s794 + $0x14] sm:$0xf]
  %v800 = vld [vmem:[%s794 + $0x18] sm:$0xf]
  %v801 = vld [vmem:[%s794 + $0x1c] sm:$0xf]
  %v802 = vld [vmem:[%s794 + $0x20] sm:$0xf]
  %v803 = vld [vmem:[%s794 + $0x28] sm:$0xf]
  %v804 = vld [vmem:[%s794 + $0x2c] sm:$0xf]
  %v805 = vld [vmem:[%s794 + $0x30] sm:$0xf]
  %v806 = vld [vmem:[%s794 + $0x34] sm:$0xf]
  %v807 = vld [vmem:[%s794 + $0x3c] sm:$0xf]
  %v808 = vld [vmem:[%s794 + $0x40] sm:$0xf]
  %v809 = vld [vmem:[%s794 + $0x44] sm:$0xf]
  %v810 = vld [vmem:[%s794 + $0x48] sm:$0xf]
  %v811 = vld [vmem:[%s794 + $0x50] sm:$0xf]
  %v812 = vld [vmem:[%s794 + $0x54] sm:$0xf]
  %v813 = vld [vmem:[%s794 + $0x58] sm:$0xf]
  %v814 = vld [vmem:[%s794 + $0x5c] sm:$0xf]
  %v815 = vld [vmem:[%s794 + $0x64] sm:$0xf]
  %v816 = vld [vmem:[%s794 + $0x68] sm:$0xf]
  %v817 = vld [vmem:[%s794 + $0x6c] sm:$0xf]
  %v818 = vld [vmem:[%s794 + $0x70] sm:$0xf]
  %v819 = vld [vmem:[%s794 + $0x78] sm:$0xf]
  %v820 = vld [vmem:[%s794 + $0x7c] sm:$0xf]
  %v821 = vld [vmem:[%s794 + $0x80] sm:$0xf]
  %v822 = vld [vmem:[%s794 + $0x84] sm:$0xf]
  %v823 = vld [vmem:[%s794 + $0x8c] sm:$0xf]
  %v824 = vld [vmem:[%s794 + $0x90] sm:$0xf]
  %v825 = vld [vmem:[%s794 + $0x94] sm:$0xf]
  %v826 = vld [vmem:[%s794 + $0x98] sm:$0xf]
  %v827 = vld [vmem:[%s794 + $0xa0] sm:$0xf]
  %v828 = vld [vmem:[%s794 + $0xa4] sm:$0xf]
  %v829 = vld [vmem:[%s794 + $0xa8] sm:$0xf]
  %v830 = vld [vmem:[%s794 + $0xac] sm:$0xf]
  %v831 = vld [vmem:[%s794 + $0xb4] sm:$0xf]
  %v832 = vld [vmem:[%s794 + $0xb8] sm:$0xf]
  %v833 = vld [vmem:[%s794 + $0xbc] sm:$0xf]
  %v834 = vld [vmem:[%s794 + $0xc0] sm:$0xf]
  %v835 = vld [vmem:[%s794 + $0xc8] sm:$0xf]
  %v836 = vld [vmem:[%s794 + $0xcc] sm:$0xf]
  %v837 = vld [vmem:[%s794 + $0xd0] sm:$0xf]
  %v838 = vld [vmem:[%s794 + $0xd4] sm:$0xf]
  %v839 = vld [vmem:[%s794 + $0xdc] sm:$0xf]
  %v840 = vld [vmem:[%s794 + $0xe0] sm:$0xf]
  %v841 = vld [vmem:[%s794 + $0xe4] sm:$0xf]
  %v842 = vld [vmem:[%s794 + $0xe8] sm:$0xf]
  %v843 = vld [vmem:[%s794 + $0xf0] sm:$0xf]
  %v844 = vld [vmem:[%s794 + $0xf4] sm:$0xf]
  %v845 = vld [vmem:[%s794 + $0xf8] sm:$0xf]
  %v846 = vld [vmem:[%s794 + $0xfc] sm:$0xf]
  %v847 = vld [vmem:[%s794 + $0x104] sm:$0xf]
  %v848 = vld [vmem:[%s794 + $0x108] sm:$0xf]
  %v849 = vld [vmem:[%s794 + $0x10c] sm:$0xf]
  %v850 = vld [vmem:[%s794 + $0x110] sm:$0xf]
  %v851 = vld [vmem:[%s794 + $0x118] sm:$0xf]
  %v852 = vld [vmem:[%s794 + $0x11c] sm:$0xf]
  %v853 = vld [vmem:[%s794 + $0x120] sm:$0xf]
  %v854 = vld [vmem:[%s794 + $0x124] sm:$0xf]
  %v855 = vld [vmem:[%s794 + $0x12c] sm:$0xf]
  %v856 = vld [vmem:[%s794 + $0x130] sm:$0xf]
  %v857 = vld [vmem:[%s794 + $0x134] sm:$0xf]
  %v858 = vld [vmem:[%s794 + $0x138] sm:$0xf]
  %v859 = vld [vmem:[%s794 + $0x140] sm:$0xf]
  %v860 = vld [vmem:[%s794 + $0x144] sm:$0xf]
  %v861 = vld [vmem:[%s794 + $0x148] sm:$0xf]
  %v862 = vld [vmem:[%s794 + $0x14c] sm:$0xf]
  %v863 = vld [vmem:[%s794 + $0x154] sm:$0xf]
  %v864 = vld [vmem:[%s794 + $0x158] sm:$0xf]
  %v865 = vld [vmem:[%s794 + $0x15c] sm:$0xf]
  %v866 = vld [vmem:[%s794 + $0x160] sm:$0xf]
  %v867 = vld [vmem:[%s794 + $0x168] sm:$0xf]
  %v868 = vld [vmem:[%s794 + $0x16c] sm:$0xf]
  %v869 = vld [vmem:[%s794 + $0x170] sm:$0xf]
  %v870 = vld [vmem:[%s794 + $0x174] sm:$0xf]
  %v871 = vld [vmem:[%s794 + $0x17c] sm:$0xf]
  %v872 = vld [vmem:[%s794 + $0x180] sm:$0xf]
  %v873 = vld [vmem:[%s794 + $0x184] sm:$0xf]
  %v874 = vld [vmem:[%s794 + $0x188] sm:$0xf]
  %v875 = vld [vmem:[%s794 + $0x190] sm:$0xf]
  %v876 = vld [vmem:[%s794 + $0x194] sm:$0xf]
  %v877 = vld [vmem:[%s794 + $0x198] sm:$0xf]
  %v878 = vld [vmem:[%s794 + $0x19c] sm:$0xf]
  %v879 = vld [vmem:[%s794 + $0x1a4] sm:$0xf]
  %v880 = vld [vmem:[%s794 + $0x1a8] sm:$0xf]
  %v881 = vld [vmem:[%s794 + $0x1ac] sm:$0xf]
  %v882 = vld [vmem:[%s794 + $0x1b0] sm:$0xf]
  %v883 = vld [vmem:[%s794 + $0x1b8] sm:$0xf]
  %v884 = vld [vmem:[%s794 + $0x1bc] sm:$0xf]
  %v885 = vld [vmem:[%s794 + $0x1c0] sm:$0xf]
  %v886 = vld [vmem:[%s794 + $0x1c4] sm:$0xf]
  %v887 = vld [vmem:[%s794 + $0x1cc] sm:$0xf]
  %v888 = vld [vmem:[%s794 + $0x1d0] sm:$0xf]
  %v889 = vld [vmem:[%s794 + $0x1d4] sm:$0xf]
  %v890 = vld [vmem:[%s794 + $0x1d8] sm:$0xf]
  %v891 = vld [vmem:[%s794 + $0x1e0] sm:$0xf]
  %v892 = vld [vmem:[%s794 + $0x1e4] sm:$0xf]
  %v893 = vld [vmem:[%s794 + $0x1e8] sm:$0xf]
  %v894 = vld [vmem:[%s794 + $0x1ec] sm:$0xf]
  %v895 = vld [vmem:[%s794 + $0x1f4] sm:$0xf]
  %v896 = vld [vmem:[%s794 + $0x1f8] sm:$0xf]
  %v897 = vld [vmem:[%s794 + $0x1fc] sm:$0xf]
  %v898 = vld [vmem:[%s794 + $0x200] sm:$0xf]
  %v899 = vld [vmem:[%s794 + $0x208] sm:$0xf]
  %v900 = vld [vmem:[%s794 + $0x20c] sm:$0xf]
  %v901 = vld [vmem:[%s794 + $0x210] sm:$0xf]
  %v902 = vld [vmem:[%s794 + $0x214] sm:$0xf]
  %v903 = vld [vmem:[%s794 + $0x21c] sm:$0xf]
  %v904 = vld [vmem:[%s794 + $0x220] sm:$0xf]
  %v905 = vld [vmem:[%s794 + $0x224] sm:$0xf]
  %v906 = vld [vmem:[%s794 + $0x228] sm:$0xf]
  %v907 = vld [vmem:[%s794 + $0x230] sm:$0xf]
  %v908 = vld [vmem:[%s794 + $0x234] sm:$0xf]
  %v909 = vld [vmem:[%s794 + $0x238] sm:$0xf]
  %v910 = vld [vmem:[%s794 + $0x23c] sm:$0xf]
  %v911 = vld [vmem:[%s794 + $0x244] sm:$0xf]
  %v912 = vld [vmem:[%s794 + $0x248] sm:$0xf]
  %v913 = vld [vmem:[%s794 + $0x24c] sm:$0xf]
  %v914 = vld [vmem:[%s794 + $0x250] sm:$0xf]
  %v915 = vld [vmem:[%s794 + $0x258] sm:$0xf]
  %v916 = vld [vmem:[%s794 + $0x25c] sm:$0xf]
  %v917 = vld [vmem:[%s794 + $0x260] sm:$0xf]
  %v918 = vld [vmem:[%s794 + $0x264] sm:$0xf]
  %v919 = vld [vmem:[%s794 + $0x26c] sm:$0xf]
  %v920 = vld [vmem:[%s794 + $0x270] sm:$0xf]
  %v921 = vld [vmem:[%s794 + $0x274] sm:$0xf]
  %v922 = vld [vmem:[%s794 + $0x278] sm:$0xf]
  %v923 = vld [vmem:[%s794 + $0x2a8] sm:$0xf]
  %v924 = vld [vmem:[%s794 + $0x2ac] sm:$0xf]
  %v925 = vld [vmem:[%s794 + $0x2b0] sm:$0xf]
  %v926 = vld [vmem:[%s794 + $0x2b4] sm:$0xf]
  %v927 = vld [vmem:[%s794 + $0x2bc] sm:$0xf]
  %v928 = vld [vmem:[%s794 + $0x2c0] sm:$0xf]
  %v929 = vld [vmem:[%s794 + $0x2c4] sm:$0xf]
  %v930 = vld [vmem:[%s794 + $0x2c8] sm:$0xf]
  %v931 = vld [vmem:[%s794 + $0x2d0] sm:$0xf]
  %v932 = vld [vmem:[%s794 + $0x2d4] sm:$0xf]
  %v933 = vld [vmem:[%s794 + $0x2d8] sm:$0xf]
  %v934 = vld [vmem:[%s794 + $0x2dc] sm:$0xf]
  %v935 = vld [vmem:[%s794 + $0x2e4] sm:$0xf]
  %v936 = vld [vmem:[%s794 + $0x2e8] sm:$0xf]
  %v937 = vld [vmem:[%s794 + $0x2ec] sm:$0xf]
  %v938 = vld [vmem:[%s794 + $0x2f0] sm:$0xf]
  %v939 = vld [vmem:[%s794 + $0x2f8] sm:$0xf]
  %v940 = vld [vmem:[%s794 + $0x2fc] sm:$0xf]
  %v941 = vld [vmem:[%s794 + $0x300] sm:$0xf]
  %v942 = vld [vmem:[%s794 + $0x304] sm:$0xf]
  %v943 = vld [vmem:[%s794 + $0x30c] sm:$0xf]
  %v944 = vld [vmem:[%s794 + $0x310] sm:$0xf]
  %v945 = vld [vmem:[%s794 + $0x314] sm:$0xf]
  %v946 = vld [vmem:[%s794 + $0x318] sm:$0xf]
  %v947 = vld [vmem:[%s794 + $0x320] sm:$0xf]
  %v948 = vld [vmem:[%s794 + $0x324] sm:$0xf]
  %v949 = vld [vmem:[%s794 + $0x328] sm:$0xf]
  %v950 = vld [vmem:[%s794 + $0x32c] sm:$0xf]
  %v951 = vld [vmem:[%s794 + $0x334] sm:$0xf]
  %v952 = vld [vmem:[%s794 + $0x338] sm:$0xf]
  %v953 = vld [vmem:[%s794 + $0x33c] sm:$0xf]
  %v954 = vld [vmem:[%s794 + $0x340] sm:$0xf]
  %v955 = vld [vmem:[%s794 + $0x348] sm:$0xf]
  %v956 = vld [vmem:[%s794 + $0x34c] sm:$0xf]
  %v957 = vld [vmem:[%s794 + $0x350] sm:$0xf]
  %v958 = vld [vmem:[%s794 + $0x354] sm:$0xf]
  %v959 = vld [vmem:[%s794 + $0x35c] sm:$0xf]
  %v960 = vld [vmem:[%s794 + $0x360] sm:$0xf]
  %v961 = vld [vmem:[%s794 + $0x364] sm:$0xf]
  %v962 = vld [vmem:[%s794 + $0x368] sm:$0xf]
  %v963 = vld [vmem:[%s794 + $0x370] sm:$0xf]
  %v964 = vld [vmem:[%s794 + $0x374] sm:$0xf]
  %v965 = vld [vmem:[%s794 + $0x378] sm:$0xf]
  %v966 = vld [vmem:[%s794 + $0x37c] sm:$0xf]
  %v967 = vld [vmem:[%s794 + $0x384] sm:$0xf]
  %v968 = vld [vmem:[%s794 + $0x388] sm:$0xf]
  %v969 = vld [vmem:[%s794 + $0x38c] sm:$0xf]
  %v970 = vld [vmem:[%s794 + $0x390] sm:$0xf]
  %v971 = vld [vmem:[%s794 + $0x398] sm:$0xf]
  %v972 = vld [vmem:[%s794 + $0x39c] sm:$0xf]
  %v973 = vld [vmem:[%s794 + $0x3a0] sm:$0xf]
  %v974 = vld [vmem:[%s794 + $0x3a4] sm:$0xf]
  %v975 = vld [vmem:[%s794 + $0x3ac] sm:$0xf]
  %v976 = vld [vmem:[%s794 + $0x3b0] sm:$0xf]
  %v977 = vld [vmem:[%s794 + $0x3b4] sm:$0xf]
  %v978 = vld [vmem:[%s794 + $0x3b8] sm:$0xf]
  %v979 = vld [vmem:[%s794 + $0x3c0] sm:$0xf]
  %v980 = vld [vmem:[%s794 + $0x3c4] sm:$0xf]
  %v981 = vld [vmem:[%s794 + $0x3c8] sm:$0xf]
  %v982 = vld [vmem:[%s794 + $0x3cc] sm:$0xf]
  %v983 = vld [vmem:[%s794 + $0x3d4] sm:$0xf]
  %v984 = vld [vmem:[%s794 + $0x3d8] sm:$0xf]
  %v985 = vld [vmem:[%s794 + $0x3dc] sm:$0xf]
  %v986 = vld [vmem:[%s794 + $0x3e0] sm:$0xf]
  %v987 = vld [vmem:[%s794 + $0x3e8] sm:$0xf]
  %v988 = vld [vmem:[%s794 + $0x3ec] sm:$0xf]
  %v989 = vld [vmem:[%s794 + $0x3f0] sm:$0xf]
  %v990 = vld [vmem:[%s794 + $0x3f4] sm:$0xf]
  %v991 = vld [vmem:[%s794 + $0x3fc] sm:$0xf]
  %v992 = vld [vmem:[%s794 + $0x400] sm:$0xf]
  %v993 = vld [vmem:[%s794 + $0x404] sm:$0xf]
  %v994 = vld [vmem:[%s794 + $0x408] sm:$0xf]
  %v995 = vld [vmem:[%s794 + $0x410] sm:$0xf]
  %v996 = vld [vmem:[%s794 + $0x414] sm:$0xf]
  %v997 = vld [vmem:[%s794 + $0x418] sm:$0xf]
  %v998 = vld [vmem:[%s794 + $0x41c] sm:$0xf]
  %v999 = vld [vmem:[%s794 + $0x424] sm:$0xf]
  %v1000 = vld [vmem:[%s794 + $0x428] sm:$0xf]
  %v1001 = vld [vmem:[%s794 + $0x42c] sm:$0xf]
  %v1002 = vld [vmem:[%s794 + $0x430] sm:$0xf]
  %v1003 = vld [vmem:[%s794 + $0x438] sm:$0xf]
  %v1004 = vld [vmem:[%s794 + $0x43c] sm:$0xf]
  %v1005 = vld [vmem:[%s794 + $0x440] sm:$0xf]
  %v1006 = vld [vmem:[%s794 + $0x444] sm:$0xf]
  %v1007 = vld [vmem:[%s794 + $0x44c] sm:$0xf]
  %v1008 = vld [vmem:[%s794 + $0x450] sm:$0xf]
  %v1009 = vld [vmem:[%s794 + $0x454] sm:$0xf]
  %v1010 = vld [vmem:[%s794 + $0x458] sm:$0xf]
  %v1011 = vld [vmem:[%s794 + $0x460] sm:$0xf]
  %v1012 = vld [vmem:[%s794 + $0x464] sm:$0xf]
  %v1013 = vld [vmem:[%s794 + $0x468] sm:$0xf]
  %v1014 = vld [vmem:[%s794 + $0x46c] sm:$0xf]
  %v1015 = vld [vmem:[%s794 + $0x474] sm:$0xf]
  %v1016 = vld [vmem:[%s794 + $0x478] sm:$0xf]
  %v1017 = vld [vmem:[%s794 + $0x47c] sm:$0xf]
  %v1018 = vld [vmem:[%s794 + $0x480] sm:$0xf]
  %v1019 = vld [vmem:[%s794 + $0x488] sm:$0xf]
  %v1020 = vld [vmem:[%s794 + $0x48c] sm:$0xf]
  %v1021 = vld [vmem:[%s794 + $0x490] sm:$0xf]
  %v1022 = vld [vmem:[%s794 + $0x494] sm:$0xf]
  %v1023 = vld [vmem:[%s794 + $0x49c] sm:$0xf]
  %v1024 = vld [vmem:[%s794 + $0x4a0] sm:$0xf]
  %v1025 = vld [vmem:[%s794 + $0x4a4] sm:$0xf]
  %v1026 = vld [vmem:[%s794 + $0x4a8] sm:$0xf]
  %v1027 = vld [vmem:[%s794 + $0x4b0] sm:$0xf]
  %v1028 = vld [vmem:[%s794 + $0x4b4] sm:$0xf]
  %v1029 = vld [vmem:[%s794 + $0x4b8] sm:$0xf]
  %v1030 = vld [vmem:[%s794 + $0x4bc] sm:$0xf]
  %v1031 = vld [vmem:[%s794 + $0x4c4] sm:$0xf]
  %v1032 = vld [vmem:[%s794 + $0x4c8] sm:$0xf]
  %v1033 = vld [vmem:[%s794 + $0x4cc] sm:$0xf]
  %v1034 = vld [vmem:[%s794 + $0x4d0] sm:$0xf]
  %v1035 = vld [vmem:[%s794 + $0x4d8] sm:$0xf]
  %v1036 = vld [vmem:[%s794 + $0x4dc] sm:$0xf]
  %v1037 = vld [vmem:[%s794 + $0x4e0] sm:$0xf]
  %v1038 = vld [vmem:[%s794 + $0x4e4] sm:$0xf]
  %v1039 = vld [vmem:[%s794 + $0x4ec] sm:$0xf]
  %v1040 = vld [vmem:[%s794 + $0x4f0] sm:$0xf]
  %v1041 = vld [vmem:[%s794 + $0x4f4] sm:$0xf]
  %v1042 = vld [vmem:[%s794 + $0x4f8] sm:$0xf]
  %v1043 = vld [vmem:[%s794 + $0x500] sm:$0xf]
  %v1044 = vld [vmem:[%s794 + $0x504] sm:$0xf]
  %v1045 = vld [vmem:[%s794 + $0x508] sm:$0xf]
  %v1046 = vld [vmem:[%s794 + $0x50c] sm:$0xf]
  %v1047 = vld [vmem:[%s794 + $0x514] sm:$0xf]
  %v1048 = vld [vmem:[%s794 + $0x518] sm:$0xf]
  %v1049 = vld [vmem:[%s794 + $0x51c] sm:$0xf]
  %v1050 = vld [vmem:[%s794 + $0x520] sm:$0xf]
  %v1051 = vld [vmem:[%s794 + $0x10] sm:$0x1]
  %v1052 = vld [vmem:[%s794 + $0x24] sm:$0x1]
  %v1053 = vld [vmem:[%s794 + $0x38] sm:$0x1]
  %v1054 = vld [vmem:[%s794 + $0x4c] sm:$0x1]
  %v1055 = vld [vmem:[%s794 + $0x60] sm:$0x1]
  %v1056 = vld [vmem:[%s794 + $0x74] sm:$0x1]
  %v1057 = vld [vmem:[%s794 + $0x88] sm:$0x1]
  %v1058 = vld [vmem:[%s794 + $0x9c] sm:$0x1]
  %v1059 = vld [vmem:[%s794 + $0xb0] sm:$0x1]
  %v1060 = vld [vmem:[%s794 + $0xc4] sm:$0x1]
  %v1061 = vld [vmem:[%s794 + $0xd8] sm:$0x1]
  %v1062 = vld [vmem:[%s794 + $0xec] sm:$0x1]
  %v1063 = vld [vmem:[%s794 + $0x100] sm:$0x1]
  %v1064 = vld [vmem:[%s794 + $0x114] sm:$0x1]
  %v1065 = vld [vmem:[%s794 + $0x128] sm:$0x1]
  %v1066 = vld [vmem:[%s794 + $0x13c] sm:$0x1]
  %v1067 = vld [vmem:[%s794 + $0x150] sm:$0x1]
  %v1068 = vld [vmem:[%s794 + $0x164] sm:$0x1]
  %v1069 = vld [vmem:[%s794 + $0x178] sm:$0x1]
  %v1070 = vld [vmem:[%s794 + $0x18c] sm:$0x1]
  %v1071 = vld [vmem:[%s794 + $0x1a0] sm:$0x1]
  %v1072 = vld [vmem:[%s794 + $0x1b4] sm:$0x1]
  %v1073 = vld [vmem:[%s794 + $0x1c8] sm:$0x1]
  %v1074 = vld [vmem:[%s794 + $0x1dc] sm:$0x1]
  %v1075 = vld [vmem:[%s794 + $0x1f0] sm:$0x1]
  %v1076 = vld [vmem:[%s794 + $0x204] sm:$0x1]
  %v1077 = vld [vmem:[%s794 + $0x218] sm:$0x1]
  %v1078 = vld [vmem:[%s794 + $0x22c] sm:$0x1]
  %v1079 = vld [vmem:[%s794 + $0x240] sm:$0x1]
  %v1080 = vld [vmem:[%s794 + $0x254] sm:$0x1]
  %v1081 = vld [vmem:[%s794 + $0x268] sm:$0x1]
  %v1082 = vld [vmem:[%s794 + $0x27c] sm:$0x1]
  %v1083 = vld [vmem:[%s794 + $0x2b8] sm:$0x1]
  %v1084 = vld [vmem:[%s794 + $0x2cc] sm:$0x1]
  %v1085 = vld [vmem:[%s794 + $0x2e0] sm:$0x1]
  %v1086 = vld [vmem:[%s794 + $0x2f4] sm:$0x1]
  %v1087 = vld [vmem:[%s794 + $0x308] sm:$0x1]
  %v1088 = vld [vmem:[%s794 + $0x31c] sm:$0x1]
  %v1089 = vld [vmem:[%s794 + $0x330] sm:$0x1]
  %v1090 = vld [vmem:[%s794 + $0x344] sm:$0x1]
  %v1091 = vld [vmem:[%s794 + $0x358] sm:$0x1]
  %v1092 = vld [vmem:[%s794 + $0x36c] sm:$0x1]
  %v1093 = vld [vmem:[%s794 + $0x380] sm:$0x1]
  %v1094 = vld [vmem:[%s794 + $0x394] sm:$0x1]
  %v1095 = vld [vmem:[%s794 + $0x3a8] sm:$0x1]
  %v1096 = vld [vmem:[%s794 + $0x3bc] sm:$0x1]
  %v1097 = vld [vmem:[%s794 + $0x3d0] sm:$0x1]
  %v1098 = vld [vmem:[%s794 + $0x3e4] sm:$0x1]
  %v1099 = vld [vmem:[%s794 + $0x3f8] sm:$0x1]
  %v1100 = vld [vmem:[%s794 + $0x40c] sm:$0x1]
  %v1101 = vld [vmem:[%s794 + $0x420] sm:$0x1]
  %v1102 = vld [vmem:[%s794 + $0x434] sm:$0x1]
  %v1103 = vld [vmem:[%s794 + $0x448] sm:$0x1]
  %v1104 = vld [vmem:[%s794 + $0x45c] sm:$0x1]
  %v1105 = vld [vmem:[%s794 + $0x470] sm:$0x1]
  %v1106 = vld [vmem:[%s794 + $0x484] sm:$0x1]
  %v1107 = vld [vmem:[%s794 + $0x498] sm:$0x1]
  %v1108 = vld [vmem:[%s794 + $0x4ac] sm:$0x1]
  %v1109 = vld [vmem:[%s794 + $0x4c0] sm:$0x1]
  %v1110 = vld [vmem:[%s794 + $0x4d4] sm:$0x1]
  %v1111 = vld [vmem:[%s794 + $0x4e8] sm:$0x1]
  %v1112 = vld [vmem:[%s794 + $0x4fc] sm:$0x1]
  %v1113 = vld [vmem:[%s794 + $0x510] sm:$0x1]
  %v1114 = vld [vmem:[%s794 + $0x524] sm:$0x1]
  %v1115 = vld [vmem:[%s794] sm:$0xe]
  %v1116 = vld [vmem:[%s794 + $0x14] sm:$0xe]
  %v1117 = vld [vmem:[%s794 + $0x28] sm:$0xe]
  %v1118 = vld [vmem:[%s794 + $0x3c] sm:$0xe]
  %v1119 = vld [vmem:[%s794 + $0x50] sm:$0xe]
  %v1120 = vld [vmem:[%s794 + $0x64] sm:$0xe]
  %v1121 = vld [vmem:[%s794 + $0x78] sm:$0xe]
  %v1122 = vld [vmem:[%s794 + $0x8c] sm:$0xe]
  %v1123 = vld [vmem:[%s794 + $0xa0] sm:$0xe]
  %v1124 = vld [vmem:[%s794 + $0xb4] sm:$0xe]
  %v1125 = vld [vmem:[%s794 + $0xc8] sm:$0xe]
  %v1126 = vld [vmem:[%s794 + $0xdc] sm:$0xe]
  %v1127 = vld [vmem:[%s794 + $0xf0] sm:$0xe]
  %v1128 = vld [vmem:[%s794 + $0x104] sm:$0xe]
  %v1129 = vld [vmem:[%s794 + $0x118] sm:$0xe]
  %v1130 = vld [vmem:[%s794 + $0x12c] sm:$0xe]
  %v1131 = vld [vmem:[%s794 + $0x140] sm:$0xe]
  %v1132 = vld [vmem:[%s794 + $0x154] sm:$0xe]
  %v1133 = vld [vmem:[%s794 + $0x168] sm:$0xe]
  %v1134 = vld [vmem:[%s794 + $0x17c] sm:$0xe]
  %v1135 = vld [vmem:[%s794 + $0x190] sm:$0xe]
  %v1136 = vld [vmem:[%s794 + $0x1a4] sm:$0xe]
  %v1137 = vld [vmem:[%s794 + $0x1b8] sm:$0xe]
  %v1138 = vld [vmem:[%s794 + $0x1cc] sm:$0xe]
  %v1139 = vld [vmem:[%s794 + $0x1e0] sm:$0xe]
  %v1140 = vld [vmem:[%s794 + $0x1f4] sm:$0xe]
  %v1141 = vld [vmem:[%s794 + $0x208] sm:$0xe]
  %v1142 = vld [vmem:[%s794 + $0x21c] sm:$0xe]
  %v1143 = vld [vmem:[%s794 + $0x230] sm:$0xe]
  %v1144 = vld [vmem:[%s794 + $0x244] sm:$0xe]
  %v1145 = vld [vmem:[%s794 + $0x258] sm:$0xe]
  %v1146 = vld [vmem:[%s794 + $0x26c] sm:$0xe]
  %v1147 = vld [vmem:[%s794 + $0x2a8] sm:$0xe]
  %v1148 = vld [vmem:[%s794 + $0x2bc] sm:$0xe]
  %v1149 = vld [vmem:[%s794 + $0x2d0] sm:$0xe]
  %v1150 = vld [vmem:[%s794 + $0x2e4] sm:$0xe]
  %v1151 = vld [vmem:[%s794 + $0x2f8] sm:$0xe]
  %v1152 = vld [vmem:[%s794 + $0x30c] sm:$0xe]
  %v1153 = vld [vmem:[%s794 + $0x320] sm:$0xe]
  %v1154 = vld [vmem:[%s794 + $0x334] sm:$0xe]
  %v1155 = vld [vmem:[%s794 + $0x348] sm:$0xe]
  %v1156 = vld [vmem:[%s794 + $0x35c] sm:$0xe]
  %v1157 = vld [vmem:[%s794 + $0x370] sm:$0xe]
  %v1158 = vld [vmem:[%s794 + $0x384] sm:$0xe]
  %v1159 = vld [vmem:[%s794 + $0x398] sm:$0xe]
  %v1160 = vld [vmem:[%s794 + $0x3ac] sm:$0xe]
  %v1161 = vld [vmem:[%s794 + $0x3c0] sm:$0xe]
  %v1162 = vld [vmem:[%s794 + $0x3d4] sm:$0xe]
  %v1163 = vld [vmem:[%s794 + $0x3e8] sm:$0xe]
  %v1164 = vld [vmem:[%s794 + $0x3fc] sm:$0xe]
  %v1165 = vld [vmem:[%s794 + $0x410] sm:$0xe]
  %v1166 = vld [vmem:[%s794 + $0x424] sm:$0xe]
  %v1167 = vld [vmem:[%s794 + $0x438] sm:$0xe]
  %v1168 = vld [vmem:[%s794 + $0x44c] sm:$0xe]
  %v1169 = vld [vmem:[%s794 + $0x460] sm:$0xe]
  %v1170 = vld [vmem:[%s794 + $0x474] sm:$0xe]
  %v1171 = vld [vmem:[%s794 + $0x488] sm:$0xe]
  %v1172 = vld [vmem:[%s794 + $0x49c] sm:$0xe]
  %v1173 = vld [vmem:[%s794 + $0x4b0] sm:$0xe]
  %v1174 = vld [vmem:[%s794 + $0x4c4] sm:$0xe]
  %v1175 = vld [vmem:[%s794 + $0x4d8] sm:$0xe]
  %v1176 = vld [vmem:[%s794 + $0x4ec] sm:$0xe]
  %v1177 = vld [vmem:[%s794 + $0x500] sm:$0xe]
  %v1178 = vld [vmem:[%s794 + $0x514] sm:$0xe]
  %v1435 = vunpack.c.l.b16 %v19
  %v1436 = vunpack.c.l.b16 %v20
  %v1437 = vunpack.c.l.b16 %v21
  %v1438 = vunpack.c.l.b16 %v22
  %v1439 = vunpack.c.l.b16 %v23
  %v1440 = vunpack.c.l.b16 %v24
  %v1441 = vunpack.c.l.b16 %v25
  %v1442 = vunpack.c.l.b16 %v26
  %v1443 = vunpack.c.l.b16 %v27
  %v1444 = vunpack.c.l.b16 %v28
  %v1445 = vunpack.c.l.b16 %v29
  %v1446 = vunpack.c.l.b16 %v30
  %v1447 = vunpack.c.l.b16 %v31
  %v1448 = vunpack.c.l.b16 %v32
  %v1449 = vunpack.c.l.b16 %v33
  %v1450 = vunpack.c.l.b16 %v34
  %v1451 = vunpack.c.l.b16 %v35
  %v1452 = vunpack.c.l.b16 %v36
  %v1453 = vunpack.c.l.b16 %v37
  %v1454 = vunpack.c.l.b16 %v38
  %v1455 = vunpack.c.l.b16 %v39
  %v1456 = vunpack.c.l.b16 %v40
  %v1457 = vunpack.c.l.b16 %v41
  %v1458 = vunpack.c.l.b16 %v42
  %v1459 = vunpack.c.l.b16 %v43
  %v1460 = vunpack.c.l.b16 %v44
  %v1461 = vunpack.c.l.b16 %v45
  %v1462 = vunpack.c.l.b16 %v46
  %v1463 = vunpack.c.l.b16 %v47
  %v1464 = vunpack.c.l.b16 %v48
  %v1465 = vunpack.c.l.b16 %v49
  %v1466 = vunpack.c.l.b16 %v50
  %v1467 = vunpack.c.l.b16 %v51
  %v1468 = vunpack.c.l.b16 %v52
  %v1469 = vunpack.c.l.b16 %v53
  %v1470 = vunpack.c.l.b16 %v54
  %v1471 = vunpack.c.l.b16 %v55
  %v1472 = vunpack.c.l.b16 %v56
  %v1473 = vunpack.c.l.b16 %v57
  %v1474 = vunpack.c.l.b16 %v58
  %v1475 = vunpack.c.l.b16 %v59
  %v1476 = vunpack.c.l.b16 %v60
  %v1477 = vunpack.c.l.b16 %v61
  %v1478 = vunpack.c.l.b16 %v62
  %v1479 = vunpack.c.l.b16 %v63
  %v1480 = vunpack.c.l.b16 %v64
  %v1481 = vunpack.c.l.b16 %v65
  %v1482 = vunpack.c.l.b16 %v66
  %v1483 = vunpack.c.l.b16 %v67
  %v1484 = vunpack.c.l.b16 %v68
  %v1485 = vunpack.c.l.b16 %v69
  %v1486 = vunpack.c.l.b16 %v70
  %v1487 = vunpack.c.l.b16 %v71
  %v1488 = vunpack.c.l.b16 %v72
  %v1489 = vunpack.c.l.b16 %v73
  %v1490 = vunpack.c.l.b16 %v74
  %v1491 = vunpack.c.l.b16 %v75
  %v1492 = vunpack.c.l.b16 %v76
  %v1493 = vunpack.c.l.b16 %v77
  %v1494 = vunpack.c.l.b16 %v78
  %v1495 = vunpack.c.l.b16 %v79
  %v1496 = vunpack.c.l.b16 %v80
  %v1497 = vunpack.c.l.b16 %v81
  %v1498 = vunpack.c.l.b16 %v82
  %v1499 = vunpack.c.l.b16 %v83
  %v1500 = vunpack.c.l.b16 %v84
  %v1501 = vunpack.c.l.b16 %v85
  %v1502 = vunpack.c.l.b16 %v86
  %v1503 = vunpack.c.l.b16 %v87
  %v1504 = vunpack.c.l.b16 %v88
  %v1505 = vunpack.c.l.b16 %v89
  %v1506 = vunpack.c.l.b16 %v90
  %v1507 = vunpack.c.l.b16 %v91
  %v1508 = vunpack.c.l.b16 %v92
  %v1509 = vunpack.c.l.b16 %v93
  %v1510 = vunpack.c.l.b16 %v94
  %v1511 = vunpack.c.l.b16 %v95
  %v1512 = vunpack.c.l.b16 %v96
  %v1513 = vunpack.c.l.b16 %v97
  %v1514 = vunpack.c.l.b16 %v98
  %v1515 = vunpack.c.l.b16 %v99
  %v1516 = vunpack.c.l.b16 %v100
  %v1517 = vunpack.c.l.b16 %v101
  %v1518 = vunpack.c.l.b16 %v102
  %v1519 = vunpack.c.l.b16 %v103
  %v1520 = vunpack.c.l.b16 %v104
  %v1521 = vunpack.c.l.b16 %v105
  %v1522 = vunpack.c.l.b16 %v106
  %v1523 = vunpack.c.l.b16 %v107
  %v1524 = vunpack.c.l.b16 %v108
  %v1525 = vunpack.c.l.b16 %v109
  %v1526 = vunpack.c.l.b16 %v110
  %v1527 = vunpack.c.l.b16 %v111
  %v1528 = vunpack.c.l.b16 %v112
  %v1529 = vunpack.c.l.b16 %v113
  %v1530 = vunpack.c.l.b16 %v114
  %v1531 = vunpack.c.l.b16 %v115
  %v1532 = vunpack.c.l.b16 %v116
  %v1533 = vunpack.c.l.b16 %v117
  %v1534 = vunpack.c.l.b16 %v118
  %v1535 = vunpack.c.l.b16 %v119
  %v1536 = vunpack.c.l.b16 %v120
  %v1537 = vunpack.c.l.b16 %v121
  %v1538 = vunpack.c.l.b16 %v122
  %v1539 = vunpack.c.l.b16 %v123
  %v1540 = vunpack.c.l.b16 %v124
  %v1541 = vunpack.c.l.b16 %v125
  %v1542 = vunpack.c.l.b16 %v126
  %v1543 = vunpack.c.l.b16 %v127
  %v1544 = vunpack.c.l.b16 %v128
  %v1545 = vunpack.c.l.b16 %v129
  %v1546 = vunpack.c.l.b16 %v130
  %v1547 = vunpack.c.l.b16 %v131
  %v1548 = vunpack.c.l.b16 %v132
  %v1549 = vunpack.c.l.b16 %v133
  %v1550 = vunpack.c.l.b16 %v134
  %v1551 = vunpack.c.l.b16 %v135
  %v1552 = vunpack.c.l.b16 %v136
  %v1553 = vunpack.c.l.b16 %v137
  %v1554 = vunpack.c.l.b16 %v138
  %v1555 = vunpack.c.l.b16 %v139
  %v1556 = vunpack.c.l.b16 %v140
  %v1557 = vunpack.c.l.b16 %v141
  %v1558 = vunpack.c.l.b16 %v142
  %v1559 = vunpack.c.l.b16 %v143
  %v1560 = vunpack.c.l.b16 %v144
  %v1561 = vunpack.c.l.b16 %v145
  %v1562 = vunpack.c.l.b16 %v146
  %v1563 = vunpack.c.l.b16 %v147
  %v1564 = vunpack.c.l.b16 %v148
  %v1565 = vunpack.c.l.b16 %v149
  %v1566 = vunpack.c.l.b16 %v150
  %v1567 = vunpack.c.l.b16 %v151
  %v1568 = vunpack.c.l.b16 %v152
  %v1569 = vunpack.c.l.b16 %v153
  %v1570 = vunpack.c.l.b16 %v154
  %v1571 = vunpack.c.l.b16 %v155
  %v1572 = vunpack.c.l.b16 %v156
  %v1573 = vunpack.c.l.b16 %v157
  %v1574 = vunpack.c.l.b16 %v158
  %v1575 = vunpack.c.l.b16 %v159
  %v1576 = vunpack.c.l.b16 %v160
  %v1577 = vunpack.c.l.b16 %v161
  %v1578 = vunpack.c.l.b16 %v162
  %v1579 = vunpack.c.l.b16 %v163
  %v1580 = vunpack.c.l.b16 %v164
  %v1581 = vunpack.c.l.b16 %v165
  %v1582 = vunpack.c.l.b16 %v166
  %v1583 = vunpack.c.l.b16 %v167
  %v1584 = vunpack.c.l.b16 %v168
  %v1585 = vunpack.c.l.b16 %v169
  %v1586 = vunpack.c.l.b16 %v170
  %v1587 = vunpack.c.l.b16 %v171
  %v1588 = vunpack.c.l.b16 %v172
  %v1589 = vunpack.c.l.b16 %v173
  %v1590 = vunpack.c.l.b16 %v174
  %v1591 = vunpack.c.l.b16 %v175
  %v1592 = vunpack.c.l.b16 %v176
  %v1593 = vunpack.c.l.b16 %v177
  %v1594 = vunpack.c.l.b16 %v178
  %v1595 = vunpack.c.l.b16 %v179
  %v1596 = vunpack.c.l.b16 %v180
  %v1597 = vunpack.c.l.b16 %v181
  %v1598 = vunpack.c.l.b16 %v182
  %v1599 = vunpack.c.l.b16 %v183
  %v1600 = vunpack.c.l.b16 %v184
  %v1601 = vunpack.c.l.b16 %v185
  %v1602 = vunpack.c.l.b16 %v186
  %v1603 = vunpack.c.l.b16 %v187
  %v1604 = vunpack.c.l.b16 %v188
  %v1605 = vunpack.c.l.b16 %v189
  %v1606 = vunpack.c.l.b16 %v190
  %v1607 = vunpack.c.l.b16 %v191
  %v1608 = vunpack.c.l.b16 %v192
  %v1609 = vunpack.c.l.b16 %v193
  %v1610 = vunpack.c.l.b16 %v194
  %v1611 = vunpack.c.l.b16 %v195
  %v1612 = vunpack.c.l.b16 %v196
  %v1613 = vunpack.c.l.b16 %v197
  %v1614 = vunpack.c.l.b16 %v198
  %v1615 = vunpack.c.l.b16 %v199
  %v1616 = vunpack.c.l.b16 %v200
  %v1617 = vunpack.c.l.b16 %v201
  %v1618 = vunpack.c.l.b16 %v202
  %v1619 = vunpack.c.l.b16 %v203
  %v1620 = vunpack.c.l.b16 %v204
  %v1621 = vunpack.c.l.b16 %v205
  %v1622 = vunpack.c.l.b16 %v206
  %v1623 = vunpack.c.l.b16 %v207
  %v1624 = vunpack.c.l.b16 %v208
  %v1625 = vunpack.c.l.b16 %v209
  %v1626 = vunpack.c.l.b16 %v210
  %v1627 = vunpack.c.l.b16 %v211
  %v1628 = vunpack.c.l.b16 %v212
  %v1629 = vunpack.c.l.b16 %v213
  %v1630 = vunpack.c.l.b16 %v214
  %v1631 = vunpack.c.l.b16 %v215
  %v1632 = vunpack.c.l.b16 %v216
  %v1633 = vunpack.c.l.b16 %v217
  %v1634 = vunpack.c.l.b16 %v218
  %v1635 = vunpack.c.l.b16 %v219
  %v1636 = vunpack.c.l.b16 %v220
  %v1637 = vunpack.c.l.b16 %v221
  %v1638 = vunpack.c.l.b16 %v222
  %v1639 = vunpack.c.l.b16 %v223
  %v1640 = vunpack.c.l.b16 %v224
  %v1641 = vunpack.c.l.b16 %v225
  %v1642 = vunpack.c.l.b16 %v226
  %v1643 = vunpack.c.l.b16 %v227
  %v1644 = vunpack.c.l.b16 %v228
  %v1645 = vunpack.c.l.b16 %v229
  %v1646 = vunpack.c.l.b16 %v230
  %v1647 = vunpack.c.l.b16 %v231
  %v1648 = vunpack.c.l.b16 %v232
  %v1649 = vunpack.c.l.b16 %v233
  %v1650 = vunpack.c.l.b16 %v234
  %v1651 = vunpack.c.l.b16 %v235
  %v1652 = vunpack.c.l.b16 %v236
  %v1653 = vunpack.c.l.b16 %v237
  %v1654 = vunpack.c.l.b16 %v238
  %v1655 = vunpack.c.l.b16 %v239
  %v1656 = vunpack.c.l.b16 %v240
  %v1657 = vunpack.c.l.b16 %v241
  %v1658 = vunpack.c.l.b16 %v242
  %v1659 = vunpack.c.l.b16 %v243
  %v1660 = vunpack.c.l.b16 %v244
  %v1661 = vunpack.c.l.b16 %v245
  %v1662 = vunpack.c.l.b16 %v246
  %v1663 = vunpack.c.l.b16 %v247
  %v1664 = vunpack.c.l.b16 %v248
  %v1665 = vunpack.c.l.b16 %v249
  %v1666 = vunpack.c.l.b16 %v250
  %v1667 = vunpack.c.l.b16 %v251
  %v1668 = vunpack.c.l.b16 %v252
  %v1669 = vunpack.c.l.b16 %v253
  %v1670 = vunpack.c.l.b16 %v254
  %v1671 = vunpack.c.l.b16 %v255
  %v1672 = vunpack.c.l.b16 %v256
  %v1673 = vunpack.c.l.b16 %v257
  %v1674 = vunpack.c.l.b16 %v258
  %v1675 = vunpack.c.l.b16 %v259
  %v1676 = vunpack.c.l.b16 %v260
  %v1677 = vunpack.c.l.b16 %v261
  %v1678 = vunpack.c.l.b16 %v262
  %v1679 = vunpack.c.l.b16 %v263
  %v1680 = vunpack.c.l.b16 %v264
  %v1681 = vunpack.c.l.b16 %v265
  %v1682 = vunpack.c.l.b16 %v266
  %v1683 = vunpack.c.l.b16 %v267
  %v1684 = vunpack.c.l.b16 %v268
  %v1685 = vunpack.c.l.b16 %v269
  %v1686 = vunpack.c.l.b16 %v270
  %v1687 = vunpack.c.l.b16 %v271
  %v1688 = vunpack.c.l.b16 %v272
  %v1689 = vunpack.c.l.b16 %v273
  %v1690 = vunpack.c.l.b16 %v274
  %v1691 = vpack.c.b16 %v1436, %v1435
  %v1692 = vpack.c.b16 %v1438, %v1437
  %v1693 = vpack.c.b16 %v1440, %v1439
  %v1694 = vpack.c.b16 %v1442, %v1441
  %v1695 = vpack.c.b16 %v1444, %v1443
  %v1696 = vpack.c.b16 %v1446, %v1445
  %v1697 = vpack.c.b16 %v1448, %v1447
  %v1698 = vpack.c.b16 %v1450, %v1449
  %v1699 = vpack.c.b16 %v1452, %v1451
  %v1700 = vpack.c.b16 %v1454, %v1453
  %v1701 = vpack.c.b16 %v1456, %v1455
  %v1702 = vpack.c.b16 %v1458, %v1457
  %v1703 = vpack.c.b16 %v1460, %v1459
  %v1704 = vpack.c.b16 %v1462, %v1461
  %v1705 = vpack.c.b16 %v1464, %v1463
  %v1706 = vpack.c.b16 %v1466, %v1465
  %v1707 = vpack.c.b16 %v1468, %v1467
  %v1708 = vpack.c.b16 %v1470, %v1469
  %v1709 = vpack.c.b16 %v1472, %v1471
  %v1710 = vpack.c.b16 %v1474, %v1473
  %v1711 = vpack.c.b16 %v1476, %v1475
  %v1712 = vpack.c.b16 %v1478, %v1477
  %v1713 = vpack.c.b16 %v1480, %v1479
  %v1714 = vpack.c.b16 %v1482, %v1481
  %v1715 = vpack.c.b16 %v1484, %v1483
  %v1716 = vpack.c.b16 %v1486, %v1485
  %v1717 = vpack.c.b16 %v1488, %v1487
  %v1718 = vpack.c.b16 %v1490, %v1489
  %v1719 = vpack.c.b16 %v1492, %v1491
  %v1720 = vpack.c.b16 %v1494, %v1493
  %v1721 = vpack.c.b16 %v1496, %v1495
  %v1722 = vpack.c.b16 %v1498, %v1497
  %v1723 = vpack.c.b16 %v1500, %v1499
  %v1724 = vpack.c.b16 %v1502, %v1501
  %v1725 = vpack.c.b16 %v1504, %v1503
  %v1726 = vpack.c.b16 %v1506, %v1505
  %v1727 = vpack.c.b16 %v1508, %v1507
  %v1728 = vpack.c.b16 %v1510, %v1509
  %v1729 = vpack.c.b16 %v1512, %v1511
  %v1730 = vpack.c.b16 %v1514, %v1513
  %v1731 = vpack.c.b16 %v1516, %v1515
  %v1732 = vpack.c.b16 %v1518, %v1517
  %v1733 = vpack.c.b16 %v1520, %v1519
  %v1734 = vpack.c.b16 %v1522, %v1521
  %v1735 = vpack.c.b16 %v1524, %v1523
  %v1736 = vpack.c.b16 %v1526, %v1525
  %v1737 = vpack.c.b16 %v1528, %v1527
  %v1738 = vpack.c.b16 %v1530, %v1529
  %v1739 = vpack.c.b16 %v1532, %v1531
  %v1740 = vpack.c.b16 %v1534, %v1533
  %v1741 = vpack.c.b16 %v1536, %v1535
  %v1742 = vpack.c.b16 %v1538, %v1537
  %v1743 = vpack.c.b16 %v1540, %v1539
  %v1744 = vpack.c.b16 %v1542, %v1541
  %v1745 = vpack.c.b16 %v1544, %v1543
  %v1746 = vpack.c.b16 %v1546, %v1545
  %v1747 = vpack.c.b16 %v1548, %v1547
  %v1748 = vpack.c.b16 %v1550, %v1549
  %v1749 = vpack.c.b16 %v1552, %v1551
  %v1750 = vpack.c.b16 %v1554, %v1553
  %v1751 = vpack.c.b16 %v1556, %v1555
  %v1752 = vpack.c.b16 %v1558, %v1557
  %v1753 = vpack.c.b16 %v1560, %v1559
  %v1754 = vpack.c.b16 %v1562, %v1561
  %v1755 = vpack.c.b16 %v1564, %v1563
  %v1756 = vpack.c.b16 %v1566, %v1565
  %v1757 = vpack.c.b16 %v1568, %v1567
  %v1758 = vpack.c.b16 %v1570, %v1569
  %v1759 = vpack.c.b16 %v1572, %v1571
  %v1760 = vpack.c.b16 %v1574, %v1573
  %v1761 = vpack.c.b16 %v1576, %v1575
  %v1762 = vpack.c.b16 %v1578, %v1577
  %v1763 = vpack.c.b16 %v1580, %v1579
  %v1764 = vpack.c.b16 %v1582, %v1581
  %v1765 = vpack.c.b16 %v1584, %v1583
  %v1766 = vpack.c.b16 %v1586, %v1585
  %v1767 = vpack.c.b16 %v1588, %v1587
  %v1768 = vpack.c.b16 %v1590, %v1589
  %v1769 = vpack.c.b16 %v1592, %v1591
  %v1770 = vpack.c.b16 %v1594, %v1593
  %v1771 = vpack.c.b16 %v1596, %v1595
  %v1772 = vpack.c.b16 %v1598, %v1597
  %v1773 = vpack.c.b16 %v1600, %v1599
  %v1774 = vpack.c.b16 %v1602, %v1601
  %v1775 = vpack.c.b16 %v1604, %v1603
  %v1776 = vpack.c.b16 %v1606, %v1605
  %v1777 = vpack.c.b16 %v1608, %v1607
  %v1778 = vpack.c.b16 %v1610, %v1609
  %v1779 = vpack.c.b16 %v1612, %v1611
  %v1780 = vpack.c.b16 %v1614, %v1613
  %v1781 = vpack.c.b16 %v1616, %v1615
  %v1782 = vpack.c.b16 %v1618, %v1617
  %v1783 = vpack.c.b16 %v1620, %v1619
  %v1784 = vpack.c.b16 %v1622, %v1621
  %v1785 = vpack.c.b16 %v1624, %v1623
  %v1786 = vpack.c.b16 %v1626, %v1625
  %v1787 = vpack.c.b16 %v1628, %v1627
  %v1788 = vpack.c.b16 %v1630, %v1629
  %v1789 = vpack.c.b16 %v1632, %v1631
  %v1790 = vpack.c.b16 %v1634, %v1633
  %v1791 = vpack.c.b16 %v1636, %v1635
  %v1792 = vpack.c.b16 %v1638, %v1637
  %v1793 = vpack.c.b16 %v1640, %v1639
  %v1794 = vpack.c.b16 %v1642, %v1641
  %v1795 = vpack.c.b16 %v1644, %v1643
  %v1796 = vpack.c.b16 %v1646, %v1645
  %v1797 = vpack.c.b16 %v1648, %v1647
  %v1798 = vpack.c.b16 %v1650, %v1649
  %v1799 = vpack.c.b16 %v1652, %v1651
  %v1800 = vpack.c.b16 %v1654, %v1653
  %v1801 = vpack.c.b16 %v1656, %v1655
  %v1802 = vpack.c.b16 %v1658, %v1657
  %v1803 = vpack.c.b16 %v1660, %v1659
  %v1804 = vpack.c.b16 %v1662, %v1661
  %v1805 = vpack.c.b16 %v1664, %v1663
  %v1806 = vpack.c.b16 %v1666, %v1665
  %v1807 = vpack.c.b16 %v1668, %v1667
  %v1808 = vpack.c.b16 %v1670, %v1669
  %v1809 = vpack.c.b16 %v1672, %v1671
  %v1810 = vpack.c.b16 %v1674, %v1673
  %v1811 = vpack.c.b16 %v1676, %v1675
  %v1812 = vpack.c.b16 %v1678, %v1677
  %v1813 = vpack.c.b16 %v1680, %v1679
  %v1814 = vpack.c.b16 %v1682, %v1681
  %v1815 = vpack.c.b16 %v1684, %v1683
  %v1816 = vpack.c.b16 %v1686, %v1685
  %v1817 = vpack.c.b16 %v1688, %v1687
  %v1818 = vpack.c.b16 %v1690, %v1689
  %v1883 = vunpack.c.l.b16 %v275
  %v1884 = vunpack.c.l.b16 %v276
  %v1885 = vunpack.c.l.b16 %v277
  %v1886 = vunpack.c.l.b16 %v278
  %v1887 = vunpack.c.l.b16 %v279
  %v1888 = vunpack.c.l.b16 %v280
  %v1889 = vunpack.c.l.b16 %v281
  %v1890 = vunpack.c.l.b16 %v282
  %v1891 = vunpack.c.l.b16 %v283
  %v1892 = vunpack.c.l.b16 %v284
  %v1893 = vunpack.c.l.b16 %v285
  %v1894 = vunpack.c.l.b16 %v286
  %v1895 = vunpack.c.l.b16 %v287
  %v1896 = vunpack.c.l.b16 %v288
  %v1897 = vunpack.c.l.b16 %v289
  %v1898 = vunpack.c.l.b16 %v290
  %v1899 = vunpack.c.l.b16 %v291
  %v1900 = vunpack.c.l.b16 %v292
  %v1901 = vunpack.c.l.b16 %v293
  %v1902 = vunpack.c.l.b16 %v294
  %v1903 = vunpack.c.l.b16 %v295
  %v1904 = vunpack.c.l.b16 %v296
  %v1905 = vunpack.c.l.b16 %v297
  %v1906 = vunpack.c.l.b16 %v298
  %v1907 = vunpack.c.l.b16 %v299
  %v1908 = vunpack.c.l.b16 %v300
  %v1909 = vunpack.c.l.b16 %v301
  %v1910 = vunpack.c.l.b16 %v302
  %v1911 = vunpack.c.l.b16 %v303
  %v1912 = vunpack.c.l.b16 %v304
  %v1913 = vunpack.c.l.b16 %v305
  %v1914 = vunpack.c.l.b16 %v306
  %v1915 = vunpack.c.l.b16 %v307
  %v1916 = vunpack.c.l.b16 %v308
  %v1917 = vunpack.c.l.b16 %v309
  %v1918 = vunpack.c.l.b16 %v310
  %v1919 = vunpack.c.l.b16 %v311
  %v1920 = vunpack.c.l.b16 %v312
  %v1921 = vunpack.c.l.b16 %v313
  %v1922 = vunpack.c.l.b16 %v314
  %v1923 = vunpack.c.l.b16 %v315
  %v1924 = vunpack.c.l.b16 %v316
  %v1925 = vunpack.c.l.b16 %v317
  %v1926 = vunpack.c.l.b16 %v318
  %v1927 = vunpack.c.l.b16 %v319
  %v1928 = vunpack.c.l.b16 %v320
  %v1929 = vunpack.c.l.b16 %v321
  %v1930 = vunpack.c.l.b16 %v322
  %v1931 = vunpack.c.l.b16 %v323
  %v1932 = vunpack.c.l.b16 %v324
  %v1933 = vunpack.c.l.b16 %v325
  %v1934 = vunpack.c.l.b16 %v326
  %v1935 = vunpack.c.l.b16 %v327
  %v1936 = vunpack.c.l.b16 %v328
  %v1937 = vunpack.c.l.b16 %v329
  %v1938 = vunpack.c.l.b16 %v330
  %v1939 = vunpack.c.l.b16 %v331
  %v1940 = vunpack.c.l.b16 %v332
  %v1941 = vunpack.c.l.b16 %v333
  %v1942 = vunpack.c.l.b16 %v334
  %v1943 = vunpack.c.l.b16 %v335
  %v1944 = vunpack.c.l.b16 %v336
  %v1945 = vunpack.c.l.b16 %v337
  %v1946 = vunpack.c.l.b16 %v338
  %v1947 = vpack.c.b16 %v1883, %v1883
  %v1948 = vpack.c.b16 %v1884, %v1884
  %v1949 = vpack.c.b16 %v1885, %v1885
  %v1950 = vpack.c.b16 %v1886, %v1886
  %v1951 = vpack.c.b16 %v1887, %v1887
  %v1952 = vpack.c.b16 %v1888, %v1888
  %v1953 = vpack.c.b16 %v1889, %v1889
  %v1954 = vpack.c.b16 %v1890, %v1890
  %v1955 = vpack.c.b16 %v1891, %v1891
  %v1956 = vpack.c.b16 %v1892, %v1892
  %v1957 = vpack.c.b16 %v1893, %v1893
  %v1958 = vpack.c.b16 %v1894, %v1894
  %v1959 = vpack.c.b16 %v1895, %v1895
  %v1960 = vpack.c.b16 %v1896, %v1896
  %v1961 = vpack.c.b16 %v1897, %v1897
  %v1962 = vpack.c.b16 %v1898, %v1898
  %v1963 = vpack.c.b16 %v1899, %v1899
  %v1964 = vpack.c.b16 %v1900, %v1900
  %v1965 = vpack.c.b16 %v1901, %v1901
  %v1966 = vpack.c.b16 %v1902, %v1902
  %v1967 = vpack.c.b16 %v1903, %v1903
  %v1968 = vpack.c.b16 %v1904, %v1904
  %v1969 = vpack.c.b16 %v1905, %v1905
  %v1970 = vpack.c.b16 %v1906, %v1906
  %v1971 = vpack.c.b16 %v1907, %v1907
  %v1972 = vpack.c.b16 %v1908, %v1908
  %v1973 = vpack.c.b16 %v1909, %v1909
  %v1974 = vpack.c.b16 %v1910, %v1910
  %v1975 = vpack.c.b16 %v1911, %v1911
  %v1976 = vpack.c.b16 %v1912, %v1912
  %v1977 = vpack.c.b16 %v1913, %v1913
  %v1978 = vpack.c.b16 %v1914, %v1914
  %v1979 = vpack.c.b16 %v1915, %v1915
  %v1980 = vpack.c.b16 %v1916, %v1916
  %v1981 = vpack.c.b16 %v1917, %v1917
  %v1982 = vpack.c.b16 %v1918, %v1918
  %v1983 = vpack.c.b16 %v1919, %v1919
  %v1984 = vpack.c.b16 %v1920, %v1920
  %v1985 = vpack.c.b16 %v1921, %v1921
  %v1986 = vpack.c.b16 %v1922, %v1922
  %v1987 = vpack.c.b16 %v1923, %v1923
  %v1988 = vpack.c.b16 %v1924, %v1924
  %v1989 = vpack.c.b16 %v1925, %v1925
  %v1990 = vpack.c.b16 %v1926, %v1926
  %v1991 = vpack.c.b16 %v1927, %v1927
  %v1992 = vpack.c.b16 %v1928, %v1928
  %v1993 = vpack.c.b16 %v1929, %v1929
  %v1994 = vpack.c.b16 %v1930, %v1930
  %v1995 = vpack.c.b16 %v1931, %v1931
  %v1996 = vpack.c.b16 %v1932, %v1932
  %v1997 = vpack.c.b16 %v1933, %v1933
  %v1998 = vpack.c.b16 %v1934, %v1934
  %v1999 = vpack.c.b16 %v1935, %v1935
  %v2000 = vpack.c.b16 %v1936, %v1936
  %v2001 = vpack.c.b16 %v1937, %v1937
  %v2002 = vpack.c.b16 %v1938, %v1938
  %v2003 = vpack.c.b16 %v1939, %v1939
  %v2004 = vpack.c.b16 %v1940, %v1940
  %v2005 = vpack.c.b16 %v1941, %v1941
  %v2006 = vpack.c.b16 %v1942, %v1942
  %v2007 = vpack.c.b16 %v1943, %v1943
  %v2008 = vpack.c.b16 %v1944, %v1944
  %v2009 = vpack.c.b16 %v1945, %v1945
  %v2010 = vpack.c.b16 %v1946, %v1946
  %vm2011 = vsmask.f32 7424
  %v2013 = vshrl.u32 %v1691, 16
  %v2015 = vshll.u32 %v1691, 16
  %v2017 = vrot.slane %v2015, 1
  %v2018 = vor.u32 %v2013, %v2017
  %v2020 = vshll.u32 %v1692, 16
  %v2022 = vrot.slane %v2020, 1
  %v2023 = vsel %vm2011, %v2018, %v2022
  %v2024 = vshrl.u32 %v1692, 16
  %v2026 = vor.u32 %v2024, %v2022
  %v2028 = vshll.u32 %v1947, 16
  %v2030 = vrot.slane %v2028, 1
  %v2031 = vsel %vm2011, %v2026, %v2030
  %v2033 = vshrl.u32 %v1693, 16
  %v2035 = vshll.u32 %v1693, 16
  %v2037 = vrot.slane %v2035, 1
  %v2038 = vor.u32 %v2033, %v2037
  %v2040 = vshll.u32 %v1694, 16
  %v2042 = vrot.slane %v2040, 1
  %v2043 = vsel %vm2011, %v2038, %v2042
  %v2044 = vshrl.u32 %v1694, 16
  %v2046 = vor.u32 %v2044, %v2042
  %v2048 = vshll.u32 %v1948, 16
  %v2050 = vrot.slane %v2048, 1
  %v2051 = vsel %vm2011, %v2046, %v2050
  %v2053 = vshrl.u32 %v1695, 16
  %v2055 = vshll.u32 %v1695, 16
  %v2057 = vrot.slane %v2055, 1
  %v2058 = vor.u32 %v2053, %v2057
  %v2060 = vshll.u32 %v1696, 16
  %v2062 = vrot.slane %v2060, 1
  %v2063 = vsel %vm2011, %v2058, %v2062
  %v2064 = vshrl.u32 %v1696, 16
  %v2066 = vor.u32 %v2064, %v2062
  %v2068 = vshll.u32 %v1949, 16
  %v2070 = vrot.slane %v2068, 1
  %v2071 = vsel %vm2011, %v2066, %v2070
  %v2073 = vshrl.u32 %v1697, 16
  %v2075 = vshll.u32 %v1697, 16
  %v2077 = vrot.slane %v2075, 1
  %v2078 = vor.u32 %v2073, %v2077
  %v2080 = vshll.u32 %v1698, 16
  %v2082 = vrot.slane %v2080, 1
  %v2083 = vsel %vm2011, %v2078, %v2082
  %v2084 = vshrl.u32 %v1698, 16
  %v2086 = vor.u32 %v2084, %v2082
  %v2088 = vshll.u32 %v1950, 16
  %v2090 = vrot.slane %v2088, 1
  %v2091 = vsel %vm2011, %v2086, %v2090
  %v2093 = vshrl.u32 %v1699, 16
  %v2095 = vshll.u32 %v1699, 16
  %v2097 = vrot.slane %v2095, 1
  %v2098 = vor.u32 %v2093, %v2097
  %v2100 = vshll.u32 %v1700, 16
  %v2102 = vrot.slane %v2100, 1
  %v2103 = vsel %vm2011, %v2098, %v2102
  %v2104 = vshrl.u32 %v1700, 16
  %v2106 = vor.u32 %v2104, %v2102
  %v2108 = vshll.u32 %v1951, 16
  %v2110 = vrot.slane %v2108, 1
  %v2111 = vsel %vm2011, %v2106, %v2110
  %v2113 = vshrl.u32 %v1701, 16
  %v2115 = vshll.u32 %v1701, 16
  %v2117 = vrot.slane %v2115, 1
  %v2118 = vor.u32 %v2113, %v2117
  %v2120 = vshll.u32 %v1702, 16
  %v2122 = vrot.slane %v2120, 1
  %v2123 = vsel %vm2011, %v2118, %v2122
  %v2124 = vshrl.u32 %v1702, 16
  %v2126 = vor.u32 %v2124, %v2122
  %v2128 = vshll.u32 %v1952, 16
  %v2130 = vrot.slane %v2128, 1
  %v2131 = vsel %vm2011, %v2126, %v2130
  %v2133 = vshrl.u32 %v1703, 16
  %v2135 = vshll.u32 %v1703, 16
  %v2137 = vrot.slane %v2135, 1
  %v2138 = vor.u32 %v2133, %v2137
  %v2140 = vshll.u32 %v1704, 16
  %v2142 = vrot.slane %v2140, 1
  %v2143 = vsel %vm2011, %v2138, %v2142
  %v2144 = vshrl.u32 %v1704, 16
  %v2146 = vor.u32 %v2144, %v2142
  %v2148 = vshll.u32 %v1953, 16
  %v2150 = vrot.slane %v2148, 1
  %v2151 = vsel %vm2011, %v2146, %v2150
  %v2153 = vshrl.u32 %v1705, 16
  %v2155 = vshll.u32 %v1705, 16
  %v2157 = vrot.slane %v2155, 1
  %v2158 = vor.u32 %v2153, %v2157
  %v2160 = vshll.u32 %v1706, 16
  %v2162 = vrot.slane %v2160, 1
  %v2163 = vsel %vm2011, %v2158, %v2162
  %v2164 = vshrl.u32 %v1706, 16
  %v2166 = vor.u32 %v2164, %v2162
  %v2168 = vshll.u32 %v1954, 16
  %v2170 = vrot.slane %v2168, 1
  %v2171 = vsel %vm2011, %v2166, %v2170
  %v2173 = vshrl.u32 %v1707, 16
  %v2175 = vshll.u32 %v1707, 16
  %v2177 = vrot.slane %v2175, 1
  %v2178 = vor.u32 %v2173, %v2177
  %v2180 = vshll.u32 %v1708, 16
  %v2182 = vrot.slane %v2180, 1
  %v2183 = vsel %vm2011, %v2178, %v2182
  %v2184 = vshrl.u32 %v1708, 16
  %v2186 = vor.u32 %v2184, %v2182
  %v2188 = vshll.u32 %v1955, 16
  %v2190 = vrot.slane %v2188, 1
  %v2191 = vsel %vm2011, %v2186, %v2190
  %v2193 = vshrl.u32 %v1709, 16
  %v2195 = vshll.u32 %v1709, 16
  %v2197 = vrot.slane %v2195, 1
  %v2198 = vor.u32 %v2193, %v2197
  %v2200 = vshll.u32 %v1710, 16
  %v2202 = vrot.slane %v2200, 1
  %v2203 = vsel %vm2011, %v2198, %v2202
  %v2204 = vshrl.u32 %v1710, 16
  %v2206 = vor.u32 %v2204, %v2202
  %v2208 = vshll.u32 %v1956, 16
  %v2210 = vrot.slane %v2208, 1
  %v2211 = vsel %vm2011, %v2206, %v2210
  %v2213 = vshrl.u32 %v1711, 16
  %v2215 = vshll.u32 %v1711, 16
  %v2217 = vrot.slane %v2215, 1
  %v2218 = vor.u32 %v2213, %v2217
  %v2220 = vshll.u32 %v1712, 16
  %v2222 = vrot.slane %v2220, 1
  %v2223 = vsel %vm2011, %v2218, %v2222
  %v2224 = vshrl.u32 %v1712, 16
  %v2226 = vor.u32 %v2224, %v2222
  %v2228 = vshll.u32 %v1957, 16
  %v2230 = vrot.slane %v2228, 1
  %v2231 = vsel %vm2011, %v2226, %v2230
  %v2233 = vshrl.u32 %v1713, 16
  %v2235 = vshll.u32 %v1713, 16
  %v2237 = vrot.slane %v2235, 1
  %v2238 = vor.u32 %v2233, %v2237
  %v2240 = vshll.u32 %v1714, 16
  %v2242 = vrot.slane %v2240, 1
  %v2243 = vsel %vm2011, %v2238, %v2242
  %v2244 = vshrl.u32 %v1714, 16
  %v2246 = vor.u32 %v2244, %v2242
  %v2248 = vshll.u32 %v1958, 16
  %v2250 = vrot.slane %v2248, 1
  %v2251 = vsel %vm2011, %v2246, %v2250
  %v2253 = vshrl.u32 %v1715, 16
  %v2255 = vshll.u32 %v1715, 16
  %v2257 = vrot.slane %v2255, 1
  %v2258 = vor.u32 %v2253, %v2257
  %v2260 = vshll.u32 %v1716, 16
  %v2262 = vrot.slane %v2260, 1
  %v2263 = vsel %vm2011, %v2258, %v2262
  %v2264 = vshrl.u32 %v1716, 16
  %v2266 = vor.u32 %v2264, %v2262
  %v2268 = vshll.u32 %v1959, 16
  %v2270 = vrot.slane %v2268, 1
  %v2271 = vsel %vm2011, %v2266, %v2270
  %v2273 = vshrl.u32 %v1717, 16
  %v2275 = vshll.u32 %v1717, 16
  %v2277 = vrot.slane %v2275, 1
  %v2278 = vor.u32 %v2273, %v2277
  %v2280 = vshll.u32 %v1718, 16
  %v2282 = vrot.slane %v2280, 1
  %v2283 = vsel %vm2011, %v2278, %v2282
  %v2284 = vshrl.u32 %v1718, 16
  %v2286 = vor.u32 %v2284, %v2282
  %v2288 = vshll.u32 %v1960, 16
  %v2290 = vrot.slane %v2288, 1
  %v2291 = vsel %vm2011, %v2286, %v2290
  %v2293 = vshrl.u32 %v1719, 16
  %v2295 = vshll.u32 %v1719, 16
  %v2297 = vrot.slane %v2295, 1
  %v2298 = vor.u32 %v2293, %v2297
  %v2300 = vshll.u32 %v1720, 16
  %v2302 = vrot.slane %v2300, 1
  %v2303 = vsel %vm2011, %v2298, %v2302
  %v2304 = vshrl.u32 %v1720, 16
  %v2306 = vor.u32 %v2304, %v2302
  %v2308 = vshll.u32 %v1961, 16
  %v2310 = vrot.slane %v2308, 1
  %v2311 = vsel %vm2011, %v2306, %v2310
  %v2313 = vshrl.u32 %v1721, 16
  %v2315 = vshll.u32 %v1721, 16
  %v2317 = vrot.slane %v2315, 1
  %v2318 = vor.u32 %v2313, %v2317
  %v2320 = vshll.u32 %v1722, 16
  %v2322 = vrot.slane %v2320, 1
  %v2323 = vsel %vm2011, %v2318, %v2322
  %v2324 = vshrl.u32 %v1722, 16
  %v2326 = vor.u32 %v2324, %v2322
  %v2328 = vshll.u32 %v1962, 16
  %v2330 = vrot.slane %v2328, 1
  %v2331 = vsel %vm2011, %v2326, %v2330
  %v2333 = vshrl.u32 %v1723, 16
  %v2335 = vshll.u32 %v1723, 16
  %v2337 = vrot.slane %v2335, 1
  %v2338 = vor.u32 %v2333, %v2337
  %v2340 = vshll.u32 %v1724, 16
  %v2342 = vrot.slane %v2340, 1
  %v2343 = vsel %vm2011, %v2338, %v2342
  %v2344 = vshrl.u32 %v1724, 16
  %v2346 = vor.u32 %v2344, %v2342
  %v2348 = vshll.u32 %v1963, 16
  %v2350 = vrot.slane %v2348, 1
  %v2351 = vsel %vm2011, %v2346, %v2350
  %v2353 = vshrl.u32 %v1725, 16
  %v2355 = vshll.u32 %v1725, 16
  %v2357 = vrot.slane %v2355, 1
  %v2358 = vor.u32 %v2353, %v2357
  %v2360 = vshll.u32 %v1726, 16
  %v2362 = vrot.slane %v2360, 1
  %v2363 = vsel %vm2011, %v2358, %v2362
  %v2364 = vshrl.u32 %v1726, 16
  %v2366 = vor.u32 %v2364, %v2362
  %v2368 = vshll.u32 %v1964, 16
  %v2370 = vrot.slane %v2368, 1
  %v2371 = vsel %vm2011, %v2366, %v2370
  %v2373 = vshrl.u32 %v1727, 16
  %v2375 = vshll.u32 %v1727, 16
  %v2377 = vrot.slane %v2375, 1
  %v2378 = vor.u32 %v2373, %v2377
  %v2380 = vshll.u32 %v1728, 16
  %v2382 = vrot.slane %v2380, 1
  %v2383 = vsel %vm2011, %v2378, %v2382
  %v2384 = vshrl.u32 %v1728, 16
  %v2386 = vor.u32 %v2384, %v2382
  %v2388 = vshll.u32 %v1965, 16
  %v2390 = vrot.slane %v2388, 1
  %v2391 = vsel %vm2011, %v2386, %v2390
  %v2393 = vshrl.u32 %v1729, 16
  %v2395 = vshll.u32 %v1729, 16
  %v2397 = vrot.slane %v2395, 1
  %v2398 = vor.u32 %v2393, %v2397
  %v2400 = vshll.u32 %v1730, 16
  %v2402 = vrot.slane %v2400, 1
  %v2403 = vsel %vm2011, %v2398, %v2402
  %v2404 = vshrl.u32 %v1730, 16
  %v2406 = vor.u32 %v2404, %v2402
  %v2408 = vshll.u32 %v1966, 16
  %v2410 = vrot.slane %v2408, 1
  %v2411 = vsel %vm2011, %v2406, %v2410
  %v2413 = vshrl.u32 %v1731, 16
  %v2415 = vshll.u32 %v1731, 16
  %v2417 = vrot.slane %v2415, 1
  %v2418 = vor.u32 %v2413, %v2417
  %v2420 = vshll.u32 %v1732, 16
  %v2422 = vrot.slane %v2420, 1
  %v2423 = vsel %vm2011, %v2418, %v2422
  %v2424 = vshrl.u32 %v1732, 16
  %v2426 = vor.u32 %v2424, %v2422
  %v2428 = vshll.u32 %v1967, 16
  %v2430 = vrot.slane %v2428, 1
  %v2431 = vsel %vm2011, %v2426, %v2430
  %v2433 = vshrl.u32 %v1733, 16
  %v2435 = vshll.u32 %v1733, 16
  %v2437 = vrot.slane %v2435, 1
  %v2438 = vor.u32 %v2433, %v2437
  %v2440 = vshll.u32 %v1734, 16
  %v2442 = vrot.slane %v2440, 1
  %v2443 = vsel %vm2011, %v2438, %v2442
  %v2444 = vshrl.u32 %v1734, 16
  %v2446 = vor.u32 %v2444, %v2442
  %v2448 = vshll.u32 %v1968, 16
  %v2450 = vrot.slane %v2448, 1
  %v2451 = vsel %vm2011, %v2446, %v2450
  %v2453 = vshrl.u32 %v1735, 16
  %v2455 = vshll.u32 %v1735, 16
  %v2457 = vrot.slane %v2455, 1
  %v2458 = vor.u32 %v2453, %v2457
  %v2460 = vshll.u32 %v1736, 16
  %v2462 = vrot.slane %v2460, 1
  %v2463 = vsel %vm2011, %v2458, %v2462
  %v2464 = vshrl.u32 %v1736, 16
  %v2466 = vor.u32 %v2464, %v2462
  %v2468 = vshll.u32 %v1969, 16
  %v2470 = vrot.slane %v2468, 1
  %v2471 = vsel %vm2011, %v2466, %v2470
  %v2473 = vshrl.u32 %v1737, 16
  %v2475 = vshll.u32 %v1737, 16
  %v2477 = vrot.slane %v2475, 1
  %v2478 = vor.u32 %v2473, %v2477
  %v2480 = vshll.u32 %v1738, 16
  %v2482 = vrot.slane %v2480, 1
  %v2483 = vsel %vm2011, %v2478, %v2482
  %v2484 = vshrl.u32 %v1738, 16
  %v2486 = vor.u32 %v2484, %v2482
  %v2488 = vshll.u32 %v1970, 16
  %v2490 = vrot.slane %v2488, 1
  %v2491 = vsel %vm2011, %v2486, %v2490
  %v2493 = vshrl.u32 %v1739, 16
  %v2495 = vshll.u32 %v1739, 16
  %v2497 = vrot.slane %v2495, 1
  %v2498 = vor.u32 %v2493, %v2497
  %v2500 = vshll.u32 %v1740, 16
  %v2502 = vrot.slane %v2500, 1
  %v2503 = vsel %vm2011, %v2498, %v2502
  %v2504 = vshrl.u32 %v1740, 16
  %v2506 = vor.u32 %v2504, %v2502
  %v2508 = vshll.u32 %v1971, 16
  %v2510 = vrot.slane %v2508, 1
  %v2511 = vsel %vm2011, %v2506, %v2510
  %v2513 = vshrl.u32 %v1741, 16
  %v2515 = vshll.u32 %v1741, 16
  %v2517 = vrot.slane %v2515, 1
  %v2518 = vor.u32 %v2513, %v2517
  %v2520 = vshll.u32 %v1742, 16
  %v2522 = vrot.slane %v2520, 1
  %v2523 = vsel %vm2011, %v2518, %v2522
  %v2524 = vshrl.u32 %v1742, 16
  %v2526 = vor.u32 %v2524, %v2522
  %v2528 = vshll.u32 %v1972, 16
  %v2530 = vrot.slane %v2528, 1
  %v2531 = vsel %vm2011, %v2526, %v2530
  %v2533 = vshrl.u32 %v1743, 16
  %v2535 = vshll.u32 %v1743, 16
  %v2537 = vrot.slane %v2535, 1
  %v2538 = vor.u32 %v2533, %v2537
  %v2540 = vshll.u32 %v1744, 16
  %v2542 = vrot.slane %v2540, 1
  %v2543 = vsel %vm2011, %v2538, %v2542
  %v2544 = vshrl.u32 %v1744, 16
  %v2546 = vor.u32 %v2544, %v2542
  %v2548 = vshll.u32 %v1973, 16
  %v2550 = vrot.slane %v2548, 1
  %v2551 = vsel %vm2011, %v2546, %v2550
  %v2553 = vshrl.u32 %v1745, 16
  %v2555 = vshll.u32 %v1745, 16
  %v2557 = vrot.slane %v2555, 1
  %v2558 = vor.u32 %v2553, %v2557
  %v2560 = vshll.u32 %v1746, 16
  %v2562 = vrot.slane %v2560, 1
  %v2563 = vsel %vm2011, %v2558, %v2562
  %v2564 = vshrl.u32 %v1746, 16
  %v2566 = vor.u32 %v2564, %v2562
  %v2568 = vshll.u32 %v1974, 16
  %v2570 = vrot.slane %v2568, 1
  %v2571 = vsel %vm2011, %v2566, %v2570
  %v2573 = vshrl.u32 %v1747, 16
  %v2575 = vshll.u32 %v1747, 16
  %v2577 = vrot.slane %v2575, 1
  %v2578 = vor.u32 %v2573, %v2577
  %v2580 = vshll.u32 %v1748, 16
  %v2582 = vrot.slane %v2580, 1
  %v2583 = vsel %vm2011, %v2578, %v2582
  %v2584 = vshrl.u32 %v1748, 16
  %v2586 = vor.u32 %v2584, %v2582
  %v2588 = vshll.u32 %v1975, 16
  %v2590 = vrot.slane %v2588, 1
  %v2591 = vsel %vm2011, %v2586, %v2590
  %v2593 = vshrl.u32 %v1749, 16
  %v2595 = vshll.u32 %v1749, 16
  %v2597 = vrot.slane %v2595, 1
  %v2598 = vor.u32 %v2593, %v2597
  %v2600 = vshll.u32 %v1750, 16
  %v2602 = vrot.slane %v2600, 1
  %v2603 = vsel %vm2011, %v2598, %v2602
  %v2604 = vshrl.u32 %v1750, 16
  %v2606 = vor.u32 %v2604, %v2602
  %v2608 = vshll.u32 %v1976, 16
  %v2610 = vrot.slane %v2608, 1
  %v2611 = vsel %vm2011, %v2606, %v2610
  %v2613 = vshrl.u32 %v1751, 16
  %v2615 = vshll.u32 %v1751, 16
  %v2617 = vrot.slane %v2615, 1
  %v2618 = vor.u32 %v2613, %v2617
  %v2620 = vshll.u32 %v1752, 16
  %v2622 = vrot.slane %v2620, 1
  %v2623 = vsel %vm2011, %v2618, %v2622
  %v2624 = vshrl.u32 %v1752, 16
  %v2626 = vor.u32 %v2624, %v2622
  %v2628 = vshll.u32 %v1977, 16
  %v2630 = vrot.slane %v2628, 1
  %v2631 = vsel %vm2011, %v2626, %v2630
  %v2633 = vshrl.u32 %v1753, 16
  %v2635 = vshll.u32 %v1753, 16
  %v2637 = vrot.slane %v2635, 1
  %v2638 = vor.u32 %v2633, %v2637
  %v2640 = vshll.u32 %v1754, 16
  %v2642 = vrot.slane %v2640, 1
  %v2643 = vsel %vm2011, %v2638, %v2642
  %v2644 = vshrl.u32 %v1754, 16
  %v2646 = vor.u32 %v2644, %v2642
  %v2648 = vshll.u32 %v1978, 16
  %v2650 = vrot.slane %v2648, 1
  %v2651 = vsel %vm2011, %v2646, %v2650
  %v2653 = vshrl.u32 %v1755, 16
  %v2655 = vshll.u32 %v1755, 16
  %v2657 = vrot.slane %v2655, 1
  %v2658 = vor.u32 %v2653, %v2657
  %v2660 = vshll.u32 %v1756, 16
  %v2662 = vrot.slane %v2660, 1
  %v2663 = vsel %vm2011, %v2658, %v2662
  %v2664 = vshrl.u32 %v1756, 16
  %v2666 = vor.u32 %v2664, %v2662
  %v2668 = vshll.u32 %v1979, 16
  %v2670 = vrot.slane %v2668, 1
  %v2671 = vsel %vm2011, %v2666, %v2670
  %v2673 = vshrl.u32 %v1757, 16
  %v2675 = vshll.u32 %v1757, 16
  %v2677 = vrot.slane %v2675, 1
  %v2678 = vor.u32 %v2673, %v2677
  %v2680 = vshll.u32 %v1758, 16
  %v2682 = vrot.slane %v2680, 1
  %v2683 = vsel %vm2011, %v2678, %v2682
  %v2684 = vshrl.u32 %v1758, 16
  %v2686 = vor.u32 %v2684, %v2682
  %v2688 = vshll.u32 %v1980, 16
  %v2690 = vrot.slane %v2688, 1
  %v2691 = vsel %vm2011, %v2686, %v2690
  %v2693 = vshrl.u32 %v1759, 16
  %v2695 = vshll.u32 %v1759, 16
  %v2697 = vrot.slane %v2695, 1
  %v2698 = vor.u32 %v2693, %v2697
  %v2700 = vshll.u32 %v1760, 16
  %v2702 = vrot.slane %v2700, 1
  %v2703 = vsel %vm2011, %v2698, %v2702
  %v2704 = vshrl.u32 %v1760, 16
  %v2706 = vor.u32 %v2704, %v2702
  %v2708 = vshll.u32 %v1981, 16
  %v2710 = vrot.slane %v2708, 1
  %v2711 = vsel %vm2011, %v2706, %v2710
  %v2713 = vshrl.u32 %v1761, 16
  %v2715 = vshll.u32 %v1761, 16
  %v2717 = vrot.slane %v2715, 1
  %v2718 = vor.u32 %v2713, %v2717
  %v2720 = vshll.u32 %v1762, 16
  %v2722 = vrot.slane %v2720, 1
  %v2723 = vsel %vm2011, %v2718, %v2722
  %v2724 = vshrl.u32 %v1762, 16
  %v2726 = vor.u32 %v2724, %v2722
  %v2728 = vshll.u32 %v1982, 16
  %v2730 = vrot.slane %v2728, 1
  %v2731 = vsel %vm2011, %v2726, %v2730
  %v2733 = vshrl.u32 %v1763, 16
  %v2735 = vshll.u32 %v1763, 16
  %v2737 = vrot.slane %v2735, 1
  %v2738 = vor.u32 %v2733, %v2737
  %v2740 = vshll.u32 %v1764, 16
  %v2742 = vrot.slane %v2740, 1
  %v2743 = vsel %vm2011, %v2738, %v2742
  %v2744 = vshrl.u32 %v1764, 16
  %v2746 = vor.u32 %v2744, %v2742
  %v2748 = vshll.u32 %v1983, 16
  %v2750 = vrot.slane %v2748, 1
  %v2751 = vsel %vm2011, %v2746, %v2750
  %v2753 = vshrl.u32 %v1765, 16
  %v2755 = vshll.u32 %v1765, 16
  %v2757 = vrot.slane %v2755, 1
  %v2758 = vor.u32 %v2753, %v2757
  %v2760 = vshll.u32 %v1766, 16
  %v2762 = vrot.slane %v2760, 1
  %v2763 = vsel %vm2011, %v2758, %v2762
  %v2764 = vshrl.u32 %v1766, 16
  %v2766 = vor.u32 %v2764, %v2762
  %v2768 = vshll.u32 %v1984, 16
  %v2770 = vrot.slane %v2768, 1
  %v2771 = vsel %vm2011, %v2766, %v2770
  %v2773 = vshrl.u32 %v1767, 16
  %v2775 = vshll.u32 %v1767, 16
  %v2777 = vrot.slane %v2775, 1
  %v2778 = vor.u32 %v2773, %v2777
  %v2780 = vshll.u32 %v1768, 16
  %v2782 = vrot.slane %v2780, 1
  %v2783 = vsel %vm2011, %v2778, %v2782
  %v2784 = vshrl.u32 %v1768, 16
  %v2786 = vor.u32 %v2784, %v2782
  %v2788 = vshll.u32 %v1985, 16
  %v2790 = vrot.slane %v2788, 1
  %v2791 = vsel %vm2011, %v2786, %v2790
  %v2793 = vshrl.u32 %v1769, 16
  %v2795 = vshll.u32 %v1769, 16
  %v2797 = vrot.slane %v2795, 1
  %v2798 = vor.u32 %v2793, %v2797
  %v2800 = vshll.u32 %v1770, 16
  %v2802 = vrot.slane %v2800, 1
  %v2803 = vsel %vm2011, %v2798, %v2802
  %v2804 = vshrl.u32 %v1770, 16
  %v2806 = vor.u32 %v2804, %v2802
  %v2808 = vshll.u32 %v1986, 16
  %v2810 = vrot.slane %v2808, 1
  %v2811 = vsel %vm2011, %v2806, %v2810
  %v2813 = vshrl.u32 %v1771, 16
  %v2815 = vshll.u32 %v1771, 16
  %v2817 = vrot.slane %v2815, 1
  %v2818 = vor.u32 %v2813, %v2817
  %v2820 = vshll.u32 %v1772, 16
  %v2822 = vrot.slane %v2820, 1
  %v2823 = vsel %vm2011, %v2818, %v2822
  %v2824 = vshrl.u32 %v1772, 16
  %v2826 = vor.u32 %v2824, %v2822
  %v2828 = vshll.u32 %v1987, 16
  %v2830 = vrot.slane %v2828, 1
  %v2831 = vsel %vm2011, %v2826, %v2830
  %v2833 = vshrl.u32 %v1773, 16
  %v2835 = vshll.u32 %v1773, 16
  %v2837 = vrot.slane %v2835, 1
  %v2838 = vor.u32 %v2833, %v2837
  %v2840 = vshll.u32 %v1774, 16
  %v2842 = vrot.slane %v2840, 1
  %v2843 = vsel %vm2011, %v2838, %v2842
  %v2844 = vshrl.u32 %v1774, 16
  %v2846 = vor.u32 %v2844, %v2842
  %v2848 = vshll.u32 %v1988, 16
  %v2850 = vrot.slane %v2848, 1
  %v2851 = vsel %vm2011, %v2846, %v2850
  %v2853 = vshrl.u32 %v1775, 16
  %v2855 = vshll.u32 %v1775, 16
  %v2857 = vrot.slane %v2855, 1
  %v2858 = vor.u32 %v2853, %v2857
  %v2860 = vshll.u32 %v1776, 16
  %v2862 = vrot.slane %v2860, 1
  %v2863 = vsel %vm2011, %v2858, %v2862
  %v2864 = vshrl.u32 %v1776, 16
  %v2866 = vor.u32 %v2864, %v2862
  %v2868 = vshll.u32 %v1989, 16
  %v2870 = vrot.slane %v2868, 1
  %v2871 = vsel %vm2011, %v2866, %v2870
  %v2873 = vshrl.u32 %v1777, 16
  %v2875 = vshll.u32 %v1777, 16
  %v2877 = vrot.slane %v2875, 1
  %v2878 = vor.u32 %v2873, %v2877
  %v2880 = vshll.u32 %v1778, 16
  %v2882 = vrot.slane %v2880, 1
  %v2883 = vsel %vm2011, %v2878, %v2882
  %v2884 = vshrl.u32 %v1778, 16
  %v2886 = vor.u32 %v2884, %v2882
  %v2888 = vshll.u32 %v1990, 16
  %v2890 = vrot.slane %v2888, 1
  %v2891 = vsel %vm2011, %v2886, %v2890
  %v2893 = vshrl.u32 %v1779, 16
  %v2895 = vshll.u32 %v1779, 16
  %v2897 = vrot.slane %v2895, 1
  %v2898 = vor.u32 %v2893, %v2897
  %v2900 = vshll.u32 %v1780, 16
  %v2902 = vrot.slane %v2900, 1
  %v2903 = vsel %vm2011, %v2898, %v2902
  %v2904 = vshrl.u32 %v1780, 16
  %v2906 = vor.u32 %v2904, %v2902
  %v2908 = vshll.u32 %v1991, 16
  %v2910 = vrot.slane %v2908, 1
  %v2911 = vsel %vm2011, %v2906, %v2910
  %v2913 = vshrl.u32 %v1781, 16
  %v2915 = vshll.u32 %v1781, 16
  %v2917 = vrot.slane %v2915, 1
  %v2918 = vor.u32 %v2913, %v2917
  %v2920 = vshll.u32 %v1782, 16
  %v2922 = vrot.slane %v2920, 1
  %v2923 = vsel %vm2011, %v2918, %v2922
  %v2924 = vshrl.u32 %v1782, 16
  %v2926 = vor.u32 %v2924, %v2922
  %v2928 = vshll.u32 %v1992, 16
  %v2930 = vrot.slane %v2928, 1
  %v2931 = vsel %vm2011, %v2926, %v2930
  %v2933 = vshrl.u32 %v1783, 16
  %v2935 = vshll.u32 %v1783, 16
  %v2937 = vrot.slane %v2935, 1
  %v2938 = vor.u32 %v2933, %v2937
  %v2940 = vshll.u32 %v1784, 16
  %v2942 = vrot.slane %v2940, 1
  %v2943 = vsel %vm2011, %v2938, %v2942
  %v2944 = vshrl.u32 %v1784, 16
  %v2946 = vor.u32 %v2944, %v2942
  %v2948 = vshll.u32 %v1993, 16
  %v2950 = vrot.slane %v2948, 1
  %v2951 = vsel %vm2011, %v2946, %v2950
  %v2953 = vshrl.u32 %v1785, 16
  %v2955 = vshll.u32 %v1785, 16
  %v2957 = vrot.slane %v2955, 1
  %v2958 = vor.u32 %v2953, %v2957
  %v2960 = vshll.u32 %v1786, 16
  %v2962 = vrot.slane %v2960, 1
  %v2963 = vsel %vm2011, %v2958, %v2962
  %v2964 = vshrl.u32 %v1786, 16
  %v2966 = vor.u32 %v2964, %v2962
  %v2968 = vshll.u32 %v1994, 16
  %v2970 = vrot.slane %v2968, 1
  %v2971 = vsel %vm2011, %v2966, %v2970
  %v2973 = vshrl.u32 %v1787, 16
  %v2975 = vshll.u32 %v1787, 16
  %v2977 = vrot.slane %v2975, 1
  %v2978 = vor.u32 %v2973, %v2977
  %v2980 = vshll.u32 %v1788, 16
  %v2982 = vrot.slane %v2980, 1
  %v2983 = vsel %vm2011, %v2978, %v2982
  %v2984 = vshrl.u32 %v1788, 16
  %v2986 = vor.u32 %v2984, %v2982
  %v2988 = vshll.u32 %v1995, 16
  %v2990 = vrot.slane %v2988, 1
  %v2991 = vsel %vm2011, %v2986, %v2990
  %v2993 = vshrl.u32 %v1789, 16
  %v2995 = vshll.u32 %v1789, 16
  %v2997 = vrot.slane %v2995, 1
  %v2998 = vor.u32 %v2993, %v2997
  %v3000 = vshll.u32 %v1790, 16
  %v3002 = vrot.slane %v3000, 1
  %v3003 = vsel %vm2011, %v2998, %v3002
  %v3004 = vshrl.u32 %v1790, 16
  %v3006 = vor.u32 %v3004, %v3002
  %v3008 = vshll.u32 %v1996, 16
  %v3010 = vrot.slane %v3008, 1
  %v3011 = vsel %vm2011, %v3006, %v3010
  %v3013 = vshrl.u32 %v1791, 16
  %v3015 = vshll.u32 %v1791, 16
  %v3017 = vrot.slane %v3015, 1
  %v3018 = vor.u32 %v3013, %v3017
  %v3020 = vshll.u32 %v1792, 16
  %v3022 = vrot.slane %v3020, 1
  %v3023 = vsel %vm2011, %v3018, %v3022
  %v3024 = vshrl.u32 %v1792, 16
  %v3026 = vor.u32 %v3024, %v3022
  %v3028 = vshll.u32 %v1997, 16
  %v3030 = vrot.slane %v3028, 1
  %v3031 = vsel %vm2011, %v3026, %v3030
  %v3033 = vshrl.u32 %v1793, 16
  %v3035 = vshll.u32 %v1793, 16
  %v3037 = vrot.slane %v3035, 1
  %v3038 = vor.u32 %v3033, %v3037
  %v3040 = vshll.u32 %v1794, 16
  %v3042 = vrot.slane %v3040, 1
  %v3043 = vsel %vm2011, %v3038, %v3042
  %v3044 = vshrl.u32 %v1794, 16
  %v3046 = vor.u32 %v3044, %v3042
  %v3048 = vshll.u32 %v1998, 16
  %v3050 = vrot.slane %v3048, 1
  %v3051 = vsel %vm2011, %v3046, %v3050
  %v3053 = vshrl.u32 %v1795, 16
  %v3055 = vshll.u32 %v1795, 16
  %v3057 = vrot.slane %v3055, 1
  %v3058 = vor.u32 %v3053, %v3057
  %v3060 = vshll.u32 %v1796, 16
  %v3062 = vrot.slane %v3060, 1
  %v3063 = vsel %vm2011, %v3058, %v3062
  %v3064 = vshrl.u32 %v1796, 16
  %v3066 = vor.u32 %v3064, %v3062
  %v3068 = vshll.u32 %v1999, 16
  %v3070 = vrot.slane %v3068, 1
  %v3071 = vsel %vm2011, %v3066, %v3070
  %v3073 = vshrl.u32 %v1797, 16
  %v3075 = vshll.u32 %v1797, 16
  %v3077 = vrot.slane %v3075, 1
  %v3078 = vor.u32 %v3073, %v3077
  %v3080 = vshll.u32 %v1798, 16
  %v3082 = vrot.slane %v3080, 1
  %v3083 = vsel %vm2011, %v3078, %v3082
  %v3084 = vshrl.u32 %v1798, 16
  %v3086 = vor.u32 %v3084, %v3082
  %v3088 = vshll.u32 %v2000, 16
  %v3090 = vrot.slane %v3088, 1
  %v3091 = vsel %vm2011, %v3086, %v3090
  %v3093 = vshrl.u32 %v1799, 16
  %v3095 = vshll.u32 %v1799, 16
  %v3097 = vrot.slane %v3095, 1
  %v3098 = vor.u32 %v3093, %v3097
  %v3100 = vshll.u32 %v1800, 16
  %v3102 = vrot.slane %v3100, 1
  %v3103 = vsel %vm2011, %v3098, %v3102
  %v3104 = vshrl.u32 %v1800, 16
  %v3106 = vor.u32 %v3104, %v3102
  %v3108 = vshll.u32 %v2001, 16
  %v3110 = vrot.slane %v3108, 1
  %v3111 = vsel %vm2011, %v3106, %v3110
  %v3113 = vshrl.u32 %v1801, 16
  %v3115 = vshll.u32 %v1801, 16
  %v3117 = vrot.slane %v3115, 1
  %v3118 = vor.u32 %v3113, %v3117
  %v3120 = vshll.u32 %v1802, 16
  %v3122 = vrot.slane %v3120, 1
  %v3123 = vsel %vm2011, %v3118, %v3122
  %v3124 = vshrl.u32 %v1802, 16
  %v3126 = vor.u32 %v3124, %v3122
  %v3128 = vshll.u32 %v2002, 16
  %v3130 = vrot.slane %v3128, 1
  %v3131 = vsel %vm2011, %v3126, %v3130
  %v3133 = vshrl.u32 %v1803, 16
  %v3135 = vshll.u32 %v1803, 16
  %v3137 = vrot.slane %v3135, 1
  %v3138 = vor.u32 %v3133, %v3137
  %v3140 = vshll.u32 %v1804, 16
  %v3142 = vrot.slane %v3140, 1
  %v3143 = vsel %vm2011, %v3138, %v3142
  %v3144 = vshrl.u32 %v1804, 16
  %v3146 = vor.u32 %v3144, %v3142
  %v3148 = vshll.u32 %v2003, 16
  %v3150 = vrot.slane %v3148, 1
  %v3151 = vsel %vm2011, %v3146, %v3150
  %v3153 = vshrl.u32 %v1805, 16
  %v3155 = vshll.u32 %v1805, 16
  %v3157 = vrot.slane %v3155, 1
  %v3158 = vor.u32 %v3153, %v3157
  %v3160 = vshll.u32 %v1806, 16
  %v3162 = vrot.slane %v3160, 1
  %v3163 = vsel %vm2011, %v3158, %v3162
  %v3164 = vshrl.u32 %v1806, 16
  %v3166 = vor.u32 %v3164, %v3162
  %v3168 = vshll.u32 %v2004, 16
  %v3170 = vrot.slane %v3168, 1
  %v3171 = vsel %vm2011, %v3166, %v3170
  %v3173 = vshrl.u32 %v1807, 16
  %v3175 = vshll.u32 %v1807, 16
  %v3177 = vrot.slane %v3175, 1
  %v3178 = vor.u32 %v3173, %v3177
  %v3180 = vshll.u32 %v1808, 16
  %v3182 = vrot.slane %v3180, 1
  %v3183 = vsel %vm2011, %v3178, %v3182
  %v3184 = vshrl.u32 %v1808, 16
  %v3186 = vor.u32 %v3184, %v3182
  %v3188 = vshll.u32 %v2005, 16
  %v3190 = vrot.slane %v3188, 1
  %v3191 = vsel %vm2011, %v3186, %v3190
  %v3193 = vshrl.u32 %v1809, 16
  %v3195 = vshll.u32 %v1809, 16
  %v3197 = vrot.slane %v3195, 1
  %v3198 = vor.u32 %v3193, %v3197
  %v3200 = vshll.u32 %v1810, 16
  %v3202 = vrot.slane %v3200, 1
  %v3203 = vsel %vm2011, %v3198, %v3202
  %v3204 = vshrl.u32 %v1810, 16
  %v3206 = vor.u32 %v3204, %v3202
  %v3208 = vshll.u32 %v2006, 16
  %v3210 = vrot.slane %v3208, 1
  %v3211 = vsel %vm2011, %v3206, %v3210
  %v3213 = vshrl.u32 %v1811, 16
  %v3215 = vshll.u32 %v1811, 16
  %v3217 = vrot.slane %v3215, 1
  %v3218 = vor.u32 %v3213, %v3217
  %v3220 = vshll.u32 %v1812, 16
  %v3222 = vrot.slane %v3220, 1
  %v3223 = vsel %vm2011, %v3218, %v3222
  %v3224 = vshrl.u32 %v1812, 16
  %v3226 = vor.u32 %v3224, %v3222
  %v3228 = vshll.u32 %v2007, 16
  %v3230 = vrot.slane %v3228, 1
  %v3231 = vsel %vm2011, %v3226, %v3230
  %v3233 = vshrl.u32 %v1813, 16
  %v3235 = vshll.u32 %v1813, 16
  %v3237 = vrot.slane %v3235, 1
  %v3238 = vor.u32 %v3233, %v3237
  %v3240 = vshll.u32 %v1814, 16
  %v3242 = vrot.slane %v3240, 1
  %v3243 = vsel %vm2011, %v3238, %v3242
  %v3244 = vshrl.u32 %v1814, 16
  %v3246 = vor.u32 %v3244, %v3242
  %v3248 = vshll.u32 %v2008, 16
  %v3250 = vrot.slane %v3248, 1
  %v3251 = vsel %vm2011, %v3246, %v3250
  %v3253 = vshrl.u32 %v1815, 16
  %v3255 = vshll.u32 %v1815, 16
  %v3257 = vrot.slane %v3255, 1
  %v3258 = vor.u32 %v3253, %v3257
  %v3260 = vshll.u32 %v1816, 16
  %v3262 = vrot.slane %v3260, 1
  %v3263 = vsel %vm2011, %v3258, %v3262
  %v3264 = vshrl.u32 %v1816, 16
  %v3266 = vor.u32 %v3264, %v3262
  %v3268 = vshll.u32 %v2009, 16
  %v3270 = vrot.slane %v3268, 1
  %v3271 = vsel %vm2011, %v3266, %v3270
  %v3273 = vshrl.u32 %v1817, 16
  %v3275 = vshll.u32 %v1817, 16
  %v3277 = vrot.slane %v3275, 1
  %v3278 = vor.u32 %v3273, %v3277
  %v3280 = vshll.u32 %v1818, 16
  %v3282 = vrot.slane %v3280, 1
  %v3283 = vsel %vm2011, %v3278, %v3282
  %v3284 = vshrl.u32 %v1818, 16
  %v3286 = vor.u32 %v3284, %v3282
  %v3288 = vshll.u32 %v2010, 16
  %v3290 = vrot.slane %v3288, 1
  %v3291 = vsel %vm2011, %v3286, %v3290
  %3292 = vrot.lane.b32.xlu0 %v2023, 4
  %v3293 = vpop.permute.xlu0 %3292
  %3294 = vrot.lane.b32.xlu0 %v2031, 4
  %v3295 = vpop.permute.xlu0 %3294
  %3296 = vrot.lane.b32.xlu0 %v2043, 4
  %v3297 = vpop.permute.xlu0 %3296
  %3298 = vrot.lane.b32.xlu0 %v2051, 4
  %v3299 = vpop.permute.xlu0 %3298
  %3300 = vrot.lane.b32.xlu0 %v2063, 4
  %v3301 = vpop.permute.xlu0 %3300
  %3302 = vrot.lane.b32.xlu0 %v2071, 4
  %v3303 = vpop.permute.xlu0 %3302
  %3304 = vrot.lane.b32.xlu0 %v2083, 4
  %v3305 = vpop.permute.xlu0 %3304
  %3306 = vrot.lane.b32.xlu0 %v2091, 4
  %v3307 = vpop.permute.xlu0 %3306
  %3308 = vrot.lane.b32.xlu0 %v2103, 4
  %v3309 = vpop.permute.xlu0 %3308
  %3310 = vrot.lane.b32.xlu0 %v2111, 4
  %v3311 = vpop.permute.xlu0 %3310
  %3312 = vrot.lane.b32.xlu0 %v2123, 4
  %v3313 = vpop.permute.xlu0 %3312
  %3314 = vrot.lane.b32.xlu0 %v2131, 4
  %v3315 = vpop.permute.xlu0 %3314
  %3316 = vrot.lane.b32.xlu0 %v2143, 4
  %v3317 = vpop.permute.xlu0 %3316
  %3318 = vrot.lane.b32.xlu0 %v2151, 4
  %v3319 = vpop.permute.xlu0 %3318
  %3320 = vrot.lane.b32.xlu0 %v2163, 4
  %v3321 = vpop.permute.xlu0 %3320
  %3322 = vrot.lane.b32.xlu0 %v2171, 4
  %v3323 = vpop.permute.xlu0 %3322
  %3324 = vrot.lane.b32.xlu0 %v2183, 4
  %v3325 = vpop.permute.xlu0 %3324
  %3326 = vrot.lane.b32.xlu0 %v2191, 4
  %v3327 = vpop.permute.xlu0 %3326
  %3328 = vrot.lane.b32.xlu0 %v2203, 4
  %v3329 = vpop.permute.xlu0 %3328
  %3330 = vrot.lane.b32.xlu0 %v2211, 4
  %v3331 = vpop.permute.xlu0 %3330
  %3332 = vrot.lane.b32.xlu0 %v2223, 4
  %v3333 = vpop.permute.xlu0 %3332
  %3334 = vrot.lane.b32.xlu0 %v2231, 4
  %v3335 = vpop.permute.xlu0 %3334
  %3336 = vrot.lane.b32.xlu0 %v2243, 4
  %v3337 = vpop.permute.xlu0 %3336
  %3338 = vrot.lane.b32.xlu0 %v2251, 4
  %v3339 = vpop.permute.xlu0 %3338
  %3340 = vrot.lane.b32.xlu0 %v2263, 4
  %v3341 = vpop.permute.xlu0 %3340
  %3342 = vrot.lane.b32.xlu0 %v2271, 4
  %v3343 = vpop.permute.xlu0 %3342
  %3344 = vrot.lane.b32.xlu0 %v2283, 4
  %v3345 = vpop.permute.xlu0 %3344
  %3346 = vrot.lane.b32.xlu0 %v2291, 4
  %v3347 = vpop.permute.xlu0 %3346
  %3348 = vrot.lane.b32.xlu0 %v2303, 4
  %v3349 = vpop.permute.xlu0 %3348
  %3350 = vrot.lane.b32.xlu0 %v2311, 4
  %v3351 = vpop.permute.xlu0 %3350
  %3352 = vrot.lane.b32.xlu0 %v2323, 4
  %v3353 = vpop.permute.xlu0 %3352
  %3354 = vrot.lane.b32.xlu0 %v2331, 4
  %v3355 = vpop.permute.xlu0 %3354
  %3356 = vrot.lane.b32.xlu0 %v2343, 4
  %v3357 = vpop.permute.xlu0 %3356
  %3358 = vrot.lane.b32.xlu0 %v2351, 4
  %v3359 = vpop.permute.xlu0 %3358
  %3360 = vrot.lane.b32.xlu0 %v2363, 4
  %v3361 = vpop.permute.xlu0 %3360
  %3362 = vrot.lane.b32.xlu0 %v2371, 4
  %v3363 = vpop.permute.xlu0 %3362
  %3364 = vrot.lane.b32.xlu0 %v2383, 4
  %v3365 = vpop.permute.xlu0 %3364
  %3366 = vrot.lane.b32.xlu0 %v2391, 4
  %v3367 = vpop.permute.xlu0 %3366
  %3368 = vrot.lane.b32.xlu0 %v2403, 4
  %v3369 = vpop.permute.xlu0 %3368
  %3370 = vrot.lane.b32.xlu0 %v2411, 4
  %v3371 = vpop.permute.xlu0 %3370
  %3372 = vrot.lane.b32.xlu0 %v2423, 4
  %v3373 = vpop.permute.xlu0 %3372
  %3374 = vrot.lane.b32.xlu0 %v2431, 4
  %v3375 = vpop.permute.xlu0 %3374
  %3376 = vrot.lane.b32.xlu0 %v2443, 4
  %v3377 = vpop.permute.xlu0 %3376
  %3378 = vrot.lane.b32.xlu0 %v2451, 4
  %v3379 = vpop.permute.xlu0 %3378
  %3380 = vrot.lane.b32.xlu0 %v2463, 4
  %v3381 = vpop.permute.xlu0 %3380
  %3382 = vrot.lane.b32.xlu0 %v2471, 4
  %v3383 = vpop.permute.xlu0 %3382
  %3384 = vrot.lane.b32.xlu0 %v2483, 4
  %v3385 = vpop.permute.xlu0 %3384
  %3386 = vrot.lane.b32.xlu0 %v2491, 4
  %v3387 = vpop.permute.xlu0 %3386
  %3388 = vrot.lane.b32.xlu0 %v2503, 4
  %v3389 = vpop.permute.xlu0 %3388
  %3390 = vrot.lane.b32.xlu0 %v2511, 4
  %v3391 = vpop.permute.xlu0 %3390
  %3392 = vrot.lane.b32.xlu0 %v2523, 4
  %v3393 = vpop.permute.xlu0 %3392
  %3394 = vrot.lane.b32.xlu0 %v2531, 4
  %v3395 = vpop.permute.xlu0 %3394
  %3396 = vrot.lane.b32.xlu0 %v2543, 4
  %v3397 = vpop.permute.xlu0 %3396
  %3398 = vrot.lane.b32.xlu0 %v2551, 4
  %v3399 = vpop.permute.xlu0 %3398
  %3400 = vrot.lane.b32.xlu0 %v2563, 4
  %v3401 = vpop.permute.xlu0 %3400
  %3402 = vrot.lane.b32.xlu0 %v2571, 4
  %v3403 = vpop.permute.xlu0 %3402
  %3404 = vrot.lane.b32.xlu0 %v2583, 4
  %v3405 = vpop.permute.xlu0 %3404
  %3406 = vrot.lane.b32.xlu0 %v2591, 4
  %v3407 = vpop.permute.xlu0 %3406
  %3408 = vrot.lane.b32.xlu0 %v2603, 4
  %v3409 = vpop.permute.xlu0 %3408
  %3410 = vrot.lane.b32.xlu0 %v2611, 4
  %v3411 = vpop.permute.xlu0 %3410
  %3412 = vrot.lane.b32.xlu0 %v2623, 4
  %v3413 = vpop.permute.xlu0 %3412
  %3414 = vrot.lane.b32.xlu0 %v2631, 4
  %v3415 = vpop.permute.xlu0 %3414
  %3416 = vrot.lane.b32.xlu0 %v2643, 4
  %v3417 = vpop.permute.xlu0 %3416
  %3418 = vrot.lane.b32.xlu0 %v2651, 4
  %v3419 = vpop.permute.xlu0 %3418
  %3420 = vrot.lane.b32.xlu0 %v2663, 4
  %v3421 = vpop.permute.xlu0 %3420
  %3422 = vrot.lane.b32.xlu0 %v2671, 4
  %v3423 = vpop.permute.xlu0 %3422
  %3424 = vrot.lane.b32.xlu0 %v2683, 4
  %v3425 = vpop.permute.xlu0 %3424
  %3426 = vrot.lane.b32.xlu0 %v2691, 4
  %v3427 = vpop.permute.xlu0 %3426
  %3428 = vrot.lane.b32.xlu0 %v2703, 4
  %v3429 = vpop.permute.xlu0 %3428
  %3430 = vrot.lane.b32.xlu0 %v2711, 4
  %v3431 = vpop.permute.xlu0 %3430
  %3432 = vrot.lane.b32.xlu0 %v2723, 4
  %v3433 = vpop.permute.xlu0 %3432
  %3434 = vrot.lane.b32.xlu0 %v2731, 4
  %v3435 = vpop.permute.xlu0 %3434
  %3436 = vrot.lane.b32.xlu0 %v2743, 4
  %v3437 = vpop.permute.xlu0 %3436
  %3438 = vrot.lane.b32.xlu0 %v2751, 4
  %v3439 = vpop.permute.xlu0 %3438
  %3440 = vrot.lane.b32.xlu0 %v2763, 4
  %v3441 = vpop.permute.xlu0 %3440
  %3442 = vrot.lane.b32.xlu0 %v2771, 4
  %v3443 = vpop.permute.xlu0 %3442
  %3444 = vrot.lane.b32.xlu0 %v2783, 4
  %v3445 = vpop.permute.xlu0 %3444
  %3446 = vrot.lane.b32.xlu0 %v2791, 4
  %v3447 = vpop.permute.xlu0 %3446
  %3448 = vrot.lane.b32.xlu0 %v2803, 4
  %v3449 = vpop.permute.xlu0 %3448
  %3450 = vrot.lane.b32.xlu0 %v2811, 4
  %v3451 = vpop.permute.xlu0 %3450
  %3452 = vrot.lane.b32.xlu0 %v2823, 4
  %v3453 = vpop.permute.xlu0 %3452
  %3454 = vrot.lane.b32.xlu0 %v2831, 4
  %v3455 = vpop.permute.xlu0 %3454
  %3456 = vrot.lane.b32.xlu0 %v2843, 4
  %v3457 = vpop.permute.xlu0 %3456
  %3458 = vrot.lane.b32.xlu0 %v2851, 4
  %v3459 = vpop.permute.xlu0 %3458
  %3460 = vrot.lane.b32.xlu0 %v2863, 4
  %v3461 = vpop.permute.xlu0 %3460
  %3462 = vrot.lane.b32.xlu0 %v2871, 4
  %v3463 = vpop.permute.xlu0 %3462
  %3464 = vrot.lane.b32.xlu0 %v2883, 4
  %v3465 = vpop.permute.xlu0 %3464
  %3466 = vrot.lane.b32.xlu0 %v2891, 4
  %v3467 = vpop.permute.xlu0 %3466
  %3468 = vrot.lane.b32.xlu0 %v2903, 4
  %v3469 = vpop.permute.xlu0 %3468
  %3470 = vrot.lane.b32.xlu0 %v2911, 4
  %v3471 = vpop.permute.xlu0 %3470
  %3472 = vrot.lane.b32.xlu0 %v2923, 4
  %v3473 = vpop.permute.xlu0 %3472
  %3474 = vrot.lane.b32.xlu0 %v2931, 4
  %v3475 = vpop.permute.xlu0 %3474
  %3476 = vrot.lane.b32.xlu0 %v2943, 4
  %v3477 = vpop.permute.xlu0 %3476
  %3478 = vrot.lane.b32.xlu0 %v2951, 4
  %v3479 = vpop.permute.xlu0 %3478
  %3480 = vrot.lane.b32.xlu0 %v2963, 4
  %v3481 = vpop.permute.xlu0 %3480
  %3482 = vrot.lane.b32.xlu0 %v2971, 4
  %v3483 = vpop.permute.xlu0 %3482
  %3484 = vrot.lane.b32.xlu0 %v2983, 4
  %v3485 = vpop.permute.xlu0 %3484
  %3486 = vrot.lane.b32.xlu0 %v2991, 4
  %v3487 = vpop.permute.xlu0 %3486
  %3488 = vrot.lane.b32.xlu0 %v3003, 4
  %v3489 = vpop.permute.xlu0 %3488
  %3490 = vrot.lane.b32.xlu0 %v3011, 4
  %v3491 = vpop.permute.xlu0 %3490
  %3492 = vrot.lane.b32.xlu0 %v3023, 4
  %v3493 = vpop.permute.xlu0 %3492
  %3494 = vrot.lane.b32.xlu0 %v3031, 4
  %v3495 = vpop.permute.xlu0 %3494
  %3496 = vrot.lane.b32.xlu0 %v3043, 4
  %v3497 = vpop.permute.xlu0 %3496
  %3498 = vrot.lane.b32.xlu0 %v3051, 4
  %v3499 = vpop.permute.xlu0 %3498
  %3500 = vrot.lane.b32.xlu0 %v3063, 4
  %v3501 = vpop.permute.xlu0 %3500
  %3502 = vrot.lane.b32.xlu0 %v3071, 4
  %v3503 = vpop.permute.xlu0 %3502
  %3504 = vrot.lane.b32.xlu0 %v3083, 4
  %v3505 = vpop.permute.xlu0 %3504
  %3506 = vrot.lane.b32.xlu0 %v3091, 4
  %v3507 = vpop.permute.xlu0 %3506
  %3508 = vrot.lane.b32.xlu0 %v3103, 4
  %v3509 = vpop.permute.xlu0 %3508
  %3510 = vrot.lane.b32.xlu0 %v3111, 4
  %v3511 = vpop.permute.xlu0 %3510
  %3512 = vrot.lane.b32.xlu0 %v3123, 4
  %v3513 = vpop.permute.xlu0 %3512
  %3514 = vrot.lane.b32.xlu0 %v3131, 4
  %v3515 = vpop.permute.xlu0 %3514
  %3516 = vrot.lane.b32.xlu0 %v3143, 4
  %v3517 = vpop.permute.xlu0 %3516
  %3518 = vrot.lane.b32.xlu0 %v3151, 4
  %v3519 = vpop.permute.xlu0 %3518
  %3520 = vrot.lane.b32.xlu0 %v3163, 4
  %v3521 = vpop.permute.xlu0 %3520
  %3522 = vrot.lane.b32.xlu0 %v3171, 4
  %v3523 = vpop.permute.xlu0 %3522
  %3524 = vrot.lane.b32.xlu0 %v3183, 4
  %v3525 = vpop.permute.xlu0 %3524
  %3526 = vrot.lane.b32.xlu0 %v3191, 4
  %v3527 = vpop.permute.xlu0 %3526
  %3528 = vrot.lane.b32.xlu0 %v3203, 4
  %v3529 = vpop.permute.xlu0 %3528
  %3530 = vrot.lane.b32.xlu0 %v3211, 4
  %v3531 = vpop.permute.xlu0 %3530
  %3532 = vrot.lane.b32.xlu0 %v3223, 4
  %v3533 = vpop.permute.xlu0 %3532
  %3534 = vrot.lane.b32.xlu0 %v3231, 4
  %v3535 = vpop.permute.xlu0 %3534
  %3536 = vrot.lane.b32.xlu0 %v3243, 4
  %v3537 = vpop.permute.xlu0 %3536
  %3538 = vrot.lane.b32.xlu0 %v3251, 4
  %v3539 = vpop.permute.xlu0 %3538
  %3540 = vrot.lane.b32.xlu0 %v3263, 4
  %v3541 = vpop.permute.xlu0 %3540
  %3542 = vrot.lane.b32.xlu0 %v3271, 4
  %v3543 = vpop.permute.xlu0 %3542
  %3544 = vrot.lane.b32.xlu0 %v3283, 4
  %v3545 = vpop.permute.xlu0 %3544
  %3546 = vrot.lane.b32.xlu0 %v3291, 4
  %v3547 = vpop.permute.xlu0 %3546
  %v3612 = vunpack.c.l.b16 %v339
  %v3613 = vunpack.c.l.b16 %v340
  %v3614 = vunpack.c.l.b16 %v341
  %v3615 = vunpack.c.l.b16 %v342
  %v3616 = vunpack.c.l.b16 %v343
  %v3617 = vunpack.c.l.b16 %v344
  %v3618 = vunpack.c.l.b16 %v345
  %v3619 = vunpack.c.l.b16 %v346
  %v3620 = vunpack.c.l.b16 %v347
  %v3621 = vunpack.c.l.b16 %v348
  %v3622 = vunpack.c.l.b16 %v349
  %v3623 = vunpack.c.l.b16 %v350
  %v3624 = vunpack.c.l.b16 %v351
  %v3625 = vunpack.c.l.b16 %v352
  %v3626 = vunpack.c.l.b16 %v353
  %v3627 = vunpack.c.l.b16 %v354
  %v3628 = vunpack.c.l.b16 %v355
  %v3629 = vunpack.c.l.b16 %v356
  %v3630 = vunpack.c.l.b16 %v357
  %v3631 = vunpack.c.l.b16 %v358
  %v3632 = vunpack.c.l.b16 %v359
  %v3633 = vunpack.c.l.b16 %v360
  %v3634 = vunpack.c.l.b16 %v361
  %v3635 = vunpack.c.l.b16 %v362
  %v3636 = vunpack.c.l.b16 %v363
  %v3637 = vunpack.c.l.b16 %v364
  %v3638 = vunpack.c.l.b16 %v365
  %v3639 = vunpack.c.l.b16 %v366
  %v3640 = vunpack.c.l.b16 %v367
  %v3641 = vunpack.c.l.b16 %v368
  %v3642 = vunpack.c.l.b16 %v369
  %v3643 = vunpack.c.l.b16 %v370
  %v3644 = vunpack.c.l.b16 %v371
  %v3645 = vunpack.c.l.b16 %v372
  %v3646 = vunpack.c.l.b16 %v373
  %v3647 = vunpack.c.l.b16 %v374
  %v3648 = vunpack.c.l.b16 %v375
  %v3649 = vunpack.c.l.b16 %v376
  %v3650 = vunpack.c.l.b16 %v377
  %v3651 = vunpack.c.l.b16 %v378
  %v3652 = vunpack.c.l.b16 %v379
  %v3653 = vunpack.c.l.b16 %v380
  %v3654 = vunpack.c.l.b16 %v381
  %v3655 = vunpack.c.l.b16 %v382
  %v3656 = vunpack.c.l.b16 %v383
  %v3657 = vunpack.c.l.b16 %v384
  %v3658 = vunpack.c.l.b16 %v385
  %v3659 = vunpack.c.l.b16 %v386
  %v3660 = vunpack.c.l.b16 %v387
  %v3661 = vunpack.c.l.b16 %v388
  %v3662 = vunpack.c.l.b16 %v389
  %v3663 = vunpack.c.l.b16 %v390
  %v3664 = vunpack.c.l.b16 %v391
  %v3665 = vunpack.c.l.b16 %v392
  %v3666 = vunpack.c.l.b16 %v393
  %v3667 = vunpack.c.l.b16 %v394
  %v3668 = vunpack.c.l.b16 %v395
  %v3669 = vunpack.c.l.b16 %v396
  %v3670 = vunpack.c.l.b16 %v397
  %v3671 = vunpack.c.l.b16 %v398
  %v3672 = vunpack.c.l.b16 %v399
  %v3673 = vunpack.c.l.b16 %v400
  %v3674 = vunpack.c.l.b16 %v401
  %v3675 = vunpack.c.l.b16 %v402
  %v3676 = vpack.c.b16 %v1436, %v3612
  %v3677 = vpack.c.b16 %v1440, %v3613
  %v3678 = vpack.c.b16 %v1444, %v3614
  %v3679 = vpack.c.b16 %v1448, %v3615
  %v3680 = vpack.c.b16 %v1452, %v3616
  %v3681 = vpack.c.b16 %v1456, %v3617
  %v3682 = vpack.c.b16 %v1460, %v3618
  %v3683 = vpack.c.b16 %v1464, %v3619
  %v3684 = vpack.c.b16 %v1468, %v3620
  %v3685 = vpack.c.b16 %v1472, %v3621
  %v3686 = vpack.c.b16 %v1476, %v3622
  %v3687 = vpack.c.b16 %v1480, %v3623
  %v3688 = vpack.c.b16 %v1484, %v3624
  %v3689 = vpack.c.b16 %v1488, %v3625
  %v3690 = vpack.c.b16 %v1492, %v3626
  %v3691 = vpack.c.b16 %v1496, %v3627
  %v3692 = vpack.c.b16 %v1500, %v3628
  %v3693 = vpack.c.b16 %v1504, %v3629
  %v3694 = vpack.c.b16 %v1508, %v3630
  %v3695 = vpack.c.b16 %v1512, %v3631
  %v3696 = vpack.c.b16 %v1516, %v3632
  %v3697 = vpack.c.b16 %v1520, %v3633
  %v3698 = vpack.c.b16 %v1524, %v3634
  %v3699 = vpack.c.b16 %v1528, %v3635
  %v3700 = vpack.c.b16 %v1532, %v3636
  %v3701 = vpack.c.b16 %v1536, %v3637
  %v3702 = vpack.c.b16 %v1540, %v3638
  %v3703 = vpack.c.b16 %v1544, %v3639
  %v3704 = vpack.c.b16 %v1548, %v3640
  %v3705 = vpack.c.b16 %v1552, %v3641
  %v3706 = vpack.c.b16 %v1556, %v3642
  %v3707 = vpack.c.b16 %v1560, %v3643
  %v3708 = vpack.c.b16 %v1564, %v3644
  %v3709 = vpack.c.b16 %v1568, %v3645
  %v3710 = vpack.c.b16 %v1572, %v3646
  %v3711 = vpack.c.b16 %v1576, %v3647
  %v3712 = vpack.c.b16 %v1580, %v3648
  %v3713 = vpack.c.b16 %v1584, %v3649
  %v3714 = vpack.c.b16 %v1588, %v3650
  %v3715 = vpack.c.b16 %v1592, %v3651
  %v3716 = vpack.c.b16 %v1596, %v3652
  %v3717 = vpack.c.b16 %v1600, %v3653
  %v3718 = vpack.c.b16 %v1604, %v3654
  %v3719 = vpack.c.b16 %v1608, %v3655
  %v3720 = vpack.c.b16 %v1612, %v3656
  %v3721 = vpack.c.b16 %v1616, %v3657
  %v3722 = vpack.c.b16 %v1620, %v3658
  %v3723 = vpack.c.b16 %v1624, %v3659
  %v3724 = vpack.c.b16 %v1628, %v3660
  %v3725 = vpack.c.b16 %v1632, %v3661
  %v3726 = vpack.c.b16 %v1636, %v3662
  %v3727 = vpack.c.b16 %v1640, %v3663
  %v3728 = vpack.c.b16 %v1644, %v3664
  %v3729 = vpack.c.b16 %v1648, %v3665
  %v3730 = vpack.c.b16 %v1652, %v3666
  %v3731 = vpack.c.b16 %v1656, %v3667
  %v3732 = vpack.c.b16 %v1660, %v3668
  %v3733 = vpack.c.b16 %v1664, %v3669
  %v3734 = vpack.c.b16 %v1668, %v3670
  %v3735 = vpack.c.b16 %v1672, %v3671
  %v3736 = vpack.c.b16 %v1676, %v3672
  %v3737 = vpack.c.b16 %v1680, %v3673
  %v3738 = vpack.c.b16 %v1684, %v3674
  %v3739 = vpack.c.b16 %v1688, %v3675
  %vm3740 = vcmask 1046528
  %v3741 = vrot.slane %v3676, 1
  %v3742 = vrot.slane %v1692, 1
  %v3743 = vsel %vm3740, %v3741, %v3742
  %v3744 = vrot.slane %v1947, 1
  %v3745 = vsel %vm3740, %v3742, %v3744
  %v3746 = vrot.slane %v3677, 1
  %v3747 = vrot.slane %v1694, 1
  %v3748 = vsel %vm3740, %v3746, %v3747
  %v3749 = vrot.slane %v1948, 1
  %v3750 = vsel %vm3740, %v3747, %v3749
  %v3751 = vrot.slane %v3678, 1
  %v3752 = vrot.slane %v1696, 1
  %v3753 = vsel %vm3740, %v3751, %v3752
  %v3754 = vrot.slane %v1949, 1
  %v3755 = vsel %vm3740, %v3752, %v3754
  %v3756 = vrot.slane %v3679, 1
  %v3757 = vrot.slane %v1698, 1
  %v3758 = vsel %vm3740, %v3756, %v3757
  %v3759 = vrot.slane %v1950, 1
  %v3760 = vsel %vm3740, %v3757, %v3759
  %v3761 = vrot.slane %v3680, 1
  %v3762 = vrot.slane %v1700, 1
  %v3763 = vsel %vm3740, %v3761, %v3762
  %v3764 = vrot.slane %v1951, 1
  %v3765 = vsel %vm3740, %v3762, %v3764
  %v3766 = vrot.slane %v3681, 1
  %v3767 = vrot.slane %v1702, 1
  %v3768 = vsel %vm3740, %v3766, %v3767
  %v3769 = vrot.slane %v1952, 1
  %v3770 = vsel %vm3740, %v3767, %v3769
  %v3771 = vrot.slane %v3682, 1
  %v3772 = vrot.slane %v1704, 1
  %v3773 = vsel %vm3740, %v3771, %v3772
  %v3774 = vrot.slane %v1953, 1
  %v3775 = vsel %vm3740, %v3772, %v3774
  %v3776 = vrot.slane %v3683, 1
  %v3777 = vrot.slane %v1706, 1
  %v3778 = vsel %vm3740, %v3776, %v3777
  %v3779 = vrot.slane %v1954, 1
  %v3780 = vsel %vm3740, %v3777, %v3779
  %v3781 = vrot.slane %v3684, 1
  %v3782 = vrot.slane %v1708, 1
  %v3783 = vsel %vm3740, %v3781, %v3782
  %v3784 = vrot.slane %v1955, 1
  %v3785 = vsel %vm3740, %v3782, %v3784
  %v3786 = vrot.slane %v3685, 1
  %v3787 = vrot.slane %v1710, 1
  %v3788 = vsel %vm3740, %v3786, %v3787
  %v3789 = vrot.slane %v1956, 1
  %v3790 = vsel %vm3740, %v3787, %v3789
  %v3791 = vrot.slane %v3686, 1
  %v3792 = vrot.slane %v1712, 1
  %v3793 = vsel %vm3740, %v3791, %v3792
  %v3794 = vrot.slane %v1957, 1
  %v3795 = vsel %vm3740, %v3792, %v3794
  %v3796 = vrot.slane %v3687, 1
  %v3797 = vrot.slane %v1714, 1
  %v3798 = vsel %vm3740, %v3796, %v3797
  %v3799 = vrot.slane %v1958, 1
  %v3800 = vsel %vm3740, %v3797, %v3799
  %v3801 = vrot.slane %v3688, 1
  %v3802 = vrot.slane %v1716, 1
  %v3803 = vsel %vm3740, %v3801, %v3802
  %v3804 = vrot.slane %v1959, 1
  %v3805 = vsel %vm3740, %v3802, %v3804
  %v3806 = vrot.slane %v3689, 1
  %v3807 = vrot.slane %v1718, 1
  %v3808 = vsel %vm3740, %v3806, %v3807
  %v3809 = vrot.slane %v1960, 1
  %v3810 = vsel %vm3740, %v3807, %v3809
  %v3811 = vrot.slane %v3690, 1
  %v3812 = vrot.slane %v1720, 1
  %v3813 = vsel %vm3740, %v3811, %v3812
  %v3814 = vrot.slane %v1961, 1
  %v3815 = vsel %vm3740, %v3812, %v3814
  %v3816 = vrot.slane %v3691, 1
  %v3817 = vrot.slane %v1722, 1
  %v3818 = vsel %vm3740, %v3816, %v3817
  %v3819 = vrot.slane %v1962, 1
  %v3820 = vsel %vm3740, %v3817, %v3819
  %v3821 = vrot.slane %v3692, 1
  %v3822 = vrot.slane %v1724, 1
  %v3823 = vsel %vm3740, %v3821, %v3822
  %v3824 = vrot.slane %v1963, 1
  %v3825 = vsel %vm3740, %v3822, %v3824
  %v3826 = vrot.slane %v3693, 1
  %v3827 = vrot.slane %v1726, 1
  %v3828 = vsel %vm3740, %v3826, %v3827
  %v3829 = vrot.slane %v1964, 1
  %v3830 = vsel %vm3740, %v3827, %v3829
  %v3831 = vrot.slane %v3694, 1
  %v3832 = vrot.slane %v1728, 1
  %v3833 = vsel %vm3740, %v3831, %v3832
  %v3834 = vrot.slane %v1965, 1
  %v3835 = vsel %vm3740, %v3832, %v3834
  %v3836 = vrot.slane %v3695, 1
  %v3837 = vrot.slane %v1730, 1
  %v3838 = vsel %vm3740, %v3836, %v3837
  %v3839 = vrot.slane %v1966, 1
  %v3840 = vsel %vm3740, %v3837, %v3839
  %v3841 = vrot.slane %v3696, 1
  %v3842 = vrot.slane %v1732, 1
  %v3843 = vsel %vm3740, %v3841, %v3842
  %v3844 = vrot.slane %v1967, 1
  %v3845 = vsel %vm3740, %v3842, %v3844
  %v3846 = vrot.slane %v3697, 1
  %v3847 = vrot.slane %v1734, 1
  %v3848 = vsel %vm3740, %v3846, %v3847
  %v3849 = vrot.slane %v1968, 1
  %v3850 = vsel %vm3740, %v3847, %v3849
  %v3851 = vrot.slane %v3698, 1
  %v3852 = vrot.slane %v1736, 1
  %v3853 = vsel %vm3740, %v3851, %v3852
  %v3854 = vrot.slane %v1969, 1
  %v3855 = vsel %vm3740, %v3852, %v3854
  %v3856 = vrot.slane %v3699, 1
  %v3857 = vrot.slane %v1738, 1
  %v3858 = vsel %vm3740, %v3856, %v3857
  %v3859 = vrot.slane %v1970, 1
  %v3860 = vsel %vm3740, %v3857, %v3859
  %v3861 = vrot.slane %v3700, 1
  %v3862 = vrot.slane %v1740, 1
  %v3863 = vsel %vm3740, %v3861, %v3862
  %v3864 = vrot.slane %v1971, 1
  %v3865 = vsel %vm3740, %v3862, %v3864
  %v3866 = vrot.slane %v3701, 1
  %v3867 = vrot.slane %v1742, 1
  %v3868 = vsel %vm3740, %v3866, %v3867
  %v3869 = vrot.slane %v1972, 1
  %v3870 = vsel %vm3740, %v3867, %v3869
  %v3871 = vrot.slane %v3702, 1
  %v3872 = vrot.slane %v1744, 1
  %v3873 = vsel %vm3740, %v3871, %v3872
  %v3874 = vrot.slane %v1973, 1
  %v3875 = vsel %vm3740, %v3872, %v3874
  %v3876 = vrot.slane %v3703, 1
  %v3877 = vrot.slane %v1746, 1
  %v3878 = vsel %vm3740, %v3876, %v3877
  %v3879 = vrot.slane %v1974, 1
  %v3880 = vsel %vm3740, %v3877, %v3879
  %v3881 = vrot.slane %v3704, 1
  %v3882 = vrot.slane %v1748, 1
  %v3883 = vsel %vm3740, %v3881, %v3882
  %v3884 = vrot.slane %v1975, 1
  %v3885 = vsel %vm3740, %v3882, %v3884
  %v3886 = vrot.slane %v3705, 1
  %v3887 = vrot.slane %v1750, 1
  %v3888 = vsel %vm3740, %v3886, %v3887
  %v3889 = vrot.slane %v1976, 1
  %v3890 = vsel %vm3740, %v3887, %v3889
  %v3891 = vrot.slane %v3706, 1
  %v3892 = vrot.slane %v1752, 1
  %v3893 = vsel %vm3740, %v3891, %v3892
  %v3894 = vrot.slane %v1977, 1
  %v3895 = vsel %vm3740, %v3892, %v3894
  %v3896 = vrot.slane %v3707, 1
  %v3897 = vrot.slane %v1754, 1
  %v3898 = vsel %vm3740, %v3896, %v3897
  %v3899 = vrot.slane %v1978, 1
  %v3900 = vsel %vm3740, %v3897, %v3899
  %v3901 = vrot.slane %v3708, 1
  %v3902 = vrot.slane %v1756, 1
  %v3903 = vsel %vm3740, %v3901, %v3902
  %v3904 = vrot.slane %v1979, 1
  %v3905 = vsel %vm3740, %v3902, %v3904
  %v3906 = vrot.slane %v3709, 1
  %v3907 = vrot.slane %v1758, 1
  %v3908 = vsel %vm3740, %v3906, %v3907
  %v3909 = vrot.slane %v1980, 1
  %v3910 = vsel %vm3740, %v3907, %v3909
  %v3911 = vrot.slane %v3710, 1
  %v3912 = vrot.slane %v1760, 1
  %v3913 = vsel %vm3740, %v3911, %v3912
  %v3914 = vrot.slane %v1981, 1
  %v3915 = vsel %vm3740, %v3912, %v3914
  %v3916 = vrot.slane %v3711, 1
  %v3917 = vrot.slane %v1762, 1
  %v3918 = vsel %vm3740, %v3916, %v3917
  %v3919 = vrot.slane %v1982, 1
  %v3920 = vsel %vm3740, %v3917, %v3919
  %v3921 = vrot.slane %v3712, 1
  %v3922 = vrot.slane %v1764, 1
  %v3923 = vsel %vm3740, %v3921, %v3922
  %v3924 = vrot.slane %v1983, 1
  %v3925 = vsel %vm3740, %v3922, %v3924
  %v3926 = vrot.slane %v3713, 1
  %v3927 = vrot.slane %v1766, 1
  %v3928 = vsel %vm3740, %v3926, %v3927
  %v3929 = vrot.slane %v1984, 1
  %v3930 = vsel %vm3740, %v3927, %v3929
  %v3931 = vrot.slane %v3714, 1
  %v3932 = vrot.slane %v1768, 1
  %v3933 = vsel %vm3740, %v3931, %v3932
  %v3934 = vrot.slane %v1985, 1
  %v3935 = vsel %vm3740, %v3932, %v3934
  %v3936 = vrot.slane %v3715, 1
  %v3937 = vrot.slane %v1770, 1
  %v3938 = vsel %vm3740, %v3936, %v3937
  %v3939 = vrot.slane %v1986, 1
  %v3940 = vsel %vm3740, %v3937, %v3939
  %v3941 = vrot.slane %v3716, 1
  %v3942 = vrot.slane %v1772, 1
  %v3943 = vsel %vm3740, %v3941, %v3942
  %v3944 = vrot.slane %v1987, 1
  %v3945 = vsel %vm3740, %v3942, %v3944
  %v3946 = vrot.slane %v3717, 1
  %v3947 = vrot.slane %v1774, 1
  %v3948 = vsel %vm3740, %v3946, %v3947
  %v3949 = vrot.slane %v1988, 1
  %v3950 = vsel %vm3740, %v3947, %v3949
  %v3951 = vrot.slane %v3718, 1
  %v3952 = vrot.slane %v1776, 1
  %v3953 = vsel %vm3740, %v3951, %v3952
  %v3954 = vrot.slane %v1989, 1
  %v3955 = vsel %vm3740, %v3952, %v3954
  %v3956 = vrot.slane %v3719, 1
  %v3957 = vrot.slane %v1778, 1
  %v3958 = vsel %vm3740, %v3956, %v3957
  %v3959 = vrot.slane %v1990, 1
  %v3960 = vsel %vm3740, %v3957, %v3959
  %v3961 = vrot.slane %v3720, 1
  %v3962 = vrot.slane %v1780, 1
  %v3963 = vsel %vm3740, %v3961, %v3962
  %v3964 = vrot.slane %v1991, 1
  %v3965 = vsel %vm3740, %v3962, %v3964
  %v3966 = vrot.slane %v3721, 1
  %v3967 = vrot.slane %v1782, 1
  %v3968 = vsel %vm3740, %v3966, %v3967
  %v3969 = vrot.slane %v1992, 1
  %v3970 = vsel %vm3740, %v3967, %v3969
  %v3971 = vrot.slane %v3722, 1
  %v3972 = vrot.slane %v1784, 1
  %v3973 = vsel %vm3740, %v3971, %v3972
  %v3974 = vrot.slane %v1993, 1
  %v3975 = vsel %vm3740, %v3972, %v3974
  %v3976 = vrot.slane %v3723, 1
  %v3977 = vrot.slane %v1786, 1
  %v3978 = vsel %vm3740, %v3976, %v3977
  %v3979 = vrot.slane %v1994, 1
  %v3980 = vsel %vm3740, %v3977, %v3979
  %v3981 = vrot.slane %v3724, 1
  %v3982 = vrot.slane %v1788, 1
  %v3983 = vsel %vm3740, %v3981, %v3982
  %v3984 = vrot.slane %v1995, 1
  %v3985 = vsel %vm3740, %v3982, %v3984
  %v3986 = vrot.slane %v3725, 1
  %v3987 = vrot.slane %v1790, 1
  %v3988 = vsel %vm3740, %v3986, %v3987
  %v3989 = vrot.slane %v1996, 1
  %v3990 = vsel %vm3740, %v3987, %v3989
  %v3991 = vrot.slane %v3726, 1
  %v3992 = vrot.slane %v1792, 1
  %v3993 = vsel %vm3740, %v3991, %v3992
  %v3994 = vrot.slane %v1997, 1
  %v3995 = vsel %vm3740, %v3992, %v3994
  %v3996 = vrot.slane %v3727, 1
  %v3997 = vrot.slane %v1794, 1
  %v3998 = vsel %vm3740, %v3996, %v3997
  %v3999 = vrot.slane %v1998, 1
  %v4000 = vsel %vm3740, %v3997, %v3999
  %v4001 = vrot.slane %v3728, 1
  %v4002 = vrot.slane %v1796, 1
  %v4003 = vsel %vm3740, %v4001, %v4002
  %v4004 = vrot.slane %v1999, 1
  %v4005 = vsel %vm3740, %v4002, %v4004
  %v4006 = vrot.slane %v3729, 1
  %v4007 = vrot.slane %v1798, 1
  %v4008 = vsel %vm3740, %v4006, %v4007
  %v4009 = vrot.slane %v2000, 1
  %v4010 = vsel %vm3740, %v4007, %v4009
  %v4011 = vrot.slane %v3730, 1
  %v4012 = vrot.slane %v1800, 1
  %v4013 = vsel %vm3740, %v4011, %v4012
  %v4014 = vrot.slane %v2001, 1
  %v4015 = vsel %vm3740, %v4012, %v4014
  %v4016 = vrot.slane %v3731, 1
  %v4017 = vrot.slane %v1802, 1
  %v4018 = vsel %vm3740, %v4016, %v4017
  %v4019 = vrot.slane %v2002, 1
  %v4020 = vsel %vm3740, %v4017, %v4019
  %v4021 = vrot.slane %v3732, 1
  %v4022 = vrot.slane %v1804, 1
  %v4023 = vsel %vm3740, %v4021, %v4022
  %v4024 = vrot.slane %v2003, 1
  %v4025 = vsel %vm3740, %v4022, %v4024
  %v4026 = vrot.slane %v3733, 1
  %v4027 = vrot.slane %v1806, 1
  %v4028 = vsel %vm3740, %v4026, %v4027
  %v4029 = vrot.slane %v2004, 1
  %v4030 = vsel %vm3740, %v4027, %v4029
  %v4031 = vrot.slane %v3734, 1
  %v4032 = vrot.slane %v1808, 1
  %v4033 = vsel %vm3740, %v4031, %v4032
  %v4034 = vrot.slane %v2005, 1
  %v4035 = vsel %vm3740, %v4032, %v4034
  %v4036 = vrot.slane %v3735, 1
  %v4037 = vrot.slane %v1810, 1
  %v4038 = vsel %vm3740, %v4036, %v4037
  %v4039 = vrot.slane %v2006, 1
  %v4040 = vsel %vm3740, %v4037, %v4039
  %v4041 = vrot.slane %v3736, 1
  %v4042 = vrot.slane %v1812, 1
  %v4043 = vsel %vm3740, %v4041, %v4042
  %v4044 = vrot.slane %v2007, 1
  %v4045 = vsel %vm3740, %v4042, %v4044
  %v4046 = vrot.slane %v3737, 1
  %v4047 = vrot.slane %v1814, 1
  %v4048 = vsel %vm3740, %v4046, %v4047
  %v4049 = vrot.slane %v2008, 1
  %v4050 = vsel %vm3740, %v4047, %v4049
  %v4051 = vrot.slane %v3738, 1
  %v4052 = vrot.slane %v1816, 1
  %v4053 = vsel %vm3740, %v4051, %v4052
  %v4054 = vrot.slane %v2009, 1
  %v4055 = vsel %vm3740, %v4052, %v4054
  %v4056 = vrot.slane %v3739, 1
  %v4057 = vrot.slane %v1818, 1
  %v4058 = vsel %vm3740, %v4056, %v4057
  %v4059 = vrot.slane %v2010, 1
  %v4060 = vsel %vm3740, %v4057, %v4059
  %4061 = vrot.lane.b32.xlu0 %v3743, 8
  %v4062 = vpop.permute.xlu0 %4061
  %4063 = vrot.lane.b32.xlu0 %v3745, 8
  %v4064 = vpop.permute.xlu0 %4063
  %4065 = vrot.lane.b32.xlu0 %v3748, 8
  %v4066 = vpop.permute.xlu0 %4065
  %4067 = vrot.lane.b32.xlu0 %v3750, 8
  %v4068 = vpop.permute.xlu0 %4067
  %4069 = vrot.lane.b32.xlu0 %v3753, 8
  %v4070 = vpop.permute.xlu0 %4069
  %4071 = vrot.lane.b32.xlu0 %v3755, 8
  %v4072 = vpop.permute.xlu0 %4071
  %4073 = vrot.lane.b32.xlu0 %v3758, 8
  %v4074 = vpop.permute.xlu0 %4073
  %4075 = vrot.lane.b32.xlu0 %v3760, 8
  %v4076 = vpop.permute.xlu0 %4075
  %4077 = vrot.lane.b32.xlu0 %v3763, 8
  %v4078 = vpop.permute.xlu0 %4077
  %4079 = vrot.lane.b32.xlu0 %v3765, 8
  %v4080 = vpop.permute.xlu0 %4079
  %4081 = vrot.lane.b32.xlu0 %v3768, 8
  %v4082 = vpop.permute.xlu0 %4081
  %4083 = vrot.lane.b32.xlu0 %v3770, 8
  %v4084 = vpop.permute.xlu0 %4083
  %4085 = vrot.lane.b32.xlu0 %v3773, 8
  %v4086 = vpop.permute.xlu0 %4085
  %4087 = vrot.lane.b32.xlu0 %v3775, 8
  %v4088 = vpop.permute.xlu0 %4087
  %4089 = vrot.lane.b32.xlu0 %v3778, 8
  %v4090 = vpop.permute.xlu0 %4089
  %4091 = vrot.lane.b32.xlu0 %v3780, 8
  %v4092 = vpop.permute.xlu0 %4091
  %4093 = vrot.lane.b32.xlu0 %v3783, 8
  %v4094 = vpop.permute.xlu0 %4093
  %4095 = vrot.lane.b32.xlu0 %v3785, 8
  %v4096 = vpop.permute.xlu0 %4095
  %4097 = vrot.lane.b32.xlu0 %v3788, 8
  %v4098 = vpop.permute.xlu0 %4097
  %4099 = vrot.lane.b32.xlu0 %v3790, 8
  %v4100 = vpop.permute.xlu0 %4099
  %4101 = vrot.lane.b32.xlu0 %v3793, 8
  %v4102 = vpop.permute.xlu0 %4101
  %4103 = vrot.lane.b32.xlu0 %v3795, 8
  %v4104 = vpop.permute.xlu0 %4103
  %4105 = vrot.lane.b32.xlu0 %v3798, 8
  %v4106 = vpop.permute.xlu0 %4105
  %4107 = vrot.lane.b32.xlu0 %v3800, 8
  %v4108 = vpop.permute.xlu0 %4107
  %4109 = vrot.lane.b32.xlu0 %v3803, 8
  %v4110 = vpop.permute.xlu0 %4109
  %4111 = vrot.lane.b32.xlu0 %v3805, 8
  %v4112 = vpop.permute.xlu0 %4111
  %4113 = vrot.lane.b32.xlu0 %v3808, 8
  %v4114 = vpop.permute.xlu0 %4113
  %4115 = vrot.lane.b32.xlu0 %v3810, 8
  %v4116 = vpop.permute.xlu0 %4115
  %4117 = vrot.lane.b32.xlu0 %v3813, 8
  %v4118 = vpop.permute.xlu0 %4117
  %4119 = vrot.lane.b32.xlu0 %v3815, 8
  %v4120 = vpop.permute.xlu0 %4119
  %4121 = vrot.lane.b32.xlu0 %v3818, 8
  %v4122 = vpop.permute.xlu0 %4121
  %4123 = vrot.lane.b32.xlu0 %v3820, 8
  %v4124 = vpop.permute.xlu0 %4123
  %4125 = vrot.lane.b32.xlu0 %v3823, 8
  %v4126 = vpop.permute.xlu0 %4125
  %4127 = vrot.lane.b32.xlu0 %v3825, 8
  %v4128 = vpop.permute.xlu0 %4127
  %4129 = vrot.lane.b32.xlu0 %v3828, 8
  %v4130 = vpop.permute.xlu0 %4129
  %4131 = vrot.lane.b32.xlu0 %v3830, 8
  %v4132 = vpop.permute.xlu0 %4131
  %4133 = vrot.lane.b32.xlu0 %v3833, 8
  %v4134 = vpop.permute.xlu0 %4133
  %4135 = vrot.lane.b32.xlu0 %v3835, 8
  %v4136 = vpop.permute.xlu0 %4135
  %4137 = vrot.lane.b32.xlu0 %v3838, 8
  %v4138 = vpop.permute.xlu0 %4137
  %4139 = vrot.lane.b32.xlu0 %v3840, 8
  %v4140 = vpop.permute.xlu0 %4139
  %4141 = vrot.lane.b32.xlu0 %v3843, 8
  %v4142 = vpop.permute.xlu0 %4141
  %4143 = vrot.lane.b32.xlu0 %v3845, 8
  %v4144 = vpop.permute.xlu0 %4143
  %4145 = vrot.lane.b32.xlu0 %v3848, 8
  %v4146 = vpop.permute.xlu0 %4145
  %4147 = vrot.lane.b32.xlu0 %v3850, 8
  %v4148 = vpop.permute.xlu0 %4147
  %4149 = vrot.lane.b32.xlu0 %v3853, 8
  %v4150 = vpop.permute.xlu0 %4149
  %4151 = vrot.lane.b32.xlu0 %v3855, 8
  %v4152 = vpop.permute.xlu0 %4151
  %4153 = vrot.lane.b32.xlu0 %v3858, 8
  %v4154 = vpop.permute.xlu0 %4153
  %4155 = vrot.lane.b32.xlu0 %v3860, 8
  %v4156 = vpop.permute.xlu0 %4155
  %4157 = vrot.lane.b32.xlu0 %v3863, 8
  %v4158 = vpop.permute.xlu0 %4157
  %4159 = vrot.lane.b32.xlu0 %v3865, 8
  %v4160 = vpop.permute.xlu0 %4159
  %4161 = vrot.lane.b32.xlu0 %v3868, 8
  %v4162 = vpop.permute.xlu0 %4161
  %4163 = vrot.lane.b32.xlu0 %v3870, 8
  %v4164 = vpop.permute.xlu0 %4163
  %4165 = vrot.lane.b32.xlu0 %v3873, 8
  %v4166 = vpop.permute.xlu0 %4165
  %4167 = vrot.lane.b32.xlu0 %v3875, 8
  %v4168 = vpop.permute.xlu0 %4167
  %4169 = vrot.lane.b32.xlu0 %v3878, 8
  %v4170 = vpop.permute.xlu0 %4169
  %4171 = vrot.lane.b32.xlu0 %v3880, 8
  %v4172 = vpop.permute.xlu0 %4171
  %4173 = vrot.lane.b32.xlu0 %v3883, 8
  %v4174 = vpop.permute.xlu0 %4173
  %4175 = vrot.lane.b32.xlu0 %v3885, 8
  %v4176 = vpop.permute.xlu0 %4175
  %4177 = vrot.lane.b32.xlu0 %v3888, 8
  %v4178 = vpop.permute.xlu0 %4177
  %4179 = vrot.lane.b32.xlu0 %v3890, 8
  %v4180 = vpop.permute.xlu0 %4179
  %4181 = vrot.lane.b32.xlu0 %v3893, 8
  %v4182 = vpop.permute.xlu0 %4181
  %4183 = vrot.lane.b32.xlu0 %v3895, 8
  %v4184 = vpop.permute.xlu0 %4183
  %4185 = vrot.lane.b32.xlu0 %v3898, 8
  %v4186 = vpop.permute.xlu0 %4185
  %4187 = vrot.lane.b32.xlu0 %v3900, 8
  %v4188 = vpop.permute.xlu0 %4187
  %4189 = vrot.lane.b32.xlu0 %v3903, 8
  %v4190 = vpop.permute.xlu0 %4189
  %4191 = vrot.lane.b32.xlu0 %v3905, 8
  %v4192 = vpop.permute.xlu0 %4191
  %4193 = vrot.lane.b32.xlu0 %v3908, 8
  %v4194 = vpop.permute.xlu0 %4193
  %4195 = vrot.lane.b32.xlu0 %v3910, 8
  %v4196 = vpop.permute.xlu0 %4195
  %4197 = vrot.lane.b32.xlu0 %v3913, 8
  %v4198 = vpop.permute.xlu0 %4197
  %4199 = vrot.lane.b32.xlu0 %v3915, 8
  %v4200 = vpop.permute.xlu0 %4199
  %4201 = vrot.lane.b32.xlu0 %v3918, 8
  %v4202 = vpop.permute.xlu0 %4201
  %4203 = vrot.lane.b32.xlu0 %v3920, 8
  %v4204 = vpop.permute.xlu0 %4203
  %4205 = vrot.lane.b32.xlu0 %v3923, 8
  %v4206 = vpop.permute.xlu0 %4205
  %4207 = vrot.lane.b32.xlu0 %v3925, 8
  %v4208 = vpop.permute.xlu0 %4207
  %4209 = vrot.lane.b32.xlu0 %v3928, 8
  %v4210 = vpop.permute.xlu0 %4209
  %4211 = vrot.lane.b32.xlu0 %v3930, 8
  %v4212 = vpop.permute.xlu0 %4211
  %4213 = vrot.lane.b32.xlu0 %v3933, 8
  %v4214 = vpop.permute.xlu0 %4213
  %4215 = vrot.lane.b32.xlu0 %v3935, 8
  %v4216 = vpop.permute.xlu0 %4215
  %4217 = vrot.lane.b32.xlu0 %v3938, 8
  %v4218 = vpop.permute.xlu0 %4217
  %4219 = vrot.lane.b32.xlu0 %v3940, 8
  %v4220 = vpop.permute.xlu0 %4219
  %4221 = vrot.lane.b32.xlu0 %v3943, 8
  %v4222 = vpop.permute.xlu0 %4221
  %4223 = vrot.lane.b32.xlu0 %v3945, 8
  %v4224 = vpop.permute.xlu0 %4223
  %4225 = vrot.lane.b32.xlu0 %v3948, 8
  %v4226 = vpop.permute.xlu0 %4225
  %4227 = vrot.lane.b32.xlu0 %v3950, 8
  %v4228 = vpop.permute.xlu0 %4227
  %4229 = vrot.lane.b32.xlu0 %v3953, 8
  %v4230 = vpop.permute.xlu0 %4229
  %4231 = vrot.lane.b32.xlu0 %v3955, 8
  %v4232 = vpop.permute.xlu0 %4231
  %4233 = vrot.lane.b32.xlu0 %v3958, 8
  %v4234 = vpop.permute.xlu0 %4233
  %4235 = vrot.lane.b32.xlu0 %v3960, 8
  %v4236 = vpop.permute.xlu0 %4235
  %4237 = vrot.lane.b32.xlu0 %v3963, 8
  %v4238 = vpop.permute.xlu0 %4237
  %4239 = vrot.lane.b32.xlu0 %v3965, 8
  %v4240 = vpop.permute.xlu0 %4239
  %4241 = vrot.lane.b32.xlu0 %v3968, 8
  %v4242 = vpop.permute.xlu0 %4241
  %4243 = vrot.lane.b32.xlu0 %v3970, 8
  %v4244 = vpop.permute.xlu0 %4243
  %4245 = vrot.lane.b32.xlu0 %v3973, 8
  %v4246 = vpop.permute.xlu0 %4245
  %4247 = vrot.lane.b32.xlu0 %v3975, 8
  %v4248 = vpop.permute.xlu0 %4247
  %4249 = vrot.lane.b32.xlu0 %v3978, 8
  %v4250 = vpop.permute.xlu0 %4249
  %4251 = vrot.lane.b32.xlu0 %v3980, 8
  %v4252 = vpop.permute.xlu0 %4251
  %4253 = vrot.lane.b32.xlu0 %v3983, 8
  %v4254 = vpop.permute.xlu0 %4253
  %4255 = vrot.lane.b32.xlu0 %v3985, 8
  %v4256 = vpop.permute.xlu0 %4255
  %4257 = vrot.lane.b32.xlu0 %v3988, 8
  %v4258 = vpop.permute.xlu0 %4257
  %4259 = vrot.lane.b32.xlu0 %v3990, 8
  %v4260 = vpop.permute.xlu0 %4259
  %4261 = vrot.lane.b32.xlu0 %v3993, 8
  %v4262 = vpop.permute.xlu0 %4261
  %4263 = vrot.lane.b32.xlu0 %v3995, 8
  %v4264 = vpop.permute.xlu0 %4263
  %4265 = vrot.lane.b32.xlu0 %v3998, 8
  %v4266 = vpop.permute.xlu0 %4265
  %4267 = vrot.lane.b32.xlu0 %v4000, 8
  %v4268 = vpop.permute.xlu0 %4267
  %4269 = vrot.lane.b32.xlu0 %v4003, 8
  %v4270 = vpop.permute.xlu0 %4269
  %4271 = vrot.lane.b32.xlu0 %v4005, 8
  %v4272 = vpop.permute.xlu0 %4271
  %4273 = vrot.lane.b32.xlu0 %v4008, 8
  %v4274 = vpop.permute.xlu0 %4273
  %4275 = vrot.lane.b32.xlu0 %v4010, 8
  %v4276 = vpop.permute.xlu0 %4275
  %4277 = vrot.lane.b32.xlu0 %v4013, 8
  %v4278 = vpop.permute.xlu0 %4277
  %4279 = vrot.lane.b32.xlu0 %v4015, 8
  %v4280 = vpop.permute.xlu0 %4279
  %4281 = vrot.lane.b32.xlu0 %v4018, 8
  %v4282 = vpop.permute.xlu0 %4281
  %4283 = vrot.lane.b32.xlu0 %v4020, 8
  %v4284 = vpop.permute.xlu0 %4283
  %4285 = vrot.lane.b32.xlu0 %v4023, 8
  %v4286 = vpop.permute.xlu0 %4285
  %4287 = vrot.lane.b32.xlu0 %v4025, 8
  %v4288 = vpop.permute.xlu0 %4287
  %4289 = vrot.lane.b32.xlu0 %v4028, 8
  %v4290 = vpop.permute.xlu0 %4289
  %4291 = vrot.lane.b32.xlu0 %v4030, 8
  %v4292 = vpop.permute.xlu0 %4291
  %4293 = vrot.lane.b32.xlu0 %v4033, 8
  %v4294 = vpop.permute.xlu0 %4293
  %4295 = vrot.lane.b32.xlu0 %v4035, 8
  %v4296 = vpop.permute.xlu0 %4295
  %4297 = vrot.lane.b32.xlu0 %v4038, 8
  %v4298 = vpop.permute.xlu0 %4297
  %4299 = vrot.lane.b32.xlu0 %v4040, 8
  %v4300 = vpop.permute.xlu0 %4299
  %4301 = vrot.lane.b32.xlu0 %v4043, 8
  %v4302 = vpop.permute.xlu0 %4301
  %4303 = vrot.lane.b32.xlu0 %v4045, 8
  %v4304 = vpop.permute.xlu0 %4303
  %4305 = vrot.lane.b32.xlu0 %v4048, 8
  %v4306 = vpop.permute.xlu0 %4305
  %4307 = vrot.lane.b32.xlu0 %v4050, 8
  %v4308 = vpop.permute.xlu0 %4307
  %4309 = vrot.lane.b32.xlu0 %v4053, 8
  %v4310 = vpop.permute.xlu0 %4309
  %4311 = vrot.lane.b32.xlu0 %v4055, 8
  %v4312 = vpop.permute.xlu0 %4311
  %4313 = vrot.lane.b32.xlu0 %v4058, 8
  %v4314 = vpop.permute.xlu0 %4313
  %4315 = vrot.lane.b32.xlu0 %v4060, 8
  %v4316 = vpop.permute.xlu0 %4315
  %v4573 = vunpack.c.l.b16 %v407
  %v4574 = vunpack.c.l.b16 %v408
  %v4575 = vunpack.c.l.b16 %v409
  %v4576 = vunpack.c.l.b16 %v410
  %v4577 = vunpack.c.l.b16 %v411
  %v4578 = vunpack.c.l.b16 %v412
  %v4579 = vunpack.c.l.b16 %v413
  %v4580 = vunpack.c.l.b16 %v414
  %v4581 = vunpack.c.l.b16 %v415
  %v4582 = vunpack.c.l.b16 %v416
  %v4583 = vunpack.c.l.b16 %v417
  %v4584 = vunpack.c.l.b16 %v418
  %v4585 = vunpack.c.l.b16 %v419
  %v4586 = vunpack.c.l.b16 %v420
  %v4587 = vunpack.c.l.b16 %v421
  %v4588 = vunpack.c.l.b16 %v422
  %v4589 = vunpack.c.l.b16 %v423
  %v4590 = vunpack.c.l.b16 %v424
  %v4591 = vunpack.c.l.b16 %v425
  %v4592 = vunpack.c.l.b16 %v426
  %v4593 = vunpack.c.l.b16 %v427
  %v4594 = vunpack.c.l.b16 %v428
  %v4595 = vunpack.c.l.b16 %v429
  %v4596 = vunpack.c.l.b16 %v430
  %v4597 = vunpack.c.l.b16 %v431
  %v4598 = vunpack.c.l.b16 %v432
  %v4599 = vunpack.c.l.b16 %v433
  %v4600 = vunpack.c.l.b16 %v434
  %v4601 = vunpack.c.l.b16 %v435
  %v4602 = vunpack.c.l.b16 %v436
  %v4603 = vunpack.c.l.b16 %v437
  %v4604 = vunpack.c.l.b16 %v438
  %v4605 = vunpack.c.l.b16 %v439
  %v4606 = vunpack.c.l.b16 %v440
  %v4607 = vunpack.c.l.b16 %v441
  %v4608 = vunpack.c.l.b16 %v442
  %v4609 = vunpack.c.l.b16 %v443
  %v4610 = vunpack.c.l.b16 %v444
  %v4611 = vunpack.c.l.b16 %v445
  %v4612 = vunpack.c.l.b16 %v446
  %v4613 = vunpack.c.l.b16 %v447
  %v4614 = vunpack.c.l.b16 %v448
  %v4615 = vunpack.c.l.b16 %v449
  %v4616 = vunpack.c.l.b16 %v450
  %v4617 = vunpack.c.l.b16 %v451
  %v4618 = vunpack.c.l.b16 %v452
  %v4619 = vunpack.c.l.b16 %v453
  %v4620 = vunpack.c.l.b16 %v454
  %v4621 = vunpack.c.l.b16 %v455
  %v4622 = vunpack.c.l.b16 %v456
  %v4623 = vunpack.c.l.b16 %v457
  %v4624 = vunpack.c.l.b16 %v458
  %v4625 = vunpack.c.l.b16 %v459
  %v4626 = vunpack.c.l.b16 %v460
  %v4627 = vunpack.c.l.b16 %v461
  %v4628 = vunpack.c.l.b16 %v462
  %v4629 = vunpack.c.l.b16 %v463
  %v4630 = vunpack.c.l.b16 %v464
  %v4631 = vunpack.c.l.b16 %v465
  %v4632 = vunpack.c.l.b16 %v466
  %v4633 = vunpack.c.l.b16 %v467
  %v4634 = vunpack.c.l.b16 %v468
  %v4635 = vunpack.c.l.b16 %v469
  %v4636 = vunpack.c.l.b16 %v470
  %v4637 = vunpack.c.l.b16 %v471
  %v4638 = vunpack.c.l.b16 %v472
  %v4639 = vunpack.c.l.b16 %v473
  %v4640 = vunpack.c.l.b16 %v474
  %v4641 = vunpack.c.l.b16 %v475
  %v4642 = vunpack.c.l.b16 %v476
  %v4643 = vunpack.c.l.b16 %v477
  %v4644 = vunpack.c.l.b16 %v478
  %v4645 = vunpack.c.l.b16 %v479
  %v4646 = vunpack.c.l.b16 %v480
  %v4647 = vunpack.c.l.b16 %v481
  %v4648 = vunpack.c.l.b16 %v482
  %v4649 = vunpack.c.l.b16 %v483
  %v4650 = vunpack.c.l.b16 %v484
  %v4651 = vunpack.c.l.b16 %v485
  %v4652 = vunpack.c.l.b16 %v486
  %v4653 = vunpack.c.l.b16 %v487
  %v4654 = vunpack.c.l.b16 %v488
  %v4655 = vunpack.c.l.b16 %v489
  %v4656 = vunpack.c.l.b16 %v490
  %v4657 = vunpack.c.l.b16 %v491
  %v4658 = vunpack.c.l.b16 %v492
  %v4659 = vunpack.c.l.b16 %v493
  %v4660 = vunpack.c.l.b16 %v494
  %v4661 = vunpack.c.l.b16 %v495
  %v4662 = vunpack.c.l.b16 %v496
  %v4663 = vunpack.c.l.b16 %v497
  %v4664 = vunpack.c.l.b16 %v498
  %v4665 = vunpack.c.l.b16 %v499
  %v4666 = vunpack.c.l.b16 %v500
  %v4667 = vunpack.c.l.b16 %v501
  %v4668 = vunpack.c.l.b16 %v502
  %v4669 = vunpack.c.l.b16 %v503
  %v4670 = vunpack.c.l.b16 %v504
  %v4671 = vunpack.c.l.b16 %v505
  %v4672 = vunpack.c.l.b16 %v506
  %v4673 = vunpack.c.l.b16 %v507
  %v4674 = vunpack.c.l.b16 %v508
  %v4675 = vunpack.c.l.b16 %v509
  %v4676 = vunpack.c.l.b16 %v510
  %v4677 = vunpack.c.l.b16 %v511
  %v4678 = vunpack.c.l.b16 %v512
  %v4679 = vunpack.c.l.b16 %v513
  %v4680 = vunpack.c.l.b16 %v514
  %v4681 = vunpack.c.l.b16 %v515
  %v4682 = vunpack.c.l.b16 %v516
  %v4683 = vunpack.c.l.b16 %v517
  %v4684 = vunpack.c.l.b16 %v518
  %v4685 = vunpack.c.l.b16 %v519
  %v4686 = vunpack.c.l.b16 %v520
  %v4687 = vunpack.c.l.b16 %v521
  %v4688 = vunpack.c.l.b16 %v522
  %v4689 = vunpack.c.l.b16 %v523
  %v4690 = vunpack.c.l.b16 %v524
  %v4691 = vunpack.c.l.b16 %v525
  %v4692 = vunpack.c.l.b16 %v526
  %v4693 = vunpack.c.l.b16 %v527
  %v4694 = vunpack.c.l.b16 %v528
  %v4695 = vunpack.c.l.b16 %v529
  %v4696 = vunpack.c.l.b16 %v530
  %v4697 = vunpack.c.l.b16 %v531
  %v4698 = vunpack.c.l.b16 %v532
  %v4699 = vunpack.c.l.b16 %v533
  %v4700 = vunpack.c.l.b16 %v534
  %v4701 = vunpack.c.l.b16 %v535
  %v4702 = vunpack.c.l.b16 %v536
  %v4703 = vunpack.c.l.b16 %v537
  %v4704 = vunpack.c.l.b16 %v538
  %v4705 = vunpack.c.l.b16 %v539
  %v4706 = vunpack.c.l.b16 %v540
  %v4707 = vunpack.c.l.b16 %v541
  %v4708 = vunpack.c.l.b16 %v542
  %v4709 = vunpack.c.l.b16 %v543
  %v4710 = vunpack.c.l.b16 %v544
  %v4711 = vunpack.c.l.b16 %v545
  %v4712 = vunpack.c.l.b16 %v546
  %v4713 = vunpack.c.l.b16 %v547
  %v4714 = vunpack.c.l.b16 %v548
  %v4715 = vunpack.c.l.b16 %v549
  %v4716 = vunpack.c.l.b16 %v550
  %v4717 = vunpack.c.l.b16 %v551
  %v4718 = vunpack.c.l.b16 %v552
  %v4719 = vunpack.c.l.b16 %v553
  %v4720 = vunpack.c.l.b16 %v554
  %v4721 = vunpack.c.l.b16 %v555
  %v4722 = vunpack.c.l.b16 %v556
  %v4723 = vunpack.c.l.b16 %v557
  %v4724 = vunpack.c.l.b16 %v558
  %v4725 = vunpack.c.l.b16 %v559
  %v4726 = vunpack.c.l.b16 %v560
  %v4727 = vunpack.c.l.b16 %v561
  %v4728 = vunpack.c.l.b16 %v562
  %v4729 = vunpack.c.l.b16 %v563
  %v4730 = vunpack.c.l.b16 %v564
  %v4731 = vunpack.c.l.b16 %v565
  %v4732 = vunpack.c.l.b16 %v566
  %v4733 = vunpack.c.l.b16 %v567
  %v4734 = vunpack.c.l.b16 %v568
  %v4735 = vunpack.c.l.b16 %v569
  %v4736 = vunpack.c.l.b16 %v570
  %v4737 = vunpack.c.l.b16 %v571
  %v4738 = vunpack.c.l.b16 %v572
  %v4739 = vunpack.c.l.b16 %v573
  %v4740 = vunpack.c.l.b16 %v574
  %v4741 = vunpack.c.l.b16 %v575
  %v4742 = vunpack.c.l.b16 %v576
  %v4743 = vunpack.c.l.b16 %v577
  %v4744 = vunpack.c.l.b16 %v578
  %v4745 = vunpack.c.l.b16 %v579
  %v4746 = vunpack.c.l.b16 %v580
  %v4747 = vunpack.c.l.b16 %v581
  %v4748 = vunpack.c.l.b16 %v582
  %v4749 = vunpack.c.l.b16 %v583
  %v4750 = vunpack.c.l.b16 %v584
  %v4751 = vunpack.c.l.b16 %v585
  %v4752 = vunpack.c.l.b16 %v586
  %v4753 = vunpack.c.l.b16 %v587
  %v4754 = vunpack.c.l.b16 %v588
  %v4755 = vunpack.c.l.b16 %v589
  %v4756 = vunpack.c.l.b16 %v590
  %v4757 = vunpack.c.l.b16 %v591
  %v4758 = vunpack.c.l.b16 %v592
  %v4759 = vunpack.c.l.b16 %v593
  %v4760 = vunpack.c.l.b16 %v594
  %v4761 = vunpack.c.l.b16 %v595
  %v4762 = vunpack.c.l.b16 %v596
  %v4763 = vunpack.c.l.b16 %v597
  %v4764 = vunpack.c.l.b16 %v598
  %v4765 = vunpack.c.l.b16 %v599
  %v4766 = vunpack.c.l.b16 %v600
  %v4767 = vunpack.c.l.b16 %v601
  %v4768 = vunpack.c.l.b16 %v602
  %v4769 = vunpack.c.l.b16 %v603
  %v4770 = vunpack.c.l.b16 %v604
  %v4771 = vunpack.c.l.b16 %v605
  %v4772 = vunpack.c.l.b16 %v606
  %v4773 = vunpack.c.l.b16 %v607
  %v4774 = vunpack.c.l.b16 %v608
  %v4775 = vunpack.c.l.b16 %v609
  %v4776 = vunpack.c.l.b16 %v610
  %v4777 = vunpack.c.l.b16 %v611
  %v4778 = vunpack.c.l.b16 %v612
  %v4779 = vunpack.c.l.b16 %v613
  %v4780 = vunpack.c.l.b16 %v614
  %v4781 = vunpack.c.l.b16 %v615
  %v4782 = vunpack.c.l.b16 %v616
  %v4783 = vunpack.c.l.b16 %v617
  %v4784 = vunpack.c.l.b16 %v618
  %v4785 = vunpack.c.l.b16 %v619
  %v4786 = vunpack.c.l.b16 %v620
  %v4787 = vunpack.c.l.b16 %v621
  %v4788 = vunpack.c.l.b16 %v622
  %v4789 = vunpack.c.l.b16 %v623
  %v4790 = vunpack.c.l.b16 %v624
  %v4791 = vunpack.c.l.b16 %v625
  %v4792 = vunpack.c.l.b16 %v626
  %v4793 = vunpack.c.l.b16 %v627
  %v4794 = vunpack.c.l.b16 %v628
  %v4795 = vunpack.c.l.b16 %v629
  %v4796 = vunpack.c.l.b16 %v630
  %v4797 = vunpack.c.l.b16 %v631
  %v4798 = vunpack.c.l.b16 %v632
  %v4799 = vunpack.c.l.b16 %v633
  %v4800 = vunpack.c.l.b16 %v634
  %v4801 = vunpack.c.l.b16 %v635
  %v4802 = vunpack.c.l.b16 %v636
  %v4803 = vunpack.c.l.b16 %v637
  %v4804 = vunpack.c.l.b16 %v638
  %v4805 = vunpack.c.l.b16 %v639
  %v4806 = vunpack.c.l.b16 %v640
  %v4807 = vunpack.c.l.b16 %v641
  %v4808 = vunpack.c.l.b16 %v642
  %v4809 = vunpack.c.l.b16 %v643
  %v4810 = vunpack.c.l.b16 %v644
  %v4811 = vunpack.c.l.b16 %v645
  %v4812 = vunpack.c.l.b16 %v646
  %v4813 = vunpack.c.l.b16 %v647
  %v4814 = vunpack.c.l.b16 %v648
  %v4815 = vunpack.c.l.b16 %v649
  %v4816 = vunpack.c.l.b16 %v650
  %v4817 = vunpack.c.l.b16 %v651
  %v4818 = vunpack.c.l.b16 %v652
  %v4819 = vunpack.c.l.b16 %v653
  %v4820 = vunpack.c.l.b16 %v654
  %v4821 = vunpack.c.l.b16 %v655
  %v4822 = vunpack.c.l.b16 %v656
  %v4823 = vunpack.c.l.b16 %v657
  %v4824 = vunpack.c.l.b16 %v658
  %v4825 = vunpack.c.l.b16 %v659
  %v4826 = vunpack.c.l.b16 %v660
  %v4827 = vunpack.c.l.b16 %v661
  %v4828 = vunpack.c.l.b16 %v662
  %v4829 = vpack.c.b16 %v4574, %v4573
  %v4830 = vpack.c.b16 %v4576, %v4575
  %v4831 = vpack.c.b16 %v4578, %v4577
  %v4832 = vpack.c.b16 %v4580, %v4579
  %v4833 = vpack.c.b16 %v4582, %v4581
  %v4834 = vpack.c.b16 %v4584, %v4583
  %v4835 = vpack.c.b16 %v4586, %v4585
  %v4836 = vpack.c.b16 %v4588, %v4587
  %v4837 = vpack.c.b16 %v4590, %v4589
  %v4838 = vpack.c.b16 %v4592, %v4591
  %v4839 = vpack.c.b16 %v4594, %v4593
  %v4840 = vpack.c.b16 %v4596, %v4595
  %v4841 = vpack.c.b16 %v4598, %v4597
  %v4842 = vpack.c.b16 %v4600, %v4599
  %v4843 = vpack.c.b16 %v4602, %v4601
  %v4844 = vpack.c.b16 %v4604, %v4603
  %v4845 = vpack.c.b16 %v4606, %v4605
  %v4846 = vpack.c.b16 %v4608, %v4607
  %v4847 = vpack.c.b16 %v4610, %v4609
  %v4848 = vpack.c.b16 %v4612, %v4611
  %v4849 = vpack.c.b16 %v4614, %v4613
  %v4850 = vpack.c.b16 %v4616, %v4615
  %v4851 = vpack.c.b16 %v4618, %v4617
  %v4852 = vpack.c.b16 %v4620, %v4619
  %v4853 = vpack.c.b16 %v4622, %v4621
  %v4854 = vpack.c.b16 %v4624, %v4623
  %v4855 = vpack.c.b16 %v4626, %v4625
  %v4856 = vpack.c.b16 %v4628, %v4627
  %v4857 = vpack.c.b16 %v4630, %v4629
  %v4858 = vpack.c.b16 %v4632, %v4631
  %v4859 = vpack.c.b16 %v4634, %v4633
  %v4860 = vpack.c.b16 %v4636, %v4635
  %v4861 = vpack.c.b16 %v4638, %v4637
  %v4862 = vpack.c.b16 %v4640, %v4639
  %v4863 = vpack.c.b16 %v4642, %v4641
  %v4864 = vpack.c.b16 %v4644, %v4643
  %v4865 = vpack.c.b16 %v4646, %v4645
  %v4866 = vpack.c.b16 %v4648, %v4647
  %v4867 = vpack.c.b16 %v4650, %v4649
  %v4868 = vpack.c.b16 %v4652, %v4651
  %v4869 = vpack.c.b16 %v4654, %v4653
  %v4870 = vpack.c.b16 %v4656, %v4655
  %v4871 = vpack.c.b16 %v4658, %v4657
  %v4872 = vpack.c.b16 %v4660, %v4659
  %v4873 = vpack.c.b16 %v4662, %v4661
  %v4874 = vpack.c.b16 %v4664, %v4663
  %v4875 = vpack.c.b16 %v4666, %v4665
  %v4876 = vpack.c.b16 %v4668, %v4667
  %v4877 = vpack.c.b16 %v4670, %v4669
  %v4878 = vpack.c.b16 %v4672, %v4671
  %v4879 = vpack.c.b16 %v4674, %v4673
  %v4880 = vpack.c.b16 %v4676, %v4675
  %v4881 = vpack.c.b16 %v4678, %v4677
  %v4882 = vpack.c.b16 %v4680, %v4679
  %v4883 = vpack.c.b16 %v4682, %v4681
  %v4884 = vpack.c.b16 %v4684, %v4683
  %v4885 = vpack.c.b16 %v4686, %v4685
  %v4886 = vpack.c.b16 %v4688, %v4687
  %v4887 = vpack.c.b16 %v4690, %v4689
  %v4888 = vpack.c.b16 %v4692, %v4691
  %v4889 = vpack.c.b16 %v4694, %v4693
  %v4890 = vpack.c.b16 %v4696, %v4695
  %v4891 = vpack.c.b16 %v4698, %v4697
  %v4892 = vpack.c.b16 %v4700, %v4699
  %v4893 = vpack.c.b16 %v4702, %v4701
  %v4894 = vpack.c.b16 %v4704, %v4703
  %v4895 = vpack.c.b16 %v4706, %v4705
  %v4896 = vpack.c.b16 %v4708, %v4707
  %v4897 = vpack.c.b16 %v4710, %v4709
  %v4898 = vpack.c.b16 %v4712, %v4711
  %v4899 = vpack.c.b16 %v4714, %v4713
  %v4900 = vpack.c.b16 %v4716, %v4715
  %v4901 = vpack.c.b16 %v4718, %v4717
  %v4902 = vpack.c.b16 %v4720, %v4719
  %v4903 = vpack.c.b16 %v4722, %v4721
  %v4904 = vpack.c.b16 %v4724, %v4723
  %v4905 = vpack.c.b16 %v4726, %v4725
  %v4906 = vpack.c.b16 %v4728, %v4727
  %v4907 = vpack.c.b16 %v4730, %v4729
  %v4908 = vpack.c.b16 %v4732, %v4731
  %v4909 = vpack.c.b16 %v4734, %v4733
  %v4910 = vpack.c.b16 %v4736, %v4735
  %v4911 = vpack.c.b16 %v4738, %v4737
  %v4912 = vpack.c.b16 %v4740, %v4739
  %v4913 = vpack.c.b16 %v4742, %v4741
  %v4914 = vpack.c.b16 %v4744, %v4743
  %v4915 = vpack.c.b16 %v4746, %v4745
  %v4916 = vpack.c.b16 %v4748, %v4747
  %v4917 = vpack.c.b16 %v4750, %v4749
  %v4918 = vpack.c.b16 %v4752, %v4751
  %v4919 = vpack.c.b16 %v4754, %v4753
  %v4920 = vpack.c.b16 %v4756, %v4755
  %v4921 = vpack.c.b16 %v4758, %v4757
  %v4922 = vpack.c.b16 %v4760, %v4759
  %v4923 = vpack.c.b16 %v4762, %v4761
  %v4924 = vpack.c.b16 %v4764, %v4763
  %v4925 = vpack.c.b16 %v4766, %v4765
  %v4926 = vpack.c.b16 %v4768, %v4767
  %v4927 = vpack.c.b16 %v4770, %v4769
  %v4928 = vpack.c.b16 %v4772, %v4771
  %v4929 = vpack.c.b16 %v4774, %v4773
  %v4930 = vpack.c.b16 %v4776, %v4775
  %v4931 = vpack.c.b16 %v4778, %v4777
  %v4932 = vpack.c.b16 %v4780, %v4779
  %v4933 = vpack.c.b16 %v4782, %v4781
  %v4934 = vpack.c.b16 %v4784, %v4783
  %v4935 = vpack.c.b16 %v4786, %v4785
  %v4936 = vpack.c.b16 %v4788, %v4787
  %v4937 = vpack.c.b16 %v4790, %v4789
  %v4938 = vpack.c.b16 %v4792, %v4791
  %v4939 = vpack.c.b16 %v4794, %v4793
  %v4940 = vpack.c.b16 %v4796, %v4795
  %v4941 = vpack.c.b16 %v4798, %v4797
  %v4942 = vpack.c.b16 %v4800, %v4799
  %v4943 = vpack.c.b16 %v4802, %v4801
  %v4944 = vpack.c.b16 %v4804, %v4803
  %v4945 = vpack.c.b16 %v4806, %v4805
  %v4946 = vpack.c.b16 %v4808, %v4807
  %v4947 = vpack.c.b16 %v4810, %v4809
  %v4948 = vpack.c.b16 %v4812, %v4811
  %v4949 = vpack.c.b16 %v4814, %v4813
  %v4950 = vpack.c.b16 %v4816, %v4815
  %v4951 = vpack.c.b16 %v4818, %v4817
  %v4952 = vpack.c.b16 %v4820, %v4819
  %v4953 = vpack.c.b16 %v4822, %v4821
  %v4954 = vpack.c.b16 %v4824, %v4823
  %v4955 = vpack.c.b16 %v4826, %v4825
  %v4956 = vpack.c.b16 %v4828, %v4827
  %4957 = vrot.lane.b32.xlu0 %v4829, 12
  %v4958 = vpop.permute.xlu0 %4957
  %4959 = vrot.lane.b32.xlu0 %v4830, 12
  %v4960 = vpop.permute.xlu0 %4959
  %4961 = vrot.lane.b32.xlu0 %v4831, 12
  %v4962 = vpop.permute.xlu0 %4961
  %4963 = vrot.lane.b32.xlu0 %v4832, 12
  %v4964 = vpop.permute.xlu0 %4963
  %4965 = vrot.lane.b32.xlu0 %v4833, 12
  %v4966 = vpop.permute.xlu0 %4965
  %4967 = vrot.lane.b32.xlu0 %v4834, 12
  %v4968 = vpop.permute.xlu0 %4967
  %4969 = vrot.lane.b32.xlu0 %v4835, 12
  %v4970 = vpop.permute.xlu0 %4969
  %4971 = vrot.lane.b32.xlu0 %v4836, 12
  %v4972 = vpop.permute.xlu0 %4971
  %4973 = vrot.lane.b32.xlu0 %v4837, 12
  %v4974 = vpop.permute.xlu0 %4973
  %4975 = vrot.lane.b32.xlu0 %v4838, 12
  %v4976 = vpop.permute.xlu0 %4975
  %4977 = vrot.lane.b32.xlu0 %v4839, 12
  %v4978 = vpop.permute.xlu0 %4977
  %4979 = vrot.lane.b32.xlu0 %v4840, 12
  %v4980 = vpop.permute.xlu0 %4979
  %4981 = vrot.lane.b32.xlu0 %v4841, 12
  %v4982 = vpop.permute.xlu0 %4981
  %4983 = vrot.lane.b32.xlu0 %v4842, 12
  %v4984 = vpop.permute.xlu0 %4983
  %4985 = vrot.lane.b32.xlu0 %v4843, 12
  %v4986 = vpop.permute.xlu0 %4985
  %4987 = vrot.lane.b32.xlu0 %v4844, 12
  %v4988 = vpop.permute.xlu0 %4987
  %4989 = vrot.lane.b32.xlu0 %v4845, 12
  %v4990 = vpop.permute.xlu0 %4989
  %4991 = vrot.lane.b32.xlu0 %v4846, 12
  %v4992 = vpop.permute.xlu0 %4991
  %4993 = vrot.lane.b32.xlu0 %v4847, 12
  %v4994 = vpop.permute.xlu0 %4993
  %4995 = vrot.lane.b32.xlu0 %v4848, 12
  %v4996 = vpop.permute.xlu0 %4995
  %4997 = vrot.lane.b32.xlu0 %v4849, 12
  %v4998 = vpop.permute.xlu0 %4997
  %4999 = vrot.lane.b32.xlu0 %v4850, 12
  %v5000 = vpop.permute.xlu0 %4999
  %5001 = vrot.lane.b32.xlu0 %v4851, 12
  %v5002 = vpop.permute.xlu0 %5001
  %5003 = vrot.lane.b32.xlu0 %v4852, 12
  %v5004 = vpop.permute.xlu0 %5003
  %5005 = vrot.lane.b32.xlu0 %v4853, 12
  %v5006 = vpop.permute.xlu0 %5005
  %5007 = vrot.lane.b32.xlu0 %v4854, 12
  %v5008 = vpop.permute.xlu0 %5007
  %5009 = vrot.lane.b32.xlu0 %v4855, 12
  %v5010 = vpop.permute.xlu0 %5009
  %5011 = vrot.lane.b32.xlu0 %v4856, 12
  %v5012 = vpop.permute.xlu0 %5011
  %5013 = vrot.lane.b32.xlu0 %v4857, 12
  %v5014 = vpop.permute.xlu0 %5013
  %5015 = vrot.lane.b32.xlu0 %v4858, 12
  %v5016 = vpop.permute.xlu0 %5015
  %5017 = vrot.lane.b32.xlu0 %v4859, 12
  %v5018 = vpop.permute.xlu0 %5017
  %5019 = vrot.lane.b32.xlu0 %v4860, 12
  %v5020 = vpop.permute.xlu0 %5019
  %5021 = vrot.lane.b32.xlu0 %v4861, 12
  %v5022 = vpop.permute.xlu0 %5021
  %5023 = vrot.lane.b32.xlu0 %v4862, 12
  %v5024 = vpop.permute.xlu0 %5023
  %5025 = vrot.lane.b32.xlu0 %v4863, 12
  %v5026 = vpop.permute.xlu0 %5025
  %5027 = vrot.lane.b32.xlu0 %v4864, 12
  %v5028 = vpop.permute.xlu0 %5027
  %5029 = vrot.lane.b32.xlu0 %v4865, 12
  %v5030 = vpop.permute.xlu0 %5029
  %5031 = vrot.lane.b32.xlu0 %v4866, 12
  %v5032 = vpop.permute.xlu0 %5031
  %5033 = vrot.lane.b32.xlu0 %v4867, 12
  %v5034 = vpop.permute.xlu0 %5033
  %5035 = vrot.lane.b32.xlu0 %v4868, 12
  %v5036 = vpop.permute.xlu0 %5035
  %5037 = vrot.lane.b32.xlu0 %v4869, 12
  %v5038 = vpop.permute.xlu0 %5037
  %5039 = vrot.lane.b32.xlu0 %v4870, 12
  %v5040 = vpop.permute.xlu0 %5039
  %5041 = vrot.lane.b32.xlu0 %v4871, 12
  %v5042 = vpop.permute.xlu0 %5041
  %5043 = vrot.lane.b32.xlu0 %v4872, 12
  %v5044 = vpop.permute.xlu0 %5043
  %5045 = vrot.lane.b32.xlu0 %v4873, 12
  %v5046 = vpop.permute.xlu0 %5045
  %5047 = vrot.lane.b32.xlu0 %v4874, 12
  %v5048 = vpop.permute.xlu0 %5047
  %5049 = vrot.lane.b32.xlu0 %v4875, 12
  %v5050 = vpop.permute.xlu0 %5049
  %5051 = vrot.lane.b32.xlu0 %v4876, 12
  %v5052 = vpop.permute.xlu0 %5051
  %5053 = vrot.lane.b32.xlu0 %v4877, 12
  %v5054 = vpop.permute.xlu0 %5053
  %5055 = vrot.lane.b32.xlu0 %v4878, 12
  %v5056 = vpop.permute.xlu0 %5055
  %5057 = vrot.lane.b32.xlu0 %v4879, 12
  %v5058 = vpop.permute.xlu0 %5057
  %5059 = vrot.lane.b32.xlu0 %v4880, 12
  %v5060 = vpop.permute.xlu0 %5059
  %5061 = vrot.lane.b32.xlu0 %v4881, 12
  %v5062 = vpop.permute.xlu0 %5061
  %5063 = vrot.lane.b32.xlu0 %v4882, 12
  %v5064 = vpop.permute.xlu0 %5063
  %5065 = vrot.lane.b32.xlu0 %v4883, 12
  %v5066 = vpop.permute.xlu0 %5065
  %5067 = vrot.lane.b32.xlu0 %v4884, 12
  %v5068 = vpop.permute.xlu0 %5067
  %5069 = vrot.lane.b32.xlu0 %v4885, 12
  %v5070 = vpop.permute.xlu0 %5069
  %5071 = vrot.lane.b32.xlu0 %v4886, 12
  %v5072 = vpop.permute.xlu0 %5071
  %5073 = vrot.lane.b32.xlu0 %v4887, 12
  %v5074 = vpop.permute.xlu0 %5073
  %5075 = vrot.lane.b32.xlu0 %v4888, 12
  %v5076 = vpop.permute.xlu0 %5075
  %5077 = vrot.lane.b32.xlu0 %v4889, 12
  %v5078 = vpop.permute.xlu0 %5077
  %5079 = vrot.lane.b32.xlu0 %v4890, 12
  %v5080 = vpop.permute.xlu0 %5079
  %5081 = vrot.lane.b32.xlu0 %v4891, 12
  %v5082 = vpop.permute.xlu0 %5081
  %5083 = vrot.lane.b32.xlu0 %v4892, 12
  %v5084 = vpop.permute.xlu0 %5083
  %5085 = vrot.lane.b32.xlu0 %v4893, 12
  %v5086 = vpop.permute.xlu0 %5085
  %5087 = vrot.lane.b32.xlu0 %v4894, 12
  %v5088 = vpop.permute.xlu0 %5087
  %5089 = vrot.lane.b32.xlu0 %v4895, 12
  %v5090 = vpop.permute.xlu0 %5089
  %5091 = vrot.lane.b32.xlu0 %v4896, 12
  %v5092 = vpop.permute.xlu0 %5091
  %5093 = vrot.lane.b32.xlu0 %v4897, 12
  %v5094 = vpop.permute.xlu0 %5093
  %5095 = vrot.lane.b32.xlu0 %v4898, 12
  %v5096 = vpop.permute.xlu0 %5095
  %5097 = vrot.lane.b32.xlu0 %v4899, 12
  %v5098 = vpop.permute.xlu0 %5097
  %5099 = vrot.lane.b32.xlu0 %v4900, 12
  %v5100 = vpop.permute.xlu0 %5099
  %5101 = vrot.lane.b32.xlu0 %v4901, 12
  %v5102 = vpop.permute.xlu0 %5101
  %5103 = vrot.lane.b32.xlu0 %v4902, 12
  %v5104 = vpop.permute.xlu0 %5103
  %5105 = vrot.lane.b32.xlu0 %v4903, 12
  %v5106 = vpop.permute.xlu0 %5105
  %5107 = vrot.lane.b32.xlu0 %v4904, 12
  %v5108 = vpop.permute.xlu0 %5107
  %5109 = vrot.lane.b32.xlu0 %v4905, 12
  %v5110 = vpop.permute.xlu0 %5109
  %5111 = vrot.lane.b32.xlu0 %v4906, 12
  %v5112 = vpop.permute.xlu0 %5111
  %5113 = vrot.lane.b32.xlu0 %v4907, 12
  %v5114 = vpop.permute.xlu0 %5113
  %5115 = vrot.lane.b32.xlu0 %v4908, 12
  %v5116 = vpop.permute.xlu0 %5115
  %5117 = vrot.lane.b32.xlu0 %v4909, 12
  %v5118 = vpop.permute.xlu0 %5117
  %5119 = vrot.lane.b32.xlu0 %v4910, 12
  %v5120 = vpop.permute.xlu0 %5119
  %5121 = vrot.lane.b32.xlu0 %v4911, 12
  %v5122 = vpop.permute.xlu0 %5121
  %5123 = vrot.lane.b32.xlu0 %v4912, 12
  %v5124 = vpop.permute.xlu0 %5123
  %5125 = vrot.lane.b32.xlu0 %v4913, 12
  %v5126 = vpop.permute.xlu0 %5125
  %5127 = vrot.lane.b32.xlu0 %v4914, 12
  %v5128 = vpop.permute.xlu0 %5127
  %5129 = vrot.lane.b32.xlu0 %v4915, 12
  %v5130 = vpop.permute.xlu0 %5129
  %5131 = vrot.lane.b32.xlu0 %v4916, 12
  %v5132 = vpop.permute.xlu0 %5131
  %5133 = vrot.lane.b32.xlu0 %v4917, 12
  %v5134 = vpop.permute.xlu0 %5133
  %5135 = vrot.lane.b32.xlu0 %v4918, 12
  %v5136 = vpop.permute.xlu0 %5135
  %5137 = vrot.lane.b32.xlu0 %v4919, 12
  %v5138 = vpop.permute.xlu0 %5137
  %5139 = vrot.lane.b32.xlu0 %v4920, 12
  %v5140 = vpop.permute.xlu0 %5139
  %5141 = vrot.lane.b32.xlu0 %v4921, 12
  %v5142 = vpop.permute.xlu0 %5141
  %5143 = vrot.lane.b32.xlu0 %v4922, 12
  %v5144 = vpop.permute.xlu0 %5143
  %5145 = vrot.lane.b32.xlu0 %v4923, 12
  %v5146 = vpop.permute.xlu0 %5145
  %5147 = vrot.lane.b32.xlu0 %v4924, 12
  %v5148 = vpop.permute.xlu0 %5147
  %5149 = vrot.lane.b32.xlu0 %v4925, 12
  %v5150 = vpop.permute.xlu0 %5149
  %5151 = vrot.lane.b32.xlu0 %v4926, 12
  %v5152 = vpop.permute.xlu0 %5151
  %5153 = vrot.lane.b32.xlu0 %v4927, 12
  %v5154 = vpop.permute.xlu0 %5153
  %5155 = vrot.lane.b32.xlu0 %v4928, 12
  %v5156 = vpop.permute.xlu0 %5155
  %5157 = vrot.lane.b32.xlu0 %v4929, 12
  %v5158 = vpop.permute.xlu0 %5157
  %5159 = vrot.lane.b32.xlu0 %v4930, 12
  %v5160 = vpop.permute.xlu0 %5159
  %5161 = vrot.lane.b32.xlu0 %v4931, 12
  %v5162 = vpop.permute.xlu0 %5161
  %5163 = vrot.lane.b32.xlu0 %v4932, 12
  %v5164 = vpop.permute.xlu0 %5163
  %5165 = vrot.lane.b32.xlu0 %v4933, 12
  %v5166 = vpop.permute.xlu0 %5165
  %5167 = vrot.lane.b32.xlu0 %v4934, 12
  %v5168 = vpop.permute.xlu0 %5167
  %5169 = vrot.lane.b32.xlu0 %v4935, 12
  %v5170 = vpop.permute.xlu0 %5169
  %5171 = vrot.lane.b32.xlu0 %v4936, 12
  %v5172 = vpop.permute.xlu0 %5171
  %5173 = vrot.lane.b32.xlu0 %v4937, 12
  %v5174 = vpop.permute.xlu0 %5173
  %5175 = vrot.lane.b32.xlu0 %v4938, 12
  %v5176 = vpop.permute.xlu0 %5175
  %5177 = vrot.lane.b32.xlu0 %v4939, 12
  %v5178 = vpop.permute.xlu0 %5177
  %5179 = vrot.lane.b32.xlu0 %v4940, 12
  %v5180 = vpop.permute.xlu0 %5179
  %5181 = vrot.lane.b32.xlu0 %v4941, 12
  %v5182 = vpop.permute.xlu0 %5181
  %5183 = vrot.lane.b32.xlu0 %v4942, 12
  %v5184 = vpop.permute.xlu0 %5183
  %5185 = vrot.lane.b32.xlu0 %v4943, 12
  %v5186 = vpop.permute.xlu0 %5185
  %5187 = vrot.lane.b32.xlu0 %v4944, 12
  %v5188 = vpop.permute.xlu0 %5187
  %5189 = vrot.lane.b32.xlu0 %v4945, 12
  %v5190 = vpop.permute.xlu0 %5189
  %5191 = vrot.lane.b32.xlu0 %v4946, 12
  %v5192 = vpop.permute.xlu0 %5191
  %5193 = vrot.lane.b32.xlu0 %v4947, 12
  %v5194 = vpop.permute.xlu0 %5193
  %5195 = vrot.lane.b32.xlu0 %v4948, 12
  %v5196 = vpop.permute.xlu0 %5195
  %5197 = vrot.lane.b32.xlu0 %v4949, 12
  %v5198 = vpop.permute.xlu0 %5197
  %5199 = vrot.lane.b32.xlu0 %v4950, 12
  %v5200 = vpop.permute.xlu0 %5199
  %5201 = vrot.lane.b32.xlu0 %v4951, 12
  %v5202 = vpop.permute.xlu0 %5201
  %5203 = vrot.lane.b32.xlu0 %v4952, 12
  %v5204 = vpop.permute.xlu0 %5203
  %5205 = vrot.lane.b32.xlu0 %v4953, 12
  %v5206 = vpop.permute.xlu0 %5205
  %5207 = vrot.lane.b32.xlu0 %v4954, 12
  %v5208 = vpop.permute.xlu0 %5207
  %5209 = vrot.lane.b32.xlu0 %v4955, 12
  %v5210 = vpop.permute.xlu0 %5209
  %5211 = vrot.lane.b32.xlu0 %v4956, 12
  %v5212 = vpop.permute.xlu0 %5211
  %v5277 = vunpack.c.l.b16 %v663
  %v5278 = vunpack.c.l.b16 %v664
  %v5279 = vunpack.c.l.b16 %v665
  %v5280 = vunpack.c.l.b16 %v666
  %v5281 = vunpack.c.l.b16 %v667
  %v5282 = vunpack.c.l.b16 %v668
  %v5283 = vunpack.c.l.b16 %v669
  %v5284 = vunpack.c.l.b16 %v670
  %v5285 = vunpack.c.l.b16 %v671
  %v5286 = vunpack.c.l.b16 %v672
  %v5287 = vunpack.c.l.b16 %v673
  %v5288 = vunpack.c.l.b16 %v674
  %v5289 = vunpack.c.l.b16 %v675
  %v5290 = vunpack.c.l.b16 %v676
  %v5291 = vunpack.c.l.b16 %v677
  %v5292 = vunpack.c.l.b16 %v678
  %v5293 = vunpack.c.l.b16 %v679
  %v5294 = vunpack.c.l.b16 %v680
  %v5295 = vunpack.c.l.b16 %v681
  %v5296 = vunpack.c.l.b16 %v682
  %v5297 = vunpack.c.l.b16 %v683
  %v5298 = vunpack.c.l.b16 %v684
  %v5299 = vunpack.c.l.b16 %v685
  %v5300 = vunpack.c.l.b16 %v686
  %v5301 = vunpack.c.l.b16 %v687
  %v5302 = vunpack.c.l.b16 %v688
  %v5303 = vunpack.c.l.b16 %v689
  %v5304 = vunpack.c.l.b16 %v690
  %v5305 = vunpack.c.l.b16 %v691
  %v5306 = vunpack.c.l.b16 %v692
  %v5307 = vunpack.c.l.b16 %v693
  %v5308 = vunpack.c.l.b16 %v694
  %v5309 = vunpack.c.l.b16 %v695
  %v5310 = vunpack.c.l.b16 %v696
  %v5311 = vunpack.c.l.b16 %v697
  %v5312 = vunpack.c.l.b16 %v698
  %v5313 = vunpack.c.l.b16 %v699
  %v5314 = vunpack.c.l.b16 %v700
  %v5315 = vunpack.c.l.b16 %v701
  %v5316 = vunpack.c.l.b16 %v702
  %v5317 = vunpack.c.l.b16 %v703
  %v5318 = vunpack.c.l.b16 %v704
  %v5319 = vunpack.c.l.b16 %v705
  %v5320 = vunpack.c.l.b16 %v706
  %v5321 = vunpack.c.l.b16 %v707
  %v5322 = vunpack.c.l.b16 %v708
  %v5323 = vunpack.c.l.b16 %v709
  %v5324 = vunpack.c.l.b16 %v710
  %v5325 = vunpack.c.l.b16 %v711
  %v5326 = vunpack.c.l.b16 %v712
  %v5327 = vunpack.c.l.b16 %v713
  %v5328 = vunpack.c.l.b16 %v714
  %v5329 = vunpack.c.l.b16 %v715
  %v5330 = vunpack.c.l.b16 %v716
  %v5331 = vunpack.c.l.b16 %v717
  %v5332 = vunpack.c.l.b16 %v718
  %v5333 = vunpack.c.l.b16 %v719
  %v5334 = vunpack.c.l.b16 %v720
  %v5335 = vunpack.c.l.b16 %v721
  %v5336 = vunpack.c.l.b16 %v722
  %v5337 = vunpack.c.l.b16 %v723
  %v5338 = vunpack.c.l.b16 %v724
  %v5339 = vunpack.c.l.b16 %v725
  %v5340 = vunpack.c.l.b16 %v726
  %v5341 = vpack.c.b16 %v5277, %v5277
  %v5342 = vpack.c.b16 %v5278, %v5278
  %v5343 = vpack.c.b16 %v5279, %v5279
  %v5344 = vpack.c.b16 %v5280, %v5280
  %v5345 = vpack.c.b16 %v5281, %v5281
  %v5346 = vpack.c.b16 %v5282, %v5282
  %v5347 = vpack.c.b16 %v5283, %v5283
  %v5348 = vpack.c.b16 %v5284, %v5284
  %v5349 = vpack.c.b16 %v5285, %v5285
  %v5350 = vpack.c.b16 %v5286, %v5286
  %v5351 = vpack.c.b16 %v5287, %v5287
  %v5352 = vpack.c.b16 %v5288, %v5288
  %v5353 = vpack.c.b16 %v5289, %v5289
  %v5354 = vpack.c.b16 %v5290, %v5290
  %v5355 = vpack.c.b16 %v5291, %v5291
  %v5356 = vpack.c.b16 %v5292, %v5292
  %v5357 = vpack.c.b16 %v5293, %v5293
  %v5358 = vpack.c.b16 %v5294, %v5294
  %v5359 = vpack.c.b16 %v5295, %v5295
  %v5360 = vpack.c.b16 %v5296, %v5296
  %v5361 = vpack.c.b16 %v5297, %v5297
  %v5362 = vpack.c.b16 %v5298, %v5298
  %v5363 = vpack.c.b16 %v5299, %v5299
  %v5364 = vpack.c.b16 %v5300, %v5300
  %v5365 = vpack.c.b16 %v5301, %v5301
  %v5366 = vpack.c.b16 %v5302, %v5302
  %v5367 = vpack.c.b16 %v5303, %v5303
  %v5368 = vpack.c.b16 %v5304, %v5304
  %v5369 = vpack.c.b16 %v5305, %v5305
  %v5370 = vpack.c.b16 %v5306, %v5306
  %v5371 = vpack.c.b16 %v5307, %v5307
  %v5372 = vpack.c.b16 %v5308, %v5308
  %v5373 = vpack.c.b16 %v5309, %v5309
  %v5374 = vpack.c.b16 %v5310, %v5310
  %v5375 = vpack.c.b16 %v5311, %v5311
  %v5376 = vpack.c.b16 %v5312, %v5312
  %v5377 = vpack.c.b16 %v5313, %v5313
  %v5378 = vpack.c.b16 %v5314, %v5314
  %v5379 = vpack.c.b16 %v5315, %v5315
  %v5380 = vpack.c.b16 %v5316, %v5316
  %v5381 = vpack.c.b16 %v5317, %v5317
  %v5382 = vpack.c.b16 %v5318, %v5318
  %v5383 = vpack.c.b16 %v5319, %v5319
  %v5384 = vpack.c.b16 %v5320, %v5320
  %v5385 = vpack.c.b16 %v5321, %v5321
  %v5386 = vpack.c.b16 %v5322, %v5322
  %v5387 = vpack.c.b16 %v5323, %v5323
  %v5388 = vpack.c.b16 %v5324, %v5324
  %v5389 = vpack.c.b16 %v5325, %v5325
  %v5390 = vpack.c.b16 %v5326, %v5326
  %v5391 = vpack.c.b16 %v5327, %v5327
  %v5392 = vpack.c.b16 %v5328, %v5328
  %v5393 = vpack.c.b16 %v5329, %v5329
  %v5394 = vpack.c.b16 %v5330, %v5330
  %v5395 = vpack.c.b16 %v5331, %v5331
  %v5396 = vpack.c.b16 %v5332, %v5332
  %v5397 = vpack.c.b16 %v5333, %v5333
  %v5398 = vpack.c.b16 %v5334, %v5334
  %v5399 = vpack.c.b16 %v5335, %v5335
  %v5400 = vpack.c.b16 %v5336, %v5336
  %v5401 = vpack.c.b16 %v5337, %v5337
  %v5402 = vpack.c.b16 %v5338, %v5338
  %v5403 = vpack.c.b16 %v5339, %v5339
  %v5404 = vpack.c.b16 %v5340, %v5340
  %v5406 = vshrl.u32 %v4829, 16
  %v5408 = vshll.u32 %v4829, 16
  %v5410 = vrot.slane %v5408, 1
  %v5411 = vor.u32 %v5406, %v5410
  %v5413 = vshll.u32 %v4830, 16
  %v5415 = vrot.slane %v5413, 1
  %v5416 = vsel %vm2011, %v5411, %v5415
  %v5417 = vshrl.u32 %v4830, 16
  %v5419 = vor.u32 %v5417, %v5415
  %v5421 = vshll.u32 %v5341, 16
  %v5423 = vrot.slane %v5421, 1
  %v5424 = vsel %vm2011, %v5419, %v5423
  %v5426 = vshrl.u32 %v4831, 16
  %v5428 = vshll.u32 %v4831, 16
  %v5430 = vrot.slane %v5428, 1
  %v5431 = vor.u32 %v5426, %v5430
  %v5433 = vshll.u32 %v4832, 16
  %v5435 = vrot.slane %v5433, 1
  %v5436 = vsel %vm2011, %v5431, %v5435
  %v5437 = vshrl.u32 %v4832, 16
  %v5439 = vor.u32 %v5437, %v5435
  %v5441 = vshll.u32 %v5342, 16
  %v5443 = vrot.slane %v5441, 1
  %v5444 = vsel %vm2011, %v5439, %v5443
  %v5446 = vshrl.u32 %v4833, 16
  %v5448 = vshll.u32 %v4833, 16
  %v5450 = vrot.slane %v5448, 1
  %v5451 = vor.u32 %v5446, %v5450
  %v5453 = vshll.u32 %v4834, 16
  %v5455 = vrot.slane %v5453, 1
  %v5456 = vsel %vm2011, %v5451, %v5455
  %v5457 = vshrl.u32 %v4834, 16
  %v5459 = vor.u32 %v5457, %v5455
  %v5461 = vshll.u32 %v5343, 16
  %v5463 = vrot.slane %v5461, 1
  %v5464 = vsel %vm2011, %v5459, %v5463
  %v5466 = vshrl.u32 %v4835, 16
  %v5468 = vshll.u32 %v4835, 16
  %v5470 = vrot.slane %v5468, 1
  %v5471 = vor.u32 %v5466, %v5470
  %v5473 = vshll.u32 %v4836, 16
  %v5475 = vrot.slane %v5473, 1
  %v5476 = vsel %vm2011, %v5471, %v5475
  %v5477 = vshrl.u32 %v4836, 16
  %v5479 = vor.u32 %v5477, %v5475
  %v5481 = vshll.u32 %v5344, 16
  %v5483 = vrot.slane %v5481, 1
  %v5484 = vsel %vm2011, %v5479, %v5483
  %v5486 = vshrl.u32 %v4837, 16
  %v5488 = vshll.u32 %v4837, 16
  %v5490 = vrot.slane %v5488, 1
  %v5491 = vor.u32 %v5486, %v5490
  %v5493 = vshll.u32 %v4838, 16
  %v5495 = vrot.slane %v5493, 1
  %v5496 = vsel %vm2011, %v5491, %v5495
  %v5497 = vshrl.u32 %v4838, 16
  %v5499 = vor.u32 %v5497, %v5495
  %v5501 = vshll.u32 %v5345, 16
  %v5503 = vrot.slane %v5501, 1
  %v5504 = vsel %vm2011, %v5499, %v5503
  %v5506 = vshrl.u32 %v4839, 16
  %v5508 = vshll.u32 %v4839, 16
  %v5510 = vrot.slane %v5508, 1
  %v5511 = vor.u32 %v5506, %v5510
  %v5513 = vshll.u32 %v4840, 16
  %v5515 = vrot.slane %v5513, 1
  %v5516 = vsel %vm2011, %v5511, %v5515
  %v5517 = vshrl.u32 %v4840, 16
  %v5519 = vor.u32 %v5517, %v5515
  %v5521 = vshll.u32 %v5346, 16
  %v5523 = vrot.slane %v5521, 1
  %v5524 = vsel %vm2011, %v5519, %v5523
  %v5526 = vshrl.u32 %v4841, 16
  %v5528 = vshll.u32 %v4841, 16
  %v5530 = vrot.slane %v5528, 1
  %v5531 = vor.u32 %v5526, %v5530
  %v5533 = vshll.u32 %v4842, 16
  %v5535 = vrot.slane %v5533, 1
  %v5536 = vsel %vm2011, %v5531, %v5535
  %v5537 = vshrl.u32 %v4842, 16
  %v5539 = vor.u32 %v5537, %v5535
  %v5541 = vshll.u32 %v5347, 16
  %v5543 = vrot.slane %v5541, 1
  %v5544 = vsel %vm2011, %v5539, %v5543
  %v5546 = vshrl.u32 %v4843, 16
  %v5548 = vshll.u32 %v4843, 16
  %v5550 = vrot.slane %v5548, 1
  %v5551 = vor.u32 %v5546, %v5550
  %v5553 = vshll.u32 %v4844, 16
  %v5555 = vrot.slane %v5553, 1
  %v5556 = vsel %vm2011, %v5551, %v5555
  %v5557 = vshrl.u32 %v4844, 16
  %v5559 = vor.u32 %v5557, %v5555
  %v5561 = vshll.u32 %v5348, 16
  %v5563 = vrot.slane %v5561, 1
  %v5564 = vsel %vm2011, %v5559, %v5563
  %v5566 = vshrl.u32 %v4845, 16
  %v5568 = vshll.u32 %v4845, 16
  %v5570 = vrot.slane %v5568, 1
  %v5571 = vor.u32 %v5566, %v5570
  %v5573 = vshll.u32 %v4846, 16
  %v5575 = vrot.slane %v5573, 1
  %v5576 = vsel %vm2011, %v5571, %v5575
  %v5577 = vshrl.u32 %v4846, 16
  %v5579 = vor.u32 %v5577, %v5575
  %v5581 = vshll.u32 %v5349, 16
  %v5583 = vrot.slane %v5581, 1
  %v5584 = vsel %vm2011, %v5579, %v5583
  %v5586 = vshrl.u32 %v4847, 16
  %v5588 = vshll.u32 %v4847, 16
  %v5590 = vrot.slane %v5588, 1
  %v5591 = vor.u32 %v5586, %v5590
  %v5593 = vshll.u32 %v4848, 16
  %v5595 = vrot.slane %v5593, 1
  %v5596 = vsel %vm2011, %v5591, %v5595
  %v5597 = vshrl.u32 %v4848, 16
  %v5599 = vor.u32 %v5597, %v5595
  %v5601 = vshll.u32 %v5350, 16
  %v5603 = vrot.slane %v5601, 1
  %v5604 = vsel %vm2011, %v5599, %v5603
  %v5606 = vshrl.u32 %v4849, 16
  %v5608 = vshll.u32 %v4849, 16
  %v5610 = vrot.slane %v5608, 1
  %v5611 = vor.u32 %v5606, %v5610
  %v5613 = vshll.u32 %v4850, 16
  %v5615 = vrot.slane %v5613, 1
  %v5616 = vsel %vm2011, %v5611, %v5615
  %v5617 = vshrl.u32 %v4850, 16
  %v5619 = vor.u32 %v5617, %v5615
  %v5621 = vshll.u32 %v5351, 16
  %v5623 = vrot.slane %v5621, 1
  %v5624 = vsel %vm2011, %v5619, %v5623
  %v5626 = vshrl.u32 %v4851, 16
  %v5628 = vshll.u32 %v4851, 16
  %v5630 = vrot.slane %v5628, 1
  %v5631 = vor.u32 %v5626, %v5630
  %v5633 = vshll.u32 %v4852, 16
  %v5635 = vrot.slane %v5633, 1
  %v5636 = vsel %vm2011, %v5631, %v5635
  %v5637 = vshrl.u32 %v4852, 16
  %v5639 = vor.u32 %v5637, %v5635
  %v5641 = vshll.u32 %v5352, 16
  %v5643 = vrot.slane %v5641, 1
  %v5644 = vsel %vm2011, %v5639, %v5643
  %v5646 = vshrl.u32 %v4853, 16
  %v5648 = vshll.u32 %v4853, 16
  %v5650 = vrot.slane %v5648, 1
  %v5651 = vor.u32 %v5646, %v5650
  %v5653 = vshll.u32 %v4854, 16
  %v5655 = vrot.slane %v5653, 1
  %v5656 = vsel %vm2011, %v5651, %v5655
  %v5657 = vshrl.u32 %v4854, 16
  %v5659 = vor.u32 %v5657, %v5655
  %v5661 = vshll.u32 %v5353, 16
  %v5663 = vrot.slane %v5661, 1
  %v5664 = vsel %vm2011, %v5659, %v5663
  %v5666 = vshrl.u32 %v4855, 16
  %v5668 = vshll.u32 %v4855, 16
  %v5670 = vrot.slane %v5668, 1
  %v5671 = vor.u32 %v5666, %v5670
  %v5673 = vshll.u32 %v4856, 16
  %v5675 = vrot.slane %v5673, 1
  %v5676 = vsel %vm2011, %v5671, %v5675
  %v5677 = vshrl.u32 %v4856, 16
  %v5679 = vor.u32 %v5677, %v5675
  %v5681 = vshll.u32 %v5354, 16
  %v5683 = vrot.slane %v5681, 1
  %v5684 = vsel %vm2011, %v5679, %v5683
  %v5686 = vshrl.u32 %v4857, 16
  %v5688 = vshll.u32 %v4857, 16
  %v5690 = vrot.slane %v5688, 1
  %v5691 = vor.u32 %v5686, %v5690
  %v5693 = vshll.u32 %v4858, 16
  %v5695 = vrot.slane %v5693, 1
  %v5696 = vsel %vm2011, %v5691, %v5695
  %v5697 = vshrl.u32 %v4858, 16
  %v5699 = vor.u32 %v5697, %v5695
  %v5701 = vshll.u32 %v5355, 16
  %v5703 = vrot.slane %v5701, 1
  %v5704 = vsel %vm2011, %v5699, %v5703
  %v5706 = vshrl.u32 %v4859, 16
  %v5708 = vshll.u32 %v4859, 16
  %v5710 = vrot.slane %v5708, 1
  %v5711 = vor.u32 %v5706, %v5710
  %v5713 = vshll.u32 %v4860, 16
  %v5715 = vrot.slane %v5713, 1
  %v5716 = vsel %vm2011, %v5711, %v5715
  %v5717 = vshrl.u32 %v4860, 16
  %v5719 = vor.u32 %v5717, %v5715
  %v5721 = vshll.u32 %v5356, 16
  %v5723 = vrot.slane %v5721, 1
  %v5724 = vsel %vm2011, %v5719, %v5723
  %v5726 = vshrl.u32 %v4861, 16
  %v5728 = vshll.u32 %v4861, 16
  %v5730 = vrot.slane %v5728, 1
  %v5731 = vor.u32 %v5726, %v5730
  %v5733 = vshll.u32 %v4862, 16
  %v5735 = vrot.slane %v5733, 1
  %v5736 = vsel %vm2011, %v5731, %v5735
  %v5737 = vshrl.u32 %v4862, 16
  %v5739 = vor.u32 %v5737, %v5735
  %v5741 = vshll.u32 %v5357, 16
  %v5743 = vrot.slane %v5741, 1
  %v5744 = vsel %vm2011, %v5739, %v5743
  %v5746 = vshrl.u32 %v4863, 16
  %v5748 = vshll.u32 %v4863, 16
  %v5750 = vrot.slane %v5748, 1
  %v5751 = vor.u32 %v5746, %v5750
  %v5753 = vshll.u32 %v4864, 16
  %v5755 = vrot.slane %v5753, 1
  %v5756 = vsel %vm2011, %v5751, %v5755
  %v5757 = vshrl.u32 %v4864, 16
  %v5759 = vor.u32 %v5757, %v5755
  %v5761 = vshll.u32 %v5358, 16
  %v5763 = vrot.slane %v5761, 1
  %v5764 = vsel %vm2011, %v5759, %v5763
  %v5766 = vshrl.u32 %v4865, 16
  %v5768 = vshll.u32 %v4865, 16
  %v5770 = vrot.slane %v5768, 1
  %v5771 = vor.u32 %v5766, %v5770
  %v5773 = vshll.u32 %v4866, 16
  %v5775 = vrot.slane %v5773, 1
  %v5776 = vsel %vm2011, %v5771, %v5775
  %v5777 = vshrl.u32 %v4866, 16
  %v5779 = vor.u32 %v5777, %v5775
  %v5781 = vshll.u32 %v5359, 16
  %v5783 = vrot.slane %v5781, 1
  %v5784 = vsel %vm2011, %v5779, %v5783
  %v5786 = vshrl.u32 %v4867, 16
  %v5788 = vshll.u32 %v4867, 16
  %v5790 = vrot.slane %v5788, 1
  %v5791 = vor.u32 %v5786, %v5790
  %v5793 = vshll.u32 %v4868, 16
  %v5795 = vrot.slane %v5793, 1
  %v5796 = vsel %vm2011, %v5791, %v5795
  %v5797 = vshrl.u32 %v4868, 16
  %v5799 = vor.u32 %v5797, %v5795
  %v5801 = vshll.u32 %v5360, 16
  %v5803 = vrot.slane %v5801, 1
  %v5804 = vsel %vm2011, %v5799, %v5803
  %v5806 = vshrl.u32 %v4869, 16
  %v5808 = vshll.u32 %v4869, 16
  %v5810 = vrot.slane %v5808, 1
  %v5811 = vor.u32 %v5806, %v5810
  %v5813 = vshll.u32 %v4870, 16
  %v5815 = vrot.slane %v5813, 1
  %v5816 = vsel %vm2011, %v5811, %v5815
  %v5817 = vshrl.u32 %v4870, 16
  %v5819 = vor.u32 %v5817, %v5815
  %v5821 = vshll.u32 %v5361, 16
  %v5823 = vrot.slane %v5821, 1
  %v5824 = vsel %vm2011, %v5819, %v5823
  %v5826 = vshrl.u32 %v4871, 16
  %v5828 = vshll.u32 %v4871, 16
  %v5830 = vrot.slane %v5828, 1
  %v5831 = vor.u32 %v5826, %v5830
  %v5833 = vshll.u32 %v4872, 16
  %v5835 = vrot.slane %v5833, 1
  %v5836 = vsel %vm2011, %v5831, %v5835
  %v5837 = vshrl.u32 %v4872, 16
  %v5839 = vor.u32 %v5837, %v5835
  %v5841 = vshll.u32 %v5362, 16
  %v5843 = vrot.slane %v5841, 1
  %v5844 = vsel %vm2011, %v5839, %v5843
  %v5846 = vshrl.u32 %v4873, 16
  %v5848 = vshll.u32 %v4873, 16
  %v5850 = vrot.slane %v5848, 1
  %v5851 = vor.u32 %v5846, %v5850
  %v5853 = vshll.u32 %v4874, 16
  %v5855 = vrot.slane %v5853, 1
  %v5856 = vsel %vm2011, %v5851, %v5855
  %v5857 = vshrl.u32 %v4874, 16
  %v5859 = vor.u32 %v5857, %v5855
  %v5861 = vshll.u32 %v5363, 16
  %v5863 = vrot.slane %v5861, 1
  %v5864 = vsel %vm2011, %v5859, %v5863
  %v5866 = vshrl.u32 %v4875, 16
  %v5868 = vshll.u32 %v4875, 16
  %v5870 = vrot.slane %v5868, 1
  %v5871 = vor.u32 %v5866, %v5870
  %v5873 = vshll.u32 %v4876, 16
  %v5875 = vrot.slane %v5873, 1
  %v5876 = vsel %vm2011, %v5871, %v5875
  %v5877 = vshrl.u32 %v4876, 16
  %v5879 = vor.u32 %v5877, %v5875
  %v5881 = vshll.u32 %v5364, 16
  %v5883 = vrot.slane %v5881, 1
  %v5884 = vsel %vm2011, %v5879, %v5883
  %v5886 = vshrl.u32 %v4877, 16
  %v5888 = vshll.u32 %v4877, 16
  %v5890 = vrot.slane %v5888, 1
  %v5891 = vor.u32 %v5886, %v5890
  %v5893 = vshll.u32 %v4878, 16
  %v5895 = vrot.slane %v5893, 1
  %v5896 = vsel %vm2011, %v5891, %v5895
  %v5897 = vshrl.u32 %v4878, 16
  %v5899 = vor.u32 %v5897, %v5895
  %v5901 = vshll.u32 %v5365, 16
  %v5903 = vrot.slane %v5901, 1
  %v5904 = vsel %vm2011, %v5899, %v5903
  %v5906 = vshrl.u32 %v4879, 16
  %v5908 = vshll.u32 %v4879, 16
  %v5910 = vrot.slane %v5908, 1
  %v5911 = vor.u32 %v5906, %v5910
  %v5913 = vshll.u32 %v4880, 16
  %v5915 = vrot.slane %v5913, 1
  %v5916 = vsel %vm2011, %v5911, %v5915
  %v5917 = vshrl.u32 %v4880, 16
  %v5919 = vor.u32 %v5917, %v5915
  %v5921 = vshll.u32 %v5366, 16
  %v5923 = vrot.slane %v5921, 1
  %v5924 = vsel %vm2011, %v5919, %v5923
  %v5926 = vshrl.u32 %v4881, 16
  %v5928 = vshll.u32 %v4881, 16
  %v5930 = vrot.slane %v5928, 1
  %v5931 = vor.u32 %v5926, %v5930
  %v5933 = vshll.u32 %v4882, 16
  %v5935 = vrot.slane %v5933, 1
  %v5936 = vsel %vm2011, %v5931, %v5935
  %v5937 = vshrl.u32 %v4882, 16
  %v5939 = vor.u32 %v5937, %v5935
  %v5941 = vshll.u32 %v5367, 16
  %v5943 = vrot.slane %v5941, 1
  %v5944 = vsel %vm2011, %v5939, %v5943
  %v5946 = vshrl.u32 %v4883, 16
  %v5948 = vshll.u32 %v4883, 16
  %v5950 = vrot.slane %v5948, 1
  %v5951 = vor.u32 %v5946, %v5950
  %v5953 = vshll.u32 %v4884, 16
  %v5955 = vrot.slane %v5953, 1
  %v5956 = vsel %vm2011, %v5951, %v5955
  %v5957 = vshrl.u32 %v4884, 16
  %v5959 = vor.u32 %v5957, %v5955
  %v5961 = vshll.u32 %v5368, 16
  %v5963 = vrot.slane %v5961, 1
  %v5964 = vsel %vm2011, %v5959, %v5963
  %v5966 = vshrl.u32 %v4885, 16
  %v5968 = vshll.u32 %v4885, 16
  %v5970 = vrot.slane %v5968, 1
  %v5971 = vor.u32 %v5966, %v5970
  %v5973 = vshll.u32 %v4886, 16
  %v5975 = vrot.slane %v5973, 1
  %v5976 = vsel %vm2011, %v5971, %v5975
  %v5977 = vshrl.u32 %v4886, 16
  %v5979 = vor.u32 %v5977, %v5975
  %v5981 = vshll.u32 %v5369, 16
  %v5983 = vrot.slane %v5981, 1
  %v5984 = vsel %vm2011, %v5979, %v5983
  %v5986 = vshrl.u32 %v4887, 16
  %v5988 = vshll.u32 %v4887, 16
  %v5990 = vrot.slane %v5988, 1
  %v5991 = vor.u32 %v5986, %v5990
  %v5993 = vshll.u32 %v4888, 16
  %v5995 = vrot.slane %v5993, 1
  %v5996 = vsel %vm2011, %v5991, %v5995
  %v5997 = vshrl.u32 %v4888, 16
  %v5999 = vor.u32 %v5997, %v5995
  %v6001 = vshll.u32 %v5370, 16
  %v6003 = vrot.slane %v6001, 1
  %v6004 = vsel %vm2011, %v5999, %v6003
  %v6006 = vshrl.u32 %v4889, 16
  %v6008 = vshll.u32 %v4889, 16
  %v6010 = vrot.slane %v6008, 1
  %v6011 = vor.u32 %v6006, %v6010
  %v6013 = vshll.u32 %v4890, 16
  %v6015 = vrot.slane %v6013, 1
  %v6016 = vsel %vm2011, %v6011, %v6015
  %v6017 = vshrl.u32 %v4890, 16
  %v6019 = vor.u32 %v6017, %v6015
  %v6021 = vshll.u32 %v5371, 16
  %v6023 = vrot.slane %v6021, 1
  %v6024 = vsel %vm2011, %v6019, %v6023
  %v6026 = vshrl.u32 %v4891, 16
  %v6028 = vshll.u32 %v4891, 16
  %v6030 = vrot.slane %v6028, 1
  %v6031 = vor.u32 %v6026, %v6030
  %v6033 = vshll.u32 %v4892, 16
  %v6035 = vrot.slane %v6033, 1
  %v6036 = vsel %vm2011, %v6031, %v6035
  %v6037 = vshrl.u32 %v4892, 16
  %v6039 = vor.u32 %v6037, %v6035
  %v6041 = vshll.u32 %v5372, 16
  %v6043 = vrot.slane %v6041, 1
  %v6044 = vsel %vm2011, %v6039, %v6043
  %v6046 = vshrl.u32 %v4893, 16
  %v6048 = vshll.u32 %v4893, 16
  %v6050 = vrot.slane %v6048, 1
  %v6051 = vor.u32 %v6046, %v6050
  %v6053 = vshll.u32 %v4894, 16
  %v6055 = vrot.slane %v6053, 1
  %v6056 = vsel %vm2011, %v6051, %v6055
  %v6057 = vshrl.u32 %v4894, 16
  %v6059 = vor.u32 %v6057, %v6055
  %v6061 = vshll.u32 %v5373, 16
  %v6063 = vrot.slane %v6061, 1
  %v6064 = vsel %vm2011, %v6059, %v6063
  %v6066 = vshrl.u32 %v4895, 16
  %v6068 = vshll.u32 %v4895, 16
  %v6070 = vrot.slane %v6068, 1
  %v6071 = vor.u32 %v6066, %v6070
  %v6073 = vshll.u32 %v4896, 16
  %v6075 = vrot.slane %v6073, 1
  %v6076 = vsel %vm2011, %v6071, %v6075
  %v6077 = vshrl.u32 %v4896, 16
  %v6079 = vor.u32 %v6077, %v6075
  %v6081 = vshll.u32 %v5374, 16
  %v6083 = vrot.slane %v6081, 1
  %v6084 = vsel %vm2011, %v6079, %v6083
  %v6086 = vshrl.u32 %v4897, 16
  %v6088 = vshll.u32 %v4897, 16
  %v6090 = vrot.slane %v6088, 1
  %v6091 = vor.u32 %v6086, %v6090
  %v6093 = vshll.u32 %v4898, 16
  %v6095 = vrot.slane %v6093, 1
  %v6096 = vsel %vm2011, %v6091, %v6095
  %v6097 = vshrl.u32 %v4898, 16
  %v6099 = vor.u32 %v6097, %v6095
  %v6101 = vshll.u32 %v5375, 16
  %v6103 = vrot.slane %v6101, 1
  %v6104 = vsel %vm2011, %v6099, %v6103
  %v6106 = vshrl.u32 %v4899, 16
  %v6108 = vshll.u32 %v4899, 16
  %v6110 = vrot.slane %v6108, 1
  %v6111 = vor.u32 %v6106, %v6110
  %v6113 = vshll.u32 %v4900, 16
  %v6115 = vrot.slane %v6113, 1
  %v6116 = vsel %vm2011, %v6111, %v6115
  %v6117 = vshrl.u32 %v4900, 16
  %v6119 = vor.u32 %v6117, %v6115
  %v6121 = vshll.u32 %v5376, 16
  %v6123 = vrot.slane %v6121, 1
  %v6124 = vsel %vm2011, %v6119, %v6123
  %v6126 = vshrl.u32 %v4901, 16
  %v6128 = vshll.u32 %v4901, 16
  %v6130 = vrot.slane %v6128, 1
  %v6131 = vor.u32 %v6126, %v6130
  %v6133 = vshll.u32 %v4902, 16
  %v6135 = vrot.slane %v6133, 1
  %v6136 = vsel %vm2011, %v6131, %v6135
  %v6137 = vshrl.u32 %v4902, 16
  %v6139 = vor.u32 %v6137, %v6135
  %v6141 = vshll.u32 %v5377, 16
  %v6143 = vrot.slane %v6141, 1
  %v6144 = vsel %vm2011, %v6139, %v6143
  %v6146 = vshrl.u32 %v4903, 16
  %v6148 = vshll.u32 %v4903, 16
  %v6150 = vrot.slane %v6148, 1
  %v6151 = vor.u32 %v6146, %v6150
  %v6153 = vshll.u32 %v4904, 16
  %v6155 = vrot.slane %v6153, 1
  %v6156 = vsel %vm2011, %v6151, %v6155
  %v6157 = vshrl.u32 %v4904, 16
  %v6159 = vor.u32 %v6157, %v6155
  %v6161 = vshll.u32 %v5378, 16
  %v6163 = vrot.slane %v6161, 1
  %v6164 = vsel %vm2011, %v6159, %v6163
  %v6166 = vshrl.u32 %v4905, 16
  %v6168 = vshll.u32 %v4905, 16
  %v6170 = vrot.slane %v6168, 1
  %v6171 = vor.u32 %v6166, %v6170
  %v6173 = vshll.u32 %v4906, 16
  %v6175 = vrot.slane %v6173, 1
  %v6176 = vsel %vm2011, %v6171, %v6175
  %v6177 = vshrl.u32 %v4906, 16
  %v6179 = vor.u32 %v6177, %v6175
  %v6181 = vshll.u32 %v5379, 16
  %v6183 = vrot.slane %v6181, 1
  %v6184 = vsel %vm2011, %v6179, %v6183
  %v6186 = vshrl.u32 %v4907, 16
  %v6188 = vshll.u32 %v4907, 16
  %v6190 = vrot.slane %v6188, 1
  %v6191 = vor.u32 %v6186, %v6190
  %v6193 = vshll.u32 %v4908, 16
  %v6195 = vrot.slane %v6193, 1
  %v6196 = vsel %vm2011, %v6191, %v6195
  %v6197 = vshrl.u32 %v4908, 16
  %v6199 = vor.u32 %v6197, %v6195
  %v6201 = vshll.u32 %v5380, 16
  %v6203 = vrot.slane %v6201, 1
  %v6204 = vsel %vm2011, %v6199, %v6203
  %v6206 = vshrl.u32 %v4909, 16
  %v6208 = vshll.u32 %v4909, 16
  %v6210 = vrot.slane %v6208, 1
  %v6211 = vor.u32 %v6206, %v6210
  %v6213 = vshll.u32 %v4910, 16
  %v6215 = vrot.slane %v6213, 1
  %v6216 = vsel %vm2011, %v6211, %v6215
  %v6217 = vshrl.u32 %v4910, 16
  %v6219 = vor.u32 %v6217, %v6215
  %v6221 = vshll.u32 %v5381, 16
  %v6223 = vrot.slane %v6221, 1
  %v6224 = vsel %vm2011, %v6219, %v6223
  %v6226 = vshrl.u32 %v4911, 16
  %v6228 = vshll.u32 %v4911, 16
  %v6230 = vrot.slane %v6228, 1
  %v6231 = vor.u32 %v6226, %v6230
  %v6233 = vshll.u32 %v4912, 16
  %v6235 = vrot.slane %v6233, 1
  %v6236 = vsel %vm2011, %v6231, %v6235
  %v6237 = vshrl.u32 %v4912, 16
  %v6239 = vor.u32 %v6237, %v6235
  %v6241 = vshll.u32 %v5382, 16
  %v6243 = vrot.slane %v6241, 1
  %v6244 = vsel %vm2011, %v6239, %v6243
  %v6246 = vshrl.u32 %v4913, 16
  %v6248 = vshll.u32 %v4913, 16
  %v6250 = vrot.slane %v6248, 1
  %v6251 = vor.u32 %v6246, %v6250
  %v6253 = vshll.u32 %v4914, 16
  %v6255 = vrot.slane %v6253, 1
  %v6256 = vsel %vm2011, %v6251, %v6255
  %v6257 = vshrl.u32 %v4914, 16
  %v6259 = vor.u32 %v6257, %v6255
  %v6261 = vshll.u32 %v5383, 16
  %v6263 = vrot.slane %v6261, 1
  %v6264 = vsel %vm2011, %v6259, %v6263
  %v6266 = vshrl.u32 %v4915, 16
  %v6268 = vshll.u32 %v4915, 16
  %v6270 = vrot.slane %v6268, 1
  %v6271 = vor.u32 %v6266, %v6270
  %v6273 = vshll.u32 %v4916, 16
  %v6275 = vrot.slane %v6273, 1
  %v6276 = vsel %vm2011, %v6271, %v6275
  %v6277 = vshrl.u32 %v4916, 16
  %v6279 = vor.u32 %v6277, %v6275
  %v6281 = vshll.u32 %v5384, 16
  %v6283 = vrot.slane %v6281, 1
  %v6284 = vsel %vm2011, %v6279, %v6283
  %v6286 = vshrl.u32 %v4917, 16
  %v6288 = vshll.u32 %v4917, 16
  %v6290 = vrot.slane %v6288, 1
  %v6291 = vor.u32 %v6286, %v6290
  %v6293 = vshll.u32 %v4918, 16
  %v6295 = vrot.slane %v6293, 1
  %v6296 = vsel %vm2011, %v6291, %v6295
  %v6297 = vshrl.u32 %v4918, 16
  %v6299 = vor.u32 %v6297, %v6295
  %v6301 = vshll.u32 %v5385, 16
  %v6303 = vrot.slane %v6301, 1
  %v6304 = vsel %vm2011, %v6299, %v6303
  %v6306 = vshrl.u32 %v4919, 16
  %v6308 = vshll.u32 %v4919, 16
  %v6310 = vrot.slane %v6308, 1
  %v6311 = vor.u32 %v6306, %v6310
  %v6313 = vshll.u32 %v4920, 16
  %v6315 = vrot.slane %v6313, 1
  %v6316 = vsel %vm2011, %v6311, %v6315
  %v6317 = vshrl.u32 %v4920, 16
  %v6319 = vor.u32 %v6317, %v6315
  %v6321 = vshll.u32 %v5386, 16
  %v6323 = vrot.slane %v6321, 1
  %v6324 = vsel %vm2011, %v6319, %v6323
  %v6326 = vshrl.u32 %v4921, 16
  %v6328 = vshll.u32 %v4921, 16
  %v6330 = vrot.slane %v6328, 1
  %v6331 = vor.u32 %v6326, %v6330
  %v6333 = vshll.u32 %v4922, 16
  %v6335 = vrot.slane %v6333, 1
  %v6336 = vsel %vm2011, %v6331, %v6335
  %v6337 = vshrl.u32 %v4922, 16
  %v6339 = vor.u32 %v6337, %v6335
  %v6341 = vshll.u32 %v5387, 16
  %v6343 = vrot.slane %v6341, 1
  %v6344 = vsel %vm2011, %v6339, %v6343
  %v6346 = vshrl.u32 %v4923, 16
  %v6348 = vshll.u32 %v4923, 16
  %v6350 = vrot.slane %v6348, 1
  %v6351 = vor.u32 %v6346, %v6350
  %v6353 = vshll.u32 %v4924, 16
  %v6355 = vrot.slane %v6353, 1
  %v6356 = vsel %vm2011, %v6351, %v6355
  %v6357 = vshrl.u32 %v4924, 16
  %v6359 = vor.u32 %v6357, %v6355
  %v6361 = vshll.u32 %v5388, 16
  %v6363 = vrot.slane %v6361, 1
  %v6364 = vsel %vm2011, %v6359, %v6363
  %v6366 = vshrl.u32 %v4925, 16
  %v6368 = vshll.u32 %v4925, 16
  %v6370 = vrot.slane %v6368, 1
  %v6371 = vor.u32 %v6366, %v6370
  %v6373 = vshll.u32 %v4926, 16
  %v6375 = vrot.slane %v6373, 1
  %v6376 = vsel %vm2011, %v6371, %v6375
  %v6377 = vshrl.u32 %v4926, 16
  %v6379 = vor.u32 %v6377, %v6375
  %v6381 = vshll.u32 %v5389, 16
  %v6383 = vrot.slane %v6381, 1
  %v6384 = vsel %vm2011, %v6379, %v6383
  %v6386 = vshrl.u32 %v4927, 16
  %v6388 = vshll.u32 %v4927, 16
  %v6390 = vrot.slane %v6388, 1
  %v6391 = vor.u32 %v6386, %v6390
  %v6393 = vshll.u32 %v4928, 16
  %v6395 = vrot.slane %v6393, 1
  %v6396 = vsel %vm2011, %v6391, %v6395
  %v6397 = vshrl.u32 %v4928, 16
  %v6399 = vor.u32 %v6397, %v6395
  %v6401 = vshll.u32 %v5390, 16
  %v6403 = vrot.slane %v6401, 1
  %v6404 = vsel %vm2011, %v6399, %v6403
  %v6406 = vshrl.u32 %v4929, 16
  %v6408 = vshll.u32 %v4929, 16
  %v6410 = vrot.slane %v6408, 1
  %v6411 = vor.u32 %v6406, %v6410
  %v6413 = vshll.u32 %v4930, 16
  %v6415 = vrot.slane %v6413, 1
  %v6416 = vsel %vm2011, %v6411, %v6415
  %v6417 = vshrl.u32 %v4930, 16
  %v6419 = vor.u32 %v6417, %v6415
  %v6421 = vshll.u32 %v5391, 16
  %v6423 = vrot.slane %v6421, 1
  %v6424 = vsel %vm2011, %v6419, %v6423
  %v6426 = vshrl.u32 %v4931, 16
  %v6428 = vshll.u32 %v4931, 16
  %v6430 = vrot.slane %v6428, 1
  %v6431 = vor.u32 %v6426, %v6430
  %v6433 = vshll.u32 %v4932, 16
  %v6435 = vrot.slane %v6433, 1
  %v6436 = vsel %vm2011, %v6431, %v6435
  %v6437 = vshrl.u32 %v4932, 16
  %v6439 = vor.u32 %v6437, %v6435
  %v6441 = vshll.u32 %v5392, 16
  %v6443 = vrot.slane %v6441, 1
  %v6444 = vsel %vm2011, %v6439, %v6443
  %v6446 = vshrl.u32 %v4933, 16
  %v6448 = vshll.u32 %v4933, 16
  %v6450 = vrot.slane %v6448, 1
  %v6451 = vor.u32 %v6446, %v6450
  %v6453 = vshll.u32 %v4934, 16
  %v6455 = vrot.slane %v6453, 1
  %v6456 = vsel %vm2011, %v6451, %v6455
  %v6457 = vshrl.u32 %v4934, 16
  %v6459 = vor.u32 %v6457, %v6455
  %v6461 = vshll.u32 %v5393, 16
  %v6463 = vrot.slane %v6461, 1
  %v6464 = vsel %vm2011, %v6459, %v6463
  %v6466 = vshrl.u32 %v4935, 16
  %v6468 = vshll.u32 %v4935, 16
  %v6470 = vrot.slane %v6468, 1
  %v6471 = vor.u32 %v6466, %v6470
  %v6473 = vshll.u32 %v4936, 16
  %v6475 = vrot.slane %v6473, 1
  %v6476 = vsel %vm2011, %v6471, %v6475
  %v6477 = vshrl.u32 %v4936, 16
  %v6479 = vor.u32 %v6477, %v6475
  %v6481 = vshll.u32 %v5394, 16
  %v6483 = vrot.slane %v6481, 1
  %v6484 = vsel %vm2011, %v6479, %v6483
  %v6486 = vshrl.u32 %v4937, 16
  %v6488 = vshll.u32 %v4937, 16
  %v6490 = vrot.slane %v6488, 1
  %v6491 = vor.u32 %v6486, %v6490
  %v6493 = vshll.u32 %v4938, 16
  %v6495 = vrot.slane %v6493, 1
  %v6496 = vsel %vm2011, %v6491, %v6495
  %v6497 = vshrl.u32 %v4938, 16
  %v6499 = vor.u32 %v6497, %v6495
  %v6501 = vshll.u32 %v5395, 16
  %v6503 = vrot.slane %v6501, 1
  %v6504 = vsel %vm2011, %v6499, %v6503
  %v6506 = vshrl.u32 %v4939, 16
  %v6508 = vshll.u32 %v4939, 16
  %v6510 = vrot.slane %v6508, 1
  %v6511 = vor.u32 %v6506, %v6510
  %v6513 = vshll.u32 %v4940, 16
  %v6515 = vrot.slane %v6513, 1
  %v6516 = vsel %vm2011, %v6511, %v6515
  %v6517 = vshrl.u32 %v4940, 16
  %v6519 = vor.u32 %v6517, %v6515
  %v6521 = vshll.u32 %v5396, 16
  %v6523 = vrot.slane %v6521, 1
  %v6524 = vsel %vm2011, %v6519, %v6523
  %v6526 = vshrl.u32 %v4941, 16
  %v6528 = vshll.u32 %v4941, 16
  %v6530 = vrot.slane %v6528, 1
  %v6531 = vor.u32 %v6526, %v6530
  %v6533 = vshll.u32 %v4942, 16
  %v6535 = vrot.slane %v6533, 1
  %v6536 = vsel %vm2011, %v6531, %v6535
  %v6537 = vshrl.u32 %v4942, 16
  %v6539 = vor.u32 %v6537, %v6535
  %v6541 = vshll.u32 %v5397, 16
  %v6543 = vrot.slane %v6541, 1
  %v6544 = vsel %vm2011, %v6539, %v6543
  %v6546 = vshrl.u32 %v4943, 16
  %v6548 = vshll.u32 %v4943, 16
  %v6550 = vrot.slane %v6548, 1
  %v6551 = vor.u32 %v6546, %v6550
  %v6553 = vshll.u32 %v4944, 16
  %v6555 = vrot.slane %v6553, 1
  %v6556 = vsel %vm2011, %v6551, %v6555
  %v6557 = vshrl.u32 %v4944, 16
  %v6559 = vor.u32 %v6557, %v6555
  %v6561 = vshll.u32 %v5398, 16
  %v6563 = vrot.slane %v6561, 1
  %v6564 = vsel %vm2011, %v6559, %v6563
  %v6566 = vshrl.u32 %v4945, 16
  %v6568 = vshll.u32 %v4945, 16
  %v6570 = vrot.slane %v6568, 1
  %v6571 = vor.u32 %v6566, %v6570
  %v6573 = vshll.u32 %v4946, 16
  %v6575 = vrot.slane %v6573, 1
  %v6576 = vsel %vm2011, %v6571, %v6575
  %v6577 = vshrl.u32 %v4946, 16
  %v6579 = vor.u32 %v6577, %v6575
  %v6581 = vshll.u32 %v5399, 16
  %v6583 = vrot.slane %v6581, 1
  %v6584 = vsel %vm2011, %v6579, %v6583
  %v6586 = vshrl.u32 %v4947, 16
  %v6588 = vshll.u32 %v4947, 16
  %v6590 = vrot.slane %v6588, 1
  %v6591 = vor.u32 %v6586, %v6590
  %v6593 = vshll.u32 %v4948, 16
  %v6595 = vrot.slane %v6593, 1
  %v6596 = vsel %vm2011, %v6591, %v6595
  %v6597 = vshrl.u32 %v4948, 16
  %v6599 = vor.u32 %v6597, %v6595
  %v6601 = vshll.u32 %v5400, 16
  %v6603 = vrot.slane %v6601, 1
  %v6604 = vsel %vm2011, %v6599, %v6603
  %v6606 = vshrl.u32 %v4949, 16
  %v6608 = vshll.u32 %v4949, 16
  %v6610 = vrot.slane %v6608, 1
  %v6611 = vor.u32 %v6606, %v6610
  %v6613 = vshll.u32 %v4950, 16
  %v6615 = vrot.slane %v6613, 1
  %v6616 = vsel %vm2011, %v6611, %v6615
  %v6617 = vshrl.u32 %v4950, 16
  %v6619 = vor.u32 %v6617, %v6615
  %v6621 = vshll.u32 %v5401, 16
  %v6623 = vrot.slane %v6621, 1
  %v6624 = vsel %vm2011, %v6619, %v6623
  %v6626 = vshrl.u32 %v4951, 16
  %v6628 = vshll.u32 %v4951, 16
  %v6630 = vrot.slane %v6628, 1
  %v6631 = vor.u32 %v6626, %v6630
  %v6633 = vshll.u32 %v4952, 16
  %v6635 = vrot.slane %v6633, 1
  %v6636 = vsel %vm2011, %v6631, %v6635
  %v6637 = vshrl.u32 %v4952, 16
  %v6639 = vor.u32 %v6637, %v6635
  %v6641 = vshll.u32 %v5402, 16
  %v6643 = vrot.slane %v6641, 1
  %v6644 = vsel %vm2011, %v6639, %v6643
  %v6646 = vshrl.u32 %v4953, 16
  %v6648 = vshll.u32 %v4953, 16
  %v6650 = vrot.slane %v6648, 1
  %v6651 = vor.u32 %v6646, %v6650
  %v6653 = vshll.u32 %v4954, 16
  %v6655 = vrot.slane %v6653, 1
  %v6656 = vsel %vm2011, %v6651, %v6655
  %v6657 = vshrl.u32 %v4954, 16
  %v6659 = vor.u32 %v6657, %v6655
  %v6661 = vshll.u32 %v5403, 16
  %v6663 = vrot.slane %v6661, 1
  %v6664 = vsel %vm2011, %v6659, %v6663
  %v6666 = vshrl.u32 %v4955, 16
  %v6668 = vshll.u32 %v4955, 16
  %v6670 = vrot.slane %v6668, 1
  %v6671 = vor.u32 %v6666, %v6670
  %v6673 = vshll.u32 %v4956, 16
  %v6675 = vrot.slane %v6673, 1
  %v6676 = vsel %vm2011, %v6671, %v6675
  %v6677 = vshrl.u32 %v4956, 16
  %v6679 = vor.u32 %v6677, %v6675
  %v6681 = vshll.u32 %v5404, 16
  %v6683 = vrot.slane %v6681, 1
  %v6684 = vsel %vm2011, %v6679, %v6683
  %6685 = vrot.lane.b32.xlu0 %v5416, 16
  %v6686 = vpop.permute.xlu0 %6685
  %6687 = vrot.lane.b32.xlu0 %v5424, 16
  %v6688 = vpop.permute.xlu0 %6687
  %6689 = vrot.lane.b32.xlu0 %v5436, 16
  %v6690 = vpop.permute.xlu0 %6689
  %6691 = vrot.lane.b32.xlu0 %v5444, 16
  %v6692 = vpop.permute.xlu0 %6691
  %6693 = vrot.lane.b32.xlu0 %v5456, 16
  %v6694 = vpop.permute.xlu0 %6693
  %6695 = vrot.lane.b32.xlu0 %v5464, 16
  %v6696 = vpop.permute.xlu0 %6695
  %6697 = vrot.lane.b32.xlu0 %v5476, 16
  %v6698 = vpop.permute.xlu0 %6697
  %6699 = vrot.lane.b32.xlu0 %v5484, 16
  %v6700 = vpop.permute.xlu0 %6699
  %6701 = vrot.lane.b32.xlu0 %v5496, 16
  %v6702 = vpop.permute.xlu0 %6701
  %6703 = vrot.lane.b32.xlu0 %v5504, 16
  %v6704 = vpop.permute.xlu0 %6703
  %6705 = vrot.lane.b32.xlu0 %v5516, 16
  %v6706 = vpop.permute.xlu0 %6705
  %6707 = vrot.lane.b32.xlu0 %v5524, 16
  %v6708 = vpop.permute.xlu0 %6707
  %6709 = vrot.lane.b32.xlu0 %v5536, 16
  %v6710 = vpop.permute.xlu0 %6709
  %6711 = vrot.lane.b32.xlu0 %v5544, 16
  %v6712 = vpop.permute.xlu0 %6711
  %6713 = vrot.lane.b32.xlu0 %v5556, 16
  %v6714 = vpop.permute.xlu0 %6713
  %6715 = vrot.lane.b32.xlu0 %v5564, 16
  %v6716 = vpop.permute.xlu0 %6715
  %6717 = vrot.lane.b32.xlu0 %v5576, 16
  %v6718 = vpop.permute.xlu0 %6717
  %6719 = vrot.lane.b32.xlu0 %v5584, 16
  %v6720 = vpop.permute.xlu0 %6719
  %6721 = vrot.lane.b32.xlu0 %v5596, 16
  %v6722 = vpop.permute.xlu0 %6721
  %6723 = vrot.lane.b32.xlu0 %v5604, 16
  %v6724 = vpop.permute.xlu0 %6723
  %6725 = vrot.lane.b32.xlu0 %v5616, 16
  %v6726 = vpop.permute.xlu0 %6725
  %6727 = vrot.lane.b32.xlu0 %v5624, 16
  %v6728 = vpop.permute.xlu0 %6727
  %6729 = vrot.lane.b32.xlu0 %v5636, 16
  %v6730 = vpop.permute.xlu0 %6729
  %6731 = vrot.lane.b32.xlu0 %v5644, 16
  %v6732 = vpop.permute.xlu0 %6731
  %6733 = vrot.lane.b32.xlu0 %v5656, 16
  %v6734 = vpop.permute.xlu0 %6733
  %6735 = vrot.lane.b32.xlu0 %v5664, 16
  %v6736 = vpop.permute.xlu0 %6735
  %6737 = vrot.lane.b32.xlu0 %v5676, 16
  %v6738 = vpop.permute.xlu0 %6737
  %6739 = vrot.lane.b32.xlu0 %v5684, 16
  %v6740 = vpop.permute.xlu0 %6739
  %6741 = vrot.lane.b32.xlu0 %v5696, 16
  %v6742 = vpop.permute.xlu0 %6741
  %6743 = vrot.lane.b32.xlu0 %v5704, 16
  %v6744 = vpop.permute.xlu0 %6743
  %6745 = vrot.lane.b32.xlu0 %v5716, 16
  %v6746 = vpop.permute.xlu0 %6745
  %6747 = vrot.lane.b32.xlu0 %v5724, 16
  %v6748 = vpop.permute.xlu0 %6747
  %6749 = vrot.lane.b32.xlu0 %v5736, 16
  %v6750 = vpop.permute.xlu0 %6749
  %6751 = vrot.lane.b32.xlu0 %v5744, 16
  %v6752 = vpop.permute.xlu0 %6751
  %6753 = vrot.lane.b32.xlu0 %v5756, 16
  %v6754 = vpop.permute.xlu0 %6753
  %6755 = vrot.lane.b32.xlu0 %v5764, 16
  %v6756 = vpop.permute.xlu0 %6755
  %6757 = vrot.lane.b32.xlu0 %v5776, 16
  %v6758 = vpop.permute.xlu0 %6757
  %6759 = vrot.lane.b32.xlu0 %v5784, 16
  %v6760 = vpop.permute.xlu0 %6759
  %6761 = vrot.lane.b32.xlu0 %v5796, 16
  %v6762 = vpop.permute.xlu0 %6761
  %6763 = vrot.lane.b32.xlu0 %v5804, 16
  %v6764 = vpop.permute.xlu0 %6763
  %6765 = vrot.lane.b32.xlu0 %v5816, 16
  %v6766 = vpop.permute.xlu0 %6765
  %6767 = vrot.lane.b32.xlu0 %v5824, 16
  %v6768 = vpop.permute.xlu0 %6767
  %6769 = vrot.lane.b32.xlu0 %v5836, 16
  %v6770 = vpop.permute.xlu0 %6769
  %6771 = vrot.lane.b32.xlu0 %v5844, 16
  %v6772 = vpop.permute.xlu0 %6771
  %6773 = vrot.lane.b32.xlu0 %v5856, 16
  %v6774 = vpop.permute.xlu0 %6773
  %6775 = vrot.lane.b32.xlu0 %v5864, 16
  %v6776 = vpop.permute.xlu0 %6775
  %6777 = vrot.lane.b32.xlu0 %v5876, 16
  %v6778 = vpop.permute.xlu0 %6777
  %6779 = vrot.lane.b32.xlu0 %v5884, 16
  %v6780 = vpop.permute.xlu0 %6779
  %6781 = vrot.lane.b32.xlu0 %v5896, 16
  %v6782 = vpop.permute.xlu0 %6781
  %6783 = vrot.lane.b32.xlu0 %v5904, 16
  %v6784 = vpop.permute.xlu0 %6783
  %6785 = vrot.lane.b32.xlu0 %v5916, 16
  %v6786 = vpop.permute.xlu0 %6785
  %6787 = vrot.lane.b32.xlu0 %v5924, 16
  %v6788 = vpop.permute.xlu0 %6787
  %6789 = vrot.lane.b32.xlu0 %v5936, 16
  %v6790 = vpop.permute.xlu0 %6789
  %6791 = vrot.lane.b32.xlu0 %v5944, 16
  %v6792 = vpop.permute.xlu0 %6791
  %6793 = vrot.lane.b32.xlu0 %v5956, 16
  %v6794 = vpop.permute.xlu0 %6793
  %6795 = vrot.lane.b32.xlu0 %v5964, 16
  %v6796 = vpop.permute.xlu0 %6795
  %6797 = vrot.lane.b32.xlu0 %v5976, 16
  %v6798 = vpop.permute.xlu0 %6797
  %6799 = vrot.lane.b32.xlu0 %v5984, 16
  %v6800 = vpop.permute.xlu0 %6799
  %6801 = vrot.lane.b32.xlu0 %v5996, 16
  %v6802 = vpop.permute.xlu0 %6801
  %6803 = vrot.lane.b32.xlu0 %v6004, 16
  %v6804 = vpop.permute.xlu0 %6803
  %6805 = vrot.lane.b32.xlu0 %v6016, 16
  %v6806 = vpop.permute.xlu0 %6805
  %6807 = vrot.lane.b32.xlu0 %v6024, 16
  %v6808 = vpop.permute.xlu0 %6807
  %6809 = vrot.lane.b32.xlu0 %v6036, 16
  %v6810 = vpop.permute.xlu0 %6809
  %6811 = vrot.lane.b32.xlu0 %v6044, 16
  %v6812 = vpop.permute.xlu0 %6811
  %6813 = vrot.lane.b32.xlu0 %v6056, 16
  %v6814 = vpop.permute.xlu0 %6813
  %6815 = vrot.lane.b32.xlu0 %v6064, 16
  %v6816 = vpop.permute.xlu0 %6815
  %6817 = vrot.lane.b32.xlu0 %v6076, 16
  %v6818 = vpop.permute.xlu0 %6817
  %6819 = vrot.lane.b32.xlu0 %v6084, 16
  %v6820 = vpop.permute.xlu0 %6819
  %6821 = vrot.lane.b32.xlu0 %v6096, 16
  %v6822 = vpop.permute.xlu0 %6821
  %6823 = vrot.lane.b32.xlu0 %v6104, 16
  %v6824 = vpop.permute.xlu0 %6823
  %6825 = vrot.lane.b32.xlu0 %v6116, 16
  %v6826 = vpop.permute.xlu0 %6825
  %6827 = vrot.lane.b32.xlu0 %v6124, 16
  %v6828 = vpop.permute.xlu0 %6827
  %6829 = vrot.lane.b32.xlu0 %v6136, 16
  %v6830 = vpop.permute.xlu0 %6829
  %6831 = vrot.lane.b32.xlu0 %v6144, 16
  %v6832 = vpop.permute.xlu0 %6831
  %6833 = vrot.lane.b32.xlu0 %v6156, 16
  %v6834 = vpop.permute.xlu0 %6833
  %6835 = vrot.lane.b32.xlu0 %v6164, 16
  %v6836 = vpop.permute.xlu0 %6835
  %6837 = vrot.lane.b32.xlu0 %v6176, 16
  %v6838 = vpop.permute.xlu0 %6837
  %6839 = vrot.lane.b32.xlu0 %v6184, 16
  %v6840 = vpop.permute.xlu0 %6839
  %6841 = vrot.lane.b32.xlu0 %v6196, 16
  %v6842 = vpop.permute.xlu0 %6841
  %6843 = vrot.lane.b32.xlu0 %v6204, 16
  %v6844 = vpop.permute.xlu0 %6843
  %6845 = vrot.lane.b32.xlu0 %v6216, 16
  %v6846 = vpop.permute.xlu0 %6845
  %6847 = vrot.lane.b32.xlu0 %v6224, 16
  %v6848 = vpop.permute.xlu0 %6847
  %6849 = vrot.lane.b32.xlu0 %v6236, 16
  %v6850 = vpop.permute.xlu0 %6849
  %6851 = vrot.lane.b32.xlu0 %v6244, 16
  %v6852 = vpop.permute.xlu0 %6851
  %6853 = vrot.lane.b32.xlu0 %v6256, 16
  %v6854 = vpop.permute.xlu0 %6853
  %6855 = vrot.lane.b32.xlu0 %v6264, 16
  %v6856 = vpop.permute.xlu0 %6855
  %6857 = vrot.lane.b32.xlu0 %v6276, 16
  %v6858 = vpop.permute.xlu0 %6857
  %6859 = vrot.lane.b32.xlu0 %v6284, 16
  %v6860 = vpop.permute.xlu0 %6859
  %6861 = vrot.lane.b32.xlu0 %v6296, 16
  %v6862 = vpop.permute.xlu0 %6861
  %6863 = vrot.lane.b32.xlu0 %v6304, 16
  %v6864 = vpop.permute.xlu0 %6863
  %6865 = vrot.lane.b32.xlu0 %v6316, 16
  %v6866 = vpop.permute.xlu0 %6865
  %6867 = vrot.lane.b32.xlu0 %v6324, 16
  %v6868 = vpop.permute.xlu0 %6867
  %6869 = vrot.lane.b32.xlu0 %v6336, 16
  %v6870 = vpop.permute.xlu0 %6869
  %6871 = vrot.lane.b32.xlu0 %v6344, 16
  %v6872 = vpop.permute.xlu0 %6871
  %6873 = vrot.lane.b32.xlu0 %v6356, 16
  %v6874 = vpop.permute.xlu0 %6873
  %6875 = vrot.lane.b32.xlu0 %v6364, 16
  %v6876 = vpop.permute.xlu0 %6875
  %6877 = vrot.lane.b32.xlu0 %v6376, 16
  %v6878 = vpop.permute.xlu0 %6877
  %6879 = vrot.lane.b32.xlu0 %v6384, 16
  %v6880 = vpop.permute.xlu0 %6879
  %6881 = vrot.lane.b32.xlu0 %v6396, 16
  %v6882 = vpop.permute.xlu0 %6881
  %6883 = vrot.lane.b32.xlu0 %v6404, 16
  %v6884 = vpop.permute.xlu0 %6883
  %6885 = vrot.lane.b32.xlu0 %v6416, 16
  %v6886 = vpop.permute.xlu0 %6885
  %6887 = vrot.lane.b32.xlu0 %v6424, 16
  %v6888 = vpop.permute.xlu0 %6887
  %6889 = vrot.lane.b32.xlu0 %v6436, 16
  %v6890 = vpop.permute.xlu0 %6889
  %6891 = vrot.lane.b32.xlu0 %v6444, 16
  %v6892 = vpop.permute.xlu0 %6891
  %6893 = vrot.lane.b32.xlu0 %v6456, 16
  %v6894 = vpop.permute.xlu0 %6893
  %6895 = vrot.lane.b32.xlu0 %v6464, 16
  %v6896 = vpop.permute.xlu0 %6895
  %6897 = vrot.lane.b32.xlu0 %v6476, 16
  %v6898 = vpop.permute.xlu0 %6897
  %6899 = vrot.lane.b32.xlu0 %v6484, 16
  %v6900 = vpop.permute.xlu0 %6899
  %6901 = vrot.lane.b32.xlu0 %v6496, 16
  %v6902 = vpop.permute.xlu0 %6901
  %6903 = vrot.lane.b32.xlu0 %v6504, 16
  %v6904 = vpop.permute.xlu0 %6903
  %6905 = vrot.lane.b32.xlu0 %v6516, 16
  %v6906 = vpop.permute.xlu0 %6905
  %6907 = vrot.lane.b32.xlu0 %v6524, 16
  %v6908 = vpop.permute.xlu0 %6907
  %6909 = vrot.lane.b32.xlu0 %v6536, 16
  %v6910 = vpop.permute.xlu0 %6909
  %6911 = vrot.lane.b32.xlu0 %v6544, 16
  %v6912 = vpop.permute.xlu0 %6911
  %6913 = vrot.lane.b32.xlu0 %v6556, 16
  %v6914 = vpop.permute.xlu0 %6913
  %6915 = vrot.lane.b32.xlu0 %v6564, 16
  %v6916 = vpop.permute.xlu0 %6915
  %6917 = vrot.lane.b32.xlu0 %v6576, 16
  %v6918 = vpop.permute.xlu0 %6917
  %6919 = vrot.lane.b32.xlu0 %v6584, 16
  %v6920 = vpop.permute.xlu0 %6919
  %6921 = vrot.lane.b32.xlu0 %v6596, 16
  %v6922 = vpop.permute.xlu0 %6921
  %6923 = vrot.lane.b32.xlu0 %v6604, 16
  %v6924 = vpop.permute.xlu0 %6923
  %6925 = vrot.lane.b32.xlu0 %v6616, 16
  %v6926 = vpop.permute.xlu0 %6925
  %6927 = vrot.lane.b32.xlu0 %v6624, 16
  %v6928 = vpop.permute.xlu0 %6927
  %6929 = vrot.lane.b32.xlu0 %v6636, 16
  %v6930 = vpop.permute.xlu0 %6929
  %6931 = vrot.lane.b32.xlu0 %v6644, 16
  %v6932 = vpop.permute.xlu0 %6931
  %6933 = vrot.lane.b32.xlu0 %v6656, 16
  %v6934 = vpop.permute.xlu0 %6933
  %6935 = vrot.lane.b32.xlu0 %v6664, 16
  %v6936 = vpop.permute.xlu0 %6935
  %6937 = vrot.lane.b32.xlu0 %v6676, 16
  %v6938 = vpop.permute.xlu0 %6937
  %6939 = vrot.lane.b32.xlu0 %v6684, 16
  %v6940 = vpop.permute.xlu0 %6939
  %v7005 = vunpack.c.l.b16 %v727
  %v7006 = vunpack.c.l.b16 %v728
  %v7007 = vunpack.c.l.b16 %v729
  %v7008 = vunpack.c.l.b16 %v730
  %v7009 = vunpack.c.l.b16 %v731
  %v7010 = vunpack.c.l.b16 %v732
  %v7011 = vunpack.c.l.b16 %v733
  %v7012 = vunpack.c.l.b16 %v734
  %v7013 = vunpack.c.l.b16 %v735
  %v7014 = vunpack.c.l.b16 %v736
  %v7015 = vunpack.c.l.b16 %v737
  %v7016 = vunpack.c.l.b16 %v738
  %v7017 = vunpack.c.l.b16 %v739
  %v7018 = vunpack.c.l.b16 %v740
  %v7019 = vunpack.c.l.b16 %v741
  %v7020 = vunpack.c.l.b16 %v742
  %v7021 = vunpack.c.l.b16 %v743
  %v7022 = vunpack.c.l.b16 %v744
  %v7023 = vunpack.c.l.b16 %v745
  %v7024 = vunpack.c.l.b16 %v746
  %v7025 = vunpack.c.l.b16 %v747
  %v7026 = vunpack.c.l.b16 %v748
  %v7027 = vunpack.c.l.b16 %v749
  %v7028 = vunpack.c.l.b16 %v750
  %v7029 = vunpack.c.l.b16 %v751
  %v7030 = vunpack.c.l.b16 %v752
  %v7031 = vunpack.c.l.b16 %v753
  %v7032 = vunpack.c.l.b16 %v754
  %v7033 = vunpack.c.l.b16 %v755
  %v7034 = vunpack.c.l.b16 %v756
  %v7035 = vunpack.c.l.b16 %v757
  %v7036 = vunpack.c.l.b16 %v758
  %v7037 = vunpack.c.l.b16 %v759
  %v7038 = vunpack.c.l.b16 %v760
  %v7039 = vunpack.c.l.b16 %v761
  %v7040 = vunpack.c.l.b16 %v762
  %v7041 = vunpack.c.l.b16 %v763
  %v7042 = vunpack.c.l.b16 %v764
  %v7043 = vunpack.c.l.b16 %v765
  %v7044 = vunpack.c.l.b16 %v766
  %v7045 = vunpack.c.l.b16 %v767
  %v7046 = vunpack.c.l.b16 %v768
  %v7047 = vunpack.c.l.b16 %v769
  %v7048 = vunpack.c.l.b16 %v770
  %v7049 = vunpack.c.l.b16 %v771
  %v7050 = vunpack.c.l.b16 %v772
  %v7051 = vunpack.c.l.b16 %v773
  %v7052 = vunpack.c.l.b16 %v774
  %v7053 = vunpack.c.l.b16 %v775
  %v7054 = vunpack.c.l.b16 %v776
  %v7055 = vunpack.c.l.b16 %v777
  %v7056 = vunpack.c.l.b16 %v778
  %v7057 = vunpack.c.l.b16 %v779
  %v7058 = vunpack.c.l.b16 %v780
  %v7059 = vunpack.c.l.b16 %v781
  %v7060 = vunpack.c.l.b16 %v782
  %v7061 = vunpack.c.l.b16 %v783
  %v7062 = vunpack.c.l.b16 %v784
  %v7063 = vunpack.c.l.b16 %v785
  %v7064 = vunpack.c.l.b16 %v786
  %v7065 = vunpack.c.l.b16 %v787
  %v7066 = vunpack.c.l.b16 %v788
  %v7067 = vunpack.c.l.b16 %v789
  %v7068 = vunpack.c.l.b16 %v790
  %v7069 = vpack.c.b16 %v4574, %v7005
  %v7070 = vpack.c.b16 %v4578, %v7006
  %v7071 = vpack.c.b16 %v4582, %v7007
  %v7072 = vpack.c.b16 %v4586, %v7008
  %v7073 = vpack.c.b16 %v4590, %v7009
  %v7074 = vpack.c.b16 %v4594, %v7010
  %v7075 = vpack.c.b16 %v4598, %v7011
  %v7076 = vpack.c.b16 %v4602, %v7012
  %v7077 = vpack.c.b16 %v4606, %v7013
  %v7078 = vpack.c.b16 %v4610, %v7014
  %v7079 = vpack.c.b16 %v4614, %v7015
  %v7080 = vpack.c.b16 %v4618, %v7016
  %v7081 = vpack.c.b16 %v4622, %v7017
  %v7082 = vpack.c.b16 %v4626, %v7018
  %v7083 = vpack.c.b16 %v4630, %v7019
  %v7084 = vpack.c.b16 %v4634, %v7020
  %v7085 = vpack.c.b16 %v4638, %v7021
  %v7086 = vpack.c.b16 %v4642, %v7022
  %v7087 = vpack.c.b16 %v4646, %v7023
  %v7088 = vpack.c.b16 %v4650, %v7024
  %v7089 = vpack.c.b16 %v4654, %v7025
  %v7090 = vpack.c.b16 %v4658, %v7026
  %v7091 = vpack.c.b16 %v4662, %v7027
  %v7092 = vpack.c.b16 %v4666, %v7028
  %v7093 = vpack.c.b16 %v4670, %v7029
  %v7094 = vpack.c.b16 %v4674, %v7030
  %v7095 = vpack.c.b16 %v4678, %v7031
  %v7096 = vpack.c.b16 %v4682, %v7032
  %v7097 = vpack.c.b16 %v4686, %v7033
  %v7098 = vpack.c.b16 %v4690, %v7034
  %v7099 = vpack.c.b16 %v4694, %v7035
  %v7100 = vpack.c.b16 %v4698, %v7036
  %v7101 = vpack.c.b16 %v4702, %v7037
  %v7102 = vpack.c.b16 %v4706, %v7038
  %v7103 = vpack.c.b16 %v4710, %v7039
  %v7104 = vpack.c.b16 %v4714, %v7040
  %v7105 = vpack.c.b16 %v4718, %v7041
  %v7106 = vpack.c.b16 %v4722, %v7042
  %v7107 = vpack.c.b16 %v4726, %v7043
  %v7108 = vpack.c.b16 %v4730, %v7044
  %v7109 = vpack.c.b16 %v4734, %v7045
  %v7110 = vpack.c.b16 %v4738, %v7046
  %v7111 = vpack.c.b16 %v4742, %v7047
  %v7112 = vpack.c.b16 %v4746, %v7048
  %v7113 = vpack.c.b16 %v4750, %v7049
  %v7114 = vpack.c.b16 %v4754, %v7050
  %v7115 = vpack.c.b16 %v4758, %v7051
  %v7116 = vpack.c.b16 %v4762, %v7052
  %v7117 = vpack.c.b16 %v4766, %v7053
  %v7118 = vpack.c.b16 %v4770, %v7054
  %v7119 = vpack.c.b16 %v4774, %v7055
  %v7120 = vpack.c.b16 %v4778, %v7056
  %v7121 = vpack.c.b16 %v4782, %v7057
  %v7122 = vpack.c.b16 %v4786, %v7058
  %v7123 = vpack.c.b16 %v4790, %v7059
  %v7124 = vpack.c.b16 %v4794, %v7060
  %v7125 = vpack.c.b16 %v4798, %v7061
  %v7126 = vpack.c.b16 %v4802, %v7062
  %v7127 = vpack.c.b16 %v4806, %v7063
  %v7128 = vpack.c.b16 %v4810, %v7064
  %v7129 = vpack.c.b16 %v4814, %v7065
  %v7130 = vpack.c.b16 %v4818, %v7066
  %v7131 = vpack.c.b16 %v4822, %v7067
  %v7132 = vpack.c.b16 %v4826, %v7068
  %v7133 = vrot.slane %v7069, 1
  %v7134 = vrot.slane %v4830, 1
  %v7135 = vsel %vm3740, %v7133, %v7134
  %v7136 = vrot.slane %v5341, 1
  %v7137 = vsel %vm3740, %v7134, %v7136
  %v7138 = vrot.slane %v7070, 1
  %v7139 = vrot.slane %v4832, 1
  %v7140 = vsel %vm3740, %v7138, %v7139
  %v7141 = vrot.slane %v5342, 1
  %v7142 = vsel %vm3740, %v7139, %v7141
  %v7143 = vrot.slane %v7071, 1
  %v7144 = vrot.slane %v4834, 1
  %v7145 = vsel %vm3740, %v7143, %v7144
  %v7146 = vrot.slane %v5343, 1
  %v7147 = vsel %vm3740, %v7144, %v7146
  %v7148 = vrot.slane %v7072, 1
  %v7149 = vrot.slane %v4836, 1
  %v7150 = vsel %vm3740, %v7148, %v7149
  %v7151 = vrot.slane %v5344, 1
  %v7152 = vsel %vm3740, %v7149, %v7151
  %v7153 = vrot.slane %v7073, 1
  %v7154 = vrot.slane %v4838, 1
  %v7155 = vsel %vm3740, %v7153, %v7154
  %v7156 = vrot.slane %v5345, 1
  %v7157 = vsel %vm3740, %v7154, %v7156
  %v7158 = vrot.slane %v7074, 1
  %v7159 = vrot.slane %v4840, 1
  %v7160 = vsel %vm3740, %v7158, %v7159
  %v7161 = vrot.slane %v5346, 1
  %v7162 = vsel %vm3740, %v7159, %v7161
  %v7163 = vrot.slane %v7075, 1
  %v7164 = vrot.slane %v4842, 1
  %v7165 = vsel %vm3740, %v7163, %v7164
  %v7166 = vrot.slane %v5347, 1
  %v7167 = vsel %vm3740, %v7164, %v7166
  %v7168 = vrot.slane %v7076, 1
  %v7169 = vrot.slane %v4844, 1
  %v7170 = vsel %vm3740, %v7168, %v7169
  %v7171 = vrot.slane %v5348, 1
  %v7172 = vsel %vm3740, %v7169, %v7171
  %v7173 = vrot.slane %v7077, 1
  %v7174 = vrot.slane %v4846, 1
  %v7175 = vsel %vm3740, %v7173, %v7174
  %v7176 = vrot.slane %v5349, 1
  %v7177 = vsel %vm3740, %v7174, %v7176
  %v7178 = vrot.slane %v7078, 1
  %v7179 = vrot.slane %v4848, 1
  %v7180 = vsel %vm3740, %v7178, %v7179
  %v7181 = vrot.slane %v5350, 1
  %v7182 = vsel %vm3740, %v7179, %v7181
  %v7183 = vrot.slane %v7079, 1
  %v7184 = vrot.slane %v4850, 1
  %v7185 = vsel %vm3740, %v7183, %v7184
  %v7186 = vrot.slane %v5351, 1
  %v7187 = vsel %vm3740, %v7184, %v7186
  %v7188 = vrot.slane %v7080, 1
  %v7189 = vrot.slane %v4852, 1
  %v7190 = vsel %vm3740, %v7188, %v7189
  %v7191 = vrot.slane %v5352, 1
  %v7192 = vsel %vm3740, %v7189, %v7191
  %v7193 = vrot.slane %v7081, 1
  %v7194 = vrot.slane %v4854, 1
  %v7195 = vsel %vm3740, %v7193, %v7194
  %v7196 = vrot.slane %v5353, 1
  %v7197 = vsel %vm3740, %v7194, %v7196
  %v7198 = vrot.slane %v7082, 1
  %v7199 = vrot.slane %v4856, 1
  %v7200 = vsel %vm3740, %v7198, %v7199
  %v7201 = vrot.slane %v5354, 1
  %v7202 = vsel %vm3740, %v7199, %v7201
  %v7203 = vrot.slane %v7083, 1
  %v7204 = vrot.slane %v4858, 1
  %v7205 = vsel %vm3740, %v7203, %v7204
  %v7206 = vrot.slane %v5355, 1
  %v7207 = vsel %vm3740, %v7204, %v7206
  %v7208 = vrot.slane %v7084, 1
  %v7209 = vrot.slane %v4860, 1
  %v7210 = vsel %vm3740, %v7208, %v7209
  %v7211 = vrot.slane %v5356, 1
  %v7212 = vsel %vm3740, %v7209, %v7211
  %v7213 = vrot.slane %v7085, 1
  %v7214 = vrot.slane %v4862, 1
  %v7215 = vsel %vm3740, %v7213, %v7214
  %v7216 = vrot.slane %v5357, 1
  %v7217 = vsel %vm3740, %v7214, %v7216
  %v7218 = vrot.slane %v7086, 1
  %v7219 = vrot.slane %v4864, 1
  %v7220 = vsel %vm3740, %v7218, %v7219
  %v7221 = vrot.slane %v5358, 1
  %v7222 = vsel %vm3740, %v7219, %v7221
  %v7223 = vrot.slane %v7087, 1
  %v7224 = vrot.slane %v4866, 1
  %v7225 = vsel %vm3740, %v7223, %v7224
  %v7226 = vrot.slane %v5359, 1
  %v7227 = vsel %vm3740, %v7224, %v7226
  %v7228 = vrot.slane %v7088, 1
  %v7229 = vrot.slane %v4868, 1
  %v7230 = vsel %vm3740, %v7228, %v7229
  %v7231 = vrot.slane %v5360, 1
  %v7232 = vsel %vm3740, %v7229, %v7231
  %v7233 = vrot.slane %v7089, 1
  %v7234 = vrot.slane %v4870, 1
  %v7235 = vsel %vm3740, %v7233, %v7234
  %v7236 = vrot.slane %v5361, 1
  %v7237 = vsel %vm3740, %v7234, %v7236
  %v7238 = vrot.slane %v7090, 1
  %v7239 = vrot.slane %v4872, 1
  %v7240 = vsel %vm3740, %v7238, %v7239
  %v7241 = vrot.slane %v5362, 1
  %v7242 = vsel %vm3740, %v7239, %v7241
  %v7243 = vrot.slane %v7091, 1
  %v7244 = vrot.slane %v4874, 1
  %v7245 = vsel %vm3740, %v7243, %v7244
  %v7246 = vrot.slane %v5363, 1
  %v7247 = vsel %vm3740, %v7244, %v7246
  %v7248 = vrot.slane %v7092, 1
  %v7249 = vrot.slane %v4876, 1
  %v7250 = vsel %vm3740, %v7248, %v7249
  %v7251 = vrot.slane %v5364, 1
  %v7252 = vsel %vm3740, %v7249, %v7251
  %v7253 = vrot.slane %v7093, 1
  %v7254 = vrot.slane %v4878, 1
  %v7255 = vsel %vm3740, %v7253, %v7254
  %v7256 = vrot.slane %v5365, 1
  %v7257 = vsel %vm3740, %v7254, %v7256
  %v7258 = vrot.slane %v7094, 1
  %v7259 = vrot.slane %v4880, 1
  %v7260 = vsel %vm3740, %v7258, %v7259
  %v7261 = vrot.slane %v5366, 1
  %v7262 = vsel %vm3740, %v7259, %v7261
  %v7263 = vrot.slane %v7095, 1
  %v7264 = vrot.slane %v4882, 1
  %v7265 = vsel %vm3740, %v7263, %v7264
  %v7266 = vrot.slane %v5367, 1
  %v7267 = vsel %vm3740, %v7264, %v7266
  %v7268 = vrot.slane %v7096, 1
  %v7269 = vrot.slane %v4884, 1
  %v7270 = vsel %vm3740, %v7268, %v7269
  %v7271 = vrot.slane %v5368, 1
  %v7272 = vsel %vm3740, %v7269, %v7271
  %v7273 = vrot.slane %v7097, 1
  %v7274 = vrot.slane %v4886, 1
  %v7275 = vsel %vm3740, %v7273, %v7274
  %v7276 = vrot.slane %v5369, 1
  %v7277 = vsel %vm3740, %v7274, %v7276
  %v7278 = vrot.slane %v7098, 1
  %v7279 = vrot.slane %v4888, 1
  %v7280 = vsel %vm3740, %v7278, %v7279
  %v7281 = vrot.slane %v5370, 1
  %v7282 = vsel %vm3740, %v7279, %v7281
  %v7283 = vrot.slane %v7099, 1
  %v7284 = vrot.slane %v4890, 1
  %v7285 = vsel %vm3740, %v7283, %v7284
  %v7286 = vrot.slane %v5371, 1
  %v7287 = vsel %vm3740, %v7284, %v7286
  %v7288 = vrot.slane %v7100, 1
  %v7289 = vrot.slane %v4892, 1
  %v7290 = vsel %vm3740, %v7288, %v7289
  %v7291 = vrot.slane %v5372, 1
  %v7292 = vsel %vm3740, %v7289, %v7291
  %v7293 = vrot.slane %v7101, 1
  %v7294 = vrot.slane %v4894, 1
  %v7295 = vsel %vm3740, %v7293, %v7294
  %v7296 = vrot.slane %v5373, 1
  %v7297 = vsel %vm3740, %v7294, %v7296
  %v7298 = vrot.slane %v7102, 1
  %v7299 = vrot.slane %v4896, 1
  %v7300 = vsel %vm3740, %v7298, %v7299
  %v7301 = vrot.slane %v5374, 1
  %v7302 = vsel %vm3740, %v7299, %v7301
  %v7303 = vrot.slane %v7103, 1
  %v7304 = vrot.slane %v4898, 1
  %v7305 = vsel %vm3740, %v7303, %v7304
  %v7306 = vrot.slane %v5375, 1
  %v7307 = vsel %vm3740, %v7304, %v7306
  %v7308 = vrot.slane %v7104, 1
  %v7309 = vrot.slane %v4900, 1
  %v7310 = vsel %vm3740, %v7308, %v7309
  %v7311 = vrot.slane %v5376, 1
  %v7312 = vsel %vm3740, %v7309, %v7311
  %v7313 = vrot.slane %v7105, 1
  %v7314 = vrot.slane %v4902, 1
  %v7315 = vsel %vm3740, %v7313, %v7314
  %v7316 = vrot.slane %v5377, 1
  %v7317 = vsel %vm3740, %v7314, %v7316
  %v7318 = vrot.slane %v7106, 1
  %v7319 = vrot.slane %v4904, 1
  %v7320 = vsel %vm3740, %v7318, %v7319
  %v7321 = vrot.slane %v5378, 1
  %v7322 = vsel %vm3740, %v7319, %v7321
  %v7323 = vrot.slane %v7107, 1
  %v7324 = vrot.slane %v4906, 1
  %v7325 = vsel %vm3740, %v7323, %v7324
  %v7326 = vrot.slane %v5379, 1
  %v7327 = vsel %vm3740, %v7324, %v7326
  %v7328 = vrot.slane %v7108, 1
  %v7329 = vrot.slane %v4908, 1
  %v7330 = vsel %vm3740, %v7328, %v7329
  %v7331 = vrot.slane %v5380, 1
  %v7332 = vsel %vm3740, %v7329, %v7331
  %v7333 = vrot.slane %v7109, 1
  %v7334 = vrot.slane %v4910, 1
  %v7335 = vsel %vm3740, %v7333, %v7334
  %v7336 = vrot.slane %v5381, 1
  %v7337 = vsel %vm3740, %v7334, %v7336
  %v7338 = vrot.slane %v7110, 1
  %v7339 = vrot.slane %v4912, 1
  %v7340 = vsel %vm3740, %v7338, %v7339
  %v7341 = vrot.slane %v5382, 1
  %v7342 = vsel %vm3740, %v7339, %v7341
  %v7343 = vrot.slane %v7111, 1
  %v7344 = vrot.slane %v4914, 1
  %v7345 = vsel %vm3740, %v7343, %v7344
  %v7346 = vrot.slane %v5383, 1
  %v7347 = vsel %vm3740, %v7344, %v7346
  %v7348 = vrot.slane %v7112, 1
  %v7349 = vrot.slane %v4916, 1
  %v7350 = vsel %vm3740, %v7348, %v7349
  %v7351 = vrot.slane %v5384, 1
  %v7352 = vsel %vm3740, %v7349, %v7351
  %v7353 = vrot.slane %v7113, 1
  %v7354 = vrot.slane %v4918, 1
  %v7355 = vsel %vm3740, %v7353, %v7354
  %v7356 = vrot.slane %v5385, 1
  %v7357 = vsel %vm3740, %v7354, %v7356
  %v7358 = vrot.slane %v7114, 1
  %v7359 = vrot.slane %v4920, 1
  %v7360 = vsel %vm3740, %v7358, %v7359
  %v7361 = vrot.slane %v5386, 1
  %v7362 = vsel %vm3740, %v7359, %v7361
  %v7363 = vrot.slane %v7115, 1
  %v7364 = vrot.slane %v4922, 1
  %v7365 = vsel %vm3740, %v7363, %v7364
  %v7366 = vrot.slane %v5387, 1
  %v7367 = vsel %vm3740, %v7364, %v7366
  %v7368 = vrot.slane %v7116, 1
  %v7369 = vrot.slane %v4924, 1
  %v7370 = vsel %vm3740, %v7368, %v7369
  %v7371 = vrot.slane %v5388, 1
  %v7372 = vsel %vm3740, %v7369, %v7371
  %v7373 = vrot.slane %v7117, 1
  %v7374 = vrot.slane %v4926, 1
  %v7375 = vsel %vm3740, %v7373, %v7374
  %v7376 = vrot.slane %v5389, 1
  %v7377 = vsel %vm3740, %v7374, %v7376
  %v7378 = vrot.slane %v7118, 1
  %v7379 = vrot.slane %v4928, 1
  %v7380 = vsel %vm3740, %v7378, %v7379
  %v7381 = vrot.slane %v5390, 1
  %v7382 = vsel %vm3740, %v7379, %v7381
  %v7383 = vrot.slane %v7119, 1
  %v7384 = vrot.slane %v4930, 1
  %v7385 = vsel %vm3740, %v7383, %v7384
  %v7386 = vrot.slane %v5391, 1
  %v7387 = vsel %vm3740, %v7384, %v7386
  %v7388 = vrot.slane %v7120, 1
  %v7389 = vrot.slane %v4932, 1
  %v7390 = vsel %vm3740, %v7388, %v7389
  %v7391 = vrot.slane %v5392, 1
  %v7392 = vsel %vm3740, %v7389, %v7391
  %v7393 = vrot.slane %v7121, 1
  %v7394 = vrot.slane %v4934, 1
  %v7395 = vsel %vm3740, %v7393, %v7394
  %v7396 = vrot.slane %v5393, 1
  %v7397 = vsel %vm3740, %v7394, %v7396
  %v7398 = vrot.slane %v7122, 1
  %v7399 = vrot.slane %v4936, 1
  %v7400 = vsel %vm3740, %v7398, %v7399
  %v7401 = vrot.slane %v5394, 1
  %v7402 = vsel %vm3740, %v7399, %v7401
  %v7403 = vrot.slane %v7123, 1
  %v7404 = vrot.slane %v4938, 1
  %v7405 = vsel %vm3740, %v7403, %v7404
  %v7406 = vrot.slane %v5395, 1
  %v7407 = vsel %vm3740, %v7404, %v7406
  %v7408 = vrot.slane %v7124, 1
  %v7409 = vrot.slane %v4940, 1
  %v7410 = vsel %vm3740, %v7408, %v7409
  %v7411 = vrot.slane %v5396, 1
  %v7412 = vsel %vm3740, %v7409, %v7411
  %v7413 = vrot.slane %v7125, 1
  %v7414 = vrot.slane %v4942, 1
  %v7415 = vsel %vm3740, %v7413, %v7414
  %v7416 = vrot.slane %v5397, 1
  %v7417 = vsel %vm3740, %v7414, %v7416
  %v7418 = vrot.slane %v7126, 1
  %v7419 = vrot.slane %v4944, 1
  %v7420 = vsel %vm3740, %v7418, %v7419
  %v7421 = vrot.slane %v5398, 1
  %v7422 = vsel %vm3740, %v7419, %v7421
  %v7423 = vrot.slane %v7127, 1
  %v7424 = vrot.slane %v4946, 1
  %v7425 = vsel %vm3740, %v7423, %v7424
  %v7426 = vrot.slane %v5399, 1
  %v7427 = vsel %vm3740, %v7424, %v7426
  %v7428 = vrot.slane %v7128, 1
  %v7429 = vrot.slane %v4948, 1
  %v7430 = vsel %vm3740, %v7428, %v7429
  %v7431 = vrot.slane %v5400, 1
  %v7432 = vsel %vm3740, %v7429, %v7431
  %v7433 = vrot.slane %v7129, 1
  %v7434 = vrot.slane %v4950, 1
  %v7435 = vsel %vm3740, %v7433, %v7434
  %v7436 = vrot.slane %v5401, 1
  %v7437 = vsel %vm3740, %v7434, %v7436
  %v7438 = vrot.slane %v7130, 1
  %v7439 = vrot.slane %v4952, 1
  %v7440 = vsel %vm3740, %v7438, %v7439
  %v7441 = vrot.slane %v5402, 1
  %v7442 = vsel %vm3740, %v7439, %v7441
  %v7443 = vrot.slane %v7131, 1
  %v7444 = vrot.slane %v4954, 1
  %v7445 = vsel %vm3740, %v7443, %v7444
  %v7446 = vrot.slane %v5403, 1
  %v7447 = vsel %vm3740, %v7444, %v7446
  %v7448 = vrot.slane %v7132, 1
  %v7449 = vrot.slane %v4956, 1
  %v7450 = vsel %vm3740, %v7448, %v7449
  %v7451 = vrot.slane %v5404, 1
  %v7452 = vsel %vm3740, %v7449, %v7451
  %7453 = vrot.lane.b32.xlu0 %v7135, 20
  %v7454 = vpop.permute.xlu0 %7453
  %7455 = vrot.lane.b32.xlu0 %v7137, 20
  %v7456 = vpop.permute.xlu0 %7455
  %7457 = vrot.lane.b32.xlu0 %v7140, 20
  %v7458 = vpop.permute.xlu0 %7457
  %7459 = vrot.lane.b32.xlu0 %v7142, 20
  %v7460 = vpop.permute.xlu0 %7459
  %7461 = vrot.lane.b32.xlu0 %v7145, 20
  %v7462 = vpop.permute.xlu0 %7461
  %7463 = vrot.lane.b32.xlu0 %v7147, 20
  %v7464 = vpop.permute.xlu0 %7463
  %7465 = vrot.lane.b32.xlu0 %v7150, 20
  %v7466 = vpop.permute.xlu0 %7465
  %7467 = vrot.lane.b32.xlu0 %v7152, 20
  %v7468 = vpop.permute.xlu0 %7467
  %7469 = vrot.lane.b32.xlu0 %v7155, 20
  %v7470 = vpop.permute.xlu0 %7469
  %7471 = vrot.lane.b32.xlu0 %v7157, 20
  %v7472 = vpop.permute.xlu0 %7471
  %7473 = vrot.lane.b32.xlu0 %v7160, 20
  %v7474 = vpop.permute.xlu0 %7473
  %7475 = vrot.lane.b32.xlu0 %v7162, 20
  %v7476 = vpop.permute.xlu0 %7475
  %7477 = vrot.lane.b32.xlu0 %v7165, 20
  %v7478 = vpop.permute.xlu0 %7477
  %7479 = vrot.lane.b32.xlu0 %v7167, 20
  %v7480 = vpop.permute.xlu0 %7479
  %7481 = vrot.lane.b32.xlu0 %v7170, 20
  %v7482 = vpop.permute.xlu0 %7481
  %7483 = vrot.lane.b32.xlu0 %v7172, 20
  %v7484 = vpop.permute.xlu0 %7483
  %7485 = vrot.lane.b32.xlu0 %v7175, 20
  %v7486 = vpop.permute.xlu0 %7485
  %7487 = vrot.lane.b32.xlu0 %v7177, 20
  %v7488 = vpop.permute.xlu0 %7487
  %7489 = vrot.lane.b32.xlu0 %v7180, 20
  %v7490 = vpop.permute.xlu0 %7489
  %7491 = vrot.lane.b32.xlu0 %v7182, 20
  %v7492 = vpop.permute.xlu0 %7491
  %7493 = vrot.lane.b32.xlu0 %v7185, 20
  %v7494 = vpop.permute.xlu0 %7493
  %7495 = vrot.lane.b32.xlu0 %v7187, 20
  %v7496 = vpop.permute.xlu0 %7495
  %7497 = vrot.lane.b32.xlu0 %v7190, 20
  %v7498 = vpop.permute.xlu0 %7497
  %7499 = vrot.lane.b32.xlu0 %v7192, 20
  %v7500 = vpop.permute.xlu0 %7499
  %7501 = vrot.lane.b32.xlu0 %v7195, 20
  %v7502 = vpop.permute.xlu0 %7501
  %7503 = vrot.lane.b32.xlu0 %v7197, 20
  %v7504 = vpop.permute.xlu0 %7503
  %7505 = vrot.lane.b32.xlu0 %v7200, 20
  %v7506 = vpop.permute.xlu0 %7505
  %7507 = vrot.lane.b32.xlu0 %v7202, 20
  %v7508 = vpop.permute.xlu0 %7507
  %7509 = vrot.lane.b32.xlu0 %v7205, 20
  %v7510 = vpop.permute.xlu0 %7509
  %7511 = vrot.lane.b32.xlu0 %v7207, 20
  %v7512 = vpop.permute.xlu0 %7511
  %7513 = vrot.lane.b32.xlu0 %v7210, 20
  %v7514 = vpop.permute.xlu0 %7513
  %7515 = vrot.lane.b32.xlu0 %v7212, 20
  %v7516 = vpop.permute.xlu0 %7515
  %7517 = vrot.lane.b32.xlu0 %v7215, 20
  %v7518 = vpop.permute.xlu0 %7517
  %7519 = vrot.lane.b32.xlu0 %v7217, 20
  %v7520 = vpop.permute.xlu0 %7519
  %7521 = vrot.lane.b32.xlu0 %v7220, 20
  %v7522 = vpop.permute.xlu0 %7521
  %7523 = vrot.lane.b32.xlu0 %v7222, 20
  %v7524 = vpop.permute.xlu0 %7523
  %7525 = vrot.lane.b32.xlu0 %v7225, 20
  %v7526 = vpop.permute.xlu0 %7525
  %7527 = vrot.lane.b32.xlu0 %v7227, 20
  %v7528 = vpop.permute.xlu0 %7527
  %7529 = vrot.lane.b32.xlu0 %v7230, 20
  %v7530 = vpop.permute.xlu0 %7529
  %7531 = vrot.lane.b32.xlu0 %v7232, 20
  %v7532 = vpop.permute.xlu0 %7531
  %7533 = vrot.lane.b32.xlu0 %v7235, 20
  %v7534 = vpop.permute.xlu0 %7533
  %7535 = vrot.lane.b32.xlu0 %v7237, 20
  %v7536 = vpop.permute.xlu0 %7535
  %7537 = vrot.lane.b32.xlu0 %v7240, 20
  %v7538 = vpop.permute.xlu0 %7537
  %7539 = vrot.lane.b32.xlu0 %v7242, 20
  %v7540 = vpop.permute.xlu0 %7539
  %7541 = vrot.lane.b32.xlu0 %v7245, 20
  %v7542 = vpop.permute.xlu0 %7541
  %7543 = vrot.lane.b32.xlu0 %v7247, 20
  %v7544 = vpop.permute.xlu0 %7543
  %7545 = vrot.lane.b32.xlu0 %v7250, 20
  %v7546 = vpop.permute.xlu0 %7545
  %7547 = vrot.lane.b32.xlu0 %v7252, 20
  %v7548 = vpop.permute.xlu0 %7547
  %7549 = vrot.lane.b32.xlu0 %v7255, 20
  %v7550 = vpop.permute.xlu0 %7549
  %7551 = vrot.lane.b32.xlu0 %v7257, 20
  %v7552 = vpop.permute.xlu0 %7551
  %7553 = vrot.lane.b32.xlu0 %v7260, 20
  %v7554 = vpop.permute.xlu0 %7553
  %7555 = vrot.lane.b32.xlu0 %v7262, 20
  %v7556 = vpop.permute.xlu0 %7555
  %7557 = vrot.lane.b32.xlu0 %v7265, 20
  %v7558 = vpop.permute.xlu0 %7557
  %7559 = vrot.lane.b32.xlu0 %v7267, 20
  %v7560 = vpop.permute.xlu0 %7559
  %7561 = vrot.lane.b32.xlu0 %v7270, 20
  %v7562 = vpop.permute.xlu0 %7561
  %7563 = vrot.lane.b32.xlu0 %v7272, 20
  %v7564 = vpop.permute.xlu0 %7563
  %7565 = vrot.lane.b32.xlu0 %v7275, 20
  %v7566 = vpop.permute.xlu0 %7565
  %7567 = vrot.lane.b32.xlu0 %v7277, 20
  %v7568 = vpop.permute.xlu0 %7567
  %7569 = vrot.lane.b32.xlu0 %v7280, 20
  %v7570 = vpop.permute.xlu0 %7569
  %7571 = vrot.lane.b32.xlu0 %v7282, 20
  %v7572 = vpop.permute.xlu0 %7571
  %7573 = vrot.lane.b32.xlu0 %v7285, 20
  %v7574 = vpop.permute.xlu0 %7573
  %7575 = vrot.lane.b32.xlu0 %v7287, 20
  %v7576 = vpop.permute.xlu0 %7575
  %7577 = vrot.lane.b32.xlu0 %v7290, 20
  %v7578 = vpop.permute.xlu0 %7577
  %7579 = vrot.lane.b32.xlu0 %v7292, 20
  %v7580 = vpop.permute.xlu0 %7579
  %7581 = vrot.lane.b32.xlu0 %v7295, 20
  %v7582 = vpop.permute.xlu0 %7581
  %7583 = vrot.lane.b32.xlu0 %v7297, 20
  %v7584 = vpop.permute.xlu0 %7583
  %7585 = vrot.lane.b32.xlu0 %v7300, 20
  %v7586 = vpop.permute.xlu0 %7585
  %7587 = vrot.lane.b32.xlu0 %v7302, 20
  %v7588 = vpop.permute.xlu0 %7587
  %7589 = vrot.lane.b32.xlu0 %v7305, 20
  %v7590 = vpop.permute.xlu0 %7589
  %7591 = vrot.lane.b32.xlu0 %v7307, 20
  %v7592 = vpop.permute.xlu0 %7591
  %7593 = vrot.lane.b32.xlu0 %v7310, 20
  %v7594 = vpop.permute.xlu0 %7593
  %7595 = vrot.lane.b32.xlu0 %v7312, 20
  %v7596 = vpop.permute.xlu0 %7595
  %7597 = vrot.lane.b32.xlu0 %v7315, 20
  %v7598 = vpop.permute.xlu0 %7597
  %7599 = vrot.lane.b32.xlu0 %v7317, 20
  %v7600 = vpop.permute.xlu0 %7599
  %7601 = vrot.lane.b32.xlu0 %v7320, 20
  %v7602 = vpop.permute.xlu0 %7601
  %7603 = vrot.lane.b32.xlu0 %v7322, 20
  %v7604 = vpop.permute.xlu0 %7603
  %7605 = vrot.lane.b32.xlu0 %v7325, 20
  %v7606 = vpop.permute.xlu0 %7605
  %7607 = vrot.lane.b32.xlu0 %v7327, 20
  %v7608 = vpop.permute.xlu0 %7607
  %7609 = vrot.lane.b32.xlu0 %v7330, 20
  %v7610 = vpop.permute.xlu0 %7609
  %7611 = vrot.lane.b32.xlu0 %v7332, 20
  %v7612 = vpop.permute.xlu0 %7611
  %7613 = vrot.lane.b32.xlu0 %v7335, 20
  %v7614 = vpop.permute.xlu0 %7613
  %7615 = vrot.lane.b32.xlu0 %v7337, 20
  %v7616 = vpop.permute.xlu0 %7615
  %7617 = vrot.lane.b32.xlu0 %v7340, 20
  %v7618 = vpop.permute.xlu0 %7617
  %7619 = vrot.lane.b32.xlu0 %v7342, 20
  %v7620 = vpop.permute.xlu0 %7619
  %7621 = vrot.lane.b32.xlu0 %v7345, 20
  %v7622 = vpop.permute.xlu0 %7621
  %7623 = vrot.lane.b32.xlu0 %v7347, 20
  %v7624 = vpop.permute.xlu0 %7623
  %7625 = vrot.lane.b32.xlu0 %v7350, 20
  %v7626 = vpop.permute.xlu0 %7625
  %7627 = vrot.lane.b32.xlu0 %v7352, 20
  %v7628 = vpop.permute.xlu0 %7627
  %7629 = vrot.lane.b32.xlu0 %v7355, 20
  %v7630 = vpop.permute.xlu0 %7629
  %7631 = vrot.lane.b32.xlu0 %v7357, 20
  %v7632 = vpop.permute.xlu0 %7631
  %7633 = vrot.lane.b32.xlu0 %v7360, 20
  %v7634 = vpop.permute.xlu0 %7633
  %7635 = vrot.lane.b32.xlu0 %v7362, 20
  %v7636 = vpop.permute.xlu0 %7635
  %7637 = vrot.lane.b32.xlu0 %v7365, 20
  %v7638 = vpop.permute.xlu0 %7637
  %7639 = vrot.lane.b32.xlu0 %v7367, 20
  %v7640 = vpop.permute.xlu0 %7639
  %7641 = vrot.lane.b32.xlu0 %v7370, 20
  %v7642 = vpop.permute.xlu0 %7641
  %7643 = vrot.lane.b32.xlu0 %v7372, 20
  %v7644 = vpop.permute.xlu0 %7643
  %7645 = vrot.lane.b32.xlu0 %v7375, 20
  %v7646 = vpop.permute.xlu0 %7645
  %7647 = vrot.lane.b32.xlu0 %v7377, 20
  %v7648 = vpop.permute.xlu0 %7647
  %7649 = vrot.lane.b32.xlu0 %v7380, 20
  %v7650 = vpop.permute.xlu0 %7649
  %7651 = vrot.lane.b32.xlu0 %v7382, 20
  %v7652 = vpop.permute.xlu0 %7651
  %7653 = vrot.lane.b32.xlu0 %v7385, 20
  %v7654 = vpop.permute.xlu0 %7653
  %7655 = vrot.lane.b32.xlu0 %v7387, 20
  %v7656 = vpop.permute.xlu0 %7655
  %7657 = vrot.lane.b32.xlu0 %v7390, 20
  %v7658 = vpop.permute.xlu0 %7657
  %7659 = vrot.lane.b32.xlu0 %v7392, 20
  %v7660 = vpop.permute.xlu0 %7659
  %7661 = vrot.lane.b32.xlu0 %v7395, 20
  %v7662 = vpop.permute.xlu0 %7661
  %7663 = vrot.lane.b32.xlu0 %v7397, 20
  %v7664 = vpop.permute.xlu0 %7663
  %7665 = vrot.lane.b32.xlu0 %v7400, 20
  %v7666 = vpop.permute.xlu0 %7665
  %7667 = vrot.lane.b32.xlu0 %v7402, 20
  %v7668 = vpop.permute.xlu0 %7667
  %7669 = vrot.lane.b32.xlu0 %v7405, 20
  %v7670 = vpop.permute.xlu0 %7669
  %7671 = vrot.lane.b32.xlu0 %v7407, 20
  %v7672 = vpop.permute.xlu0 %7671
  %7673 = vrot.lane.b32.xlu0 %v7410, 20
  %v7674 = vpop.permute.xlu0 %7673
  %7675 = vrot.lane.b32.xlu0 %v7412, 20
  %v7676 = vpop.permute.xlu0 %7675
  %7677 = vrot.lane.b32.xlu0 %v7415, 20
  %v7678 = vpop.permute.xlu0 %7677
  %7679 = vrot.lane.b32.xlu0 %v7417, 20
  %v7680 = vpop.permute.xlu0 %7679
  %7681 = vrot.lane.b32.xlu0 %v7420, 20
  %v7682 = vpop.permute.xlu0 %7681
  %7683 = vrot.lane.b32.xlu0 %v7422, 20
  %v7684 = vpop.permute.xlu0 %7683
  %7685 = vrot.lane.b32.xlu0 %v7425, 20
  %v7686 = vpop.permute.xlu0 %7685
  %7687 = vrot.lane.b32.xlu0 %v7427, 20
  %v7688 = vpop.permute.xlu0 %7687
  %7689 = vrot.lane.b32.xlu0 %v7430, 20
  %v7690 = vpop.permute.xlu0 %7689
  %7691 = vrot.lane.b32.xlu0 %v7432, 20
  %v7692 = vpop.permute.xlu0 %7691
  %7693 = vrot.lane.b32.xlu0 %v7435, 20
  %v7694 = vpop.permute.xlu0 %7693
  %7695 = vrot.lane.b32.xlu0 %v7437, 20
  %v7696 = vpop.permute.xlu0 %7695
  %7697 = vrot.lane.b32.xlu0 %v7440, 20
  %v7698 = vpop.permute.xlu0 %7697
  %7699 = vrot.lane.b32.xlu0 %v7442, 20
  %v7700 = vpop.permute.xlu0 %7699
  %7701 = vrot.lane.b32.xlu0 %v7445, 20
  %v7702 = vpop.permute.xlu0 %7701
  %7703 = vrot.lane.b32.xlu0 %v7447, 20
  %v7704 = vpop.permute.xlu0 %7703
  %7705 = vrot.lane.b32.xlu0 %v7450, 20
  %v7706 = vpop.permute.xlu0 %7705
  %7707 = vrot.lane.b32.xlu0 %v7452, 20
  %v7708 = vpop.permute.xlu0 %7707
  %v7965 = vunpack.c.l.b16 %v795
  %v7966 = vunpack.c.l.b16 %v796
  %v7967 = vunpack.c.l.b16 %v797
  %v7968 = vunpack.c.l.b16 %v798
  %v7969 = vunpack.c.l.b16 %v799
  %v7970 = vunpack.c.l.b16 %v800
  %v7971 = vunpack.c.l.b16 %v801
  %v7972 = vunpack.c.l.b16 %v802
  %v7973 = vunpack.c.l.b16 %v803
  %v7974 = vunpack.c.l.b16 %v804
  %v7975 = vunpack.c.l.b16 %v805
  %v7976 = vunpack.c.l.b16 %v806
  %v7977 = vunpack.c.l.b16 %v807
  %v7978 = vunpack.c.l.b16 %v808
  %v7979 = vunpack.c.l.b16 %v809
  %v7980 = vunpack.c.l.b16 %v810
  %v7981 = vunpack.c.l.b16 %v811
  %v7982 = vunpack.c.l.b16 %v812
  %v7983 = vunpack.c.l.b16 %v813
  %v7984 = vunpack.c.l.b16 %v814
  %v7985 = vunpack.c.l.b16 %v815
  %v7986 = vunpack.c.l.b16 %v816
  %v7987 = vunpack.c.l.b16 %v817
  %v7988 = vunpack.c.l.b16 %v818
  %v7989 = vunpack.c.l.b16 %v819
  %v7990 = vunpack.c.l.b16 %v820
  %v7991 = vunpack.c.l.b16 %v821
  %v7992 = vunpack.c.l.b16 %v822
  %v7993 = vunpack.c.l.b16 %v823
  %v7994 = vunpack.c.l.b16 %v824
  %v7995 = vunpack.c.l.b16 %v825
  %v7996 = vunpack.c.l.b16 %v826
  %v7997 = vunpack.c.l.b16 %v827
  %v7998 = vunpack.c.l.b16 %v828
  %v7999 = vunpack.c.l.b16 %v829
  %v8000 = vunpack.c.l.b16 %v830
  %v8001 = vunpack.c.l.b16 %v831
  %v8002 = vunpack.c.l.b16 %v832
  %v8003 = vunpack.c.l.b16 %v833
  %v8004 = vunpack.c.l.b16 %v834
  %v8005 = vunpack.c.l.b16 %v835
  %v8006 = vunpack.c.l.b16 %v836
  %v8007 = vunpack.c.l.b16 %v837
  %v8008 = vunpack.c.l.b16 %v838
  %v8009 = vunpack.c.l.b16 %v839
  %v8010 = vunpack.c.l.b16 %v840
  %v8011 = vunpack.c.l.b16 %v841
  %v8012 = vunpack.c.l.b16 %v842
  %v8013 = vunpack.c.l.b16 %v843
  %v8014 = vunpack.c.l.b16 %v844
  %v8015 = vunpack.c.l.b16 %v845
  %v8016 = vunpack.c.l.b16 %v846
  %v8017 = vunpack.c.l.b16 %v847
  %v8018 = vunpack.c.l.b16 %v848
  %v8019 = vunpack.c.l.b16 %v849
  %v8020 = vunpack.c.l.b16 %v850
  %v8021 = vunpack.c.l.b16 %v851
  %v8022 = vunpack.c.l.b16 %v852
  %v8023 = vunpack.c.l.b16 %v853
  %v8024 = vunpack.c.l.b16 %v854
  %v8025 = vunpack.c.l.b16 %v855
  %v8026 = vunpack.c.l.b16 %v856
  %v8027 = vunpack.c.l.b16 %v857
  %v8028 = vunpack.c.l.b16 %v858
  %v8029 = vunpack.c.l.b16 %v859
  %v8030 = vunpack.c.l.b16 %v860
  %v8031 = vunpack.c.l.b16 %v861
  %v8032 = vunpack.c.l.b16 %v862
  %v8033 = vunpack.c.l.b16 %v863
  %v8034 = vunpack.c.l.b16 %v864
  %v8035 = vunpack.c.l.b16 %v865
  %v8036 = vunpack.c.l.b16 %v866
  %v8037 = vunpack.c.l.b16 %v867
  %v8038 = vunpack.c.l.b16 %v868
  %v8039 = vunpack.c.l.b16 %v869
  %v8040 = vunpack.c.l.b16 %v870
  %v8041 = vunpack.c.l.b16 %v871
  %v8042 = vunpack.c.l.b16 %v872
  %v8043 = vunpack.c.l.b16 %v873
  %v8044 = vunpack.c.l.b16 %v874
  %v8045 = vunpack.c.l.b16 %v875
  %v8046 = vunpack.c.l.b16 %v876
  %v8047 = vunpack.c.l.b16 %v877
  %v8048 = vunpack.c.l.b16 %v878
  %v8049 = vunpack.c.l.b16 %v879
  %v8050 = vunpack.c.l.b16 %v880
  %v8051 = vunpack.c.l.b16 %v881
  %v8052 = vunpack.c.l.b16 %v882
  %v8053 = vunpack.c.l.b16 %v883
  %v8054 = vunpack.c.l.b16 %v884
  %v8055 = vunpack.c.l.b16 %v885
  %v8056 = vunpack.c.l.b16 %v886
  %v8057 = vunpack.c.l.b16 %v887
  %v8058 = vunpack.c.l.b16 %v888
  %v8059 = vunpack.c.l.b16 %v889
  %v8060 = vunpack.c.l.b16 %v890
  %v8061 = vunpack.c.l.b16 %v891
  %v8062 = vunpack.c.l.b16 %v892
  %v8063 = vunpack.c.l.b16 %v893
  %v8064 = vunpack.c.l.b16 %v894
  %v8065 = vunpack.c.l.b16 %v895
  %v8066 = vunpack.c.l.b16 %v896
  %v8067 = vunpack.c.l.b16 %v897
  %v8068 = vunpack.c.l.b16 %v898
  %v8069 = vunpack.c.l.b16 %v899
  %v8070 = vunpack.c.l.b16 %v900
  %v8071 = vunpack.c.l.b16 %v901
  %v8072 = vunpack.c.l.b16 %v902
  %v8073 = vunpack.c.l.b16 %v903
  %v8074 = vunpack.c.l.b16 %v904
  %v8075 = vunpack.c.l.b16 %v905
  %v8076 = vunpack.c.l.b16 %v906
  %v8077 = vunpack.c.l.b16 %v907
  %v8078 = vunpack.c.l.b16 %v908
  %v8079 = vunpack.c.l.b16 %v909
  %v8080 = vunpack.c.l.b16 %v910
  %v8081 = vunpack.c.l.b16 %v911
  %v8082 = vunpack.c.l.b16 %v912
  %v8083 = vunpack.c.l.b16 %v913
  %v8084 = vunpack.c.l.b16 %v914
  %v8085 = vunpack.c.l.b16 %v915
  %v8086 = vunpack.c.l.b16 %v916
  %v8087 = vunpack.c.l.b16 %v917
  %v8088 = vunpack.c.l.b16 %v918
  %v8089 = vunpack.c.l.b16 %v919
  %v8090 = vunpack.c.l.b16 %v920
  %v8091 = vunpack.c.l.b16 %v921
  %v8092 = vunpack.c.l.b16 %v922
  %v8093 = vunpack.c.l.b16 %v923
  %v8094 = vunpack.c.l.b16 %v924
  %v8095 = vunpack.c.l.b16 %v925
  %v8096 = vunpack.c.l.b16 %v926
  %v8097 = vunpack.c.l.b16 %v927
  %v8098 = vunpack.c.l.b16 %v928
  %v8099 = vunpack.c.l.b16 %v929
  %v8100 = vunpack.c.l.b16 %v930
  %v8101 = vunpack.c.l.b16 %v931
  %v8102 = vunpack.c.l.b16 %v932
  %v8103 = vunpack.c.l.b16 %v933
  %v8104 = vunpack.c.l.b16 %v934
  %v8105 = vunpack.c.l.b16 %v935
  %v8106 = vunpack.c.l.b16 %v936
  %v8107 = vunpack.c.l.b16 %v937
  %v8108 = vunpack.c.l.b16 %v938
  %v8109 = vunpack.c.l.b16 %v939
  %v8110 = vunpack.c.l.b16 %v940
  %v8111 = vunpack.c.l.b16 %v941
  %v8112 = vunpack.c.l.b16 %v942
  %v8113 = vunpack.c.l.b16 %v943
  %v8114 = vunpack.c.l.b16 %v944
  %v8115 = vunpack.c.l.b16 %v945
  %v8116 = vunpack.c.l.b16 %v946
  %v8117 = vunpack.c.l.b16 %v947
  %v8118 = vunpack.c.l.b16 %v948
  %v8119 = vunpack.c.l.b16 %v949
  %v8120 = vunpack.c.l.b16 %v950
  %v8121 = vunpack.c.l.b16 %v951
  %v8122 = vunpack.c.l.b16 %v952
  %v8123 = vunpack.c.l.b16 %v953
  %v8124 = vunpack.c.l.b16 %v954
  %v8125 = vunpack.c.l.b16 %v955
  %v8126 = vunpack.c.l.b16 %v956
  %v8127 = vunpack.c.l.b16 %v957
  %v8128 = vunpack.c.l.b16 %v958
  %v8129 = vunpack.c.l.b16 %v959
  %v8130 = vunpack.c.l.b16 %v960
  %v8131 = vunpack.c.l.b16 %v961
  %v8132 = vunpack.c.l.b16 %v962
  %v8133 = vunpack.c.l.b16 %v963
  %v8134 = vunpack.c.l.b16 %v964
  %v8135 = vunpack.c.l.b16 %v965
  %v8136 = vunpack.c.l.b16 %v966
  %v8137 = vunpack.c.l.b16 %v967
  %v8138 = vunpack.c.l.b16 %v968
  %v8139 = vunpack.c.l.b16 %v969
  %v8140 = vunpack.c.l.b16 %v970
  %v8141 = vunpack.c.l.b16 %v971
  %v8142 = vunpack.c.l.b16 %v972
  %v8143 = vunpack.c.l.b16 %v973
  %v8144 = vunpack.c.l.b16 %v974
  %v8145 = vunpack.c.l.b16 %v975
  %v8146 = vunpack.c.l.b16 %v976
  %v8147 = vunpack.c.l.b16 %v977
  %v8148 = vunpack.c.l.b16 %v978
  %v8149 = vunpack.c.l.b16 %v979
  %v8150 = vunpack.c.l.b16 %v980
  %v8151 = vunpack.c.l.b16 %v981
  %v8152 = vunpack.c.l.b16 %v982
  %v8153 = vunpack.c.l.b16 %v983
  %v8154 = vunpack.c.l.b16 %v984
  %v8155 = vunpack.c.l.b16 %v985
  %v8156 = vunpack.c.l.b16 %v986
  %v8157 = vunpack.c.l.b16 %v987
  %v8158 = vunpack.c.l.b16 %v988
  %v8159 = vunpack.c.l.b16 %v989
  %v8160 = vunpack.c.l.b16 %v990
  %v8161 = vunpack.c.l.b16 %v991
  %v8162 = vunpack.c.l.b16 %v992
  %v8163 = vunpack.c.l.b16 %v993
  %v8164 = vunpack.c.l.b16 %v994
  %v8165 = vunpack.c.l.b16 %v995
  %v8166 = vunpack.c.l.b16 %v996
  %v8167 = vunpack.c.l.b16 %v997
  %v8168 = vunpack.c.l.b16 %v998
  %v8169 = vunpack.c.l.b16 %v999
  %v8170 = vunpack.c.l.b16 %v1000
  %v8171 = vunpack.c.l.b16 %v1001
  %v8172 = vunpack.c.l.b16 %v1002
  %v8173 = vunpack.c.l.b16 %v1003
  %v8174 = vunpack.c.l.b16 %v1004
  %v8175 = vunpack.c.l.b16 %v1005
  %v8176 = vunpack.c.l.b16 %v1006
  %v8177 = vunpack.c.l.b16 %v1007
  %v8178 = vunpack.c.l.b16 %v1008
  %v8179 = vunpack.c.l.b16 %v1009
  %v8180 = vunpack.c.l.b16 %v1010
  %v8181 = vunpack.c.l.b16 %v1011
  %v8182 = vunpack.c.l.b16 %v1012
  %v8183 = vunpack.c.l.b16 %v1013
  %v8184 = vunpack.c.l.b16 %v1014
  %v8185 = vunpack.c.l.b16 %v1015
  %v8186 = vunpack.c.l.b16 %v1016
  %v8187 = vunpack.c.l.b16 %v1017
  %v8188 = vunpack.c.l.b16 %v1018
  %v8189 = vunpack.c.l.b16 %v1019
  %v8190 = vunpack.c.l.b16 %v1020
  %v8191 = vunpack.c.l.b16 %v1021
  %v8192 = vunpack.c.l.b16 %v1022
  %v8193 = vunpack.c.l.b16 %v1023
  %v8194 = vunpack.c.l.b16 %v1024
  %v8195 = vunpack.c.l.b16 %v1025
  %v8196 = vunpack.c.l.b16 %v1026
  %v8197 = vunpack.c.l.b16 %v1027
  %v8198 = vunpack.c.l.b16 %v1028
  %v8199 = vunpack.c.l.b16 %v1029
  %v8200 = vunpack.c.l.b16 %v1030
  %v8201 = vunpack.c.l.b16 %v1031
  %v8202 = vunpack.c.l.b16 %v1032
  %v8203 = vunpack.c.l.b16 %v1033
  %v8204 = vunpack.c.l.b16 %v1034
  %v8205 = vunpack.c.l.b16 %v1035
  %v8206 = vunpack.c.l.b16 %v1036
  %v8207 = vunpack.c.l.b16 %v1037
  %v8208 = vunpack.c.l.b16 %v1038
  %v8209 = vunpack.c.l.b16 %v1039
  %v8210 = vunpack.c.l.b16 %v1040
  %v8211 = vunpack.c.l.b16 %v1041
  %v8212 = vunpack.c.l.b16 %v1042
  %v8213 = vunpack.c.l.b16 %v1043
  %v8214 = vunpack.c.l.b16 %v1044
  %v8215 = vunpack.c.l.b16 %v1045
  %v8216 = vunpack.c.l.b16 %v1046
  %v8217 = vunpack.c.l.b16 %v1047
  %v8218 = vunpack.c.l.b16 %v1048
  %v8219 = vunpack.c.l.b16 %v1049
  %v8220 = vunpack.c.l.b16 %v1050
  %v8221 = vpack.c.b16 %v7966, %v7965
  %v8222 = vpack.c.b16 %v7968, %v7967
  %v8223 = vpack.c.b16 %v7970, %v7969
  %v8224 = vpack.c.b16 %v7972, %v7971
  %v8225 = vpack.c.b16 %v7974, %v7973
  %v8226 = vpack.c.b16 %v7976, %v7975
  %v8227 = vpack.c.b16 %v7978, %v7977
  %v8228 = vpack.c.b16 %v7980, %v7979
  %v8229 = vpack.c.b16 %v7982, %v7981
  %v8230 = vpack.c.b16 %v7984, %v7983
  %v8231 = vpack.c.b16 %v7986, %v7985
  %v8232 = vpack.c.b16 %v7988, %v7987
  %v8233 = vpack.c.b16 %v7990, %v7989
  %v8234 = vpack.c.b16 %v7992, %v7991
  %v8235 = vpack.c.b16 %v7994, %v7993
  %v8236 = vpack.c.b16 %v7996, %v7995
  %v8237 = vpack.c.b16 %v7998, %v7997
  %v8238 = vpack.c.b16 %v8000, %v7999
  %v8239 = vpack.c.b16 %v8002, %v8001
  %v8240 = vpack.c.b16 %v8004, %v8003
  %v8241 = vpack.c.b16 %v8006, %v8005
  %v8242 = vpack.c.b16 %v8008, %v8007
  %v8243 = vpack.c.b16 %v8010, %v8009
  %v8244 = vpack.c.b16 %v8012, %v8011
  %v8245 = vpack.c.b16 %v8014, %v8013
  %v8246 = vpack.c.b16 %v8016, %v8015
  %v8247 = vpack.c.b16 %v8018, %v8017
  %v8248 = vpack.c.b16 %v8020, %v8019
  %v8249 = vpack.c.b16 %v8022, %v8021
  %v8250 = vpack.c.b16 %v8024, %v8023
  %v8251 = vpack.c.b16 %v8026, %v8025
  %v8252 = vpack.c.b16 %v8028, %v8027
  %v8253 = vpack.c.b16 %v8030, %v8029
  %v8254 = vpack.c.b16 %v8032, %v8031
  %v8255 = vpack.c.b16 %v8034, %v8033
  %v8256 = vpack.c.b16 %v8036, %v8035
  %v8257 = vpack.c.b16 %v8038, %v8037
  %v8258 = vpack.c.b16 %v8040, %v8039
  %v8259 = vpack.c.b16 %v8042, %v8041
  %v8260 = vpack.c.b16 %v8044, %v8043
  %v8261 = vpack.c.b16 %v8046, %v8045
  %v8262 = vpack.c.b16 %v8048, %v8047
  %v8263 = vpack.c.b16 %v8050, %v8049
  %v8264 = vpack.c.b16 %v8052, %v8051
  %v8265 = vpack.c.b16 %v8054, %v8053
  %v8266 = vpack.c.b16 %v8056, %v8055
  %v8267 = vpack.c.b16 %v8058, %v8057
  %v8268 = vpack.c.b16 %v8060, %v8059
  %v8269 = vpack.c.b16 %v8062, %v8061
  %v8270 = vpack.c.b16 %v8064, %v8063
  %v8271 = vpack.c.b16 %v8066, %v8065
  %v8272 = vpack.c.b16 %v8068, %v8067
  %v8273 = vpack.c.b16 %v8070, %v8069
  %v8274 = vpack.c.b16 %v8072, %v8071
  %v8275 = vpack.c.b16 %v8074, %v8073
  %v8276 = vpack.c.b16 %v8076, %v8075
  %v8277 = vpack.c.b16 %v8078, %v8077
  %v8278 = vpack.c.b16 %v8080, %v8079
  %v8279 = vpack.c.b16 %v8082, %v8081
  %v8280 = vpack.c.b16 %v8084, %v8083
  %v8281 = vpack.c.b16 %v8086, %v8085
  %v8282 = vpack.c.b16 %v8088, %v8087
  %v8283 = vpack.c.b16 %v8090, %v8089
  %v8284 = vpack.c.b16 %v8092, %v8091
  %v8285 = vpack.c.b16 %v8094, %v8093
  %v8286 = vpack.c.b16 %v8096, %v8095
  %v8287 = vpack.c.b16 %v8098, %v8097
  %v8288 = vpack.c.b16 %v8100, %v8099
  %v8289 = vpack.c.b16 %v8102, %v8101
  %v8290 = vpack.c.b16 %v8104, %v8103
  %v8291 = vpack.c.b16 %v8106, %v8105
  %v8292 = vpack.c.b16 %v8108, %v8107
  %v8293 = vpack.c.b16 %v8110, %v8109
  %v8294 = vpack.c.b16 %v8112, %v8111
  %v8295 = vpack.c.b16 %v8114, %v8113
  %v8296 = vpack.c.b16 %v8116, %v8115
  %v8297 = vpack.c.b16 %v8118, %v8117
  %v8298 = vpack.c.b16 %v8120, %v8119
  %v8299 = vpack.c.b16 %v8122, %v8121
  %v8300 = vpack.c.b16 %v8124, %v8123
  %v8301 = vpack.c.b16 %v8126, %v8125
  %v8302 = vpack.c.b16 %v8128, %v8127
  %v8303 = vpack.c.b16 %v8130, %v8129
  %v8304 = vpack.c.b16 %v8132, %v8131
  %v8305 = vpack.c.b16 %v8134, %v8133
  %v8306 = vpack.c.b16 %v8136, %v8135
  %v8307 = vpack.c.b16 %v8138, %v8137
  %v8308 = vpack.c.b16 %v8140, %v8139
  %v8309 = vpack.c.b16 %v8142, %v8141
  %v8310 = vpack.c.b16 %v8144, %v8143
  %v8311 = vpack.c.b16 %v8146, %v8145
  %v8312 = vpack.c.b16 %v8148, %v8147
  %v8313 = vpack.c.b16 %v8150, %v8149
  %v8314 = vpack.c.b16 %v8152, %v8151
  %v8315 = vpack.c.b16 %v8154, %v8153
  %v8316 = vpack.c.b16 %v8156, %v8155
  %v8317 = vpack.c.b16 %v8158, %v8157
  %v8318 = vpack.c.b16 %v8160, %v8159
  %v8319 = vpack.c.b16 %v8162, %v8161
  %v8320 = vpack.c.b16 %v8164, %v8163
  %v8321 = vpack.c.b16 %v8166, %v8165
  %v8322 = vpack.c.b16 %v8168, %v8167
  %v8323 = vpack.c.b16 %v8170, %v8169
  %v8324 = vpack.c.b16 %v8172, %v8171
  %v8325 = vpack.c.b16 %v8174, %v8173
  %v8326 = vpack.c.b16 %v8176, %v8175
  %v8327 = vpack.c.b16 %v8178, %v8177
  %v8328 = vpack.c.b16 %v8180, %v8179
  %v8329 = vpack.c.b16 %v8182, %v8181
  %v8330 = vpack.c.b16 %v8184, %v8183
  %v8331 = vpack.c.b16 %v8186, %v8185
  %v8332 = vpack.c.b16 %v8188, %v8187
  %v8333 = vpack.c.b16 %v8190, %v8189
  %v8334 = vpack.c.b16 %v8192, %v8191
  %v8335 = vpack.c.b16 %v8194, %v8193
  %v8336 = vpack.c.b16 %v8196, %v8195
  %v8337 = vpack.c.b16 %v8198, %v8197
  %v8338 = vpack.c.b16 %v8200, %v8199
  %v8339 = vpack.c.b16 %v8202, %v8201
  %v8340 = vpack.c.b16 %v8204, %v8203
  %v8341 = vpack.c.b16 %v8206, %v8205
  %v8342 = vpack.c.b16 %v8208, %v8207
  %v8343 = vpack.c.b16 %v8210, %v8209
  %v8344 = vpack.c.b16 %v8212, %v8211
  %v8345 = vpack.c.b16 %v8214, %v8213
  %v8346 = vpack.c.b16 %v8216, %v8215
  %v8347 = vpack.c.b16 %v8218, %v8217
  %v8348 = vpack.c.b16 %v8220, %v8219
  %8349 = vrot.lane.b32.xlu0 %v8221, 24
  %v8350 = vpop.permute.xlu0 %8349
  %8351 = vrot.lane.b32.xlu0 %v8222, 24
  %v8352 = vpop.permute.xlu0 %8351
  %8353 = vrot.lane.b32.xlu0 %v8223, 24
  %v8354 = vpop.permute.xlu0 %8353
  %8355 = vrot.lane.b32.xlu0 %v8224, 24
  %v8356 = vpop.permute.xlu0 %8355
  %8357 = vrot.lane.b32.xlu0 %v8225, 24
  %v8358 = vpop.permute.xlu0 %8357
  %8359 = vrot.lane.b32.xlu0 %v8226, 24
  %v8360 = vpop.permute.xlu0 %8359
  %8361 = vrot.lane.b32.xlu0 %v8227, 24
  %v8362 = vpop.permute.xlu0 %8361
  %8363 = vrot.lane.b32.xlu0 %v8228, 24
  %v8364 = vpop.permute.xlu0 %8363
  %8365 = vrot.lane.b32.xlu0 %v8229, 24
  %v8366 = vpop.permute.xlu0 %8365
  %8367 = vrot.lane.b32.xlu0 %v8230, 24
  %v8368 = vpop.permute.xlu0 %8367
  %8369 = vrot.lane.b32.xlu0 %v8231, 24
  %v8370 = vpop.permute.xlu0 %8369
  %8371 = vrot.lane.b32.xlu0 %v8232, 24
  %v8372 = vpop.permute.xlu0 %8371
  %8373 = vrot.lane.b32.xlu0 %v8233, 24
  %v8374 = vpop.permute.xlu0 %8373
  %8375 = vrot.lane.b32.xlu0 %v8234, 24
  %v8376 = vpop.permute.xlu0 %8375
  %8377 = vrot.lane.b32.xlu0 %v8235, 24
  %v8378 = vpop.permute.xlu0 %8377
  %8379 = vrot.lane.b32.xlu0 %v8236, 24
  %v8380 = vpop.permute.xlu0 %8379
  %8381 = vrot.lane.b32.xlu0 %v8237, 24
  %v8382 = vpop.permute.xlu0 %8381
  %8383 = vrot.lane.b32.xlu0 %v8238, 24
  %v8384 = vpop.permute.xlu0 %8383
  %8385 = vrot.lane.b32.xlu0 %v8239, 24
  %v8386 = vpop.permute.xlu0 %8385
  %8387 = vrot.lane.b32.xlu0 %v8240, 24
  %v8388 = vpop.permute.xlu0 %8387
  %8389 = vrot.lane.b32.xlu0 %v8241, 24
  %v8390 = vpop.permute.xlu0 %8389
  %8391 = vrot.lane.b32.xlu0 %v8242, 24
  %v8392 = vpop.permute.xlu0 %8391
  %8393 = vrot.lane.b32.xlu0 %v8243, 24
  %v8394 = vpop.permute.xlu0 %8393
  %8395 = vrot.lane.b32.xlu0 %v8244, 24
  %v8396 = vpop.permute.xlu0 %8395
  %8397 = vrot.lane.b32.xlu0 %v8245, 24
  %v8398 = vpop.permute.xlu0 %8397
  %8399 = vrot.lane.b32.xlu0 %v8246, 24
  %v8400 = vpop.permute.xlu0 %8399
  %8401 = vrot.lane.b32.xlu0 %v8247, 24
  %v8402 = vpop.permute.xlu0 %8401
  %8403 = vrot.lane.b32.xlu0 %v8248, 24
  %v8404 = vpop.permute.xlu0 %8403
  %8405 = vrot.lane.b32.xlu0 %v8249, 24
  %v8406 = vpop.permute.xlu0 %8405
  %8407 = vrot.lane.b32.xlu0 %v8250, 24
  %v8408 = vpop.permute.xlu0 %8407
  %8409 = vrot.lane.b32.xlu0 %v8251, 24
  %v8410 = vpop.permute.xlu0 %8409
  %8411 = vrot.lane.b32.xlu0 %v8252, 24
  %v8412 = vpop.permute.xlu0 %8411
  %8413 = vrot.lane.b32.xlu0 %v8253, 24
  %v8414 = vpop.permute.xlu0 %8413
  %8415 = vrot.lane.b32.xlu0 %v8254, 24
  %v8416 = vpop.permute.xlu0 %8415
  %8417 = vrot.lane.b32.xlu0 %v8255, 24
  %v8418 = vpop.permute.xlu0 %8417
  %8419 = vrot.lane.b32.xlu0 %v8256, 24
  %v8420 = vpop.permute.xlu0 %8419
  %8421 = vrot.lane.b32.xlu0 %v8257, 24
  %v8422 = vpop.permute.xlu0 %8421
  %8423 = vrot.lane.b32.xlu0 %v8258, 24
  %v8424 = vpop.permute.xlu0 %8423
  %8425 = vrot.lane.b32.xlu0 %v8259, 24
  %v8426 = vpop.permute.xlu0 %8425
  %8427 = vrot.lane.b32.xlu0 %v8260, 24
  %v8428 = vpop.permute.xlu0 %8427
  %8429 = vrot.lane.b32.xlu0 %v8261, 24
  %v8430 = vpop.permute.xlu0 %8429
  %8431 = vrot.lane.b32.xlu0 %v8262, 24
  %v8432 = vpop.permute.xlu0 %8431
  %8433 = vrot.lane.b32.xlu0 %v8263, 24
  %v8434 = vpop.permute.xlu0 %8433
  %8435 = vrot.lane.b32.xlu0 %v8264, 24
  %v8436 = vpop.permute.xlu0 %8435
  %8437 = vrot.lane.b32.xlu0 %v8265, 24
  %v8438 = vpop.permute.xlu0 %8437
  %8439 = vrot.lane.b32.xlu0 %v8266, 24
  %v8440 = vpop.permute.xlu0 %8439
  %8441 = vrot.lane.b32.xlu0 %v8267, 24
  %v8442 = vpop.permute.xlu0 %8441
  %8443 = vrot.lane.b32.xlu0 %v8268, 24
  %v8444 = vpop.permute.xlu0 %8443
  %8445 = vrot.lane.b32.xlu0 %v8269, 24
  %v8446 = vpop.permute.xlu0 %8445
  %8447 = vrot.lane.b32.xlu0 %v8270, 24
  %v8448 = vpop.permute.xlu0 %8447
  %8449 = vrot.lane.b32.xlu0 %v8271, 24
  %v8450 = vpop.permute.xlu0 %8449
  %8451 = vrot.lane.b32.xlu0 %v8272, 24
  %v8452 = vpop.permute.xlu0 %8451
  %8453 = vrot.lane.b32.xlu0 %v8273, 24
  %v8454 = vpop.permute.xlu0 %8453
  %8455 = vrot.lane.b32.xlu0 %v8274, 24
  %v8456 = vpop.permute.xlu0 %8455
  %8457 = vrot.lane.b32.xlu0 %v8275, 24
  %v8458 = vpop.permute.xlu0 %8457
  %8459 = vrot.lane.b32.xlu0 %v8276, 24
  %v8460 = vpop.permute.xlu0 %8459
  %8461 = vrot.lane.b32.xlu0 %v8277, 24
  %v8462 = vpop.permute.xlu0 %8461
  %8463 = vrot.lane.b32.xlu0 %v8278, 24
  %v8464 = vpop.permute.xlu0 %8463
  %8465 = vrot.lane.b32.xlu0 %v8279, 24
  %v8466 = vpop.permute.xlu0 %8465
  %8467 = vrot.lane.b32.xlu0 %v8280, 24
  %v8468 = vpop.permute.xlu0 %8467
  %8469 = vrot.lane.b32.xlu0 %v8281, 24
  %v8470 = vpop.permute.xlu0 %8469
  %8471 = vrot.lane.b32.xlu0 %v8282, 24
  %v8472 = vpop.permute.xlu0 %8471
  %8473 = vrot.lane.b32.xlu0 %v8283, 24
  %v8474 = vpop.permute.xlu0 %8473
  %8475 = vrot.lane.b32.xlu0 %v8284, 24
  %v8476 = vpop.permute.xlu0 %8475
  %8477 = vrot.lane.b32.xlu0 %v8285, 24
  %v8478 = vpop.permute.xlu0 %8477
  %8479 = vrot.lane.b32.xlu0 %v8286, 24
  %v8480 = vpop.permute.xlu0 %8479
  %8481 = vrot.lane.b32.xlu0 %v8287, 24
  %v8482 = vpop.permute.xlu0 %8481
  %8483 = vrot.lane.b32.xlu0 %v8288, 24
  %v8484 = vpop.permute.xlu0 %8483
  %8485 = vrot.lane.b32.xlu0 %v8289, 24
  %v8486 = vpop.permute.xlu0 %8485
  %8487 = vrot.lane.b32.xlu0 %v8290, 24
  %v8488 = vpop.permute.xlu0 %8487
  %8489 = vrot.lane.b32.xlu0 %v8291, 24
  %v8490 = vpop.permute.xlu0 %8489
  %8491 = vrot.lane.b32.xlu0 %v8292, 24
  %v8492 = vpop.permute.xlu0 %8491
  %8493 = vrot.lane.b32.xlu0 %v8293, 24
  %v8494 = vpop.permute.xlu0 %8493
  %8495 = vrot.lane.b32.xlu0 %v8294, 24
  %v8496 = vpop.permute.xlu0 %8495
  %8497 = vrot.lane.b32.xlu0 %v8295, 24
  %v8498 = vpop.permute.xlu0 %8497
  %8499 = vrot.lane.b32.xlu0 %v8296, 24
  %v8500 = vpop.permute.xlu0 %8499
  %8501 = vrot.lane.b32.xlu0 %v8297, 24
  %v8502 = vpop.permute.xlu0 %8501
  %8503 = vrot.lane.b32.xlu0 %v8298, 24
  %v8504 = vpop.permute.xlu0 %8503
  %8505 = vrot.lane.b32.xlu0 %v8299, 24
  %v8506 = vpop.permute.xlu0 %8505
  %8507 = vrot.lane.b32.xlu0 %v8300, 24
  %v8508 = vpop.permute.xlu0 %8507
  %8509 = vrot.lane.b32.xlu0 %v8301, 24
  %v8510 = vpop.permute.xlu0 %8509
  %8511 = vrot.lane.b32.xlu0 %v8302, 24
  %v8512 = vpop.permute.xlu0 %8511
  %8513 = vrot.lane.b32.xlu0 %v8303, 24
  %v8514 = vpop.permute.xlu0 %8513
  %8515 = vrot.lane.b32.xlu0 %v8304, 24
  %v8516 = vpop.permute.xlu0 %8515
  %8517 = vrot.lane.b32.xlu0 %v8305, 24
  %v8518 = vpop.permute.xlu0 %8517
  %8519 = vrot.lane.b32.xlu0 %v8306, 24
  %v8520 = vpop.permute.xlu0 %8519
  %8521 = vrot.lane.b32.xlu0 %v8307, 24
  %v8522 = vpop.permute.xlu0 %8521
  %8523 = vrot.lane.b32.xlu0 %v8308, 24
  %v8524 = vpop.permute.xlu0 %8523
  %8525 = vrot.lane.b32.xlu0 %v8309, 24
  %v8526 = vpop.permute.xlu0 %8525
  %8527 = vrot.lane.b32.xlu0 %v8310, 24
  %v8528 = vpop.permute.xlu0 %8527
  %8529 = vrot.lane.b32.xlu0 %v8311, 24
  %v8530 = vpop.permute.xlu0 %8529
  %8531 = vrot.lane.b32.xlu0 %v8312, 24
  %v8532 = vpop.permute.xlu0 %8531
  %8533 = vrot.lane.b32.xlu0 %v8313, 24
  %v8534 = vpop.permute.xlu0 %8533
  %8535 = vrot.lane.b32.xlu0 %v8314, 24
  %v8536 = vpop.permute.xlu0 %8535
  %8537 = vrot.lane.b32.xlu0 %v8315, 24
  %v8538 = vpop.permute.xlu0 %8537
  %8539 = vrot.lane.b32.xlu0 %v8316, 24
  %v8540 = vpop.permute.xlu0 %8539
  %8541 = vrot.lane.b32.xlu0 %v8317, 24
  %v8542 = vpop.permute.xlu0 %8541
  %8543 = vrot.lane.b32.xlu0 %v8318, 24
  %v8544 = vpop.permute.xlu0 %8543
  %8545 = vrot.lane.b32.xlu0 %v8319, 24
  %v8546 = vpop.permute.xlu0 %8545
  %8547 = vrot.lane.b32.xlu0 %v8320, 24
  %v8548 = vpop.permute.xlu0 %8547
  %8549 = vrot.lane.b32.xlu0 %v8321, 24
  %v8550 = vpop.permute.xlu0 %8549
  %8551 = vrot.lane.b32.xlu0 %v8322, 24
  %v8552 = vpop.permute.xlu0 %8551
  %8553 = vrot.lane.b32.xlu0 %v8323, 24
  %v8554 = vpop.permute.xlu0 %8553
  %8555 = vrot.lane.b32.xlu0 %v8324, 24
  %v8556 = vpop.permute.xlu0 %8555
  %8557 = vrot.lane.b32.xlu0 %v8325, 24
  %v8558 = vpop.permute.xlu0 %8557
  %8559 = vrot.lane.b32.xlu0 %v8326, 24
  %v8560 = vpop.permute.xlu0 %8559
  %8561 = vrot.lane.b32.xlu0 %v8327, 24
  %v8562 = vpop.permute.xlu0 %8561
  %8563 = vrot.lane.b32.xlu0 %v8328, 24
  %v8564 = vpop.permute.xlu0 %8563
  %8565 = vrot.lane.b32.xlu0 %v8329, 24
  %v8566 = vpop.permute.xlu0 %8565
  %8567 = vrot.lane.b32.xlu0 %v8330, 24
  %v8568 = vpop.permute.xlu0 %8567
  %8569 = vrot.lane.b32.xlu0 %v8331, 24
  %v8570 = vpop.permute.xlu0 %8569
  %8571 = vrot.lane.b32.xlu0 %v8332, 24
  %v8572 = vpop.permute.xlu0 %8571
  %8573 = vrot.lane.b32.xlu0 %v8333, 24
  %v8574 = vpop.permute.xlu0 %8573
  %8575 = vrot.lane.b32.xlu0 %v8334, 24
  %v8576 = vpop.permute.xlu0 %8575
  %8577 = vrot.lane.b32.xlu0 %v8335, 24
  %v8578 = vpop.permute.xlu0 %8577
  %8579 = vrot.lane.b32.xlu0 %v8336, 24
  %v8580 = vpop.permute.xlu0 %8579
  %8581 = vrot.lane.b32.xlu0 %v8337, 24
  %v8582 = vpop.permute.xlu0 %8581
  %8583 = vrot.lane.b32.xlu0 %v8338, 24
  %v8584 = vpop.permute.xlu0 %8583
  %8585 = vrot.lane.b32.xlu0 %v8339, 24
  %v8586 = vpop.permute.xlu0 %8585
  %8587 = vrot.lane.b32.xlu0 %v8340, 24
  %v8588 = vpop.permute.xlu0 %8587
  %8589 = vrot.lane.b32.xlu0 %v8341, 24
  %v8590 = vpop.permute.xlu0 %8589
  %8591 = vrot.lane.b32.xlu0 %v8342, 24
  %v8592 = vpop.permute.xlu0 %8591
  %8593 = vrot.lane.b32.xlu0 %v8343, 24
  %v8594 = vpop.permute.xlu0 %8593
  %8595 = vrot.lane.b32.xlu0 %v8344, 24
  %v8596 = vpop.permute.xlu0 %8595
  %8597 = vrot.lane.b32.xlu0 %v8345, 24
  %v8598 = vpop.permute.xlu0 %8597
  %8599 = vrot.lane.b32.xlu0 %v8346, 24
  %v8600 = vpop.permute.xlu0 %8599
  %8601 = vrot.lane.b32.xlu0 %v8347, 24
  %v8602 = vpop.permute.xlu0 %8601
  %8603 = vrot.lane.b32.xlu0 %v8348, 24
  %v8604 = vpop.permute.xlu0 %8603
  %v8669 = vunpack.c.l.b16 %v1051
  %v8670 = vunpack.c.l.b16 %v1052
  %v8671 = vunpack.c.l.b16 %v1053
  %v8672 = vunpack.c.l.b16 %v1054
  %v8673 = vunpack.c.l.b16 %v1055
  %v8674 = vunpack.c.l.b16 %v1056
  %v8675 = vunpack.c.l.b16 %v1057
  %v8676 = vunpack.c.l.b16 %v1058
  %v8677 = vunpack.c.l.b16 %v1059
  %v8678 = vunpack.c.l.b16 %v1060
  %v8679 = vunpack.c.l.b16 %v1061
  %v8680 = vunpack.c.l.b16 %v1062
  %v8681 = vunpack.c.l.b16 %v1063
  %v8682 = vunpack.c.l.b16 %v1064
  %v8683 = vunpack.c.l.b16 %v1065
  %v8684 = vunpack.c.l.b16 %v1066
  %v8685 = vunpack.c.l.b16 %v1067
  %v8686 = vunpack.c.l.b16 %v1068
  %v8687 = vunpack.c.l.b16 %v1069
  %v8688 = vunpack.c.l.b16 %v1070
  %v8689 = vunpack.c.l.b16 %v1071
  %v8690 = vunpack.c.l.b16 %v1072
  %v8691 = vunpack.c.l.b16 %v1073
  %v8692 = vunpack.c.l.b16 %v1074
  %v8693 = vunpack.c.l.b16 %v1075
  %v8694 = vunpack.c.l.b16 %v1076
  %v8695 = vunpack.c.l.b16 %v1077
  %v8696 = vunpack.c.l.b16 %v1078
  %v8697 = vunpack.c.l.b16 %v1079
  %v8698 = vunpack.c.l.b16 %v1080
  %v8699 = vunpack.c.l.b16 %v1081
  %v8700 = vunpack.c.l.b16 %v1082
  %v8701 = vunpack.c.l.b16 %v1083
  %v8702 = vunpack.c.l.b16 %v1084
  %v8703 = vunpack.c.l.b16 %v1085
  %v8704 = vunpack.c.l.b16 %v1086
  %v8705 = vunpack.c.l.b16 %v1087
  %v8706 = vunpack.c.l.b16 %v1088
  %v8707 = vunpack.c.l.b16 %v1089
  %v8708 = vunpack.c.l.b16 %v1090
  %v8709 = vunpack.c.l.b16 %v1091
  %v8710 = vunpack.c.l.b16 %v1092
  %v8711 = vunpack.c.l.b16 %v1093
  %v8712 = vunpack.c.l.b16 %v1094
  %v8713 = vunpack.c.l.b16 %v1095
  %v8714 = vunpack.c.l.b16 %v1096
  %v8715 = vunpack.c.l.b16 %v1097
  %v8716 = vunpack.c.l.b16 %v1098
  %v8717 = vunpack.c.l.b16 %v1099
  %v8718 = vunpack.c.l.b16 %v1100
  %v8719 = vunpack.c.l.b16 %v1101
  %v8720 = vunpack.c.l.b16 %v1102
  %v8721 = vunpack.c.l.b16 %v1103
  %v8722 = vunpack.c.l.b16 %v1104
  %v8723 = vunpack.c.l.b16 %v1105
  %v8724 = vunpack.c.l.b16 %v1106
  %v8725 = vunpack.c.l.b16 %v1107
  %v8726 = vunpack.c.l.b16 %v1108
  %v8727 = vunpack.c.l.b16 %v1109
  %v8728 = vunpack.c.l.b16 %v1110
  %v8729 = vunpack.c.l.b16 %v1111
  %v8730 = vunpack.c.l.b16 %v1112
  %v8731 = vunpack.c.l.b16 %v1113
  %v8732 = vunpack.c.l.b16 %v1114
  %v8733 = vpack.c.b16 %v8669, %v8669
  %v8734 = vpack.c.b16 %v8670, %v8670
  %v8735 = vpack.c.b16 %v8671, %v8671
  %v8736 = vpack.c.b16 %v8672, %v8672
  %v8737 = vpack.c.b16 %v8673, %v8673
  %v8738 = vpack.c.b16 %v8674, %v8674
  %v8739 = vpack.c.b16 %v8675, %v8675
  %v8740 = vpack.c.b16 %v8676, %v8676
  %v8741 = vpack.c.b16 %v8677, %v8677
  %v8742 = vpack.c.b16 %v8678, %v8678
  %v8743 = vpack.c.b16 %v8679, %v8679
  %v8744 = vpack.c.b16 %v8680, %v8680
  %v8745 = vpack.c.b16 %v8681, %v8681
  %v8746 = vpack.c.b16 %v8682, %v8682
  %v8747 = vpack.c.b16 %v8683, %v8683
  %v8748 = vpack.c.b16 %v8684, %v8684
  %v8749 = vpack.c.b16 %v8685, %v8685
  %v8750 = vpack.c.b16 %v8686, %v8686
  %v8751 = vpack.c.b16 %v8687, %v8687
  %v8752 = vpack.c.b16 %v8688, %v8688
  %v8753 = vpack.c.b16 %v8689, %v8689
  %v8754 = vpack.c.b16 %v8690, %v8690
  %v8755 = vpack.c.b16 %v8691, %v8691
  %v8756 = vpack.c.b16 %v8692, %v8692
  %v8757 = vpack.c.b16 %v8693, %v8693
  %v8758 = vpack.c.b16 %v8694, %v8694
  %v8759 = vpack.c.b16 %v8695, %v8695
  %v8760 = vpack.c.b16 %v8696, %v8696
  %v8761 = vpack.c.b16 %v8697, %v8697
  %v8762 = vpack.c.b16 %v8698, %v8698
  %v8763 = vpack.c.b16 %v8699, %v8699
  %v8764 = vpack.c.b16 %v8700, %v8700
  %v8765 = vpack.c.b16 %v8701, %v8701
  %v8766 = vpack.c.b16 %v8702, %v8702
  %v8767 = vpack.c.b16 %v8703, %v8703
  %v8768 = vpack.c.b16 %v8704, %v8704
  %v8769 = vpack.c.b16 %v8705, %v8705
  %v8770 = vpack.c.b16 %v8706, %v8706
  %v8771 = vpack.c.b16 %v8707, %v8707
  %v8772 = vpack.c.b16 %v8708, %v8708
  %v8773 = vpack.c.b16 %v8709, %v8709
  %v8774 = vpack.c.b16 %v8710, %v8710
  %v8775 = vpack.c.b16 %v8711, %v8711
  %v8776 = vpack.c.b16 %v8712, %v8712
  %v8777 = vpack.c.b16 %v8713, %v8713
  %v8778 = vpack.c.b16 %v8714, %v8714
  %v8779 = vpack.c.b16 %v8715, %v8715
  %v8780 = vpack.c.b16 %v8716, %v8716
  %v8781 = vpack.c.b16 %v8717, %v8717
  %v8782 = vpack.c.b16 %v8718, %v8718
  %v8783 = vpack.c.b16 %v8719, %v8719
  %v8784 = vpack.c.b16 %v8720, %v8720
  %v8785 = vpack.c.b16 %v8721, %v8721
  %v8786 = vpack.c.b16 %v8722, %v8722
  %v8787 = vpack.c.b16 %v8723, %v8723
  %v8788 = vpack.c.b16 %v8724, %v8724
  %v8789 = vpack.c.b16 %v8725, %v8725
  %v8790 = vpack.c.b16 %v8726, %v8726
  %v8791 = vpack.c.b16 %v8727, %v8727
  %v8792 = vpack.c.b16 %v8728, %v8728
  %v8793 = vpack.c.b16 %v8729, %v8729
  %v8794 = vpack.c.b16 %v8730, %v8730
  %v8795 = vpack.c.b16 %v8731, %v8731
  %v8796 = vpack.c.b16 %v8732, %v8732
  %v8798 = vshrl.u32 %v8221, 16
  %v8800 = vshll.u32 %v8221, 16
  %v8802 = vrot.slane %v8800, 1
  %v8803 = vor.u32 %v8798, %v8802
  %v8805 = vshll.u32 %v8222, 16
  %v8807 = vrot.slane %v8805, 1
  %v8808 = vsel %vm2011, %v8803, %v8807
  %v8809 = vshrl.u32 %v8222, 16
  %v8811 = vor.u32 %v8809, %v8807
  %v8813 = vshll.u32 %v8733, 16
  %v8815 = vrot.slane %v8813, 1
  %v8816 = vsel %vm2011, %v8811, %v8815
  %v8818 = vshrl.u32 %v8223, 16
  %v8820 = vshll.u32 %v8223, 16
  %v8822 = vrot.slane %v8820, 1
  %v8823 = vor.u32 %v8818, %v8822
  %v8825 = vshll.u32 %v8224, 16
  %v8827 = vrot.slane %v8825, 1
  %v8828 = vsel %vm2011, %v8823, %v8827
  %v8829 = vshrl.u32 %v8224, 16
  %v8831 = vor.u32 %v8829, %v8827
  %v8833 = vshll.u32 %v8734, 16
  %v8835 = vrot.slane %v8833, 1
  %v8836 = vsel %vm2011, %v8831, %v8835
  %v8838 = vshrl.u32 %v8225, 16
  %v8840 = vshll.u32 %v8225, 16
  %v8842 = vrot.slane %v8840, 1
  %v8843 = vor.u32 %v8838, %v8842
  %v8845 = vshll.u32 %v8226, 16
  %v8847 = vrot.slane %v8845, 1
  %v8848 = vsel %vm2011, %v8843, %v8847
  %v8849 = vshrl.u32 %v8226, 16
  %v8851 = vor.u32 %v8849, %v8847
  %v8853 = vshll.u32 %v8735, 16
  %v8855 = vrot.slane %v8853, 1
  %v8856 = vsel %vm2011, %v8851, %v8855
  %v8858 = vshrl.u32 %v8227, 16
  %v8860 = vshll.u32 %v8227, 16
  %v8862 = vrot.slane %v8860, 1
  %v8863 = vor.u32 %v8858, %v8862
  %v8865 = vshll.u32 %v8228, 16
  %v8867 = vrot.slane %v8865, 1
  %v8868 = vsel %vm2011, %v8863, %v8867
  %v8869 = vshrl.u32 %v8228, 16
  %v8871 = vor.u32 %v8869, %v8867
  %v8873 = vshll.u32 %v8736, 16
  %v8875 = vrot.slane %v8873, 1
  %v8876 = vsel %vm2011, %v8871, %v8875
  %v8878 = vshrl.u32 %v8229, 16
  %v8880 = vshll.u32 %v8229, 16
  %v8882 = vrot.slane %v8880, 1
  %v8883 = vor.u32 %v8878, %v8882
  %v8885 = vshll.u32 %v8230, 16
  %v8887 = vrot.slane %v8885, 1
  %v8888 = vsel %vm2011, %v8883, %v8887
  %v8889 = vshrl.u32 %v8230, 16
  %v8891 = vor.u32 %v8889, %v8887
  %v8893 = vshll.u32 %v8737, 16
  %v8895 = vrot.slane %v8893, 1
  %v8896 = vsel %vm2011, %v8891, %v8895
  %v8898 = vshrl.u32 %v8231, 16
  %v8900 = vshll.u32 %v8231, 16
  %v8902 = vrot.slane %v8900, 1
  %v8903 = vor.u32 %v8898, %v8902
  %v8905 = vshll.u32 %v8232, 16
  %v8907 = vrot.slane %v8905, 1
  %v8908 = vsel %vm2011, %v8903, %v8907
  %v8909 = vshrl.u32 %v8232, 16
  %v8911 = vor.u32 %v8909, %v8907
  %v8913 = vshll.u32 %v8738, 16
  %v8915 = vrot.slane %v8913, 1
  %v8916 = vsel %vm2011, %v8911, %v8915
  %v8918 = vshrl.u32 %v8233, 16
  %v8920 = vshll.u32 %v8233, 16
  %v8922 = vrot.slane %v8920, 1
  %v8923 = vor.u32 %v8918, %v8922
  %v8925 = vshll.u32 %v8234, 16
  %v8927 = vrot.slane %v8925, 1
  %v8928 = vsel %vm2011, %v8923, %v8927
  %v8929 = vshrl.u32 %v8234, 16
  %v8931 = vor.u32 %v8929, %v8927
  %v8933 = vshll.u32 %v8739, 16
  %v8935 = vrot.slane %v8933, 1
  %v8936 = vsel %vm2011, %v8931, %v8935
  %v8938 = vshrl.u32 %v8235, 16
  %v8940 = vshll.u32 %v8235, 16
  %v8942 = vrot.slane %v8940, 1
  %v8943 = vor.u32 %v8938, %v8942
  %v8945 = vshll.u32 %v8236, 16
  %v8947 = vrot.slane %v8945, 1
  %v8948 = vsel %vm2011, %v8943, %v8947
  %v8949 = vshrl.u32 %v8236, 16
  %v8951 = vor.u32 %v8949, %v8947
  %v8953 = vshll.u32 %v8740, 16
  %v8955 = vrot.slane %v8953, 1
  %v8956 = vsel %vm2011, %v8951, %v8955
  %v8958 = vshrl.u32 %v8237, 16
  %v8960 = vshll.u32 %v8237, 16
  %v8962 = vrot.slane %v8960, 1
  %v8963 = vor.u32 %v8958, %v8962
  %v8965 = vshll.u32 %v8238, 16
  %v8967 = vrot.slane %v8965, 1
  %v8968 = vsel %vm2011, %v8963, %v8967
  %v8969 = vshrl.u32 %v8238, 16
  %v8971 = vor.u32 %v8969, %v8967
  %v8973 = vshll.u32 %v8741, 16
  %v8975 = vrot.slane %v8973, 1
  %v8976 = vsel %vm2011, %v8971, %v8975
  %v8978 = vshrl.u32 %v8239, 16
  %v8980 = vshll.u32 %v8239, 16
  %v8982 = vrot.slane %v8980, 1
  %v8983 = vor.u32 %v8978, %v8982
  %v8985 = vshll.u32 %v8240, 16
  %v8987 = vrot.slane %v8985, 1
  %v8988 = vsel %vm2011, %v8983, %v8987
  %v8989 = vshrl.u32 %v8240, 16
  %v8991 = vor.u32 %v8989, %v8987
  %v8993 = vshll.u32 %v8742, 16
  %v8995 = vrot.slane %v8993, 1
  %v8996 = vsel %vm2011, %v8991, %v8995
  %v8998 = vshrl.u32 %v8241, 16
  %v9000 = vshll.u32 %v8241, 16
  %v9002 = vrot.slane %v9000, 1
  %v9003 = vor.u32 %v8998, %v9002
  %v9005 = vshll.u32 %v8242, 16
  %v9007 = vrot.slane %v9005, 1
  %v9008 = vsel %vm2011, %v9003, %v9007
  %v9009 = vshrl.u32 %v8242, 16
  %v9011 = vor.u32 %v9009, %v9007
  %v9013 = vshll.u32 %v8743, 16
  %v9015 = vrot.slane %v9013, 1
  %v9016 = vsel %vm2011, %v9011, %v9015
  %v9018 = vshrl.u32 %v8243, 16
  %v9020 = vshll.u32 %v8243, 16
  %v9022 = vrot.slane %v9020, 1
  %v9023 = vor.u32 %v9018, %v9022
  %v9025 = vshll.u32 %v8244, 16
  %v9027 = vrot.slane %v9025, 1
  %v9028 = vsel %vm2011, %v9023, %v9027
  %v9029 = vshrl.u32 %v8244, 16
  %v9031 = vor.u32 %v9029, %v9027
  %v9033 = vshll.u32 %v8744, 16
  %v9035 = vrot.slane %v9033, 1
  %v9036 = vsel %vm2011, %v9031, %v9035
  %v9038 = vshrl.u32 %v8245, 16
  %v9040 = vshll.u32 %v8245, 16
  %v9042 = vrot.slane %v9040, 1
  %v9043 = vor.u32 %v9038, %v9042
  %v9045 = vshll.u32 %v8246, 16
  %v9047 = vrot.slane %v9045, 1
  %v9048 = vsel %vm2011, %v9043, %v9047
  %v9049 = vshrl.u32 %v8246, 16
  %v9051 = vor.u32 %v9049, %v9047
  %v9053 = vshll.u32 %v8745, 16
  %v9055 = vrot.slane %v9053, 1
  %v9056 = vsel %vm2011, %v9051, %v9055
  %v9058 = vshrl.u32 %v8247, 16
  %v9060 = vshll.u32 %v8247, 16
  %v9062 = vrot.slane %v9060, 1
  %v9063 = vor.u32 %v9058, %v9062
  %v9065 = vshll.u32 %v8248, 16
  %v9067 = vrot.slane %v9065, 1
  %v9068 = vsel %vm2011, %v9063, %v9067
  %v9069 = vshrl.u32 %v8248, 16
  %v9071 = vor.u32 %v9069, %v9067
  %v9073 = vshll.u32 %v8746, 16
  %v9075 = vrot.slane %v9073, 1
  %v9076 = vsel %vm2011, %v9071, %v9075
  %v9078 = vshrl.u32 %v8249, 16
  %v9080 = vshll.u32 %v8249, 16
  %v9082 = vrot.slane %v9080, 1
  %v9083 = vor.u32 %v9078, %v9082
  %v9085 = vshll.u32 %v8250, 16
  %v9087 = vrot.slane %v9085, 1
  %v9088 = vsel %vm2011, %v9083, %v9087
  %v9089 = vshrl.u32 %v8250, 16
  %v9091 = vor.u32 %v9089, %v9087
  %v9093 = vshll.u32 %v8747, 16
  %v9095 = vrot.slane %v9093, 1
  %v9096 = vsel %vm2011, %v9091, %v9095
  %v9098 = vshrl.u32 %v8251, 16
  %v9100 = vshll.u32 %v8251, 16
  %v9102 = vrot.slane %v9100, 1
  %v9103 = vor.u32 %v9098, %v9102
  %v9105 = vshll.u32 %v8252, 16
  %v9107 = vrot.slane %v9105, 1
  %v9108 = vsel %vm2011, %v9103, %v9107
  %v9109 = vshrl.u32 %v8252, 16
  %v9111 = vor.u32 %v9109, %v9107
  %v9113 = vshll.u32 %v8748, 16
  %v9115 = vrot.slane %v9113, 1
  %v9116 = vsel %vm2011, %v9111, %v9115
  %v9118 = vshrl.u32 %v8253, 16
  %v9120 = vshll.u32 %v8253, 16
  %v9122 = vrot.slane %v9120, 1
  %v9123 = vor.u32 %v9118, %v9122
  %v9125 = vshll.u32 %v8254, 16
  %v9127 = vrot.slane %v9125, 1
  %v9128 = vsel %vm2011, %v9123, %v9127
  %v9129 = vshrl.u32 %v8254, 16
  %v9131 = vor.u32 %v9129, %v9127
  %v9133 = vshll.u32 %v8749, 16
  %v9135 = vrot.slane %v9133, 1
  %v9136 = vsel %vm2011, %v9131, %v9135
  %v9138 = vshrl.u32 %v8255, 16
  %v9140 = vshll.u32 %v8255, 16
  %v9142 = vrot.slane %v9140, 1
  %v9143 = vor.u32 %v9138, %v9142
  %v9145 = vshll.u32 %v8256, 16
  %v9147 = vrot.slane %v9145, 1
  %v9148 = vsel %vm2011, %v9143, %v9147
  %v9149 = vshrl.u32 %v8256, 16
  %v9151 = vor.u32 %v9149, %v9147
  %v9153 = vshll.u32 %v8750, 16
  %v9155 = vrot.slane %v9153, 1
  %v9156 = vsel %vm2011, %v9151, %v9155
  %v9158 = vshrl.u32 %v8257, 16
  %v9160 = vshll.u32 %v8257, 16
  %v9162 = vrot.slane %v9160, 1
  %v9163 = vor.u32 %v9158, %v9162
  %v9165 = vshll.u32 %v8258, 16
  %v9167 = vrot.slane %v9165, 1
  %v9168 = vsel %vm2011, %v9163, %v9167
  %v9169 = vshrl.u32 %v8258, 16
  %v9171 = vor.u32 %v9169, %v9167
  %v9173 = vshll.u32 %v8751, 16
  %v9175 = vrot.slane %v9173, 1
  %v9176 = vsel %vm2011, %v9171, %v9175
  %v9178 = vshrl.u32 %v8259, 16
  %v9180 = vshll.u32 %v8259, 16
  %v9182 = vrot.slane %v9180, 1
  %v9183 = vor.u32 %v9178, %v9182
  %v9185 = vshll.u32 %v8260, 16
  %v9187 = vrot.slane %v9185, 1
  %v9188 = vsel %vm2011, %v9183, %v9187
  %v9189 = vshrl.u32 %v8260, 16
  %v9191 = vor.u32 %v9189, %v9187
  %v9193 = vshll.u32 %v8752, 16
  %v9195 = vrot.slane %v9193, 1
  %v9196 = vsel %vm2011, %v9191, %v9195
  %v9198 = vshrl.u32 %v8261, 16
  %v9200 = vshll.u32 %v8261, 16
  %v9202 = vrot.slane %v9200, 1
  %v9203 = vor.u32 %v9198, %v9202
  %v9205 = vshll.u32 %v8262, 16
  %v9207 = vrot.slane %v9205, 1
  %v9208 = vsel %vm2011, %v9203, %v9207
  %v9209 = vshrl.u32 %v8262, 16
  %v9211 = vor.u32 %v9209, %v9207
  %v9213 = vshll.u32 %v8753, 16
  %v9215 = vrot.slane %v9213, 1
  %v9216 = vsel %vm2011, %v9211, %v9215
  %v9218 = vshrl.u32 %v8263, 16
  %v9220 = vshll.u32 %v8263, 16
  %v9222 = vrot.slane %v9220, 1
  %v9223 = vor.u32 %v9218, %v9222
  %v9225 = vshll.u32 %v8264, 16
  %v9227 = vrot.slane %v9225, 1
  %v9228 = vsel %vm2011, %v9223, %v9227
  %v9229 = vshrl.u32 %v8264, 16
  %v9231 = vor.u32 %v9229, %v9227
  %v9233 = vshll.u32 %v8754, 16
  %v9235 = vrot.slane %v9233, 1
  %v9236 = vsel %vm2011, %v9231, %v9235
  %v9238 = vshrl.u32 %v8265, 16
  %v9240 = vshll.u32 %v8265, 16
  %v9242 = vrot.slane %v9240, 1
  %v9243 = vor.u32 %v9238, %v9242
  %v9245 = vshll.u32 %v8266, 16
  %v9247 = vrot.slane %v9245, 1
  %v9248 = vsel %vm2011, %v9243, %v9247
  %v9249 = vshrl.u32 %v8266, 16
  %v9251 = vor.u32 %v9249, %v9247
  %v9253 = vshll.u32 %v8755, 16
  %v9255 = vrot.slane %v9253, 1
  %v9256 = vsel %vm2011, %v9251, %v9255
  %v9258 = vshrl.u32 %v8267, 16
  %v9260 = vshll.u32 %v8267, 16
  %v9262 = vrot.slane %v9260, 1
  %v9263 = vor.u32 %v9258, %v9262
  %v9265 = vshll.u32 %v8268, 16
  %v9267 = vrot.slane %v9265, 1
  %v9268 = vsel %vm2011, %v9263, %v9267
  %v9269 = vshrl.u32 %v8268, 16
  %v9271 = vor.u32 %v9269, %v9267
  %v9273 = vshll.u32 %v8756, 16
  %v9275 = vrot.slane %v9273, 1
  %v9276 = vsel %vm2011, %v9271, %v9275
  %v9278 = vshrl.u32 %v8269, 16
  %v9280 = vshll.u32 %v8269, 16
  %v9282 = vrot.slane %v9280, 1
  %v9283 = vor.u32 %v9278, %v9282
  %v9285 = vshll.u32 %v8270, 16
  %v9287 = vrot.slane %v9285, 1
  %v9288 = vsel %vm2011, %v9283, %v9287
  %v9289 = vshrl.u32 %v8270, 16
  %v9291 = vor.u32 %v9289, %v9287
  %v9293 = vshll.u32 %v8757, 16
  %v9295 = vrot.slane %v9293, 1
  %v9296 = vsel %vm2011, %v9291, %v9295
  %v9298 = vshrl.u32 %v8271, 16
  %v9300 = vshll.u32 %v8271, 16
  %v9302 = vrot.slane %v9300, 1
  %v9303 = vor.u32 %v9298, %v9302
  %v9305 = vshll.u32 %v8272, 16
  %v9307 = vrot.slane %v9305, 1
  %v9308 = vsel %vm2011, %v9303, %v9307
  %v9309 = vshrl.u32 %v8272, 16
  %v9311 = vor.u32 %v9309, %v9307
  %v9313 = vshll.u32 %v8758, 16
  %v9315 = vrot.slane %v9313, 1
  %v9316 = vsel %vm2011, %v9311, %v9315
  %v9318 = vshrl.u32 %v8273, 16
  %v9320 = vshll.u32 %v8273, 16
  %v9322 = vrot.slane %v9320, 1
  %v9323 = vor.u32 %v9318, %v9322
  %v9325 = vshll.u32 %v8274, 16
  %v9327 = vrot.slane %v9325, 1
  %v9328 = vsel %vm2011, %v9323, %v9327
  %v9329 = vshrl.u32 %v8274, 16
  %v9331 = vor.u32 %v9329, %v9327
  %v9333 = vshll.u32 %v8759, 16
  %v9335 = vrot.slane %v9333, 1
  %v9336 = vsel %vm2011, %v9331, %v9335
  %v9338 = vshrl.u32 %v8275, 16
  %v9340 = vshll.u32 %v8275, 16
  %v9342 = vrot.slane %v9340, 1
  %v9343 = vor.u32 %v9338, %v9342
  %v9345 = vshll.u32 %v8276, 16
  %v9347 = vrot.slane %v9345, 1
  %v9348 = vsel %vm2011, %v9343, %v9347
  %v9349 = vshrl.u32 %v8276, 16
  %v9351 = vor.u32 %v9349, %v9347
  %v9353 = vshll.u32 %v8760, 16
  %v9355 = vrot.slane %v9353, 1
  %v9356 = vsel %vm2011, %v9351, %v9355
  %v9358 = vshrl.u32 %v8277, 16
  %v9360 = vshll.u32 %v8277, 16
  %v9362 = vrot.slane %v9360, 1
  %v9363 = vor.u32 %v9358, %v9362
  %v9365 = vshll.u32 %v8278, 16
  %v9367 = vrot.slane %v9365, 1
  %v9368 = vsel %vm2011, %v9363, %v9367
  %v9369 = vshrl.u32 %v8278, 16
  %v9371 = vor.u32 %v9369, %v9367
  %v9373 = vshll.u32 %v8761, 16
  %v9375 = vrot.slane %v9373, 1
  %v9376 = vsel %vm2011, %v9371, %v9375
  %v9378 = vshrl.u32 %v8279, 16
  %v9380 = vshll.u32 %v8279, 16
  %v9382 = vrot.slane %v9380, 1
  %v9383 = vor.u32 %v9378, %v9382
  %v9385 = vshll.u32 %v8280, 16
  %v9387 = vrot.slane %v9385, 1
  %v9388 = vsel %vm2011, %v9383, %v9387
  %v9389 = vshrl.u32 %v8280, 16
  %v9391 = vor.u32 %v9389, %v9387
  %v9393 = vshll.u32 %v8762, 16
  %v9395 = vrot.slane %v9393, 1
  %v9396 = vsel %vm2011, %v9391, %v9395
  %v9398 = vshrl.u32 %v8281, 16
  %v9400 = vshll.u32 %v8281, 16
  %v9402 = vrot.slane %v9400, 1
  %v9403 = vor.u32 %v9398, %v9402
  %v9405 = vshll.u32 %v8282, 16
  %v9407 = vrot.slane %v9405, 1
  %v9408 = vsel %vm2011, %v9403, %v9407
  %v9409 = vshrl.u32 %v8282, 16
  %v9411 = vor.u32 %v9409, %v9407
  %v9413 = vshll.u32 %v8763, 16
  %v9415 = vrot.slane %v9413, 1
  %v9416 = vsel %vm2011, %v9411, %v9415
  %v9418 = vshrl.u32 %v8283, 16
  %v9420 = vshll.u32 %v8283, 16
  %v9422 = vrot.slane %v9420, 1
  %v9423 = vor.u32 %v9418, %v9422
  %v9425 = vshll.u32 %v8284, 16
  %v9427 = vrot.slane %v9425, 1
  %v9428 = vsel %vm2011, %v9423, %v9427
  %v9429 = vshrl.u32 %v8284, 16
  %v9431 = vor.u32 %v9429, %v9427
  %v9433 = vshll.u32 %v8764, 16
  %v9435 = vrot.slane %v9433, 1
  %v9436 = vsel %vm2011, %v9431, %v9435
  %v9438 = vshrl.u32 %v8285, 16
  %v9440 = vshll.u32 %v8285, 16
  %v9442 = vrot.slane %v9440, 1
  %v9443 = vor.u32 %v9438, %v9442
  %v9445 = vshll.u32 %v8286, 16
  %v9447 = vrot.slane %v9445, 1
  %v9448 = vsel %vm2011, %v9443, %v9447
  %v9449 = vshrl.u32 %v8286, 16
  %v9451 = vor.u32 %v9449, %v9447
  %v9453 = vshll.u32 %v8765, 16
  %v9455 = vrot.slane %v9453, 1
  %v9456 = vsel %vm2011, %v9451, %v9455
  %v9458 = vshrl.u32 %v8287, 16
  %v9460 = vshll.u32 %v8287, 16
  %v9462 = vrot.slane %v9460, 1
  %v9463 = vor.u32 %v9458, %v9462
  %v9465 = vshll.u32 %v8288, 16
  %v9467 = vrot.slane %v9465, 1
  %v9468 = vsel %vm2011, %v9463, %v9467
  %v9469 = vshrl.u32 %v8288, 16
  %v9471 = vor.u32 %v9469, %v9467
  %v9473 = vshll.u32 %v8766, 16
  %v9475 = vrot.slane %v9473, 1
  %v9476 = vsel %vm2011, %v9471, %v9475
  %v9478 = vshrl.u32 %v8289, 16
  %v9480 = vshll.u32 %v8289, 16
  %v9482 = vrot.slane %v9480, 1
  %v9483 = vor.u32 %v9478, %v9482
  %v9485 = vshll.u32 %v8290, 16
  %v9487 = vrot.slane %v9485, 1
  %v9488 = vsel %vm2011, %v9483, %v9487
  %v9489 = vshrl.u32 %v8290, 16
  %v9491 = vor.u32 %v9489, %v9487
  %v9493 = vshll.u32 %v8767, 16
  %v9495 = vrot.slane %v9493, 1
  %v9496 = vsel %vm2011, %v9491, %v9495
  %v9498 = vshrl.u32 %v8291, 16
  %v9500 = vshll.u32 %v8291, 16
  %v9502 = vrot.slane %v9500, 1
  %v9503 = vor.u32 %v9498, %v9502
  %v9505 = vshll.u32 %v8292, 16
  %v9507 = vrot.slane %v9505, 1
  %v9508 = vsel %vm2011, %v9503, %v9507
  %v9509 = vshrl.u32 %v8292, 16
  %v9511 = vor.u32 %v9509, %v9507
  %v9513 = vshll.u32 %v8768, 16
  %v9515 = vrot.slane %v9513, 1
  %v9516 = vsel %vm2011, %v9511, %v9515
  %v9518 = vshrl.u32 %v8293, 16
  %v9520 = vshll.u32 %v8293, 16
  %v9522 = vrot.slane %v9520, 1
  %v9523 = vor.u32 %v9518, %v9522
  %v9525 = vshll.u32 %v8294, 16
  %v9527 = vrot.slane %v9525, 1
  %v9528 = vsel %vm2011, %v9523, %v9527
  %v9529 = vshrl.u32 %v8294, 16
  %v9531 = vor.u32 %v9529, %v9527
  %v9533 = vshll.u32 %v8769, 16
  %v9535 = vrot.slane %v9533, 1
  %v9536 = vsel %vm2011, %v9531, %v9535
  %v9538 = vshrl.u32 %v8295, 16
  %v9540 = vshll.u32 %v8295, 16
  %v9542 = vrot.slane %v9540, 1
  %v9543 = vor.u32 %v9538, %v9542
  %v9545 = vshll.u32 %v8296, 16
  %v9547 = vrot.slane %v9545, 1
  %v9548 = vsel %vm2011, %v9543, %v9547
  %v9549 = vshrl.u32 %v8296, 16
  %v9551 = vor.u32 %v9549, %v9547
  %v9553 = vshll.u32 %v8770, 16
  %v9555 = vrot.slane %v9553, 1
  %v9556 = vsel %vm2011, %v9551, %v9555
  %v9558 = vshrl.u32 %v8297, 16
  %v9560 = vshll.u32 %v8297, 16
  %v9562 = vrot.slane %v9560, 1
  %v9563 = vor.u32 %v9558, %v9562
  %v9565 = vshll.u32 %v8298, 16
  %v9567 = vrot.slane %v9565, 1
  %v9568 = vsel %vm2011, %v9563, %v9567
  %v9569 = vshrl.u32 %v8298, 16
  %v9571 = vor.u32 %v9569, %v9567
  %v9573 = vshll.u32 %v8771, 16
  %v9575 = vrot.slane %v9573, 1
  %v9576 = vsel %vm2011, %v9571, %v9575
  %v9578 = vshrl.u32 %v8299, 16
  %v9580 = vshll.u32 %v8299, 16
  %v9582 = vrot.slane %v9580, 1
  %v9583 = vor.u32 %v9578, %v9582
  %v9585 = vshll.u32 %v8300, 16
  %v9587 = vrot.slane %v9585, 1
  %v9588 = vsel %vm2011, %v9583, %v9587
  %v9589 = vshrl.u32 %v8300, 16
  %v9591 = vor.u32 %v9589, %v9587
  %v9593 = vshll.u32 %v8772, 16
  %v9595 = vrot.slane %v9593, 1
  %v9596 = vsel %vm2011, %v9591, %v9595
  %v9598 = vshrl.u32 %v8301, 16
  %v9600 = vshll.u32 %v8301, 16
  %v9602 = vrot.slane %v9600, 1
  %v9603 = vor.u32 %v9598, %v9602
  %v9605 = vshll.u32 %v8302, 16
  %v9607 = vrot.slane %v9605, 1
  %v9608 = vsel %vm2011, %v9603, %v9607
  %v9609 = vshrl.u32 %v8302, 16
  %v9611 = vor.u32 %v9609, %v9607
  %v9613 = vshll.u32 %v8773, 16
  %v9615 = vrot.slane %v9613, 1
  %v9616 = vsel %vm2011, %v9611, %v9615
  %v9618 = vshrl.u32 %v8303, 16
  %v9620 = vshll.u32 %v8303, 16
  %v9622 = vrot.slane %v9620, 1
  %v9623 = vor.u32 %v9618, %v9622
  %v9625 = vshll.u32 %v8304, 16
  %v9627 = vrot.slane %v9625, 1
  %v9628 = vsel %vm2011, %v9623, %v9627
  %v9629 = vshrl.u32 %v8304, 16
  %v9631 = vor.u32 %v9629, %v9627
  %v9633 = vshll.u32 %v8774, 16
  %v9635 = vrot.slane %v9633, 1
  %v9636 = vsel %vm2011, %v9631, %v9635
  %v9638 = vshrl.u32 %v8305, 16
  %v9640 = vshll.u32 %v8305, 16
  %v9642 = vrot.slane %v9640, 1
  %v9643 = vor.u32 %v9638, %v9642
  %v9645 = vshll.u32 %v8306, 16
  %v9647 = vrot.slane %v9645, 1
  %v9648 = vsel %vm2011, %v9643, %v9647
  %v9649 = vshrl.u32 %v8306, 16
  %v9651 = vor.u32 %v9649, %v9647
  %v9653 = vshll.u32 %v8775, 16
  %v9655 = vrot.slane %v9653, 1
  %v9656 = vsel %vm2011, %v9651, %v9655
  %v9658 = vshrl.u32 %v8307, 16
  %v9660 = vshll.u32 %v8307, 16
  %v9662 = vrot.slane %v9660, 1
  %v9663 = vor.u32 %v9658, %v9662
  %v9665 = vshll.u32 %v8308, 16
  %v9667 = vrot.slane %v9665, 1
  %v9668 = vsel %vm2011, %v9663, %v9667
  %v9669 = vshrl.u32 %v8308, 16
  %v9671 = vor.u32 %v9669, %v9667
  %v9673 = vshll.u32 %v8776, 16
  %v9675 = vrot.slane %v9673, 1
  %v9676 = vsel %vm2011, %v9671, %v9675
  %v9678 = vshrl.u32 %v8309, 16
  %v9680 = vshll.u32 %v8309, 16
  %v9682 = vrot.slane %v9680, 1
  %v9683 = vor.u32 %v9678, %v9682
  %v9685 = vshll.u32 %v8310, 16
  %v9687 = vrot.slane %v9685, 1
  %v9688 = vsel %vm2011, %v9683, %v9687
  %v9689 = vshrl.u32 %v8310, 16
  %v9691 = vor.u32 %v9689, %v9687
  %v9693 = vshll.u32 %v8777, 16
  %v9695 = vrot.slane %v9693, 1
  %v9696 = vsel %vm2011, %v9691, %v9695
  %v9698 = vshrl.u32 %v8311, 16
  %v9700 = vshll.u32 %v8311, 16
  %v9702 = vrot.slane %v9700, 1
  %v9703 = vor.u32 %v9698, %v9702
  %v9705 = vshll.u32 %v8312, 16
  %v9707 = vrot.slane %v9705, 1
  %v9708 = vsel %vm2011, %v9703, %v9707
  %v9709 = vshrl.u32 %v8312, 16
  %v9711 = vor.u32 %v9709, %v9707
  %v9713 = vshll.u32 %v8778, 16
  %v9715 = vrot.slane %v9713, 1
  %v9716 = vsel %vm2011, %v9711, %v9715
  %v9718 = vshrl.u32 %v8313, 16
  %v9720 = vshll.u32 %v8313, 16
  %v9722 = vrot.slane %v9720, 1
  %v9723 = vor.u32 %v9718, %v9722
  %v9725 = vshll.u32 %v8314, 16
  %v9727 = vrot.slane %v9725, 1
  %v9728 = vsel %vm2011, %v9723, %v9727
  %v9729 = vshrl.u32 %v8314, 16
  %v9731 = vor.u32 %v9729, %v9727
  %v9733 = vshll.u32 %v8779, 16
  %v9735 = vrot.slane %v9733, 1
  %v9736 = vsel %vm2011, %v9731, %v9735
  %v9738 = vshrl.u32 %v8315, 16
  %v9740 = vshll.u32 %v8315, 16
  %v9742 = vrot.slane %v9740, 1
  %v9743 = vor.u32 %v9738, %v9742
  %v9745 = vshll.u32 %v8316, 16
  %v9747 = vrot.slane %v9745, 1
  %v9748 = vsel %vm2011, %v9743, %v9747
  %v9749 = vshrl.u32 %v8316, 16
  %v9751 = vor.u32 %v9749, %v9747
  %v9753 = vshll.u32 %v8780, 16
  %v9755 = vrot.slane %v9753, 1
  %v9756 = vsel %vm2011, %v9751, %v9755
  %v9758 = vshrl.u32 %v8317, 16
  %v9760 = vshll.u32 %v8317, 16
  %v9762 = vrot.slane %v9760, 1
  %v9763 = vor.u32 %v9758, %v9762
  %v9765 = vshll.u32 %v8318, 16
  %v9767 = vrot.slane %v9765, 1
  %v9768 = vsel %vm2011, %v9763, %v9767
  %v9769 = vshrl.u32 %v8318, 16
  %v9771 = vor.u32 %v9769, %v9767
  %v9773 = vshll.u32 %v8781, 16
  %v9775 = vrot.slane %v9773, 1
  %v9776 = vsel %vm2011, %v9771, %v9775
  %v9778 = vshrl.u32 %v8319, 16
  %v9780 = vshll.u32 %v8319, 16
  %v9782 = vrot.slane %v9780, 1
  %v9783 = vor.u32 %v9778, %v9782
  %v9785 = vshll.u32 %v8320, 16
  %v9787 = vrot.slane %v9785, 1
  %v9788 = vsel %vm2011, %v9783, %v9787
  %v9789 = vshrl.u32 %v8320, 16
  %v9791 = vor.u32 %v9789, %v9787
  %v9793 = vshll.u32 %v8782, 16
  %v9795 = vrot.slane %v9793, 1
  %v9796 = vsel %vm2011, %v9791, %v9795
  %v9798 = vshrl.u32 %v8321, 16
  %v9800 = vshll.u32 %v8321, 16
  %v9802 = vrot.slane %v9800, 1
  %v9803 = vor.u32 %v9798, %v9802
  %v9805 = vshll.u32 %v8322, 16
  %v9807 = vrot.slane %v9805, 1
  %v9808 = vsel %vm2011, %v9803, %v9807
  %v9809 = vshrl.u32 %v8322, 16
  %v9811 = vor.u32 %v9809, %v9807
  %v9813 = vshll.u32 %v8783, 16
  %v9815 = vrot.slane %v9813, 1
  %v9816 = vsel %vm2011, %v9811, %v9815
  %v9818 = vshrl.u32 %v8323, 16
  %v9820 = vshll.u32 %v8323, 16
  %v9822 = vrot.slane %v9820, 1
  %v9823 = vor.u32 %v9818, %v9822
  %v9825 = vshll.u32 %v8324, 16
  %v9827 = vrot.slane %v9825, 1
  %v9828 = vsel %vm2011, %v9823, %v9827
  %v9829 = vshrl.u32 %v8324, 16
  %v9831 = vor.u32 %v9829, %v9827
  %v9833 = vshll.u32 %v8784, 16
  %v9835 = vrot.slane %v9833, 1
  %v9836 = vsel %vm2011, %v9831, %v9835
  %v9838 = vshrl.u32 %v8325, 16
  %v9840 = vshll.u32 %v8325, 16
  %v9842 = vrot.slane %v9840, 1
  %v9843 = vor.u32 %v9838, %v9842
  %v9845 = vshll.u32 %v8326, 16
  %v9847 = vrot.slane %v9845, 1
  %v9848 = vsel %vm2011, %v9843, %v9847
  %v9849 = vshrl.u32 %v8326, 16
  %v9851 = vor.u32 %v9849, %v9847
  %v9853 = vshll.u32 %v8785, 16
  %v9855 = vrot.slane %v9853, 1
  %v9856 = vsel %vm2011, %v9851, %v9855
  %v9858 = vshrl.u32 %v8327, 16
  %v9860 = vshll.u32 %v8327, 16
  %v9862 = vrot.slane %v9860, 1
  %v9863 = vor.u32 %v9858, %v9862
  %v9865 = vshll.u32 %v8328, 16
  %v9867 = vrot.slane %v9865, 1
  %v9868 = vsel %vm2011, %v9863, %v9867
  %v9869 = vshrl.u32 %v8328, 16
  %v9871 = vor.u32 %v9869, %v9867
  %v9873 = vshll.u32 %v8786, 16
  %v9875 = vrot.slane %v9873, 1
  %v9876 = vsel %vm2011, %v9871, %v9875
  %v9878 = vshrl.u32 %v8329, 16
  %v9880 = vshll.u32 %v8329, 16
  %v9882 = vrot.slane %v9880, 1
  %v9883 = vor.u32 %v9878, %v9882
  %v9885 = vshll.u32 %v8330, 16
  %v9887 = vrot.slane %v9885, 1
  %v9888 = vsel %vm2011, %v9883, %v9887
  %v9889 = vshrl.u32 %v8330, 16
  %v9891 = vor.u32 %v9889, %v9887
  %v9893 = vshll.u32 %v8787, 16
  %v9895 = vrot.slane %v9893, 1
  %v9896 = vsel %vm2011, %v9891, %v9895
  %v9898 = vshrl.u32 %v8331, 16
  %v9900 = vshll.u32 %v8331, 16
  %v9902 = vrot.slane %v9900, 1
  %v9903 = vor.u32 %v9898, %v9902
  %v9905 = vshll.u32 %v8332, 16
  %v9907 = vrot.slane %v9905, 1
  %v9908 = vsel %vm2011, %v9903, %v9907
  %v9909 = vshrl.u32 %v8332, 16
  %v9911 = vor.u32 %v9909, %v9907
  %v9913 = vshll.u32 %v8788, 16
  %v9915 = vrot.slane %v9913, 1
  %v9916 = vsel %vm2011, %v9911, %v9915
  %v9918 = vshrl.u32 %v8333, 16
  %v9920 = vshll.u32 %v8333, 16
  %v9922 = vrot.slane %v9920, 1
  %v9923 = vor.u32 %v9918, %v9922
  %v9925 = vshll.u32 %v8334, 16
  %v9927 = vrot.slane %v9925, 1
  %v9928 = vsel %vm2011, %v9923, %v9927
  %v9929 = vshrl.u32 %v8334, 16
  %v9931 = vor.u32 %v9929, %v9927
  %v9933 = vshll.u32 %v8789, 16
  %v9935 = vrot.slane %v9933, 1
  %v9936 = vsel %vm2011, %v9931, %v9935
  %v9938 = vshrl.u32 %v8335, 16
  %v9940 = vshll.u32 %v8335, 16
  %v9942 = vrot.slane %v9940, 1
  %v9943 = vor.u32 %v9938, %v9942
  %v9945 = vshll.u32 %v8336, 16
  %v9947 = vrot.slane %v9945, 1
  %v9948 = vsel %vm2011, %v9943, %v9947
  %v9949 = vshrl.u32 %v8336, 16
  %v9951 = vor.u32 %v9949, %v9947
  %v9953 = vshll.u32 %v8790, 16
  %v9955 = vrot.slane %v9953, 1
  %v9956 = vsel %vm2011, %v9951, %v9955
  %v9958 = vshrl.u32 %v8337, 16
  %v9960 = vshll.u32 %v8337, 16
  %v9962 = vrot.slane %v9960, 1
  %v9963 = vor.u32 %v9958, %v9962
  %v9965 = vshll.u32 %v8338, 16
  %v9967 = vrot.slane %v9965, 1
  %v9968 = vsel %vm2011, %v9963, %v9967
  %v9969 = vshrl.u32 %v8338, 16
  %v9971 = vor.u32 %v9969, %v9967
  %v9973 = vshll.u32 %v8791, 16
  %v9975 = vrot.slane %v9973, 1
  %v9976 = vsel %vm2011, %v9971, %v9975
  %v9978 = vshrl.u32 %v8339, 16
  %v9980 = vshll.u32 %v8339, 16
  %v9982 = vrot.slane %v9980, 1
  %v9983 = vor.u32 %v9978, %v9982
  %v9985 = vshll.u32 %v8340, 16
  %v9987 = vrot.slane %v9985, 1
  %v9988 = vsel %vm2011, %v9983, %v9987
  %v9989 = vshrl.u32 %v8340, 16
  %v9991 = vor.u32 %v9989, %v9987
  %v9993 = vshll.u32 %v8792, 16
  %v9995 = vrot.slane %v9993, 1
  %v9996 = vsel %vm2011, %v9991, %v9995
  %v9998 = vshrl.u32 %v8341, 16
  %v10000 = vshll.u32 %v8341, 16
  %v10002 = vrot.slane %v10000, 1
  %v10003 = vor.u32 %v9998, %v10002
  %v10005 = vshll.u32 %v8342, 16
  %v10007 = vrot.slane %v10005, 1
  %v10008 = vsel %vm2011, %v10003, %v10007
  %v10009 = vshrl.u32 %v8342, 16
  %v10011 = vor.u32 %v10009, %v10007
  %v10013 = vshll.u32 %v8793, 16
  %v10015 = vrot.slane %v10013, 1
  %v10016 = vsel %vm2011, %v10011, %v10015
  %v10018 = vshrl.u32 %v8343, 16
  %v10020 = vshll.u32 %v8343, 16
  %v10022 = vrot.slane %v10020, 1
  %v10023 = vor.u32 %v10018, %v10022
  %v10025 = vshll.u32 %v8344, 16
  %v10027 = vrot.slane %v10025, 1
  %v10028 = vsel %vm2011, %v10023, %v10027
  %v10029 = vshrl.u32 %v8344, 16
  %v10031 = vor.u32 %v10029, %v10027
  %v10033 = vshll.u32 %v8794, 16
  %v10035 = vrot.slane %v10033, 1
  %v10036 = vsel %vm2011, %v10031, %v10035
  %v10038 = vshrl.u32 %v8345, 16
  %v10040 = vshll.u32 %v8345, 16
  %v10042 = vrot.slane %v10040, 1
  %v10043 = vor.u32 %v10038, %v10042
  %v10045 = vshll.u32 %v8346, 16
  %v10047 = vrot.slane %v10045, 1
  %v10048 = vsel %vm2011, %v10043, %v10047
  %v10049 = vshrl.u32 %v8346, 16
  %v10051 = vor.u32 %v10049, %v10047
  %v10053 = vshll.u32 %v8795, 16
  %v10055 = vrot.slane %v10053, 1
  %v10056 = vsel %vm2011, %v10051, %v10055
  %v10058 = vshrl.u32 %v8347, 16
  %v10060 = vshll.u32 %v8347, 16
  %v10062 = vrot.slane %v10060, 1
  %v10063 = vor.u32 %v10058, %v10062
  %v10065 = vshll.u32 %v8348, 16
  %v10067 = vrot.slane %v10065, 1
  %v10068 = vsel %vm2011, %v10063, %v10067
  %v10069 = vshrl.u32 %v8348, 16
  %v10071 = vor.u32 %v10069, %v10067
  %v10073 = vshll.u32 %v8796, 16
  %v10075 = vrot.slane %v10073, 1
  %v10076 = vsel %vm2011, %v10071, %v10075
  %10077 = vrot.lane.b32.xlu0 %v8808, 28
  %v10078 = vpop.permute.xlu0 %10077
  %10079 = vrot.lane.b32.xlu0 %v8816, 28
  %v10080 = vpop.permute.xlu0 %10079
  %10081 = vrot.lane.b32.xlu0 %v8828, 28
  %v10082 = vpop.permute.xlu0 %10081
  %10083 = vrot.lane.b32.xlu0 %v8836, 28
  %v10084 = vpop.permute.xlu0 %10083
  %10085 = vrot.lane.b32.xlu0 %v8848, 28
  %v10086 = vpop.permute.xlu0 %10085
  %10087 = vrot.lane.b32.xlu0 %v8856, 28
  %v10088 = vpop.permute.xlu0 %10087
  %10089 = vrot.lane.b32.xlu0 %v8868, 28
  %v10090 = vpop.permute.xlu0 %10089
  %10091 = vrot.lane.b32.xlu0 %v8876, 28
  %v10092 = vpop.permute.xlu0 %10091
  %10093 = vrot.lane.b32.xlu0 %v8888, 28
  %v10094 = vpop.permute.xlu0 %10093
  %10095 = vrot.lane.b32.xlu0 %v8896, 28
  %v10096 = vpop.permute.xlu0 %10095
  %10097 = vrot.lane.b32.xlu0 %v8908, 28
  %v10098 = vpop.permute.xlu0 %10097
  %10099 = vrot.lane.b32.xlu0 %v8916, 28
  %v10100 = vpop.permute.xlu0 %10099
  %10101 = vrot.lane.b32.xlu0 %v8928, 28
  %v10102 = vpop.permute.xlu0 %10101
  %10103 = vrot.lane.b32.xlu0 %v8936, 28
  %v10104 = vpop.permute.xlu0 %10103
  %10105 = vrot.lane.b32.xlu0 %v8948, 28
  %v10106 = vpop.permute.xlu0 %10105
  %10107 = vrot.lane.b32.xlu0 %v8956, 28
  %v10108 = vpop.permute.xlu0 %10107
  %10109 = vrot.lane.b32.xlu0 %v8968, 28
  %v10110 = vpop.permute.xlu0 %10109
  %10111 = vrot.lane.b32.xlu0 %v8976, 28
  %v10112 = vpop.permute.xlu0 %10111
  %10113 = vrot.lane.b32.xlu0 %v8988, 28
  %v10114 = vpop.permute.xlu0 %10113
  %10115 = vrot.lane.b32.xlu0 %v8996, 28
  %v10116 = vpop.permute.xlu0 %10115
  %10117 = vrot.lane.b32.xlu0 %v9008, 28
  %v10118 = vpop.permute.xlu0 %10117
  %10119 = vrot.lane.b32.xlu0 %v9016, 28
  %v10120 = vpop.permute.xlu0 %10119
  %10121 = vrot.lane.b32.xlu0 %v9028, 28
  %v10122 = vpop.permute.xlu0 %10121
  %10123 = vrot.lane.b32.xlu0 %v9036, 28
  %v10124 = vpop.permute.xlu0 %10123
  %10125 = vrot.lane.b32.xlu0 %v9048, 28
  %v10126 = vpop.permute.xlu0 %10125
  %10127 = vrot.lane.b32.xlu0 %v9056, 28
  %v10128 = vpop.permute.xlu0 %10127
  %10129 = vrot.lane.b32.xlu0 %v9068, 28
  %v10130 = vpop.permute.xlu0 %10129
  %10131 = vrot.lane.b32.xlu0 %v9076, 28
  %v10132 = vpop.permute.xlu0 %10131
  %10133 = vrot.lane.b32.xlu0 %v9088, 28
  %v10134 = vpop.permute.xlu0 %10133
  %10135 = vrot.lane.b32.xlu0 %v9096, 28
  %v10136 = vpop.permute.xlu0 %10135
  %10137 = vrot.lane.b32.xlu0 %v9108, 28
  %v10138 = vpop.permute.xlu0 %10137
  %10139 = vrot.lane.b32.xlu0 %v9116, 28
  %v10140 = vpop.permute.xlu0 %10139
  %10141 = vrot.lane.b32.xlu0 %v9128, 28
  %v10142 = vpop.permute.xlu0 %10141
  %10143 = vrot.lane.b32.xlu0 %v9136, 28
  %v10144 = vpop.permute.xlu0 %10143
  %10145 = vrot.lane.b32.xlu0 %v9148, 28
  %v10146 = vpop.permute.xlu0 %10145
  %10147 = vrot.lane.b32.xlu0 %v9156, 28
  %v10148 = vpop.permute.xlu0 %10147
  %10149 = vrot.lane.b32.xlu0 %v9168, 28
  %v10150 = vpop.permute.xlu0 %10149
  %10151 = vrot.lane.b32.xlu0 %v9176, 28
  %v10152 = vpop.permute.xlu0 %10151
  %10153 = vrot.lane.b32.xlu0 %v9188, 28
  %v10154 = vpop.permute.xlu0 %10153
  %10155 = vrot.lane.b32.xlu0 %v9196, 28
  %v10156 = vpop.permute.xlu0 %10155
  %10157 = vrot.lane.b32.xlu0 %v9208, 28
  %v10158 = vpop.permute.xlu0 %10157
  %10159 = vrot.lane.b32.xlu0 %v9216, 28
  %v10160 = vpop.permute.xlu0 %10159
  %10161 = vrot.lane.b32.xlu0 %v9228, 28
  %v10162 = vpop.permute.xlu0 %10161
  %10163 = vrot.lane.b32.xlu0 %v9236, 28
  %v10164 = vpop.permute.xlu0 %10163
  %10165 = vrot.lane.b32.xlu0 %v9248, 28
  %v10166 = vpop.permute.xlu0 %10165
  %10167 = vrot.lane.b32.xlu0 %v9256, 28
  %v10168 = vpop.permute.xlu0 %10167
  %10169 = vrot.lane.b32.xlu0 %v9268, 28
  %v10170 = vpop.permute.xlu0 %10169
  %10171 = vrot.lane.b32.xlu0 %v9276, 28
  %v10172 = vpop.permute.xlu0 %10171
  %10173 = vrot.lane.b32.xlu0 %v9288, 28
  %v10174 = vpop.permute.xlu0 %10173
  %10175 = vrot.lane.b32.xlu0 %v9296, 28
  %v10176 = vpop.permute.xlu0 %10175
  %10177 = vrot.lane.b32.xlu0 %v9308, 28
  %v10178 = vpop.permute.xlu0 %10177
  %10179 = vrot.lane.b32.xlu0 %v9316, 28
  %v10180 = vpop.permute.xlu0 %10179
  %10181 = vrot.lane.b32.xlu0 %v9328, 28
  %v10182 = vpop.permute.xlu0 %10181
  %10183 = vrot.lane.b32.xlu0 %v9336, 28
  %v10184 = vpop.permute.xlu0 %10183
  %10185 = vrot.lane.b32.xlu0 %v9348, 28
  %v10186 = vpop.permute.xlu0 %10185
  %10187 = vrot.lane.b32.xlu0 %v9356, 28
  %v10188 = vpop.permute.xlu0 %10187
  %10189 = vrot.lane.b32.xlu0 %v9368, 28
  %v10190 = vpop.permute.xlu0 %10189
  %10191 = vrot.lane.b32.xlu0 %v9376, 28
  %v10192 = vpop.permute.xlu0 %10191
  %10193 = vrot.lane.b32.xlu0 %v9388, 28
  %v10194 = vpop.permute.xlu0 %10193
  %10195 = vrot.lane.b32.xlu0 %v9396, 28
  %v10196 = vpop.permute.xlu0 %10195
  %10197 = vrot.lane.b32.xlu0 %v9408, 28
  %v10198 = vpop.permute.xlu0 %10197
  %10199 = vrot.lane.b32.xlu0 %v9416, 28
  %v10200 = vpop.permute.xlu0 %10199
  %10201 = vrot.lane.b32.xlu0 %v9428, 28
  %v10202 = vpop.permute.xlu0 %10201
  %10203 = vrot.lane.b32.xlu0 %v9436, 28
  %v10204 = vpop.permute.xlu0 %10203
  %10205 = vrot.lane.b32.xlu0 %v9448, 28
  %v10206 = vpop.permute.xlu0 %10205
  %10207 = vrot.lane.b32.xlu0 %v9456, 28
  %v10208 = vpop.permute.xlu0 %10207
  %10209 = vrot.lane.b32.xlu0 %v9468, 28
  %v10210 = vpop.permute.xlu0 %10209
  %10211 = vrot.lane.b32.xlu0 %v9476, 28
  %v10212 = vpop.permute.xlu0 %10211
  %10213 = vrot.lane.b32.xlu0 %v9488, 28
  %v10214 = vpop.permute.xlu0 %10213
  %10215 = vrot.lane.b32.xlu0 %v9496, 28
  %v10216 = vpop.permute.xlu0 %10215
  %10217 = vrot.lane.b32.xlu0 %v9508, 28
  %v10218 = vpop.permute.xlu0 %10217
  %10219 = vrot.lane.b32.xlu0 %v9516, 28
  %v10220 = vpop.permute.xlu0 %10219
  %10221 = vrot.lane.b32.xlu0 %v9528, 28
  %v10222 = vpop.permute.xlu0 %10221
  %10223 = vrot.lane.b32.xlu0 %v9536, 28
  %v10224 = vpop.permute.xlu0 %10223
  %10225 = vrot.lane.b32.xlu0 %v9548, 28
  %v10226 = vpop.permute.xlu0 %10225
  %10227 = vrot.lane.b32.xlu0 %v9556, 28
  %v10228 = vpop.permute.xlu0 %10227
  %10229 = vrot.lane.b32.xlu0 %v9568, 28
  %v10230 = vpop.permute.xlu0 %10229
  %10231 = vrot.lane.b32.xlu0 %v9576, 28
  %v10232 = vpop.permute.xlu0 %10231
  %10233 = vrot.lane.b32.xlu0 %v9588, 28
  %v10234 = vpop.permute.xlu0 %10233
  %10235 = vrot.lane.b32.xlu0 %v9596, 28
  %v10236 = vpop.permute.xlu0 %10235
  %10237 = vrot.lane.b32.xlu0 %v9608, 28
  %v10238 = vpop.permute.xlu0 %10237
  %10239 = vrot.lane.b32.xlu0 %v9616, 28
  %v10240 = vpop.permute.xlu0 %10239
  %10241 = vrot.lane.b32.xlu0 %v9628, 28
  %v10242 = vpop.permute.xlu0 %10241
  %10243 = vrot.lane.b32.xlu0 %v9636, 28
  %v10244 = vpop.permute.xlu0 %10243
  %10245 = vrot.lane.b32.xlu0 %v9648, 28
  %v10246 = vpop.permute.xlu0 %10245
  %10247 = vrot.lane.b32.xlu0 %v9656, 28
  %v10248 = vpop.permute.xlu0 %10247
  %10249 = vrot.lane.b32.xlu0 %v9668, 28
  %v10250 = vpop.permute.xlu0 %10249
  %10251 = vrot.lane.b32.xlu0 %v9676, 28
  %v10252 = vpop.permute.xlu0 %10251
  %10253 = vrot.lane.b32.xlu0 %v9688, 28
  %v10254 = vpop.permute.xlu0 %10253
  %10255 = vrot.lane.b32.xlu0 %v9696, 28
  %v10256 = vpop.permute.xlu0 %10255
  %10257 = vrot.lane.b32.xlu0 %v9708, 28
  %v10258 = vpop.permute.xlu0 %10257
  %10259 = vrot.lane.b32.xlu0 %v9716, 28
  %v10260 = vpop.permute.xlu0 %10259
  %10261 = vrot.lane.b32.xlu0 %v9728, 28
  %v10262 = vpop.permute.xlu0 %10261
  %10263 = vrot.lane.b32.xlu0 %v9736, 28
  %v10264 = vpop.permute.xlu0 %10263
  %10265 = vrot.lane.b32.xlu0 %v9748, 28
  %v10266 = vpop.permute.xlu0 %10265
  %10267 = vrot.lane.b32.xlu0 %v9756, 28
  %v10268 = vpop.permute.xlu0 %10267
  %10269 = vrot.lane.b32.xlu0 %v9768, 28
  %v10270 = vpop.permute.xlu0 %10269
  %10271 = vrot.lane.b32.xlu0 %v9776, 28
  %v10272 = vpop.permute.xlu0 %10271
  %10273 = vrot.lane.b32.xlu0 %v9788, 28
  %v10274 = vpop.permute.xlu0 %10273
  %10275 = vrot.lane.b32.xlu0 %v9796, 28
  %v10276 = vpop.permute.xlu0 %10275
  %10277 = vrot.lane.b32.xlu0 %v9808, 28
  %v10278 = vpop.permute.xlu0 %10277
  %10279 = vrot.lane.b32.xlu0 %v9816, 28
  %v10280 = vpop.permute.xlu0 %10279
  %10281 = vrot.lane.b32.xlu0 %v9828, 28
  %v10282 = vpop.permute.xlu0 %10281
  %10283 = vrot.lane.b32.xlu0 %v9836, 28
  %v10284 = vpop.permute.xlu0 %10283
  %10285 = vrot.lane.b32.xlu0 %v9848, 28
  %v10286 = vpop.permute.xlu0 %10285
  %10287 = vrot.lane.b32.xlu0 %v9856, 28
  %v10288 = vpop.permute.xlu0 %10287
  %10289 = vrot.lane.b32.xlu0 %v9868, 28
  %v10290 = vpop.permute.xlu0 %10289
  %10291 = vrot.lane.b32.xlu0 %v9876, 28
  %v10292 = vpop.permute.xlu0 %10291
  %10293 = vrot.lane.b32.xlu0 %v9888, 28
  %v10294 = vpop.permute.xlu0 %10293
  %10295 = vrot.lane.b32.xlu0 %v9896, 28
  %v10296 = vpop.permute.xlu0 %10295
  %10297 = vrot.lane.b32.xlu0 %v9908, 28
  %v10298 = vpop.permute.xlu0 %10297
  %10299 = vrot.lane.b32.xlu0 %v9916, 28
  %v10300 = vpop.permute.xlu0 %10299
  %10301 = vrot.lane.b32.xlu0 %v9928, 28
  %v10302 = vpop.permute.xlu0 %10301
  %10303 = vrot.lane.b32.xlu0 %v9936, 28
  %v10304 = vpop.permute.xlu0 %10303
  %10305 = vrot.lane.b32.xlu0 %v9948, 28
  %v10306 = vpop.permute.xlu0 %10305
  %10307 = vrot.lane.b32.xlu0 %v9956, 28
  %v10308 = vpop.permute.xlu0 %10307
  %10309 = vrot.lane.b32.xlu0 %v9968, 28
  %v10310 = vpop.permute.xlu0 %10309
  %10311 = vrot.lane.b32.xlu0 %v9976, 28
  %v10312 = vpop.permute.xlu0 %10311
  %10313 = vrot.lane.b32.xlu0 %v9988, 28
  %v10314 = vpop.permute.xlu0 %10313
  %10315 = vrot.lane.b32.xlu0 %v9996, 28
  %v10316 = vpop.permute.xlu0 %10315
  %10317 = vrot.lane.b32.xlu0 %v10008, 28
  %v10318 = vpop.permute.xlu0 %10317
  %10319 = vrot.lane.b32.xlu0 %v10016, 28
  %v10320 = vpop.permute.xlu0 %10319
  %10321 = vrot.lane.b32.xlu0 %v10028, 28
  %v10322 = vpop.permute.xlu0 %10321
  %10323 = vrot.lane.b32.xlu0 %v10036, 28
  %v10324 = vpop.permute.xlu0 %10323
  %10325 = vrot.lane.b32.xlu0 %v10048, 28
  %v10326 = vpop.permute.xlu0 %10325
  %10327 = vrot.lane.b32.xlu0 %v10056, 28
  %v10328 = vpop.permute.xlu0 %10327
  %10329 = vrot.lane.b32.xlu0 %v10068, 28
  %v10330 = vpop.permute.xlu0 %10329
  %10331 = vrot.lane.b32.xlu0 %v10076, 28
  %v10332 = vpop.permute.xlu0 %10331
  %v10397 = vunpack.c.l.b16 %v1115
  %v10398 = vunpack.c.l.b16 %v1116
  %v10399 = vunpack.c.l.b16 %v1117
  %v10400 = vunpack.c.l.b16 %v1118
  %v10401 = vunpack.c.l.b16 %v1119
  %v10402 = vunpack.c.l.b16 %v1120
  %v10403 = vunpack.c.l.b16 %v1121
  %v10404 = vunpack.c.l.b16 %v1122
  %v10405 = vunpack.c.l.b16 %v1123
  %v10406 = vunpack.c.l.b16 %v1124
  %v10407 = vunpack.c.l.b16 %v1125
  %v10408 = vunpack.c.l.b16 %v1126
  %v10409 = vunpack.c.l.b16 %v1127
  %v10410 = vunpack.c.l.b16 %v1128
  %v10411 = vunpack.c.l.b16 %v1129
  %v10412 = vunpack.c.l.b16 %v1130
  %v10413 = vunpack.c.l.b16 %v1131
  %v10414 = vunpack.c.l.b16 %v1132
  %v10415 = vunpack.c.l.b16 %v1133
  %v10416 = vunpack.c.l.b16 %v1134
  %v10417 = vunpack.c.l.b16 %v1135
  %v10418 = vunpack.c.l.b16 %v1136
  %v10419 = vunpack.c.l.b16 %v1137
  %v10420 = vunpack.c.l.b16 %v1138
  %v10421 = vunpack.c.l.b16 %v1139
  %v10422 = vunpack.c.l.b16 %v1140
  %v10423 = vunpack.c.l.b16 %v1141
  %v10424 = vunpack.c.l.b16 %v1142
  %v10425 = vunpack.c.l.b16 %v1143
  %v10426 = vunpack.c.l.b16 %v1144
  %v10427 = vunpack.c.l.b16 %v1145
  %v10428 = vunpack.c.l.b16 %v1146
  %v10429 = vunpack.c.l.b16 %v1147
  %v10430 = vunpack.c.l.b16 %v1148
  %v10431 = vunpack.c.l.b16 %v1149
  %v10432 = vunpack.c.l.b16 %v1150
  %v10433 = vunpack.c.l.b16 %v1151
  %v10434 = vunpack.c.l.b16 %v1152
  %v10435 = vunpack.c.l.b16 %v1153
  %v10436 = vunpack.c.l.b16 %v1154
  %v10437 = vunpack.c.l.b16 %v1155
  %v10438 = vunpack.c.l.b16 %v1156
  %v10439 = vunpack.c.l.b16 %v1157
  %v10440 = vunpack.c.l.b16 %v1158
  %v10441 = vunpack.c.l.b16 %v1159
  %v10442 = vunpack.c.l.b16 %v1160
  %v10443 = vunpack.c.l.b16 %v1161
  %v10444 = vunpack.c.l.b16 %v1162
  %v10445 = vunpack.c.l.b16 %v1163
  %v10446 = vunpack.c.l.b16 %v1164
  %v10447 = vunpack.c.l.b16 %v1165
  %v10448 = vunpack.c.l.b16 %v1166
  %v10449 = vunpack.c.l.b16 %v1167
  %v10450 = vunpack.c.l.b16 %v1168
  %v10451 = vunpack.c.l.b16 %v1169
  %v10452 = vunpack.c.l.b16 %v1170
  %v10453 = vunpack.c.l.b16 %v1171
  %v10454 = vunpack.c.l.b16 %v1172
  %v10455 = vunpack.c.l.b16 %v1173
  %v10456 = vunpack.c.l.b16 %v1174
  %v10457 = vunpack.c.l.b16 %v1175
  %v10458 = vunpack.c.l.b16 %v1176
  %v10459 = vunpack.c.l.b16 %v1177
  %v10460 = vunpack.c.l.b16 %v1178
  %v10461 = vpack.c.b16 %v7966, %v10397
  %v10462 = vpack.c.b16 %v7970, %v10398
  %v10463 = vpack.c.b16 %v7974, %v10399
  %v10464 = vpack.c.b16 %v7978, %v10400
  %v10465 = vpack.c.b16 %v7982, %v10401
  %v10466 = vpack.c.b16 %v7986, %v10402
  %v10467 = vpack.c.b16 %v7990, %v10403
  %v10468 = vpack.c.b16 %v7994, %v10404
  %v10469 = vpack.c.b16 %v7998, %v10405
  %v10470 = vpack.c.b16 %v8002, %v10406
  %v10471 = vpack.c.b16 %v8006, %v10407
  %v10472 = vpack.c.b16 %v8010, %v10408
  %v10473 = vpack.c.b16 %v8014, %v10409
  %v10474 = vpack.c.b16 %v8018, %v10410
  %v10475 = vpack.c.b16 %v8022, %v10411
  %v10476 = vpack.c.b16 %v8026, %v10412
  %v10477 = vpack.c.b16 %v8030, %v10413
  %v10478 = vpack.c.b16 %v8034, %v10414
  %v10479 = vpack.c.b16 %v8038, %v10415
  %v10480 = vpack.c.b16 %v8042, %v10416
  %v10481 = vpack.c.b16 %v8046, %v10417
  %v10482 = vpack.c.b16 %v8050, %v10418
  %v10483 = vpack.c.b16 %v8054, %v10419
  %v10484 = vpack.c.b16 %v8058, %v10420
  %v10485 = vpack.c.b16 %v8062, %v10421
  %v10486 = vpack.c.b16 %v8066, %v10422
  %v10487 = vpack.c.b16 %v8070, %v10423
  %v10488 = vpack.c.b16 %v8074, %v10424
  %v10489 = vpack.c.b16 %v8078, %v10425
  %v10490 = vpack.c.b16 %v8082, %v10426
  %v10491 = vpack.c.b16 %v8086, %v10427
  %v10492 = vpack.c.b16 %v8090, %v10428
  %v10493 = vpack.c.b16 %v8094, %v10429
  %v10494 = vpack.c.b16 %v8098, %v10430
  %v10495 = vpack.c.b16 %v8102, %v10431
  %v10496 = vpack.c.b16 %v8106, %v10432
  %v10497 = vpack.c.b16 %v8110, %v10433
  %v10498 = vpack.c.b16 %v8114, %v10434
  %v10499 = vpack.c.b16 %v8118, %v10435
  %v10500 = vpack.c.b16 %v8122, %v10436
  %v10501 = vpack.c.b16 %v8126, %v10437
  %v10502 = vpack.c.b16 %v8130, %v10438
  %v10503 = vpack.c.b16 %v8134, %v10439
  %v10504 = vpack.c.b16 %v8138, %v10440
  %v10505 = vpack.c.b16 %v8142, %v10441
  %v10506 = vpack.c.b16 %v8146, %v10442
  %v10507 = vpack.c.b16 %v8150, %v10443
  %v10508 = vpack.c.b16 %v8154, %v10444
  %v10509 = vpack.c.b16 %v8158, %v10445
  %v10510 = vpack.c.b16 %v8162, %v10446
  %v10511 = vpack.c.b16 %v8166, %v10447
  %v10512 = vpack.c.b16 %v8170, %v10448
  %v10513 = vpack.c.b16 %v8174, %v10449
  %v10514 = vpack.c.b16 %v8178, %v10450
  %v10515 = vpack.c.b16 %v8182, %v10451
  %v10516 = vpack.c.b16 %v8186, %v10452
  %v10517 = vpack.c.b16 %v8190, %v10453
  %v10518 = vpack.c.b16 %v8194, %v10454
  %v10519 = vpack.c.b16 %v8198, %v10455
  %v10520 = vpack.c.b16 %v8202, %v10456
  %v10521 = vpack.c.b16 %v8206, %v10457
  %v10522 = vpack.c.b16 %v8210, %v10458
  %v10523 = vpack.c.b16 %v8214, %v10459
  %v10524 = vpack.c.b16 %v8218, %v10460
  %v10525 = vrot.slane %v10461, 1
  %v10526 = vrot.slane %v8222, 1
  %v10527 = vsel %vm3740, %v10525, %v10526
  %v10528 = vrot.slane %v8733, 1
  %v10529 = vsel %vm3740, %v10526, %v10528
  %v10530 = vrot.slane %v10462, 1
  %v10531 = vrot.slane %v8224, 1
  %v10532 = vsel %vm3740, %v10530, %v10531
  %v10533 = vrot.slane %v8734, 1
  %v10534 = vsel %vm3740, %v10531, %v10533
  %v10535 = vrot.slane %v10463, 1
  %v10536 = vrot.slane %v8226, 1
  %v10537 = vsel %vm3740, %v10535, %v10536
  %v10538 = vrot.slane %v8735, 1
  %v10539 = vsel %vm3740, %v10536, %v10538
  %v10540 = vrot.slane %v10464, 1
  %v10541 = vrot.slane %v8228, 1
  %v10542 = vsel %vm3740, %v10540, %v10541
  %v10543 = vrot.slane %v8736, 1
  %v10544 = vsel %vm3740, %v10541, %v10543
  %v10545 = vrot.slane %v10465, 1
  %v10546 = vrot.slane %v8230, 1
  %v10547 = vsel %vm3740, %v10545, %v10546
  %v10548 = vrot.slane %v8737, 1
  %v10549 = vsel %vm3740, %v10546, %v10548
  %v10550 = vrot.slane %v10466, 1
  %v10551 = vrot.slane %v8232, 1
  %v10552 = vsel %vm3740, %v10550, %v10551
  %v10553 = vrot.slane %v8738, 1
  %v10554 = vsel %vm3740, %v10551, %v10553
  %v10555 = vrot.slane %v10467, 1
  %v10556 = vrot.slane %v8234, 1
  %v10557 = vsel %vm3740, %v10555, %v10556
  %v10558 = vrot.slane %v8739, 1
  %v10559 = vsel %vm3740, %v10556, %v10558
  %v10560 = vrot.slane %v10468, 1
  %v10561 = vrot.slane %v8236, 1
  %v10562 = vsel %vm3740, %v10560, %v10561
  %v10563 = vrot.slane %v8740, 1
  %v10564 = vsel %vm3740, %v10561, %v10563
  %v10565 = vrot.slane %v10469, 1
  %v10566 = vrot.slane %v8238, 1
  %v10567 = vsel %vm3740, %v10565, %v10566
  %v10568 = vrot.slane %v8741, 1
  %v10569 = vsel %vm3740, %v10566, %v10568
  %v10570 = vrot.slane %v10470, 1
  %v10571 = vrot.slane %v8240, 1
  %v10572 = vsel %vm3740, %v10570, %v10571
  %v10573 = vrot.slane %v8742, 1
  %v10574 = vsel %vm3740, %v10571, %v10573
  %v10575 = vrot.slane %v10471, 1
  %v10576 = vrot.slane %v8242, 1
  %v10577 = vsel %vm3740, %v10575, %v10576
  %v10578 = vrot.slane %v8743, 1
  %v10579 = vsel %vm3740, %v10576, %v10578
  %v10580 = vrot.slane %v10472, 1
  %v10581 = vrot.slane %v8244, 1
  %v10582 = vsel %vm3740, %v10580, %v10581
  %v10583 = vrot.slane %v8744, 1
  %v10584 = vsel %vm3740, %v10581, %v10583
  %v10585 = vrot.slane %v10473, 1
  %v10586 = vrot.slane %v8246, 1
  %v10587 = vsel %vm3740, %v10585, %v10586
  %v10588 = vrot.slane %v8745, 1
  %v10589 = vsel %vm3740, %v10586, %v10588
  %v10590 = vrot.slane %v10474, 1
  %v10591 = vrot.slane %v8248, 1
  %v10592 = vsel %vm3740, %v10590, %v10591
  %v10593 = vrot.slane %v8746, 1
  %v10594 = vsel %vm3740, %v10591, %v10593
  %v10595 = vrot.slane %v10475, 1
  %v10596 = vrot.slane %v8250, 1
  %v10597 = vsel %vm3740, %v10595, %v10596
  %v10598 = vrot.slane %v8747, 1
  %v10599 = vsel %vm3740, %v10596, %v10598
  %v10600 = vrot.slane %v10476, 1
  %v10601 = vrot.slane %v8252, 1
  %v10602 = vsel %vm3740, %v10600, %v10601
  %v10603 = vrot.slane %v8748, 1
  %v10604 = vsel %vm3740, %v10601, %v10603
  %v10605 = vrot.slane %v10477, 1
  %v10606 = vrot.slane %v8254, 1
  %v10607 = vsel %vm3740, %v10605, %v10606
  %v10608 = vrot.slane %v8749, 1
  %v10609 = vsel %vm3740, %v10606, %v10608
  %v10610 = vrot.slane %v10478, 1
  %v10611 = vrot.slane %v8256, 1
  %v10612 = vsel %vm3740, %v10610, %v10611
  %v10613 = vrot.slane %v8750, 1
  %v10614 = vsel %vm3740, %v10611, %v10613
  %v10615 = vrot.slane %v10479, 1
  %v10616 = vrot.slane %v8258, 1
  %v10617 = vsel %vm3740, %v10615, %v10616
  %v10618 = vrot.slane %v8751, 1
  %v10619 = vsel %vm3740, %v10616, %v10618
  %v10620 = vrot.slane %v10480, 1
  %v10621 = vrot.slane %v8260, 1
  %v10622 = vsel %vm3740, %v10620, %v10621
  %v10623 = vrot.slane %v8752, 1
  %v10624 = vsel %vm3740, %v10621, %v10623
  %v10625 = vrot.slane %v10481, 1
  %v10626 = vrot.slane %v8262, 1
  %v10627 = vsel %vm3740, %v10625, %v10626
  %v10628 = vrot.slane %v8753, 1
  %v10629 = vsel %vm3740, %v10626, %v10628
  %v10630 = vrot.slane %v10482, 1
  %v10631 = vrot.slane %v8264, 1
  %v10632 = vsel %vm3740, %v10630, %v10631
  %v10633 = vrot.slane %v8754, 1
  %v10634 = vsel %vm3740, %v10631, %v10633
  %v10635 = vrot.slane %v10483, 1
  %v10636 = vrot.slane %v8266, 1
  %v10637 = vsel %vm3740, %v10635, %v10636
  %v10638 = vrot.slane %v8755, 1
  %v10639 = vsel %vm3740, %v10636, %v10638
  %v10640 = vrot.slane %v10484, 1
  %v10641 = vrot.slane %v8268, 1
  %v10642 = vsel %vm3740, %v10640, %v10641
  %v10643 = vrot.slane %v8756, 1
  %v10644 = vsel %vm3740, %v10641, %v10643
  %v10645 = vrot.slane %v10485, 1
  %v10646 = vrot.slane %v8270, 1
  %v10647 = vsel %vm3740, %v10645, %v10646
  %v10648 = vrot.slane %v8757, 1
  %v10649 = vsel %vm3740, %v10646, %v10648
  %v10650 = vrot.slane %v10486, 1
  %v10651 = vrot.slane %v8272, 1
  %v10652 = vsel %vm3740, %v10650, %v10651
  %v10653 = vrot.slane %v8758, 1
  %v10654 = vsel %vm3740, %v10651, %v10653
  %v10655 = vrot.slane %v10487, 1
  %v10656 = vrot.slane %v8274, 1
  %v10657 = vsel %vm3740, %v10655, %v10656
  %v10658 = vrot.slane %v8759, 1
  %v10659 = vsel %vm3740, %v10656, %v10658
  %v10660 = vrot.slane %v10488, 1
  %v10661 = vrot.slane %v8276, 1
  %v10662 = vsel %vm3740, %v10660, %v10661
  %v10663 = vrot.slane %v8760, 1
  %v10664 = vsel %vm3740, %v10661, %v10663
  %v10665 = vrot.slane %v10489, 1
  %v10666 = vrot.slane %v8278, 1
  %v10667 = vsel %vm3740, %v10665, %v10666
  %v10668 = vrot.slane %v8761, 1
  %v10669 = vsel %vm3740, %v10666, %v10668
  %v10670 = vrot.slane %v10490, 1
  %v10671 = vrot.slane %v8280, 1
  %v10672 = vsel %vm3740, %v10670, %v10671
  %v10673 = vrot.slane %v8762, 1
  %v10674 = vsel %vm3740, %v10671, %v10673
  %v10675 = vrot.slane %v10491, 1
  %v10676 = vrot.slane %v8282, 1
  %v10677 = vsel %vm3740, %v10675, %v10676
  %v10678 = vrot.slane %v8763, 1
  %v10679 = vsel %vm3740, %v10676, %v10678
  %v10680 = vrot.slane %v10492, 1
  %v10681 = vrot.slane %v8284, 1
  %v10682 = vsel %vm3740, %v10680, %v10681
  %v10683 = vrot.slane %v8764, 1
  %v10684 = vsel %vm3740, %v10681, %v10683
  %v10685 = vrot.slane %v10493, 1
  %v10686 = vrot.slane %v8286, 1
  %v10687 = vsel %vm3740, %v10685, %v10686
  %v10688 = vrot.slane %v8765, 1
  %v10689 = vsel %vm3740, %v10686, %v10688
  %v10690 = vrot.slane %v10494, 1
  %v10691 = vrot.slane %v8288, 1
  %v10692 = vsel %vm3740, %v10690, %v10691
  %v10693 = vrot.slane %v8766, 1
  %v10694 = vsel %vm3740, %v10691, %v10693
  %v10695 = vrot.slane %v10495, 1
  %v10696 = vrot.slane %v8290, 1
  %v10697 = vsel %vm3740, %v10695, %v10696
  %v10698 = vrot.slane %v8767, 1
  %v10699 = vsel %vm3740, %v10696, %v10698
  %v10700 = vrot.slane %v10496, 1
  %v10701 = vrot.slane %v8292, 1
  %v10702 = vsel %vm3740, %v10700, %v10701
  %v10703 = vrot.slane %v8768, 1
  %v10704 = vsel %vm3740, %v10701, %v10703
  %v10705 = vrot.slane %v10497, 1
  %v10706 = vrot.slane %v8294, 1
  %v10707 = vsel %vm3740, %v10705, %v10706
  %v10708 = vrot.slane %v8769, 1
  %v10709 = vsel %vm3740, %v10706, %v10708
  %v10710 = vrot.slane %v10498, 1
  %v10711 = vrot.slane %v8296, 1
  %v10712 = vsel %vm3740, %v10710, %v10711
  %v10713 = vrot.slane %v8770, 1
  %v10714 = vsel %vm3740, %v10711, %v10713
  %v10715 = vrot.slane %v10499, 1
  %v10716 = vrot.slane %v8298, 1
  %v10717 = vsel %vm3740, %v10715, %v10716
  %v10718 = vrot.slane %v8771, 1
  %v10719 = vsel %vm3740, %v10716, %v10718
  %v10720 = vrot.slane %v10500, 1
  %v10721 = vrot.slane %v8300, 1
  %v10722 = vsel %vm3740, %v10720, %v10721
  %v10723 = vrot.slane %v8772, 1
  %v10724 = vsel %vm3740, %v10721, %v10723
  %v10725 = vrot.slane %v10501, 1
  %v10726 = vrot.slane %v8302, 1
  %v10727 = vsel %vm3740, %v10725, %v10726
  %v10728 = vrot.slane %v8773, 1
  %v10729 = vsel %vm3740, %v10726, %v10728
  %v10730 = vrot.slane %v10502, 1
  %v10731 = vrot.slane %v8304, 1
  %v10732 = vsel %vm3740, %v10730, %v10731
  %v10733 = vrot.slane %v8774, 1
  %v10734 = vsel %vm3740, %v10731, %v10733
  %v10735 = vrot.slane %v10503, 1
  %v10736 = vrot.slane %v8306, 1
  %v10737 = vsel %vm3740, %v10735, %v10736
  %v10738 = vrot.slane %v8775, 1
  %v10739 = vsel %vm3740, %v10736, %v10738
  %v10740 = vrot.slane %v10504, 1
  %v10741 = vrot.slane %v8308, 1
  %v10742 = vsel %vm3740, %v10740, %v10741
  %v10743 = vrot.slane %v8776, 1
  %v10744 = vsel %vm3740, %v10741, %v10743
  %v10745 = vrot.slane %v10505, 1
  %v10746 = vrot.slane %v8310, 1
  %v10747 = vsel %vm3740, %v10745, %v10746
  %v10748 = vrot.slane %v8777, 1
  %v10749 = vsel %vm3740, %v10746, %v10748
  %v10750 = vrot.slane %v10506, 1
  %v10751 = vrot.slane %v8312, 1
  %v10752 = vsel %vm3740, %v10750, %v10751
  %v10753 = vrot.slane %v8778, 1
  %v10754 = vsel %vm3740, %v10751, %v10753
  %v10755 = vrot.slane %v10507, 1
  %v10756 = vrot.slane %v8314, 1
  %v10757 = vsel %vm3740, %v10755, %v10756
  %v10758 = vrot.slane %v8779, 1
  %v10759 = vsel %vm3740, %v10756, %v10758
  %v10760 = vrot.slane %v10508, 1
  %v10761 = vrot.slane %v8316, 1
  %v10762 = vsel %vm3740, %v10760, %v10761
  %v10763 = vrot.slane %v8780, 1
  %v10764 = vsel %vm3740, %v10761, %v10763
  %v10765 = vrot.slane %v10509, 1
  %v10766 = vrot.slane %v8318, 1
  %v10767 = vsel %vm3740, %v10765, %v10766
  %v10768 = vrot.slane %v8781, 1
  %v10769 = vsel %vm3740, %v10766, %v10768
  %v10770 = vrot.slane %v10510, 1
  %v10771 = vrot.slane %v8320, 1
  %v10772 = vsel %vm3740, %v10770, %v10771
  %v10773 = vrot.slane %v8782, 1
  %v10774 = vsel %vm3740, %v10771, %v10773
  %v10775 = vrot.slane %v10511, 1
  %v10776 = vrot.slane %v8322, 1
  %v10777 = vsel %vm3740, %v10775, %v10776
  %v10778 = vrot.slane %v8783, 1
  %v10779 = vsel %vm3740, %v10776, %v10778
  %v10780 = vrot.slane %v10512, 1
  %v10781 = vrot.slane %v8324, 1
  %v10782 = vsel %vm3740, %v10780, %v10781
  %v10783 = vrot.slane %v8784, 1
  %v10784 = vsel %vm3740, %v10781, %v10783
  %v10785 = vrot.slane %v10513, 1
  %v10786 = vrot.slane %v8326, 1
  %v10787 = vsel %vm3740, %v10785, %v10786
  %v10788 = vrot.slane %v8785, 1
  %v10789 = vsel %vm3740, %v10786, %v10788
  %v10790 = vrot.slane %v10514, 1
  %v10791 = vrot.slane %v8328, 1
  %v10792 = vsel %vm3740, %v10790, %v10791
  %v10793 = vrot.slane %v8786, 1
  %v10794 = vsel %vm3740, %v10791, %v10793
  %v10795 = vrot.slane %v10515, 1
  %v10796 = vrot.slane %v8330, 1
  %v10797 = vsel %vm3740, %v10795, %v10796
  %v10798 = vrot.slane %v8787, 1
  %v10799 = vsel %vm3740, %v10796, %v10798
  %v10800 = vrot.slane %v10516, 1
  %v10801 = vrot.slane %v8332, 1
  %v10802 = vsel %vm3740, %v10800, %v10801
  %v10803 = vrot.slane %v8788, 1
  %v10804 = vsel %vm3740, %v10801, %v10803
  %v10805 = vrot.slane %v10517, 1
  %v10806 = vrot.slane %v8334, 1
  %v10807 = vsel %vm3740, %v10805, %v10806
  %v10808 = vrot.slane %v8789, 1
  %v10809 = vsel %vm3740, %v10806, %v10808
  %v10810 = vrot.slane %v10518, 1
  %v10811 = vrot.slane %v8336, 1
  %v10812 = vsel %vm3740, %v10810, %v10811
  %v10813 = vrot.slane %v8790, 1
  %v10814 = vsel %vm3740, %v10811, %v10813
  %v10815 = vrot.slane %v10519, 1
  %v10816 = vrot.slane %v8338, 1
  %v10817 = vsel %vm3740, %v10815, %v10816
  %v10818 = vrot.slane %v8791, 1
  %v10819 = vsel %vm3740, %v10816, %v10818
  %v10820 = vrot.slane %v10520, 1
  %v10821 = vrot.slane %v8340, 1
  %v10822 = vsel %vm3740, %v10820, %v10821
  %v10823 = vrot.slane %v8792, 1
  %v10824 = vsel %vm3740, %v10821, %v10823
  %v10825 = vrot.slane %v10521, 1
  %v10826 = vrot.slane %v8342, 1
  %v10827 = vsel %vm3740, %v10825, %v10826
  %v10828 = vrot.slane %v8793, 1
  %v10829 = vsel %vm3740, %v10826, %v10828
  %v10830 = vrot.slane %v10522, 1
  %v10831 = vrot.slane %v8344, 1
  %v10832 = vsel %vm3740, %v10830, %v10831
  %v10833 = vrot.slane %v8794, 1
  %v10834 = vsel %vm3740, %v10831, %v10833
  %v10835 = vrot.slane %v10523, 1
  %v10836 = vrot.slane %v8346, 1
  %v10837 = vsel %vm3740, %v10835, %v10836
  %v10838 = vrot.slane %v8795, 1
  %v10839 = vsel %vm3740, %v10836, %v10838
  %v10840 = vrot.slane %v10524, 1
  %v10841 = vrot.slane %v8348, 1
  %v10842 = vsel %vm3740, %v10840, %v10841
  %v10843 = vrot.slane %v8796, 1
  %v10844 = vsel %vm3740, %v10841, %v10843
  %10845 = vrot.lane.b32.xlu0 %v10527, 32
  %v10846 = vpop.permute.xlu0 %10845
  %10847 = vrot.lane.b32.xlu0 %v10529, 32
  %v10848 = vpop.permute.xlu0 %10847
  %10849 = vrot.lane.b32.xlu0 %v10532, 32
  %v10850 = vpop.permute.xlu0 %10849
  %10851 = vrot.lane.b32.xlu0 %v10534, 32
  %v10852 = vpop.permute.xlu0 %10851
  %10853 = vrot.lane.b32.xlu0 %v10537, 32
  %v10854 = vpop.permute.xlu0 %10853
  %10855 = vrot.lane.b32.xlu0 %v10539, 32
  %v10856 = vpop.permute.xlu0 %10855
  %10857 = vrot.lane.b32.xlu0 %v10542, 32
  %v10858 = vpop.permute.xlu0 %10857
  %10859 = vrot.lane.b32.xlu0 %v10544, 32
  %v10860 = vpop.permute.xlu0 %10859
  %10861 = vrot.lane.b32.xlu0 %v10547, 32
  %v10862 = vpop.permute.xlu0 %10861
  %10863 = vrot.lane.b32.xlu0 %v10549, 32
  %v10864 = vpop.permute.xlu0 %10863
  %10865 = vrot.lane.b32.xlu0 %v10552, 32
  %v10866 = vpop.permute.xlu0 %10865
  %10867 = vrot.lane.b32.xlu0 %v10554, 32
  %v10868 = vpop.permute.xlu0 %10867
  %10869 = vrot.lane.b32.xlu0 %v10557, 32
  %v10870 = vpop.permute.xlu0 %10869
  %10871 = vrot.lane.b32.xlu0 %v10559, 32
  %v10872 = vpop.permute.xlu0 %10871
  %10873 = vrot.lane.b32.xlu0 %v10562, 32
  %v10874 = vpop.permute.xlu0 %10873
  %10875 = vrot.lane.b32.xlu0 %v10564, 32
  %v10876 = vpop.permute.xlu0 %10875
  %10877 = vrot.lane.b32.xlu0 %v10567, 32
  %v10878 = vpop.permute.xlu0 %10877
  %10879 = vrot.lane.b32.xlu0 %v10569, 32
  %v10880 = vpop.permute.xlu0 %10879
  %10881 = vrot.lane.b32.xlu0 %v10572, 32
  %v10882 = vpop.permute.xlu0 %10881
  %10883 = vrot.lane.b32.xlu0 %v10574, 32
  %v10884 = vpop.permute.xlu0 %10883
  %10885 = vrot.lane.b32.xlu0 %v10577, 32
  %v10886 = vpop.permute.xlu0 %10885
  %10887 = vrot.lane.b32.xlu0 %v10579, 32
  %v10888 = vpop.permute.xlu0 %10887
  %10889 = vrot.lane.b32.xlu0 %v10582, 32
  %v10890 = vpop.permute.xlu0 %10889
  %10891 = vrot.lane.b32.xlu0 %v10584, 32
  %v10892 = vpop.permute.xlu0 %10891
  %10893 = vrot.lane.b32.xlu0 %v10587, 32
  %v10894 = vpop.permute.xlu0 %10893
  %10895 = vrot.lane.b32.xlu0 %v10589, 32
  %v10896 = vpop.permute.xlu0 %10895
  %10897 = vrot.lane.b32.xlu0 %v10592, 32
  %v10898 = vpop.permute.xlu0 %10897
  %10899 = vrot.lane.b32.xlu0 %v10594, 32
  %v10900 = vpop.permute.xlu0 %10899
  %10901 = vrot.lane.b32.xlu0 %v10597, 32
  %v10902 = vpop.permute.xlu0 %10901
  %10903 = vrot.lane.b32.xlu0 %v10599, 32
  %v10904 = vpop.permute.xlu0 %10903
  %10905 = vrot.lane.b32.xlu0 %v10602, 32
  %v10906 = vpop.permute.xlu0 %10905
  %10907 = vrot.lane.b32.xlu0 %v10604, 32
  %v10908 = vpop.permute.xlu0 %10907
  %10909 = vrot.lane.b32.xlu0 %v10607, 32
  %v10910 = vpop.permute.xlu0 %10909
  %10911 = vrot.lane.b32.xlu0 %v10609, 32
  %v10912 = vpop.permute.xlu0 %10911
  %10913 = vrot.lane.b32.xlu0 %v10612, 32
  %v10914 = vpop.permute.xlu0 %10913
  %10915 = vrot.lane.b32.xlu0 %v10614, 32
  %v10916 = vpop.permute.xlu0 %10915
  %10917 = vrot.lane.b32.xlu0 %v10617, 32
  %v10918 = vpop.permute.xlu0 %10917
  %10919 = vrot.lane.b32.xlu0 %v10619, 32
  %v10920 = vpop.permute.xlu0 %10919
  %10921 = vrot.lane.b32.xlu0 %v10622, 32
  %v10922 = vpop.permute.xlu0 %10921
  %10923 = vrot.lane.b32.xlu0 %v10624, 32
  %v10924 = vpop.permute.xlu0 %10923
  %10925 = vrot.lane.b32.xlu0 %v10627, 32
  %v10926 = vpop.permute.xlu0 %10925
  %10927 = vrot.lane.b32.xlu0 %v10629, 32
  %v10928 = vpop.permute.xlu0 %10927
  %10929 = vrot.lane.b32.xlu0 %v10632, 32
  %v10930 = vpop.permute.xlu0 %10929
  %10931 = vrot.lane.b32.xlu0 %v10634, 32
  %v10932 = vpop.permute.xlu0 %10931
  %10933 = vrot.lane.b32.xlu0 %v10637, 32
  %v10934 = vpop.permute.xlu0 %10933
  %10935 = vrot.lane.b32.xlu0 %v10639, 32
  %v10936 = vpop.permute.xlu0 %10935
  %10937 = vrot.lane.b32.xlu0 %v10642, 32
  %v10938 = vpop.permute.xlu0 %10937
  %10939 = vrot.lane.b32.xlu0 %v10644, 32
  %v10940 = vpop.permute.xlu0 %10939
  %10941 = vrot.lane.b32.xlu0 %v10647, 32
  %v10942 = vpop.permute.xlu0 %10941
  %10943 = vrot.lane.b32.xlu0 %v10649, 32
  %v10944 = vpop.permute.xlu0 %10943
  %10945 = vrot.lane.b32.xlu0 %v10652, 32
  %v10946 = vpop.permute.xlu0 %10945
  %10947 = vrot.lane.b32.xlu0 %v10654, 32
  %v10948 = vpop.permute.xlu0 %10947
  %10949 = vrot.lane.b32.xlu0 %v10657, 32
  %v10950 = vpop.permute.xlu0 %10949
  %10951 = vrot.lane.b32.xlu0 %v10659, 32
  %v10952 = vpop.permute.xlu0 %10951
  %10953 = vrot.lane.b32.xlu0 %v10662, 32
  %v10954 = vpop.permute.xlu0 %10953
  %10955 = vrot.lane.b32.xlu0 %v10664, 32
  %v10956 = vpop.permute.xlu0 %10955
  %10957 = vrot.lane.b32.xlu0 %v10667, 32
  %v10958 = vpop.permute.xlu0 %10957
  %10959 = vrot.lane.b32.xlu0 %v10669, 32
  %v10960 = vpop.permute.xlu0 %10959
  %10961 = vrot.lane.b32.xlu0 %v10672, 32
  %v10962 = vpop.permute.xlu0 %10961
  %10963 = vrot.lane.b32.xlu0 %v10674, 32
  %v10964 = vpop.permute.xlu0 %10963
  %10965 = vrot.lane.b32.xlu0 %v10677, 32
  %v10966 = vpop.permute.xlu0 %10965
  %10967 = vrot.lane.b32.xlu0 %v10679, 32
  %v10968 = vpop.permute.xlu0 %10967
  %10969 = vrot.lane.b32.xlu0 %v10682, 32
  %v10970 = vpop.permute.xlu0 %10969
  %10971 = vrot.lane.b32.xlu0 %v10684, 32
  %v10972 = vpop.permute.xlu0 %10971
  %10973 = vrot.lane.b32.xlu0 %v10687, 32
  %v10974 = vpop.permute.xlu0 %10973
  %10975 = vrot.lane.b32.xlu0 %v10689, 32
  %v10976 = vpop.permute.xlu0 %10975
  %10977 = vrot.lane.b32.xlu0 %v10692, 32
  %v10978 = vpop.permute.xlu0 %10977
  %10979 = vrot.lane.b32.xlu0 %v10694, 32
  %v10980 = vpop.permute.xlu0 %10979
  %10981 = vrot.lane.b32.xlu0 %v10697, 32
  %v10982 = vpop.permute.xlu0 %10981
  %10983 = vrot.lane.b32.xlu0 %v10699, 32
  %v10984 = vpop.permute.xlu0 %10983
  %10985 = vrot.lane.b32.xlu0 %v10702, 32
  %v10986 = vpop.permute.xlu0 %10985
  %10987 = vrot.lane.b32.xlu0 %v10704, 32
  %v10988 = vpop.permute.xlu0 %10987
  %10989 = vrot.lane.b32.xlu0 %v10707, 32
  %v10990 = vpop.permute.xlu0 %10989
  %10991 = vrot.lane.b32.xlu0 %v10709, 32
  %v10992 = vpop.permute.xlu0 %10991
  %10993 = vrot.lane.b32.xlu0 %v10712, 32
  %v10994 = vpop.permute.xlu0 %10993
  %10995 = vrot.lane.b32.xlu0 %v10714, 32
  %v10996 = vpop.permute.xlu0 %10995
  %10997 = vrot.lane.b32.xlu0 %v10717, 32
  %v10998 = vpop.permute.xlu0 %10997
  %10999 = vrot.lane.b32.xlu0 %v10719, 32
  %v11000 = vpop.permute.xlu0 %10999
  %11001 = vrot.lane.b32.xlu0 %v10722, 32
  %v11002 = vpop.permute.xlu0 %11001
  %11003 = vrot.lane.b32.xlu0 %v10724, 32
  %v11004 = vpop.permute.xlu0 %11003
  %11005 = vrot.lane.b32.xlu0 %v10727, 32
  %v11006 = vpop.permute.xlu0 %11005
  %11007 = vrot.lane.b32.xlu0 %v10729, 32
  %v11008 = vpop.permute.xlu0 %11007
  %11009 = vrot.lane.b32.xlu0 %v10732, 32
  %v11010 = vpop.permute.xlu0 %11009
  %11011 = vrot.lane.b32.xlu0 %v10734, 32
  %v11012 = vpop.permute.xlu0 %11011
  %11013 = vrot.lane.b32.xlu0 %v10737, 32
  %v11014 = vpop.permute.xlu0 %11013
  %11015 = vrot.lane.b32.xlu0 %v10739, 32
  %v11016 = vpop.permute.xlu0 %11015
  %11017 = vrot.lane.b32.xlu0 %v10742, 32
  %v11018 = vpop.permute.xlu0 %11017
  %11019 = vrot.lane.b32.xlu0 %v10744, 32
  %v11020 = vpop.permute.xlu0 %11019
  %11021 = vrot.lane.b32.xlu0 %v10747, 32
  %v11022 = vpop.permute.xlu0 %11021
  %11023 = vrot.lane.b32.xlu0 %v10749, 32
  %v11024 = vpop.permute.xlu0 %11023
  %11025 = vrot.lane.b32.xlu0 %v10752, 32
  %v11026 = vpop.permute.xlu0 %11025
  %11027 = vrot.lane.b32.xlu0 %v10754, 32
  %v11028 = vpop.permute.xlu0 %11027
  %11029 = vrot.lane.b32.xlu0 %v10757, 32
  %v11030 = vpop.permute.xlu0 %11029
  %11031 = vrot.lane.b32.xlu0 %v10759, 32
  %v11032 = vpop.permute.xlu0 %11031
  %11033 = vrot.lane.b32.xlu0 %v10762, 32
  %v11034 = vpop.permute.xlu0 %11033
  %11035 = vrot.lane.b32.xlu0 %v10764, 32
  %v11036 = vpop.permute.xlu0 %11035
  %11037 = vrot.lane.b32.xlu0 %v10767, 32
  %v11038 = vpop.permute.xlu0 %11037
  %11039 = vrot.lane.b32.xlu0 %v10769, 32
  %v11040 = vpop.permute.xlu0 %11039
  %11041 = vrot.lane.b32.xlu0 %v10772, 32
  %v11042 = vpop.permute.xlu0 %11041
  %11043 = vrot.lane.b32.xlu0 %v10774, 32
  %v11044 = vpop.permute.xlu0 %11043
  %11045 = vrot.lane.b32.xlu0 %v10777, 32
  %v11046 = vpop.permute.xlu0 %11045
  %11047 = vrot.lane.b32.xlu0 %v10779, 32
  %v11048 = vpop.permute.xlu0 %11047
  %11049 = vrot.lane.b32.xlu0 %v10782, 32
  %v11050 = vpop.permute.xlu0 %11049
  %11051 = vrot.lane.b32.xlu0 %v10784, 32
  %v11052 = vpop.permute.xlu0 %11051
  %11053 = vrot.lane.b32.xlu0 %v10787, 32
  %v11054 = vpop.permute.xlu0 %11053
  %11055 = vrot.lane.b32.xlu0 %v10789, 32
  %v11056 = vpop.permute.xlu0 %11055
  %11057 = vrot.lane.b32.xlu0 %v10792, 32
  %v11058 = vpop.permute.xlu0 %11057
  %11059 = vrot.lane.b32.xlu0 %v10794, 32
  %v11060 = vpop.permute.xlu0 %11059
  %11061 = vrot.lane.b32.xlu0 %v10797, 32
  %v11062 = vpop.permute.xlu0 %11061
  %11063 = vrot.lane.b32.xlu0 %v10799, 32
  %v11064 = vpop.permute.xlu0 %11063
  %11065 = vrot.lane.b32.xlu0 %v10802, 32
  %v11066 = vpop.permute.xlu0 %11065
  %11067 = vrot.lane.b32.xlu0 %v10804, 32
  %v11068 = vpop.permute.xlu0 %11067
  %11069 = vrot.lane.b32.xlu0 %v10807, 32
  %v11070 = vpop.permute.xlu0 %11069
  %11071 = vrot.lane.b32.xlu0 %v10809, 32
  %v11072 = vpop.permute.xlu0 %11071
  %11073 = vrot.lane.b32.xlu0 %v10812, 32
  %v11074 = vpop.permute.xlu0 %11073
  %11075 = vrot.lane.b32.xlu0 %v10814, 32
  %v11076 = vpop.permute.xlu0 %11075
  %11077 = vrot.lane.b32.xlu0 %v10817, 32
  %v11078 = vpop.permute.xlu0 %11077
  %11079 = vrot.lane.b32.xlu0 %v10819, 32
  %v11080 = vpop.permute.xlu0 %11079
  %11081 = vrot.lane.b32.xlu0 %v10822, 32
  %v11082 = vpop.permute.xlu0 %11081
  %11083 = vrot.lane.b32.xlu0 %v10824, 32
  %v11084 = vpop.permute.xlu0 %11083
  %11085 = vrot.lane.b32.xlu0 %v10827, 32
  %v11086 = vpop.permute.xlu0 %11085
  %11087 = vrot.lane.b32.xlu0 %v10829, 32
  %v11088 = vpop.permute.xlu0 %11087
  %11089 = vrot.lane.b32.xlu0 %v10832, 32
  %v11090 = vpop.permute.xlu0 %11089
  %11091 = vrot.lane.b32.xlu0 %v10834, 32
  %v11092 = vpop.permute.xlu0 %11091
  %11093 = vrot.lane.b32.xlu0 %v10837, 32
  %v11094 = vpop.permute.xlu0 %11093
  %11095 = vrot.lane.b32.xlu0 %v10839, 32
  %v11096 = vpop.permute.xlu0 %11095
  %11097 = vrot.lane.b32.xlu0 %v10842, 32
  %v11098 = vpop.permute.xlu0 %11097
  %11099 = vrot.lane.b32.xlu0 %v10844, 32
  %v11100 = vpop.permute.xlu0 %11099
  %vm11101 = vcmask 31744
  %v11103 = vsel %vm11101, %v1691, %v3293
  %v11105 = vsel %vm11101, %v1692, %v3295
  %v11107 = vsel %vm11101, %v1693, %v3297
  %v11109 = vsel %vm11101, %v1694, %v3299
  %v11111 = vsel %vm11101, %v1695, %v3301
  %v11113 = vsel %vm11101, %v1696, %v3303
  %v11115 = vsel %vm11101, %v1697, %v3305
  %v11117 = vsel %vm11101, %v1698, %v3307
  %v11119 = vsel %vm11101, %v1699, %v3309
  %v11121 = vsel %vm11101, %v1700, %v3311
  %v11123 = vsel %vm11101, %v1701, %v3313
  %v11125 = vsel %vm11101, %v1702, %v3315
  %v11127 = vsel %vm11101, %v1703, %v3317
  %v11129 = vsel %vm11101, %v1704, %v3319
  %v11131 = vsel %vm11101, %v1705, %v3321
  %v11133 = vsel %vm11101, %v1706, %v3323
  %v11135 = vsel %vm11101, %v1707, %v3325
  %v11137 = vsel %vm11101, %v1708, %v3327
  %v11139 = vsel %vm11101, %v1709, %v3329
  %v11141 = vsel %vm11101, %v1710, %v3331
  %v11143 = vsel %vm11101, %v1711, %v3333
  %v11145 = vsel %vm11101, %v1712, %v3335
  %v11147 = vsel %vm11101, %v1713, %v3337
  %v11149 = vsel %vm11101, %v1714, %v3339
  %v11151 = vsel %vm11101, %v1715, %v3341
  %v11153 = vsel %vm11101, %v1716, %v3343
  %v11155 = vsel %vm11101, %v1717, %v3345
  %v11157 = vsel %vm11101, %v1718, %v3347
  %v11159 = vsel %vm11101, %v1719, %v3349
  %v11161 = vsel %vm11101, %v1720, %v3351
  %v11163 = vsel %vm11101, %v1721, %v3353
  %v11165 = vsel %vm11101, %v1722, %v3355
  %v11167 = vsel %vm11101, %v1723, %v3357
  %v11169 = vsel %vm11101, %v1724, %v3359
  %v11171 = vsel %vm11101, %v1725, %v3361
  %v11173 = vsel %vm11101, %v1726, %v3363
  %v11175 = vsel %vm11101, %v1727, %v3365
  %v11177 = vsel %vm11101, %v1728, %v3367
  %v11179 = vsel %vm11101, %v1729, %v3369
  %v11181 = vsel %vm11101, %v1730, %v3371
  %v11183 = vsel %vm11101, %v1731, %v3373
  %v11185 = vsel %vm11101, %v1732, %v3375
  %v11187 = vsel %vm11101, %v1733, %v3377
  %v11189 = vsel %vm11101, %v1734, %v3379
  %v11191 = vsel %vm11101, %v1735, %v3381
  %v11193 = vsel %vm11101, %v1736, %v3383
  %v11195 = vsel %vm11101, %v1737, %v3385
  %v11197 = vsel %vm11101, %v1738, %v3387
  %v11199 = vsel %vm11101, %v1739, %v3389
  %v11201 = vsel %vm11101, %v1740, %v3391
  %v11203 = vsel %vm11101, %v1741, %v3393
  %v11205 = vsel %vm11101, %v1742, %v3395
  %v11207 = vsel %vm11101, %v1743, %v3397
  %v11209 = vsel %vm11101, %v1744, %v3399
  %v11211 = vsel %vm11101, %v1745, %v3401
  %v11213 = vsel %vm11101, %v1746, %v3403
  %v11215 = vsel %vm11101, %v1747, %v3405
  %v11217 = vsel %vm11101, %v1748, %v3407
  %v11219 = vsel %vm11101, %v1749, %v3409
  %v11221 = vsel %vm11101, %v1750, %v3411
  %v11223 = vsel %vm11101, %v1751, %v3413
  %v11225 = vsel %vm11101, %v1752, %v3415
  %v11227 = vsel %vm11101, %v1753, %v3417
  %v11229 = vsel %vm11101, %v1754, %v3419
  %v11231 = vsel %vm11101, %v1755, %v3421
  %v11233 = vsel %vm11101, %v1756, %v3423
  %v11235 = vsel %vm11101, %v1757, %v3425
  %v11237 = vsel %vm11101, %v1758, %v3427
  %v11239 = vsel %vm11101, %v1759, %v3429
  %v11241 = vsel %vm11101, %v1760, %v3431
  %v11243 = vsel %vm11101, %v1761, %v3433
  %v11245 = vsel %vm11101, %v1762, %v3435
  %v11247 = vsel %vm11101, %v1763, %v3437
  %v11249 = vsel %vm11101, %v1764, %v3439
  %v11251 = vsel %vm11101, %v1765, %v3441
  %v11253 = vsel %vm11101, %v1766, %v3443
  %v11255 = vsel %vm11101, %v1767, %v3445
  %v11257 = vsel %vm11101, %v1768, %v3447
  %v11259 = vsel %vm11101, %v1769, %v3449
  %v11261 = vsel %vm11101, %v1770, %v3451
  %v11263 = vsel %vm11101, %v1771, %v3453
  %v11265 = vsel %vm11101, %v1772, %v3455
  %v11267 = vsel %vm11101, %v1773, %v3457
  %v11269 = vsel %vm11101, %v1774, %v3459
  %v11271 = vsel %vm11101, %v1775, %v3461
  %v11273 = vsel %vm11101, %v1776, %v3463
  %v11275 = vsel %vm11101, %v1777, %v3465
  %v11277 = vsel %vm11101, %v1778, %v3467
  %v11279 = vsel %vm11101, %v1779, %v3469
  %v11281 = vsel %vm11101, %v1780, %v3471
  %v11283 = vsel %vm11101, %v1781, %v3473
  %v11285 = vsel %vm11101, %v1782, %v3475
  %v11287 = vsel %vm11101, %v1783, %v3477
  %v11289 = vsel %vm11101, %v1784, %v3479
  %v11291 = vsel %vm11101, %v1785, %v3481
  %v11293 = vsel %vm11101, %v1786, %v3483
  %v11295 = vsel %vm11101, %v1787, %v3485
  %v11297 = vsel %vm11101, %v1788, %v3487
  %v11299 = vsel %vm11101, %v1789, %v3489
  %v11301 = vsel %vm11101, %v1790, %v3491
  %v11303 = vsel %vm11101, %v1791, %v3493
  %v11305 = vsel %vm11101, %v1792, %v3495
  %v11307 = vsel %vm11101, %v1793, %v3497
  %v11309 = vsel %vm11101, %v1794, %v3499
  %v11311 = vsel %vm11101, %v1795, %v3501
  %v11313 = vsel %vm11101, %v1796, %v3503
  %v11315 = vsel %vm11101, %v1797, %v3505
  %v11317 = vsel %vm11101, %v1798, %v3507
  %v11319 = vsel %vm11101, %v1799, %v3509
  %v11321 = vsel %vm11101, %v1800, %v3511
  %v11323 = vsel %vm11101, %v1801, %v3513
  %v11325 = vsel %vm11101, %v1802, %v3515
  %v11327 = vsel %vm11101, %v1803, %v3517
  %v11329 = vsel %vm11101, %v1804, %v3519
  %v11331 = vsel %vm11101, %v1805, %v3521
  %v11333 = vsel %vm11101, %v1806, %v3523
  %v11335 = vsel %vm11101, %v1807, %v3525
  %v11337 = vsel %vm11101, %v1808, %v3527
  %v11339 = vsel %vm11101, %v1809, %v3529
  %v11341 = vsel %vm11101, %v1810, %v3531
  %v11343 = vsel %vm11101, %v1811, %v3533
  %v11345 = vsel %vm11101, %v1812, %v3535
  %v11347 = vsel %vm11101, %v1813, %v3537
  %v11349 = vsel %vm11101, %v1814, %v3539
  %v11351 = vsel %vm11101, %v1815, %v3541
  %v11353 = vsel %vm11101, %v1816, %v3543
  %v11355 = vsel %vm11101, %v1817, %v3545
  %v11357 = vsel %vm11101, %v1818, %v3547
  %vm11358 = vcmask 64512
  %v11360 = vsel %vm11358, %v11103, %v4062
  %v11362 = vsel %vm11358, %v11105, %v4064
  %v11364 = vsel %vm11358, %v11107, %v4066
  %v11366 = vsel %vm11358, %v11109, %v4068
  %v11368 = vsel %vm11358, %v11111, %v4070
  %v11370 = vsel %vm11358, %v11113, %v4072
  %v11372 = vsel %vm11358, %v11115, %v4074
  %v11374 = vsel %vm11358, %v11117, %v4076
  %v11376 = vsel %vm11358, %v11119, %v4078
  %v11378 = vsel %vm11358, %v11121, %v4080
  %v11380 = vsel %vm11358, %v11123, %v4082
  %v11382 = vsel %vm11358, %v11125, %v4084
  %v11384 = vsel %vm11358, %v11127, %v4086
  %v11386 = vsel %vm11358, %v11129, %v4088
  %v11388 = vsel %vm11358, %v11131, %v4090
  %v11390 = vsel %vm11358, %v11133, %v4092
  %v11392 = vsel %vm11358, %v11135, %v4094
  %v11394 = vsel %vm11358, %v11137, %v4096
  %v11396 = vsel %vm11358, %v11139, %v4098
  %v11398 = vsel %vm11358, %v11141, %v4100
  %v11400 = vsel %vm11358, %v11143, %v4102
  %v11402 = vsel %vm11358, %v11145, %v4104
  %v11404 = vsel %vm11358, %v11147, %v4106
  %v11406 = vsel %vm11358, %v11149, %v4108
  %v11408 = vsel %vm11358, %v11151, %v4110
  %v11410 = vsel %vm11358, %v11153, %v4112
  %v11412 = vsel %vm11358, %v11155, %v4114
  %v11414 = vsel %vm11358, %v11157, %v4116
  %v11416 = vsel %vm11358, %v11159, %v4118
  %v11418 = vsel %vm11358, %v11161, %v4120
  %v11420 = vsel %vm11358, %v11163, %v4122
  %v11422 = vsel %vm11358, %v11165, %v4124
  %v11424 = vsel %vm11358, %v11167, %v4126
  %v11426 = vsel %vm11358, %v11169, %v4128
  %v11428 = vsel %vm11358, %v11171, %v4130
  %v11430 = vsel %vm11358, %v11173, %v4132
  %v11432 = vsel %vm11358, %v11175, %v4134
  %v11434 = vsel %vm11358, %v11177, %v4136
  %v11436 = vsel %vm11358, %v11179, %v4138
  %v11438 = vsel %vm11358, %v11181, %v4140
  %v11440 = vsel %vm11358, %v11183, %v4142
  %v11442 = vsel %vm11358, %v11185, %v4144
  %v11444 = vsel %vm11358, %v11187, %v4146
  %v11446 = vsel %vm11358, %v11189, %v4148
  %v11448 = vsel %vm11358, %v11191, %v4150
  %v11450 = vsel %vm11358, %v11193, %v4152
  %v11452 = vsel %vm11358, %v11195, %v4154
  %v11454 = vsel %vm11358, %v11197, %v4156
  %v11456 = vsel %vm11358, %v11199, %v4158
  %v11458 = vsel %vm11358, %v11201, %v4160
  %v11460 = vsel %vm11358, %v11203, %v4162
  %v11462 = vsel %vm11358, %v11205, %v4164
  %v11464 = vsel %vm11358, %v11207, %v4166
  %v11466 = vsel %vm11358, %v11209, %v4168
  %v11468 = vsel %vm11358, %v11211, %v4170
  %v11470 = vsel %vm11358, %v11213, %v4172
  %v11472 = vsel %vm11358, %v11215, %v4174
  %v11474 = vsel %vm11358, %v11217, %v4176
  %v11476 = vsel %vm11358, %v11219, %v4178
  %v11478 = vsel %vm11358, %v11221, %v4180
  %v11480 = vsel %vm11358, %v11223, %v4182
  %v11482 = vsel %vm11358, %v11225, %v4184
  %v11484 = vsel %vm11358, %v11227, %v4186
  %v11486 = vsel %vm11358, %v11229, %v4188
  %v11488 = vsel %vm11358, %v11231, %v4190
  %v11490 = vsel %vm11358, %v11233, %v4192
  %v11492 = vsel %vm11358, %v11235, %v4194
  %v11494 = vsel %vm11358, %v11237, %v4196
  %v11496 = vsel %vm11358, %v11239, %v4198
  %v11498 = vsel %vm11358, %v11241, %v4200
  %v11500 = vsel %vm11358, %v11243, %v4202
  %v11502 = vsel %vm11358, %v11245, %v4204
  %v11504 = vsel %vm11358, %v11247, %v4206
  %v11506 = vsel %vm11358, %v11249, %v4208
  %v11508 = vsel %vm11358, %v11251, %v4210
  %v11510 = vsel %vm11358, %v11253, %v4212
  %v11512 = vsel %vm11358, %v11255, %v4214
  %v11514 = vsel %vm11358, %v11257, %v4216
  %v11516 = vsel %vm11358, %v11259, %v4218
  %v11518 = vsel %vm11358, %v11261, %v4220
  %v11520 = vsel %vm11358, %v11263, %v4222
  %v11522 = vsel %vm11358, %v11265, %v4224
  %v11524 = vsel %vm11358, %v11267, %v4226
  %v11526 = vsel %vm11358, %v11269, %v4228
  %v11528 = vsel %vm11358, %v11271, %v4230
  %v11530 = vsel %vm11358, %v11273, %v4232
  %v11532 = vsel %vm11358, %v11275, %v4234
  %v11534 = vsel %vm11358, %v11277, %v4236
  %v11536 = vsel %vm11358, %v11279, %v4238
  %v11538 = vsel %vm11358, %v11281, %v4240
  %v11540 = vsel %vm11358, %v11283, %v4242
  %v11542 = vsel %vm11358, %v11285, %v4244
  %v11544 = vsel %vm11358, %v11287, %v4246
  %v11546 = vsel %vm11358, %v11289, %v4248
  %v11548 = vsel %vm11358, %v11291, %v4250
  %v11550 = vsel %vm11358, %v11293, %v4252
  %v11552 = vsel %vm11358, %v11295, %v4254
  %v11554 = vsel %vm11358, %v11297, %v4256
  %v11556 = vsel %vm11358, %v11299, %v4258
  %v11558 = vsel %vm11358, %v11301, %v4260
  %v11560 = vsel %vm11358, %v11303, %v4262
  %v11562 = vsel %vm11358, %v11305, %v4264
  %v11564 = vsel %vm11358, %v11307, %v4266
  %v11566 = vsel %vm11358, %v11309, %v4268
  %v11568 = vsel %vm11358, %v11311, %v4270
  %v11570 = vsel %vm11358, %v11313, %v4272
  %v11572 = vsel %vm11358, %v11315, %v4274
  %v11574 = vsel %vm11358, %v11317, %v4276
  %v11576 = vsel %vm11358, %v11319, %v4278
  %v11578 = vsel %vm11358, %v11321, %v4280
  %v11580 = vsel %vm11358, %v11323, %v4282
  %v11582 = vsel %vm11358, %v11325, %v4284
  %v11584 = vsel %vm11358, %v11327, %v4286
  %v11586 = vsel %vm11358, %v11329, %v4288
  %v11588 = vsel %vm11358, %v11331, %v4290
  %v11590 = vsel %vm11358, %v11333, %v4292
  %v11592 = vsel %vm11358, %v11335, %v4294
  %v11594 = vsel %vm11358, %v11337, %v4296
  %v11596 = vsel %vm11358, %v11339, %v4298
  %v11598 = vsel %vm11358, %v11341, %v4300
  %v11600 = vsel %vm11358, %v11343, %v4302
  %v11602 = vsel %vm11358, %v11345, %v4304
  %v11604 = vsel %vm11358, %v11347, %v4306
  %v11606 = vsel %vm11358, %v11349, %v4308
  %v11608 = vsel %vm11358, %v11351, %v4310
  %v11610 = vsel %vm11358, %v11353, %v4312
  %v11612 = vsel %vm11358, %v11355, %v4314
  %v11614 = vsel %vm11358, %v11357, %v4316
  %vm11615 = vcmask 97280
  %v11617 = vsel %vm11615, %v11360, %v4958
  %v11619 = vsel %vm11615, %v11362, %v4960
  %v11621 = vsel %vm11615, %v11364, %v4962
  %v11623 = vsel %vm11615, %v11366, %v4964
  %v11625 = vsel %vm11615, %v11368, %v4966
  %v11627 = vsel %vm11615, %v11370, %v4968
  %v11629 = vsel %vm11615, %v11372, %v4970
  %v11631 = vsel %vm11615, %v11374, %v4972
  %v11633 = vsel %vm11615, %v11376, %v4974
  %v11635 = vsel %vm11615, %v11378, %v4976
  %v11637 = vsel %vm11615, %v11380, %v4978
  %v11639 = vsel %vm11615, %v11382, %v4980
  %v11641 = vsel %vm11615, %v11384, %v4982
  %v11643 = vsel %vm11615, %v11386, %v4984
  %v11645 = vsel %vm11615, %v11388, %v4986
  %v11647 = vsel %vm11615, %v11390, %v4988
  %v11649 = vsel %vm11615, %v11392, %v4990
  %v11651 = vsel %vm11615, %v11394, %v4992
  %v11653 = vsel %vm11615, %v11396, %v4994
  %v11655 = vsel %vm11615, %v11398, %v4996
  %v11657 = vsel %vm11615, %v11400, %v4998
  %v11659 = vsel %vm11615, %v11402, %v5000
  %v11661 = vsel %vm11615, %v11404, %v5002
  %v11663 = vsel %vm11615, %v11406, %v5004
  %v11665 = vsel %vm11615, %v11408, %v5006
  %v11667 = vsel %vm11615, %v11410, %v5008
  %v11669 = vsel %vm11615, %v11412, %v5010
  %v11671 = vsel %vm11615, %v11414, %v5012
  %v11673 = vsel %vm11615, %v11416, %v5014
  %v11675 = vsel %vm11615, %v11418, %v5016
  %v11677 = vsel %vm11615, %v11420, %v5018
  %v11679 = vsel %vm11615, %v11422, %v5020
  %v11681 = vsel %vm11615, %v11424, %v5022
  %v11683 = vsel %vm11615, %v11426, %v5024
  %v11685 = vsel %vm11615, %v11428, %v5026
  %v11687 = vsel %vm11615, %v11430, %v5028
  %v11689 = vsel %vm11615, %v11432, %v5030
  %v11691 = vsel %vm11615, %v11434, %v5032
  %v11693 = vsel %vm11615, %v11436, %v5034
  %v11695 = vsel %vm11615, %v11438, %v5036
  %v11697 = vsel %vm11615, %v11440, %v5038
  %v11699 = vsel %vm11615, %v11442, %v5040
  %v11701 = vsel %vm11615, %v11444, %v5042
  %v11703 = vsel %vm11615, %v11446, %v5044
  %v11705 = vsel %vm11615, %v11448, %v5046
  %v11707 = vsel %vm11615, %v11450, %v5048
  %v11709 = vsel %vm11615, %v11452, %v5050
  %v11711 = vsel %vm11615, %v11454, %v5052
  %v11713 = vsel %vm11615, %v11456, %v5054
  %v11715 = vsel %vm11615, %v11458, %v5056
  %v11717 = vsel %vm11615, %v11460, %v5058
  %v11719 = vsel %vm11615, %v11462, %v5060
  %v11721 = vsel %vm11615, %v11464, %v5062
  %v11723 = vsel %vm11615, %v11466, %v5064
  %v11725 = vsel %vm11615, %v11468, %v5066
  %v11727 = vsel %vm11615, %v11470, %v5068
  %v11729 = vsel %vm11615, %v11472, %v5070
  %v11731 = vsel %vm11615, %v11474, %v5072
  %v11733 = vsel %vm11615, %v11476, %v5074
  %v11735 = vsel %vm11615, %v11478, %v5076
  %v11737 = vsel %vm11615, %v11480, %v5078
  %v11739 = vsel %vm11615, %v11482, %v5080
  %v11741 = vsel %vm11615, %v11484, %v5082
  %v11743 = vsel %vm11615, %v11486, %v5084
  %v11745 = vsel %vm11615, %v11488, %v5086
  %v11747 = vsel %vm11615, %v11490, %v5088
  %v11749 = vsel %vm11615, %v11492, %v5090
  %v11751 = vsel %vm11615, %v11494, %v5092
  %v11753 = vsel %vm11615, %v11496, %v5094
  %v11755 = vsel %vm11615, %v11498, %v5096
  %v11757 = vsel %vm11615, %v11500, %v5098
  %v11759 = vsel %vm11615, %v11502, %v5100
  %v11761 = vsel %vm11615, %v11504, %v5102
  %v11763 = vsel %vm11615, %v11506, %v5104
  %v11765 = vsel %vm11615, %v11508, %v5106
  %v11767 = vsel %vm11615, %v11510, %v5108
  %v11769 = vsel %vm11615, %v11512, %v5110
  %v11771 = vsel %vm11615, %v11514, %v5112
  %v11773 = vsel %vm11615, %v11516, %v5114
  %v11775 = vsel %vm11615, %v11518, %v5116
  %v11777 = vsel %vm11615, %v11520, %v5118
  %v11779 = vsel %vm11615, %v11522, %v5120
  %v11781 = vsel %vm11615, %v11524, %v5122
  %v11783 = vsel %vm11615, %v11526, %v5124
  %v11785 = vsel %vm11615, %v11528, %v5126
  %v11787 = vsel %vm11615, %v11530, %v5128
  %v11789 = vsel %vm11615, %v11532, %v5130
  %v11791 = vsel %vm11615, %v11534, %v5132
  %v11793 = vsel %vm11615, %v11536, %v5134
  %v11795 = vsel %vm11615, %v11538, %v5136
  %v11797 = vsel %vm11615, %v11540, %v5138
  %v11799 = vsel %vm11615, %v11542, %v5140
  %v11801 = vsel %vm11615, %v11544, %v5142
  %v11803 = vsel %vm11615, %v11546, %v5144
  %v11805 = vsel %vm11615, %v11548, %v5146
  %v11807 = vsel %vm11615, %v11550, %v5148
  %v11809 = vsel %vm11615, %v11552, %v5150
  %v11811 = vsel %vm11615, %v11554, %v5152
  %v11813 = vsel %vm11615, %v11556, %v5154
  %v11815 = vsel %vm11615, %v11558, %v5156
  %v11817 = vsel %vm11615, %v11560, %v5158
  %v11819 = vsel %vm11615, %v11562, %v5160
  %v11821 = vsel %vm11615, %v11564, %v5162
  %v11823 = vsel %vm11615, %v11566, %v5164
  %v11825 = vsel %vm11615, %v11568, %v5166
  %v11827 = vsel %vm11615, %v11570, %v5168
  %v11829 = vsel %vm11615, %v11572, %v5170
  %v11831 = vsel %vm11615, %v11574, %v5172
  %v11833 = vsel %vm11615, %v11576, %v5174
  %v11835 = vsel %vm11615, %v11578, %v5176
  %v11837 = vsel %vm11615, %v11580, %v5178
  %v11839 = vsel %vm11615, %v11582, %v5180
  %v11841 = vsel %vm11615, %v11584, %v5182
  %v11843 = vsel %vm11615, %v11586, %v5184
  %v11845 = vsel %vm11615, %v11588, %v5186
  %v11847 = vsel %vm11615, %v11590, %v5188
  %v11849 = vsel %vm11615, %v11592, %v5190
  %v11851 = vsel %vm11615, %v11594, %v5192
  %v11853 = vsel %vm11615, %v11596, %v5194
  %v11855 = vsel %vm11615, %v11598, %v5196
  %v11857 = vsel %vm11615, %v11600, %v5198
  %v11859 = vsel %vm11615, %v11602, %v5200
  %v11861 = vsel %vm11615, %v11604, %v5202
  %v11863 = vsel %vm11615, %v11606, %v5204
  %v11865 = vsel %vm11615, %v11608, %v5206
  %v11867 = vsel %vm11615, %v11610, %v5208
  %v11869 = vsel %vm11615, %v11612, %v5210
  %v11871 = vsel %vm11615, %v11614, %v5212
  %vm11872 = vcmask 130048
  %v11874 = vsel %vm11872, %v11617, %v6686
  %v11876 = vsel %vm11872, %v11619, %v6688
  %v11878 = vsel %vm11872, %v11621, %v6690
  %v11880 = vsel %vm11872, %v11623, %v6692
  %v11882 = vsel %vm11872, %v11625, %v6694
  %v11884 = vsel %vm11872, %v11627, %v6696
  %v11886 = vsel %vm11872, %v11629, %v6698
  %v11888 = vsel %vm11872, %v11631, %v6700
  %v11890 = vsel %vm11872, %v11633, %v6702
  %v11892 = vsel %vm11872, %v11635, %v6704
  %v11894 = vsel %vm11872, %v11637, %v6706
  %v11896 = vsel %vm11872, %v11639, %v6708
  %v11898 = vsel %vm11872, %v11641, %v6710
  %v11900 = vsel %vm11872, %v11643, %v6712
  %v11902 = vsel %vm11872, %v11645, %v6714
  %v11904 = vsel %vm11872, %v11647, %v6716
  %v11906 = vsel %vm11872, %v11649, %v6718
  %v11908 = vsel %vm11872, %v11651, %v6720
  %v11910 = vsel %vm11872, %v11653, %v6722
  %v11912 = vsel %vm11872, %v11655, %v6724
  %v11914 = vsel %vm11872, %v11657, %v6726
  %v11916 = vsel %vm11872, %v11659, %v6728
  %v11918 = vsel %vm11872, %v11661, %v6730
  %v11920 = vsel %vm11872, %v11663, %v6732
  %v11922 = vsel %vm11872, %v11665, %v6734
  %v11924 = vsel %vm11872, %v11667, %v6736
  %v11926 = vsel %vm11872, %v11669, %v6738
  %v11928 = vsel %vm11872, %v11671, %v6740
  %v11930 = vsel %vm11872, %v11673, %v6742
  %v11932 = vsel %vm11872, %v11675, %v6744
  %v11934 = vsel %vm11872, %v11677, %v6746
  %v11936 = vsel %vm11872, %v11679, %v6748
  %v11938 = vsel %vm11872, %v11681, %v6750
  %v11940 = vsel %vm11872, %v11683, %v6752
  %v11942 = vsel %vm11872, %v11685, %v6754
  %v11944 = vsel %vm11872, %v11687, %v6756
  %v11946 = vsel %vm11872, %v11689, %v6758
  %v11948 = vsel %vm11872, %v11691, %v6760
  %v11950 = vsel %vm11872, %v11693, %v6762
  %v11952 = vsel %vm11872, %v11695, %v6764
  %v11954 = vsel %vm11872, %v11697, %v6766
  %v11956 = vsel %vm11872, %v11699, %v6768
  %v11958 = vsel %vm11872, %v11701, %v6770
  %v11960 = vsel %vm11872, %v11703, %v6772
  %v11962 = vsel %vm11872, %v11705, %v6774
  %v11964 = vsel %vm11872, %v11707, %v6776
  %v11966 = vsel %vm11872, %v11709, %v6778
  %v11968 = vsel %vm11872, %v11711, %v6780
  %v11970 = vsel %vm11872, %v11713, %v6782
  %v11972 = vsel %vm11872, %v11715, %v6784
  %v11974 = vsel %vm11872, %v11717, %v6786
  %v11976 = vsel %vm11872, %v11719, %v6788
  %v11978 = vsel %vm11872, %v11721, %v6790
  %v11980 = vsel %vm11872, %v11723, %v6792
  %v11982 = vsel %vm11872, %v11725, %v6794
  %v11984 = vsel %vm11872, %v11727, %v6796
  %v11986 = vsel %vm11872, %v11729, %v6798
  %v11988 = vsel %vm11872, %v11731, %v6800
  %v11990 = vsel %vm11872, %v11733, %v6802
  %v11992 = vsel %vm11872, %v11735, %v6804
  %v11994 = vsel %vm11872, %v11737, %v6806
  %v11996 = vsel %vm11872, %v11739, %v6808
  %v11998 = vsel %vm11872, %v11741, %v6810
  %v12000 = vsel %vm11872, %v11743, %v6812
  %v12002 = vsel %vm11872, %v11745, %v6814
  %v12004 = vsel %vm11872, %v11747, %v6816
  %v12006 = vsel %vm11872, %v11749, %v6818
  %v12008 = vsel %vm11872, %v11751, %v6820
  %v12010 = vsel %vm11872, %v11753, %v6822
  %v12012 = vsel %vm11872, %v11755, %v6824
  %v12014 = vsel %vm11872, %v11757, %v6826
  %v12016 = vsel %vm11872, %v11759, %v6828
  %v12018 = vsel %vm11872, %v11761, %v6830
  %v12020 = vsel %vm11872, %v11763, %v6832
  %v12022 = vsel %vm11872, %v11765, %v6834
  %v12024 = vsel %vm11872, %v11767, %v6836
  %v12026 = vsel %vm11872, %v11769, %v6838
  %v12028 = vsel %vm11872, %v11771, %v6840
  %v12030 = vsel %vm11872, %v11773, %v6842
  %v12032 = vsel %vm11872, %v11775, %v6844
  %v12034 = vsel %vm11872, %v11777, %v6846
  %v12036 = vsel %vm11872, %v11779, %v6848
  %v12038 = vsel %vm11872, %v11781, %v6850
  %v12040 = vsel %vm11872, %v11783, %v6852
  %v12042 = vsel %vm11872, %v11785, %v6854
  %v12044 = vsel %vm11872, %v11787, %v6856
  %v12046 = vsel %vm11872, %v11789, %v6858
  %v12048 = vsel %vm11872, %v11791, %v6860
  %v12050 = vsel %vm11872, %v11793, %v6862
  %v12052 = vsel %vm11872, %v11795, %v6864
  %v12054 = vsel %vm11872, %v11797, %v6866
  %v12056 = vsel %vm11872, %v11799, %v6868
  %v12058 = vsel %vm11872, %v11801, %v6870
  %v12060 = vsel %vm11872, %v11803, %v6872
  %v12062 = vsel %vm11872, %v11805, %v6874
  %v12064 = vsel %vm11872, %v11807, %v6876
  %v12066 = vsel %vm11872, %v11809, %v6878
  %v12068 = vsel %vm11872, %v11811, %v6880
  %v12070 = vsel %vm11872, %v11813, %v6882
  %v12072 = vsel %vm11872, %v11815, %v6884
  %v12074 = vsel %vm11872, %v11817, %v6886
  %v12076 = vsel %vm11872, %v11819, %v6888
  %v12078 = vsel %vm11872, %v11821, %v6890
  %v12080 = vsel %vm11872, %v11823, %v6892
  %v12082 = vsel %vm11872, %v11825, %v6894
  %v12084 = vsel %vm11872, %v11827, %v6896
  %v12086 = vsel %vm11872, %v11829, %v6898
  %v12088 = vsel %vm11872, %v11831, %v6900
  %v12090 = vsel %vm11872, %v11833, %v6902
  %v12092 = vsel %vm11872, %v11835, %v6904
  %v12094 = vsel %vm11872, %v11837, %v6906
  %v12096 = vsel %vm11872, %v11839, %v6908
  %v12098 = vsel %vm11872, %v11841, %v6910
  %v12100 = vsel %vm11872, %v11843, %v6912
  %v12102 = vsel %vm11872, %v11845, %v6914
  %v12104 = vsel %vm11872, %v11847, %v6916
  %v12106 = vsel %vm11872, %v11849, %v6918
  %v12108 = vsel %vm11872, %v11851, %v6920
  %v12110 = vsel %vm11872, %v11853, %v6922
  %v12112 = vsel %vm11872, %v11855, %v6924
  %v12114 = vsel %vm11872, %v11857, %v6926
  %v12116 = vsel %vm11872, %v11859, %v6928
  %v12118 = vsel %vm11872, %v11861, %v6930
  %v12120 = vsel %vm11872, %v11863, %v6932
  %v12122 = vsel %vm11872, %v11865, %v6934
  %v12124 = vsel %vm11872, %v11867, %v6936
  %v12126 = vsel %vm11872, %v11869, %v6938
  %v12128 = vsel %vm11872, %v11871, %v6940
  %vm12129 = vcmask 162816
  %v12131 = vsel %vm12129, %v11874, %v7454
  %v12133 = vsel %vm12129, %v11876, %v7456
  %v12135 = vsel %vm12129, %v11878, %v7458
  %v12137 = vsel %vm12129, %v11880, %v7460
  %v12139 = vsel %vm12129, %v11882, %v7462
  %v12141 = vsel %vm12129, %v11884, %v7464
  %v12143 = vsel %vm12129, %v11886, %v7466
  %v12145 = vsel %vm12129, %v11888, %v7468
  %v12147 = vsel %vm12129, %v11890, %v7470
  %v12149 = vsel %vm12129, %v11892, %v7472
  %v12151 = vsel %vm12129, %v11894, %v7474
  %v12153 = vsel %vm12129, %v11896, %v7476
  %v12155 = vsel %vm12129, %v11898, %v7478
  %v12157 = vsel %vm12129, %v11900, %v7480
  %v12159 = vsel %vm12129, %v11902, %v7482
  %v12161 = vsel %vm12129, %v11904, %v7484
  %v12163 = vsel %vm12129, %v11906, %v7486
  %v12165 = vsel %vm12129, %v11908, %v7488
  %v12167 = vsel %vm12129, %v11910, %v7490
  %v12169 = vsel %vm12129, %v11912, %v7492
  %v12171 = vsel %vm12129, %v11914, %v7494
  %v12173 = vsel %vm12129, %v11916, %v7496
  %v12175 = vsel %vm12129, %v11918, %v7498
  %v12177 = vsel %vm12129, %v11920, %v7500
  %v12179 = vsel %vm12129, %v11922, %v7502
  %v12181 = vsel %vm12129, %v11924, %v7504
  %v12183 = vsel %vm12129, %v11926, %v7506
  %v12185 = vsel %vm12129, %v11928, %v7508
  %v12187 = vsel %vm12129, %v11930, %v7510
  %v12189 = vsel %vm12129, %v11932, %v7512
  %v12191 = vsel %vm12129, %v11934, %v7514
  %v12193 = vsel %vm12129, %v11936, %v7516
  %v12195 = vsel %vm12129, %v11938, %v7518
  %v12197 = vsel %vm12129, %v11940, %v7520
  %v12199 = vsel %vm12129, %v11942, %v7522
  %v12201 = vsel %vm12129, %v11944, %v7524
  %v12203 = vsel %vm12129, %v11946, %v7526
  %v12205 = vsel %vm12129, %v11948, %v7528
  %v12207 = vsel %vm12129, %v11950, %v7530
  %v12209 = vsel %vm12129, %v11952, %v7532
  %v12211 = vsel %vm12129, %v11954, %v7534
  %v12213 = vsel %vm12129, %v11956, %v7536
  %v12215 = vsel %vm12129, %v11958, %v7538
  %v12217 = vsel %vm12129, %v11960, %v7540
  %v12219 = vsel %vm12129, %v11962, %v7542
  %v12221 = vsel %vm12129, %v11964, %v7544
  %v12223 = vsel %vm12129, %v11966, %v7546
  %v12225 = vsel %vm12129, %v11968, %v7548
  %v12227 = vsel %vm12129, %v11970, %v7550
  %v12229 = vsel %vm12129, %v11972, %v7552
  %v12231 = vsel %vm12129, %v11974, %v7554
  %v12233 = vsel %vm12129, %v11976, %v7556
  %v12235 = vsel %vm12129, %v11978, %v7558
  %v12237 = vsel %vm12129, %v11980, %v7560
  %v12239 = vsel %vm12129, %v11982, %v7562
  %v12241 = vsel %vm12129, %v11984, %v7564
  %v12243 = vsel %vm12129, %v11986, %v7566
  %v12245 = vsel %vm12129, %v11988, %v7568
  %v12247 = vsel %vm12129, %v11990, %v7570
  %v12249 = vsel %vm12129, %v11992, %v7572
  %v12251 = vsel %vm12129, %v11994, %v7574
  %v12253 = vsel %vm12129, %v11996, %v7576
  %v12255 = vsel %vm12129, %v11998, %v7578
  %v12257 = vsel %vm12129, %v12000, %v7580
  %v12259 = vsel %vm12129, %v12002, %v7582
  %v12261 = vsel %vm12129, %v12004, %v7584
  %v12263 = vsel %vm12129, %v12006, %v7586
  %v12265 = vsel %vm12129, %v12008, %v7588
  %v12267 = vsel %vm12129, %v12010, %v7590
  %v12269 = vsel %vm12129, %v12012, %v7592
  %v12271 = vsel %vm12129, %v12014, %v7594
  %v12273 = vsel %vm12129, %v12016, %v7596
  %v12275 = vsel %vm12129, %v12018, %v7598
  %v12277 = vsel %vm12129, %v12020, %v7600
  %v12279 = vsel %vm12129, %v12022, %v7602
  %v12281 = vsel %vm12129, %v12024, %v7604
  %v12283 = vsel %vm12129, %v12026, %v7606
  %v12285 = vsel %vm12129, %v12028, %v7608
  %v12287 = vsel %vm12129, %v12030, %v7610
  %v12289 = vsel %vm12129, %v12032, %v7612
  %v12291 = vsel %vm12129, %v12034, %v7614
  %v12293 = vsel %vm12129, %v12036, %v7616
  %v12295 = vsel %vm12129, %v12038, %v7618
  %v12297 = vsel %vm12129, %v12040, %v7620
  %v12299 = vsel %vm12129, %v12042, %v7622
  %v12301 = vsel %vm12129, %v12044, %v7624
  %v12303 = vsel %vm12129, %v12046, %v7626
  %v12305 = vsel %vm12129, %v12048, %v7628
  %v12307 = vsel %vm12129, %v12050, %v7630
  %v12309 = vsel %vm12129, %v12052, %v7632
  %v12311 = vsel %vm12129, %v12054, %v7634
  %v12313 = vsel %vm12129, %v12056, %v7636
  %v12315 = vsel %vm12129, %v12058, %v7638
  %v12317 = vsel %vm12129, %v12060, %v7640
  %v12319 = vsel %vm12129, %v12062, %v7642
  %v12321 = vsel %vm12129, %v12064, %v7644
  %v12323 = vsel %vm12129, %v12066, %v7646
  %v12325 = vsel %vm12129, %v12068, %v7648
  %v12327 = vsel %vm12129, %v12070, %v7650
  %v12329 = vsel %vm12129, %v12072, %v7652
  %v12331 = vsel %vm12129, %v12074, %v7654
  %v12333 = vsel %vm12129, %v12076, %v7656
  %v12335 = vsel %vm12129, %v12078, %v7658
  %v12337 = vsel %vm12129, %v12080, %v7660
  %v12339 = vsel %vm12129, %v12082, %v7662
  %v12341 = vsel %vm12129, %v12084, %v7664
  %v12343 = vsel %vm12129, %v12086, %v7666
  %v12345 = vsel %vm12129, %v12088, %v7668
  %v12347 = vsel %vm12129, %v12090, %v7670
  %v12349 = vsel %vm12129, %v12092, %v7672
  %v12351 = vsel %vm12129, %v12094, %v7674
  %v12353 = vsel %vm12129, %v12096, %v7676
  %v12355 = vsel %vm12129, %v12098, %v7678
  %v12357 = vsel %vm12129, %v12100, %v7680
  %v12359 = vsel %vm12129, %v12102, %v7682
  %v12361 = vsel %vm12129, %v12104, %v7684
  %v12363 = vsel %vm12129, %v12106, %v7686
  %v12365 = vsel %vm12129, %v12108, %v7688
  %v12367 = vsel %vm12129, %v12110, %v7690
  %v12369 = vsel %vm12129, %v12112, %v7692
  %v12371 = vsel %vm12129, %v12114, %v7694
  %v12373 = vsel %vm12129, %v12116, %v7696
  %v12375 = vsel %vm12129, %v12118, %v7698
  %v12377 = vsel %vm12129, %v12120, %v7700
  %v12379 = vsel %vm12129, %v12122, %v7702
  %v12381 = vsel %vm12129, %v12124, %v7704
  %v12383 = vsel %vm12129, %v12126, %v7706
  %v12385 = vsel %vm12129, %v12128, %v7708
  %vm12386 = vcmask 195584
  %v12388 = vsel %vm12386, %v12131, %v8350
  %v12390 = vsel %vm12386, %v12133, %v8352
  %v12392 = vsel %vm12386, %v12135, %v8354
  %v12394 = vsel %vm12386, %v12137, %v8356
  %v12396 = vsel %vm12386, %v12139, %v8358
  %v12398 = vsel %vm12386, %v12141, %v8360
  %v12400 = vsel %vm12386, %v12143, %v8362
  %v12402 = vsel %vm12386, %v12145, %v8364
  %v12404 = vsel %vm12386, %v12147, %v8366
  %v12406 = vsel %vm12386, %v12149, %v8368
  %v12408 = vsel %vm12386, %v12151, %v8370
  %v12410 = vsel %vm12386, %v12153, %v8372
  %v12412 = vsel %vm12386, %v12155, %v8374
  %v12414 = vsel %vm12386, %v12157, %v8376
  %v12416 = vsel %vm12386, %v12159, %v8378
  %v12418 = vsel %vm12386, %v12161, %v8380
  %v12420 = vsel %vm12386, %v12163, %v8382
  %v12422 = vsel %vm12386, %v12165, %v8384
  %v12424 = vsel %vm12386, %v12167, %v8386
  %v12426 = vsel %vm12386, %v12169, %v8388
  %v12428 = vsel %vm12386, %v12171, %v8390
  %v12430 = vsel %vm12386, %v12173, %v8392
  %v12432 = vsel %vm12386, %v12175, %v8394
  %v12434 = vsel %vm12386, %v12177, %v8396
  %v12436 = vsel %vm12386, %v12179, %v8398
  %v12438 = vsel %vm12386, %v12181, %v8400
  %v12440 = vsel %vm12386, %v12183, %v8402
  %v12442 = vsel %vm12386, %v12185, %v8404
  %v12444 = vsel %vm12386, %v12187, %v8406
  %v12446 = vsel %vm12386, %v12189, %v8408
  %v12448 = vsel %vm12386, %v12191, %v8410
  %v12450 = vsel %vm12386, %v12193, %v8412
  %v12452 = vsel %vm12386, %v12195, %v8414
  %v12454 = vsel %vm12386, %v12197, %v8416
  %v12456 = vsel %vm12386, %v12199, %v8418
  %v12458 = vsel %vm12386, %v12201, %v8420
  %v12460 = vsel %vm12386, %v12203, %v8422
  %v12462 = vsel %vm12386, %v12205, %v8424
  %v12464 = vsel %vm12386, %v12207, %v8426
  %v12466 = vsel %vm12386, %v12209, %v8428
  %v12468 = vsel %vm12386, %v12211, %v8430
  %v12470 = vsel %vm12386, %v12213, %v8432
  %v12472 = vsel %vm12386, %v12215, %v8434
  %v12474 = vsel %vm12386, %v12217, %v8436
  %v12476 = vsel %vm12386, %v12219, %v8438
  %v12478 = vsel %vm12386, %v12221, %v8440
  %v12480 = vsel %vm12386, %v12223, %v8442
  %v12482 = vsel %vm12386, %v12225, %v8444
  %v12484 = vsel %vm12386, %v12227, %v8446
  %v12486 = vsel %vm12386, %v12229, %v8448
  %v12488 = vsel %vm12386, %v12231, %v8450
  %v12490 = vsel %vm12386, %v12233, %v8452
  %v12492 = vsel %vm12386, %v12235, %v8454
  %v12494 = vsel %vm12386, %v12237, %v8456
  %v12496 = vsel %vm12386, %v12239, %v8458
  %v12498 = vsel %vm12386, %v12241, %v8460
  %v12500 = vsel %vm12386, %v12243, %v8462
  %v12502 = vsel %vm12386, %v12245, %v8464
  %v12504 = vsel %vm12386, %v12247, %v8466
  %v12506 = vsel %vm12386, %v12249, %v8468
  %v12508 = vsel %vm12386, %v12251, %v8470
  %v12510 = vsel %vm12386, %v12253, %v8472
  %v12512 = vsel %vm12386, %v12255, %v8474
  %v12514 = vsel %vm12386, %v12257, %v8476
  %v12516 = vsel %vm12386, %v12259, %v8478
  %v12518 = vsel %vm12386, %v12261, %v8480
  %v12520 = vsel %vm12386, %v12263, %v8482
  %v12522 = vsel %vm12386, %v12265, %v8484
  %v12524 = vsel %vm12386, %v12267, %v8486
  %v12526 = vsel %vm12386, %v12269, %v8488
  %v12528 = vsel %vm12386, %v12271, %v8490
  %v12530 = vsel %vm12386, %v12273, %v8492
  %v12532 = vsel %vm12386, %v12275, %v8494
  %v12534 = vsel %vm12386, %v12277, %v8496
  %v12536 = vsel %vm12386, %v12279, %v8498
  %v12538 = vsel %vm12386, %v12281, %v8500
  %v12540 = vsel %vm12386, %v12283, %v8502
  %v12542 = vsel %vm12386, %v12285, %v8504
  %v12544 = vsel %vm12386, %v12287, %v8506
  %v12546 = vsel %vm12386, %v12289, %v8508
  %v12548 = vsel %vm12386, %v12291, %v8510
  %v12550 = vsel %vm12386, %v12293, %v8512
  %v12552 = vsel %vm12386, %v12295, %v8514
  %v12554 = vsel %vm12386, %v12297, %v8516
  %v12556 = vsel %vm12386, %v12299, %v8518
  %v12558 = vsel %vm12386, %v12301, %v8520
  %v12560 = vsel %vm12386, %v12303, %v8522
  %v12562 = vsel %vm12386, %v12305, %v8524
  %v12564 = vsel %vm12386, %v12307, %v8526
  %v12566 = vsel %vm12386, %v12309, %v8528
  %v12568 = vsel %vm12386, %v12311, %v8530
  %v12570 = vsel %vm12386, %v12313, %v8532
  %v12572 = vsel %vm12386, %v12315, %v8534
  %v12574 = vsel %vm12386, %v12317, %v8536
  %v12576 = vsel %vm12386, %v12319, %v8538
  %v12578 = vsel %vm12386, %v12321, %v8540
  %v12580 = vsel %vm12386, %v12323, %v8542
  %v12582 = vsel %vm12386, %v12325, %v8544
  %v12584 = vsel %vm12386, %v12327, %v8546
  %v12586 = vsel %vm12386, %v12329, %v8548
  %v12588 = vsel %vm12386, %v12331, %v8550
  %v12590 = vsel %vm12386, %v12333, %v8552
  %v12592 = vsel %vm12386, %v12335, %v8554
  %v12594 = vsel %vm12386, %v12337, %v8556
  %v12596 = vsel %vm12386, %v12339, %v8558
  %v12598 = vsel %vm12386, %v12341, %v8560
  %v12600 = vsel %vm12386, %v12343, %v8562
  %v12602 = vsel %vm12386, %v12345, %v8564
  %v12604 = vsel %vm12386, %v12347, %v8566
  %v12606 = vsel %vm12386, %v12349, %v8568
  %v12608 = vsel %vm12386, %v12351, %v8570
  %v12610 = vsel %vm12386, %v12353, %v8572
  %v12612 = vsel %vm12386, %v12355, %v8574
  %v12614 = vsel %vm12386, %v12357, %v8576
  %v12616 = vsel %vm12386, %v12359, %v8578
  %v12618 = vsel %vm12386, %v12361, %v8580
  %v12620 = vsel %vm12386, %v12363, %v8582
  %v12622 = vsel %vm12386, %v12365, %v8584
  %v12624 = vsel %vm12386, %v12367, %v8586
  %v12626 = vsel %vm12386, %v12369, %v8588
  %v12628 = vsel %vm12386, %v12371, %v8590
  %v12630 = vsel %vm12386, %v12373, %v8592
  %v12632 = vsel %vm12386, %v12375, %v8594
  %v12634 = vsel %vm12386, %v12377, %v8596
  %v12636 = vsel %vm12386, %v12379, %v8598
  %v12638 = vsel %vm12386, %v12381, %v8600
  %v12640 = vsel %vm12386, %v12383, %v8602
  %v12642 = vsel %vm12386, %v12385, %v8604
  %vm12643 = vcmask 228352
  %v12645 = vsel %vm12643, %v12388, %v10078
  %v12647 = vsel %vm12643, %v12390, %v10080
  %v12649 = vsel %vm12643, %v12392, %v10082
  %v12651 = vsel %vm12643, %v12394, %v10084
  %v12653 = vsel %vm12643, %v12396, %v10086
  %v12655 = vsel %vm12643, %v12398, %v10088
  %v12657 = vsel %vm12643, %v12400, %v10090
  %v12659 = vsel %vm12643, %v12402, %v10092
  %v12661 = vsel %vm12643, %v12404, %v10094
  %v12663 = vsel %vm12643, %v12406, %v10096
  %v12665 = vsel %vm12643, %v12408, %v10098
  %v12667 = vsel %vm12643, %v12410, %v10100
  %v12669 = vsel %vm12643, %v12412, %v10102
  %v12671 = vsel %vm12643, %v12414, %v10104
  %v12673 = vsel %vm12643, %v12416, %v10106
  %v12675 = vsel %vm12643, %v12418, %v10108
  %v12677 = vsel %vm12643, %v12420, %v10110
  %v12679 = vsel %vm12643, %v12422, %v10112
  %v12681 = vsel %vm12643, %v12424, %v10114
  %v12683 = vsel %vm12643, %v12426, %v10116
  %v12685 = vsel %vm12643, %v12428, %v10118
  %v12687 = vsel %vm12643, %v12430, %v10120
  %v12689 = vsel %vm12643, %v12432, %v10122
  %v12691 = vsel %vm12643, %v12434, %v10124
  %v12693 = vsel %vm12643, %v12436, %v10126
  %v12695 = vsel %vm12643, %v12438, %v10128
  %v12697 = vsel %vm12643, %v12440, %v10130
  %v12699 = vsel %vm12643, %v12442, %v10132
  %v12701 = vsel %vm12643, %v12444, %v10134
  %v12703 = vsel %vm12643, %v12446, %v10136
  %v12705 = vsel %vm12643, %v12448, %v10138
  %v12707 = vsel %vm12643, %v12450, %v10140
  %v12709 = vsel %vm12643, %v12452, %v10142
  %v12711 = vsel %vm12643, %v12454, %v10144
  %v12713 = vsel %vm12643, %v12456, %v10146
  %v12715 = vsel %vm12643, %v12458, %v10148
  %v12717 = vsel %vm12643, %v12460, %v10150
  %v12719 = vsel %vm12643, %v12462, %v10152
  %v12721 = vsel %vm12643, %v12464, %v10154
  %v12723 = vsel %vm12643, %v12466, %v10156
  %v12725 = vsel %vm12643, %v12468, %v10158
  %v12727 = vsel %vm12643, %v12470, %v10160
  %v12729 = vsel %vm12643, %v12472, %v10162
  %v12731 = vsel %vm12643, %v12474, %v10164
  %v12733 = vsel %vm12643, %v12476, %v10166
  %v12735 = vsel %vm12643, %v12478, %v10168
  %v12737 = vsel %vm12643, %v12480, %v10170
  %v12739 = vsel %vm12643, %v12482, %v10172
  %v12741 = vsel %vm12643, %v12484, %v10174
  %v12743 = vsel %vm12643, %v12486, %v10176
  %v12745 = vsel %vm12643, %v12488, %v10178
  %v12747 = vsel %vm12643, %v12490, %v10180
  %v12749 = vsel %vm12643, %v12492, %v10182
  %v12751 = vsel %vm12643, %v12494, %v10184
  %v12753 = vsel %vm12643, %v12496, %v10186
  %v12755 = vsel %vm12643, %v12498, %v10188
  %v12757 = vsel %vm12643, %v12500, %v10190
  %v12759 = vsel %vm12643, %v12502, %v10192
  %v12761 = vsel %vm12643, %v12504, %v10194
  %v12763 = vsel %vm12643, %v12506, %v10196
  %v12765 = vsel %vm12643, %v12508, %v10198
  %v12767 = vsel %vm12643, %v12510, %v10200
  %v12769 = vsel %vm12643, %v12512, %v10202
  %v12771 = vsel %vm12643, %v12514, %v10204
  %v12773 = vsel %vm12643, %v12516, %v10206
  %v12775 = vsel %vm12643, %v12518, %v10208
  %v12777 = vsel %vm12643, %v12520, %v10210
  %v12779 = vsel %vm12643, %v12522, %v10212
  %v12781 = vsel %vm12643, %v12524, %v10214
  %v12783 = vsel %vm12643, %v12526, %v10216
  %v12785 = vsel %vm12643, %v12528, %v10218
  %v12787 = vsel %vm12643, %v12530, %v10220
  %v12789 = vsel %vm12643, %v12532, %v10222
  %v12791 = vsel %vm12643, %v12534, %v10224
  %v12793 = vsel %vm12643, %v12536, %v10226
  %v12795 = vsel %vm12643, %v12538, %v10228
  %v12797 = vsel %vm12643, %v12540, %v10230
  %v12799 = vsel %vm12643, %v12542, %v10232
  %v12801 = vsel %vm12643, %v12544, %v10234
  %v12803 = vsel %vm12643, %v12546, %v10236
  %v12805 = vsel %vm12643, %v12548, %v10238
  %v12807 = vsel %vm12643, %v12550, %v10240
  %v12809 = vsel %vm12643, %v12552, %v10242
  %v12811 = vsel %vm12643, %v12554, %v10244
  %v12813 = vsel %vm12643, %v12556, %v10246
  %v12815 = vsel %vm12643, %v12558, %v10248
  %v12817 = vsel %vm12643, %v12560, %v10250
  %v12819 = vsel %vm12643, %v12562, %v10252
  %v12821 = vsel %vm12643, %v12564, %v10254
  %v12823 = vsel %vm12643, %v12566, %v10256
  %v12825 = vsel %vm12643, %v12568, %v10258
  %v12827 = vsel %vm12643, %v12570, %v10260
  %v12829 = vsel %vm12643, %v12572, %v10262
  %v12831 = vsel %vm12643, %v12574, %v10264
  %v12833 = vsel %vm12643, %v12576, %v10266
  %v12835 = vsel %vm12643, %v12578, %v10268
  %v12837 = vsel %vm12643, %v12580, %v10270
  %v12839 = vsel %vm12643, %v12582, %v10272
  %v12841 = vsel %vm12643, %v12584, %v10274
  %v12843 = vsel %vm12643, %v12586, %v10276
  %v12845 = vsel %vm12643, %v12588, %v10278
  %v12847 = vsel %vm12643, %v12590, %v10280
  %v12849 = vsel %vm12643, %v12592, %v10282
  %v12851 = vsel %vm12643, %v12594, %v10284
  %v12853 = vsel %vm12643, %v12596, %v10286
  %v12855 = vsel %vm12643, %v12598, %v10288
  %v12857 = vsel %vm12643, %v12600, %v10290
  %v12859 = vsel %vm12643, %v12602, %v10292
  %v12861 = vsel %vm12643, %v12604, %v10294
  %v12863 = vsel %vm12643, %v12606, %v10296
  %v12865 = vsel %vm12643, %v12608, %v10298
  %v12867 = vsel %vm12643, %v12610, %v10300
  %v12869 = vsel %vm12643, %v12612, %v10302
  %v12871 = vsel %vm12643, %v12614, %v10304
  %v12873 = vsel %vm12643, %v12616, %v10306
  %v12875 = vsel %vm12643, %v12618, %v10308
  %v12877 = vsel %vm12643, %v12620, %v10310
  %v12879 = vsel %vm12643, %v12622, %v10312
  %v12881 = vsel %vm12643, %v12624, %v10314
  %v12883 = vsel %vm12643, %v12626, %v10316
  %v12885 = vsel %vm12643, %v12628, %v10318
  %v12887 = vsel %vm12643, %v12630, %v10320
  %v12889 = vsel %vm12643, %v12632, %v10322
  %v12891 = vsel %vm12643, %v12634, %v10324
  %v12893 = vsel %vm12643, %v12636, %v10326
  %v12895 = vsel %vm12643, %v12638, %v10328
  %v12897 = vsel %vm12643, %v12640, %v10330
  %v12899 = vsel %vm12643, %v12642, %v10332
  %vm12900 = vcmask 261120
  %v12902 = vsel %vm12900, %v12645, %v10846
  %v12904 = vsel %vm12900, %v12647, %v10848
  %v12906 = vsel %vm12900, %v12649, %v10850
  %v12908 = vsel %vm12900, %v12651, %v10852
  %v12910 = vsel %vm12900, %v12653, %v10854
  %v12912 = vsel %vm12900, %v12655, %v10856
  %v12914 = vsel %vm12900, %v12657, %v10858
  %v12916 = vsel %vm12900, %v12659, %v10860
  %v12918 = vsel %vm12900, %v12661, %v10862
  %v12920 = vsel %vm12900, %v12663, %v10864
  %v12922 = vsel %vm12900, %v12665, %v10866
  %v12924 = vsel %vm12900, %v12667, %v10868
  %v12926 = vsel %vm12900, %v12669, %v10870
  %v12928 = vsel %vm12900, %v12671, %v10872
  %v12930 = vsel %vm12900, %v12673, %v10874
  %v12932 = vsel %vm12900, %v12675, %v10876
  %v12934 = vsel %vm12900, %v12677, %v10878
  %v12936 = vsel %vm12900, %v12679, %v10880
  %v12938 = vsel %vm12900, %v12681, %v10882
  %v12940 = vsel %vm12900, %v12683, %v10884
  %v12942 = vsel %vm12900, %v12685, %v10886
  %v12944 = vsel %vm12900, %v12687, %v10888
  %v12946 = vsel %vm12900, %v12689, %v10890
  %v12948 = vsel %vm12900, %v12691, %v10892
  %v12950 = vsel %vm12900, %v12693, %v10894
  %v12952 = vsel %vm12900, %v12695, %v10896
  %v12954 = vsel %vm12900, %v12697, %v10898
  %v12956 = vsel %vm12900, %v12699, %v10900
  %v12958 = vsel %vm12900, %v12701, %v10902
  %v12960 = vsel %vm12900, %v12703, %v10904
  %v12962 = vsel %vm12900, %v12705, %v10906
  %v12964 = vsel %vm12900, %v12707, %v10908
  %v12966 = vsel %vm12900, %v12709, %v10910
  %v12968 = vsel %vm12900, %v12711, %v10912
  %v12970 = vsel %vm12900, %v12713, %v10914
  %v12972 = vsel %vm12900, %v12715, %v10916
  %v12974 = vsel %vm12900, %v12717, %v10918
  %v12976 = vsel %vm12900, %v12719, %v10920
  %v12978 = vsel %vm12900, %v12721, %v10922
  %v12980 = vsel %vm12900, %v12723, %v10924
  %v12982 = vsel %vm12900, %v12725, %v10926
  %v12984 = vsel %vm12900, %v12727, %v10928
  %v12986 = vsel %vm12900, %v12729, %v10930
  %v12988 = vsel %vm12900, %v12731, %v10932
  %v12990 = vsel %vm12900, %v12733, %v10934
  %v12992 = vsel %vm12900, %v12735, %v10936
  %v12994 = vsel %vm12900, %v12737, %v10938
  %v12996 = vsel %vm12900, %v12739, %v10940
  %v12998 = vsel %vm12900, %v12741, %v10942
  %v13000 = vsel %vm12900, %v12743, %v10944
  %v13002 = vsel %vm12900, %v12745, %v10946
  %v13004 = vsel %vm12900, %v12747, %v10948
  %v13006 = vsel %vm12900, %v12749, %v10950
  %v13008 = vsel %vm12900, %v12751, %v10952
  %v13010 = vsel %vm12900, %v12753, %v10954
  %v13012 = vsel %vm12900, %v12755, %v10956
  %v13014 = vsel %vm12900, %v12757, %v10958
  %v13016 = vsel %vm12900, %v12759, %v10960
  %v13018 = vsel %vm12900, %v12761, %v10962
  %v13020 = vsel %vm12900, %v12763, %v10964
  %v13022 = vsel %vm12900, %v12765, %v10966
  %v13024 = vsel %vm12900, %v12767, %v10968
  %v13026 = vsel %vm12900, %v12769, %v10970
  %v13028 = vsel %vm12900, %v12771, %v10972
  %v13030 = vsel %vm12900, %v12773, %v10974
  %v13032 = vsel %vm12900, %v12775, %v10976
  %v13034 = vsel %vm12900, %v12777, %v10978
  %v13036 = vsel %vm12900, %v12779, %v10980
  %v13038 = vsel %vm12900, %v12781, %v10982
  %v13040 = vsel %vm12900, %v12783, %v10984
  %v13042 = vsel %vm12900, %v12785, %v10986
  %v13044 = vsel %vm12900, %v12787, %v10988
  %v13046 = vsel %vm12900, %v12789, %v10990
  %v13048 = vsel %vm12900, %v12791, %v10992
  %v13050 = vsel %vm12900, %v12793, %v10994
  %v13052 = vsel %vm12900, %v12795, %v10996
  %v13054 = vsel %vm12900, %v12797, %v10998
  %v13056 = vsel %vm12900, %v12799, %v11000
  %v13058 = vsel %vm12900, %v12801, %v11002
  %v13060 = vsel %vm12900, %v12803, %v11004
  %v13062 = vsel %vm12900, %v12805, %v11006
  %v13064 = vsel %vm12900, %v12807, %v11008
  %v13066 = vsel %vm12900, %v12809, %v11010
  %v13068 = vsel %vm12900, %v12811, %v11012
  %v13070 = vsel %vm12900, %v12813, %v11014
  %v13072 = vsel %vm12900, %v12815, %v11016
  %v13074 = vsel %vm12900, %v12817, %v11018
  %v13076 = vsel %vm12900, %v12819, %v11020
  %v13078 = vsel %vm12900, %v12821, %v11022
  %v13080 = vsel %vm12900, %v12823, %v11024
  %v13082 = vsel %vm12900, %v12825, %v11026
  %v13084 = vsel %vm12900, %v12827, %v11028
  %v13086 = vsel %vm12900, %v12829, %v11030
  %v13088 = vsel %vm12900, %v12831, %v11032
  %v13090 = vsel %vm12900, %v12833, %v11034
  %v13092 = vsel %vm12900, %v12835, %v11036
  %v13094 = vsel %vm12900, %v12837, %v11038
  %v13096 = vsel %vm12900, %v12839, %v11040
  %v13098 = vsel %vm12900, %v12841, %v11042
  %v13100 = vsel %vm12900, %v12843, %v11044
  %v13102 = vsel %vm12900, %v12845, %v11046
  %v13104 = vsel %vm12900, %v12847, %v11048
  %v13106 = vsel %vm12900, %v12849, %v11050
  %v13108 = vsel %vm12900, %v12851, %v11052
  %v13110 = vsel %vm12900, %v12853, %v11054
  %v13112 = vsel %vm12900, %v12855, %v11056
  %v13114 = vsel %vm12900, %v12857, %v11058
  %v13116 = vsel %vm12900, %v12859, %v11060
  %v13118 = vsel %vm12900, %v12861, %v11062
  %v13120 = vsel %vm12900, %v12863, %v11064
  %v13122 = vsel %vm12900, %v12865, %v11066
  %v13124 = vsel %vm12900, %v12867, %v11068
  %v13126 = vsel %vm12900, %v12869, %v11070
  %v13128 = vsel %vm12900, %v12871, %v11072
  %v13130 = vsel %vm12900, %v12873, %v11074
  %v13132 = vsel %vm12900, %v12875, %v11076
  %v13134 = vsel %vm12900, %v12877, %v11078
  %v13136 = vsel %vm12900, %v12879, %v11080
  %v13138 = vsel %vm12900, %v12881, %v11082
  %v13140 = vsel %vm12900, %v12883, %v11084
  %v13142 = vsel %vm12900, %v12885, %v11086
  %v13144 = vsel %vm12900, %v12887, %v11088
  %v13146 = vsel %vm12900, %v12889, %v11090
  %v13148 = vsel %vm12900, %v12891, %v11092
  %v13150 = vsel %vm12900, %v12893, %v11094
  %v13152 = vsel %vm12900, %v12895, %v11096
  %v13154 = vsel %vm12900, %v12897, %v11098
  %v13156 = vsel %vm12900, %v12899, %v11100
  %v13157 = vld [vmem:[%s1] sm:$0xf]
  %v13158 = vld [vmem:[%s1 + $0x4] sm:$0xf]
  %v13159 = vld [vmem:[%s1 + $0x8] sm:$0xf]
  %v13160 = vld [vmem:[%s1 + $0xc] sm:$0xf]
  %v13161 = vld [vmem:[%s1 + $0x10] sm:$0x3]
  %v13162 = vld [vmem:[%s2] sm:$0x1]
  %v13164 = vlaneseq
  %v13165 = vshrl.u32 %v13164, 7
  %v13166 = vsub.s32 0, %v13165
  %v13167 = vrot.slane %v13162, %v13166
  %v13174 = vunpack.c.l.b16 %v13157
  %v13175 = vunpack.c.l.b16 %v13158
  %v13176 = vunpack.c.l.b16 %v13159
  %v13177 = vunpack.c.l.b16 %v13160
  %v13178 = vunpack.c.l.b16 %v13161
  %v13179 = vpack.c.b16 %v13175, %v13174
  %v13180 = vpack.c.b16 %v13177, %v13176
  %v13181 = vpack.c.b16 %v13178, %v13178
  %vm13184 = vcmask 293888
  %v13185 = vsel %vm13184, %v12902, 0
  %v13187 = vsel %vm13184, %v12904, 0
  %v13189 = vsel %vm13184, %v12906, 0
  %v13191 = vsel %vm13184, %v12908, 0
  %v13193 = vsel %vm13184, %v12910, 0
  %v13195 = vsel %vm13184, %v12912, 0
  %v13197 = vsel %vm13184, %v12914, 0
  %v13199 = vsel %vm13184, %v12916, 0
  %v13201 = vsel %vm13184, %v12918, 0
  %v13203 = vsel %vm13184, %v12920, 0
  %v13205 = vsel %vm13184, %v12922, 0
  %v13207 = vsel %vm13184, %v12924, 0
  %v13209 = vsel %vm13184, %v12926, 0
  %v13211 = vsel %vm13184, %v12928, 0
  %v13213 = vsel %vm13184, %v12930, 0
  %v13215 = vsel %vm13184, %v12932, 0
  %v13217 = vsel %vm13184, %v12934, 0
  %v13219 = vsel %vm13184, %v12936, 0
  %v13221 = vsel %vm13184, %v12938, 0
  %v13223 = vsel %vm13184, %v12940, 0
  %v13225 = vsel %vm13184, %v12942, 0
  %v13227 = vsel %vm13184, %v12944, 0
  %v13229 = vsel %vm13184, %v12946, 0
  %v13231 = vsel %vm13184, %v12948, 0
  %v13233 = vsel %vm13184, %v12950, 0
  %v13235 = vsel %vm13184, %v12952, 0
  %v13237 = vsel %vm13184, %v12954, 0
  %v13239 = vsel %vm13184, %v12956, 0
  %v13241 = vsel %vm13184, %v12958, 0
  %v13243 = vsel %vm13184, %v12960, 0
  %v13245 = vsel %vm13184, %v12962, 0
  %v13247 = vsel %vm13184, %v12964, 0
  %v13249 = vsel %vm13184, %v12966, 0
  %v13251 = vsel %vm13184, %v12968, 0
  %v13253 = vsel %vm13184, %v12970, 0
  %v13255 = vsel %vm13184, %v12972, 0
  %v13257 = vsel %vm13184, %v12974, 0
  %v13259 = vsel %vm13184, %v12976, 0
  %v13261 = vsel %vm13184, %v12978, 0
  %v13263 = vsel %vm13184, %v12980, 0
  %v13265 = vsel %vm13184, %v12982, 0
  %v13267 = vsel %vm13184, %v12984, 0
  %v13269 = vsel %vm13184, %v12986, 0
  %v13271 = vsel %vm13184, %v12988, 0
  %v13273 = vsel %vm13184, %v12990, 0
  %v13275 = vsel %vm13184, %v12992, 0
  %v13277 = vsel %vm13184, %v12994, 0
  %v13279 = vsel %vm13184, %v12996, 0
  %v13281 = vsel %vm13184, %v12998, 0
  %v13283 = vsel %vm13184, %v13000, 0
  %v13285 = vsel %vm13184, %v13002, 0
  %v13287 = vsel %vm13184, %v13004, 0
  %v13289 = vsel %vm13184, %v13006, 0
  %v13291 = vsel %vm13184, %v13008, 0
  %v13293 = vsel %vm13184, %v13010, 0
  %v13295 = vsel %vm13184, %v13012, 0
  %v13297 = vsel %vm13184, %v13014, 0
  %v13299 = vsel %vm13184, %v13016, 0
  %v13301 = vsel %vm13184, %v13018, 0
  %v13303 = vsel %vm13184, %v13020, 0
  %v13305 = vsel %vm13184, %v13022, 0
  %v13307 = vsel %vm13184, %v13024, 0
  %v13309 = vsel %vm13184, %v13026, 0
  %v13311 = vsel %vm13184, %v13028, 0
  %v13313 = vsel %vm13184, %v13030, 0
  %v13315 = vsel %vm13184, %v13032, 0
  %v13317 = vsel %vm13184, %v13034, 0
  %v13319 = vsel %vm13184, %v13036, 0
  %v13321 = vsel %vm13184, %v13038, 0
  %v13323 = vsel %vm13184, %v13040, 0
  %v13325 = vsel %vm13184, %v13042, 0
  %v13327 = vsel %vm13184, %v13044, 0
  %v13329 = vsel %vm13184, %v13046, 0
  %v13331 = vsel %vm13184, %v13048, 0
  %v13333 = vsel %vm13184, %v13050, 0
  %v13335 = vsel %vm13184, %v13052, 0
  %v13337 = vsel %vm13184, %v13054, 0
  %v13339 = vsel %vm13184, %v13056, 0
  %v13341 = vsel %vm13184, %v13058, 0
  %v13343 = vsel %vm13184, %v13060, 0
  %v13345 = vsel %vm13184, %v13062, 0
  %v13347 = vsel %vm13184, %v13064, 0
  %v13349 = vsel %vm13184, %v13066, 0
  %v13351 = vsel %vm13184, %v13068, 0
  %v13353 = vsel %vm13184, %v13070, 0
  %v13355 = vsel %vm13184, %v13072, 0
  %v13357 = vsel %vm13184, %v13074, 0
  %v13359 = vsel %vm13184, %v13076, 0
  %v13361 = vsel %vm13184, %v13078, 0
  %v13363 = vsel %vm13184, %v13080, 0
  %v13365 = vsel %vm13184, %v13082, 0
  %v13367 = vsel %vm13184, %v13084, 0
  %v13369 = vsel %vm13184, %v13086, 0
  %v13371 = vsel %vm13184, %v13088, 0
  %v13373 = vsel %vm13184, %v13090, 0
  %v13375 = vsel %vm13184, %v13092, 0
  %v13377 = vsel %vm13184, %v13094, 0
  %v13379 = vsel %vm13184, %v13096, 0
  %v13381 = vsel %vm13184, %v13098, 0
  %v13383 = vsel %vm13184, %v13100, 0
  %v13385 = vsel %vm13184, %v13102, 0
  %v13387 = vsel %vm13184, %v13104, 0
  %v13389 = vsel %vm13184, %v13106, 0
  %v13391 = vsel %vm13184, %v13108, 0
  %v13393 = vsel %vm13184, %v13110, 0
  %v13395 = vsel %vm13184, %v13112, 0
  %v13397 = vsel %vm13184, %v13114, 0
  %v13399 = vsel %vm13184, %v13116, 0
  %v13401 = vsel %vm13184, %v13118, 0
  %v13403 = vsel %vm13184, %v13120, 0
  %v13405 = vsel %vm13184, %v13122, 0
  %v13407 = vsel %vm13184, %v13124, 0
  %v13409 = vsel %vm13184, %v13126, 0
  %v13411 = vsel %vm13184, %v13128, 0
  %v13413 = vsel %vm13184, %v13130, 0
  %v13415 = vsel %vm13184, %v13132, 0
  %v13417 = vsel %vm13184, %v13134, 0
  %v13419 = vsel %vm13184, %v13136, 0
  %v13421 = vsel %vm13184, %v13138, 0
  %v13423 = vsel %vm13184, %v13140, 0
  %v13425 = vsel %vm13184, %v13142, 0
  %v13427 = vsel %vm13184, %v13144, 0
  %v13429 = vsel %vm13184, %v13146, 0
  %v13431 = vsel %vm13184, %v13148, 0
  %v13433 = vsel %vm13184, %v13150, 0
  %v13435 = vsel %vm13184, %v13152, 0
  %v13437 = vsel %vm13184, %v13154, 0
  %v13439 = vsel %vm13184, %v13156, 0
  %vm13441 = vcmask 1041408
  %v13443 = vsel %vm13441, %v13181, 0
  %13445 = vmatprep.subr.bf16.mxu0 0
  %13446 = vmatpush1.bf16.msra.mxu0 %v13179
  %13447 = vmatprep.subr.bf16.mxu0 0
  %13448 = vmatpush1.bf16.msra.mxu0 %v13180
  %13449 = vmatprep.subr.bf16.mxu0 0
  %13450 = vmatpush1.bf16.msra.mxu0 %v13443
  %13451 = vmatprep.subr.bf16.mxu0 0
  %13452 = vmatpush1.bf16.msra.mxu0 0
  %13453 = vmatprep.subr.bf16.mxu0 0
  %13454 = vmatpush1.bf16.msra.mxu0 0
  %13455 = vmatprep.subr.bf16.mxu0 0
  %13456 = vmatpush1.bf16.msra.mxu0 0
  %13457 = vmatprep.subr.bf16.mxu0 0
  %13458 = vmatpush1.bf16.msra.mxu0 0
  %13459 = vmatprep.subr.bf16.mxu0 0
  %13460 = vmatpush1.bf16.msra.mxu0 0
  %13461 = vmatprep.subr.bf16.mxu0 0
  %13462 = vmatpush1.bf16.msra.mxu0 0
  %13463 = vmatprep.subr.bf16.mxu0 0
  %13464 = vmatpush1.bf16.msra.mxu0 0
  %13465 = vmatprep.subr.bf16.mxu0 0
  %13466 = vmatpush1.bf16.msra.mxu0 0
  %13467 = vmatprep.subr.bf16.mxu0 0
  %13468 = vmatpush1.bf16.msra.mxu0 0
  %13469 = vmatprep.subr.bf16.mxu0 0
  %13470 = vmatpush1.bf16.msra.mxu0 0
  %13471 = vmatprep.subr.bf16.mxu0 0
  %13472 = vmatpush1.bf16.msra.mxu0 0
  %13473 = vmatprep.subr.bf16.mxu0 0
  %13474 = vmatpush1.bf16.msra.mxu0 0
  %13475 = vmatprep.subr.bf16.mxu0 0
  %13476 = vmatpush1.bf16.msra.mxu0 0
  %13477 = vmatprep.mubr.bf16.mxu0 0
  %13478 = vmatmul.mubr.bf16.gmra.mrb[0].mxu0 %v13185
  %v13479 = vpop.f32.mrb[0].mxu0
  %v13480 = vadd.f32 %v13167, %v13479
  %v13481 = vpop.f32.mrb[0].mxu0
  %v13482 = vpop.f32.mrb[0].mxu0
  %v13483 = vadd.f32 %v13167, %v13482
  %v13484 = vpop.f32.mrb[0].mxu0
  %13485 = vmatprep.mubr.bf16.mxu0 0
  %13486 = vmatmul.mubr.bf16.gmra.mrb[0].mxu0 %v13187
  %v13487 = vpop.f32.mrb[0].mxu0
  %v13488 = vadd.f32 %v13167, %v13487
  %v13489 = vpop.f32.mrb[0].mxu0
  %v13490 = vpop.f32.mrb[0].mxu0
  %v13491 = vadd.f32 %v13167, %v13490
  %v13492 = vpop.f32.mrb[0].mxu0
  %13493 = vmatprep.mubr.bf16.mxu0 0
  %13494 = vmatmul.mubr.bf16.gmra.mrb[0].mxu0 %v13189
  %v13495 = vpop.f32.mrb[0].mxu0
  %v13496 = vadd.f32 %v13167, %v13495
  %v13497 = vpop.f32.mrb[0].mxu0
  %v13498 = vpop.f32.mrb[0].mxu0
  %v13499 = vadd.f32 %v13167, %v13498
  %v13500 = vpop.f32.mrb[0].mxu0
  %13501 = vmatprep.mubr.bf16.mxu0 0
  %13502 = vmatmul.mubr.bf16.gmra.mrb[0].mxu0 %v13191
  %v13503 = vpop.f32.mrb[0].mxu0
  %v13504 = vadd.f32 %v13167, %v13503
  %v13505 = vpop.f32.mrb[0].mxu0
  %v13506 = vpop.f32.mrb[0].mxu0
  %v13507 = vadd.f32 %v13167, %v13506
  %v13508 = vpop.f32.mrb[0].mxu0
  %13509 = vmatprep.mubr.bf16.mxu0 0
  %13510 = vmatmul.mubr.bf16.gmra.mrb[0].mxu0 %v13193
  %v13511 = vpop.f32.mrb[0].mxu0
  %v13512 = vadd.f32 %v13167, %v13511
  %v13513 = vpop.f32.mrb[0].mxu0
  %v13514 = vpop.f32.mrb[0].mxu0
  %v13515 = vadd.f32 %v13167, %v13514
  %v13516 = vpop.f32.mrb[0].mxu0
  %13517 = vmatprep.mubr.bf16.mxu0 0
  %13518 = vmatmul.mubr.bf16.gmra.mrb[0].mxu0 %v13195
  %v13519 = vpop.f32.mrb[0].mxu0
  %v13520 = vadd.f32 %v13167, %v13519
  %v13521 = vpop.f32.mrb[0].mxu0
  %v13522 = vpop.f32.mrb[0].mxu0
  %v13523 = vadd.f32 %v13167, %v13522
  %v13524 = vpop.f32.mrb[0].mxu0
  %13525 = vmatprep.mubr.bf16.mxu0 0
  %13526 = vmatmul.mubr.bf16.gmra.mrb[0].mxu0 %v13197
  %v13527 = vpop.f32.mrb[0].mxu0
  %v13528 = vadd.f32 %v13167, %v13527
  %v13529 = vpop.f32.mrb[0].mxu0
  %v13530 = vpop.f32.mrb[0].mxu0
  %v13531 = vadd.f32 %v13167, %v13530
  %v13532 = vpop.f32.mrb[0].mxu0
  %13533 = vmatprep.mubr.bf16.mxu0 0
  %13534 = vmatmul.mubr.bf16.gmra.mrb[0].mxu0 %v13199
  %v13535 = vpop.f32.mrb[0].mxu0
  %v13536 = vadd.f32 %v13167, %v13535
  %v13537 = vpop.f32.mrb[0].mxu0
  %v13538 = vpop.f32.mrb[0].mxu0
  %v13539 = vadd.f32 %v13167, %v13538
  %v13540 = vpop.f32.mrb[0].mxu0
  %13541 = vmatprep.mubr.bf16.mxu0 0
  %13542 = vmatmul.mubr.bf16.gmra.mrb[0].mxu0 %v13201
  %v13543 = vpop.f32.mrb[0].mxu0
  %v13544 = vadd.f32 %v13167, %v13543
  %v13545 = vpop.f32.mrb[0].mxu0
  %v13546 = vpop.f32.mrb[0].mxu0
  %v13547 = vadd.f32 %v13167, %v13546
  %v13548 = vpop.f32.mrb[0].mxu0
  %13549 = vmatprep.mubr.bf16.mxu0 0
  %13550 = vmatmul.mubr.bf16.gmra.mrb[0].mxu0 %v13203
  %v13551 = vpop.f32.mrb[0].mxu0
  %v13552 = vadd.f32 %v13167, %v13551
  %v13553 = vpop.f32.mrb[0].mxu0
  %v13554 = vpop.f32.mrb[0].mxu0
  %v13555 = vadd.f32 %v13167, %v13554
  %v13556 = vpop.f32.mrb[0].mxu0
  %13557 = vmatprep.mubr.bf16.mxu0 0
  %13558 = vmatmul.mubr.bf16.gmra.mrb[0].mxu0 %v13205
  %v13559 = vpop.f32.mrb[0].mxu0
  %v13560 = vadd.f32 %v13167, %v13559
  %v13561 = vpop.f32.mrb[0].mxu0
  %v13562 = vpop.f32.mrb[0].mxu0
  %v13563 = vadd.f32 %v13167, %v13562
  %v13564 = vpop.f32.mrb[0].mxu0
  %13565 = vmatprep.mubr.bf16.mxu0 0
  %13566 = vmatmul.mubr.bf16.gmra.mrb[0].mxu0 %v13207
  %v13567 = vpop.f32.mrb[0].mxu0
  %v13568 = vadd.f32 %v13167, %v13567
  %v13569 = vpop.f32.mrb[0].mxu0
  %v13570 = vpop.f32.mrb[0].mxu0
  %v13571 = vadd.f32 %v13167, %v13570
  %v13572 = vpop.f32.mrb[0].mxu0
  %13573 = vmatprep.mubr.bf16.mxu0 0
  %13574 = vmatmul.mubr.bf16.gmra.mrb[0].mxu0 %v13209
  %v13575 = vpop.f32.mrb[0].mxu0
  %v13576 = vadd.f32 %v13167, %v13575
  %v13577 = vpop.f32.mrb[0].mxu0
  %v13578 = vpop.f32.mrb[0].mxu0
  %v13579 = vadd.f32 %v13167, %v13578
  %v13580 = vpop.f32.mrb[0].mxu0
  %13581 = vmatprep.mubr.bf16.mxu0 0
  %13582 = vmatmul.mubr.bf16.gmra.mrb[0].mxu0 %v13211
  %v13583 = vpop.f32.mrb[0].mxu0
  %v13584 = vadd.f32 %v13167, %v13583
  %v13585 = vpop.f32.mrb[0].mxu0
  %v13586 = vpop.f32.mrb[0].mxu0
  %v13587 = vadd.f32 %v13167, %v13586
  %v13588 = vpop.f32.mrb[0].mxu0
  %13589 = vmatprep.mubr.bf16.mxu0 0
  %13590 = vmatmul.mubr.bf16.gmra.mrb[0].mxu0 %v13213
  %v13591 = vpop.f32.mrb[0].mxu0
  %v13592 = vadd.f32 %v13167, %v13591
  %v13593 = vpop.f32.mrb[0].mxu0
  %v13594 = vpop.f32.mrb[0].mxu0
  %v13595 = vadd.f32 %v13167, %v13594
  %v13596 = vpop.f32.mrb[0].mxu0
  %13597 = vmatprep.mubr.bf16.mxu0 0
  %13598 = vmatmul.mubr.bf16.gmra.mrb[0].mxu0 %v13215
  %v13599 = vpop.f32.mrb[0].mxu0
  %v13600 = vadd.f32 %v13167, %v13599
  %v13601 = vpop.f32.mrb[0].mxu0
  %v13602 = vpop.f32.mrb[0].mxu0
  %v13603 = vadd.f32 %v13167, %v13602
  %v13604 = vpop.f32.mrb[0].mxu0
  %13605 = vmatprep.mubr.bf16.mxu0 0
  %13606 = vmatmul.mubr.bf16.gmra.mrb[0].mxu0 %v13217
  %v13607 = vpop.f32.mrb[0].mxu0
  %v13608 = vadd.f32 %v13167, %v13607
  %v13609 = vpop.f32.mrb[0].mxu0
  %v13610 = vpop.f32.mrb[0].mxu0
  %v13611 = vadd.f32 %v13167, %v13610
  %v13612 = vpop.f32.mrb[0].mxu0
  %13613 = vmatprep.mubr.bf16.mxu0 0
  %13614 = vmatmul.mubr.bf16.gmra.mrb[0].mxu0 %v13219
  %v13615 = vpop.f32.mrb[0].mxu0
  %v13616 = vadd.f32 %v13167, %v13615
  %v13617 = vpop.f32.mrb[0].mxu0
  %v13618 = vpop.f32.mrb[0].mxu0
  %v13619 = vadd.f32 %v13167, %v13618
  %v13620 = vpop.f32.mrb[0].mxu0
  %13621 = vmatprep.mubr.bf16.mxu0 0
  %13622 = vmatmul.mubr.bf16.gmra.mrb[0].mxu0 %v13221
  %v13623 = vpop.f32.mrb[0].mxu0
  %v13624 = vadd.f32 %v13167, %v13623
  %v13625 = vpop.f32.mrb[0].mxu0
  %v13626 = vpop.f32.mrb[0].mxu0
  %v13627 = vadd.f32 %v13167, %v13626
  %v13628 = vpop.f32.mrb[0].mxu0
  %13629 = vmatprep.mubr.bf16.mxu0 0
  %13630 = vmatmul.mubr.bf16.gmra.mrb[0].mxu0 %v13223
  %v13631 = vpop.f32.mrb[0].mxu0
  %v13632 = vadd.f32 %v13167, %v13631
  %v13633 = vpop.f32.mrb[0].mxu0
  %v13634 = vpop.f32.mrb[0].mxu0
  %v13635 = vadd.f32 %v13167, %v13634
  %v13636 = vpop.f32.mrb[0].mxu0
  %13637 = vmatprep.mubr.bf16.mxu0 0
  %13638 = vmatmul.mubr.bf16.gmra.mrb[0].mxu0 %v13225
  %v13639 = vpop.f32.mrb[0].mxu0
  %v13640 = vadd.f32 %v13167, %v13639
  %v13641 = vpop.f32.mrb[0].mxu0
  %v13642 = vpop.f32.mrb[0].mxu0
  %v13643 = vadd.f32 %v13167, %v13642
  %v13644 = vpop.f32.mrb[0].mxu0
  %13645 = vmatprep.mubr.bf16.mxu0 0
  %13646 = vmatmul.mubr.bf16.gmra.mrb[0].mxu0 %v13227
  %v13647 = vpop.f32.mrb[0].mxu0
  %v13648 = vadd.f32 %v13167, %v13647
  %v13649 = vpop.f32.mrb[0].mxu0
  %v13650 = vpop.f32.mrb[0].mxu0
  %v13651 = vadd.f32 %v13167, %v13650
  %v13652 = vpop.f32.mrb[0].mxu0
  %13653 = vmatprep.mubr.bf16.mxu0 0
  %13654 = vmatmul.mubr.bf16.gmra.mrb[0].mxu0 %v13229
  %v13655 = vpop.f32.mrb[0].mxu0
  %v13656 = vadd.f32 %v13167, %v13655
  %v13657 = vpop.f32.mrb[0].mxu0
  %v13658 = vpop.f32.mrb[0].mxu0
  %v13659 = vadd.f32 %v13167, %v13658
  %v13660 = vpop.f32.mrb[0].mxu0
  %13661 = vmatprep.mubr.bf16.mxu0 0
  %13662 = vmatmul.mubr.bf16.gmra.mrb[0].mxu0 %v13231
  %v13663 = vpop.f32.mrb[0].mxu0
  %v13664 = vadd.f32 %v13167, %v13663
  %v13665 = vpop.f32.mrb[0].mxu0
  %v13666 = vpop.f32.mrb[0].mxu0
  %v13667 = vadd.f32 %v13167, %v13666
  %v13668 = vpop.f32.mrb[0].mxu0
  %13669 = vmatprep.mubr.bf16.mxu0 0
  %13670 = vmatmul.mubr.bf16.gmra.mrb[0].mxu0 %v13233
  %v13671 = vpop.f32.mrb[0].mxu0
  %v13672 = vadd.f32 %v13167, %v13671
  %v13673 = vpop.f32.mrb[0].mxu0
  %v13674 = vpop.f32.mrb[0].mxu0
  %v13675 = vadd.f32 %v13167, %v13674
  %v13676 = vpop.f32.mrb[0].mxu0
  %13677 = vmatprep.mubr.bf16.mxu0 0
  %13678 = vmatmul.mubr.bf16.gmra.mrb[0].mxu0 %v13235
  %v13679 = vpop.f32.mrb[0].mxu0
  %v13680 = vadd.f32 %v13167, %v13679
  %v13681 = vpop.f32.mrb[0].mxu0
  %v13682 = vpop.f32.mrb[0].mxu0
  %v13683 = vadd.f32 %v13167, %v13682
  %v13684 = vpop.f32.mrb[0].mxu0
  %13685 = vmatprep.mubr.bf16.mxu0 0
  %13686 = vmatmul.mubr.bf16.gmra.mrb[0].mxu0 %v13237
  %v13687 = vpop.f32.mrb[0].mxu0
  %v13688 = vadd.f32 %v13167, %v13687
  %v13689 = vpop.f32.mrb[0].mxu0
  %v13690 = vpop.f32.mrb[0].mxu0
  %v13691 = vadd.f32 %v13167, %v13690
  %v13692 = vpop.f32.mrb[0].mxu0
  %13693 = vmatprep.mubr.bf16.mxu0 0
  %13694 = vmatmul.mubr.bf16.gmra.mrb[0].mxu0 %v13239
  %v13695 = vpop.f32.mrb[0].mxu0
  %v13696 = vadd.f32 %v13167, %v13695
  %v13697 = vpop.f32.mrb[0].mxu0
  %v13698 = vpop.f32.mrb[0].mxu0
  %v13699 = vadd.f32 %v13167, %v13698
  %v13700 = vpop.f32.mrb[0].mxu0
  %13701 = vmatprep.mubr.bf16.mxu0 0
  %13702 = vmatmul.mubr.bf16.gmra.mrb[0].mxu0 %v13241
  %v13703 = vpop.f32.mrb[0].mxu0
  %v13704 = vadd.f32 %v13167, %v13703
  %v13705 = vpop.f32.mrb[0].mxu0
  %v13706 = vpop.f32.mrb[0].mxu0
  %v13707 = vadd.f32 %v13167, %v13706
  %v13708 = vpop.f32.mrb[0].mxu0
  %13709 = vmatprep.mubr.bf16.mxu0 0
  %13710 = vmatmul.mubr.bf16.gmra.mrb[0].mxu0 %v13243
  %v13711 = vpop.f32.mrb[0].mxu0
  %v13712 = vadd.f32 %v13167, %v13711
  %v13713 = vpop.f32.mrb[0].mxu0
  %v13714 = vpop.f32.mrb[0].mxu0
  %v13715 = vadd.f32 %v13167, %v13714
  %v13716 = vpop.f32.mrb[0].mxu0
  %13717 = vmatprep.mubr.bf16.mxu0 0
  %13718 = vmatmul.mubr.bf16.gmra.mrb[0].mxu0 %v13245
  %v13719 = vpop.f32.mrb[0].mxu0
  %v13720 = vadd.f32 %v13167, %v13719
  %v13721 = vpop.f32.mrb[0].mxu0
  %v13722 = vpop.f32.mrb[0].mxu0
  %v13723 = vadd.f32 %v13167, %v13722
  %v13724 = vpop.f32.mrb[0].mxu0
  %13725 = vmatprep.mubr.bf16.mxu0 0
  %13726 = vmatmul.mubr.bf16.gmra.mrb[0].mxu0 %v13247
  %v13727 = vpop.f32.mrb[0].mxu0
  %v13728 = vadd.f32 %v13167, %v13727
  %v13729 = vpop.f32.mrb[0].mxu0
  %v13730 = vpop.f32.mrb[0].mxu0
  %v13731 = vadd.f32 %v13167, %v13730
  %v13732 = vpop.f32.mrb[0].mxu0
  %13733 = vmatprep.mubr.bf16.mxu0 0
  %13734 = vmatmul.mubr.bf16.gmra.mrb[0].mxu0 %v13249
  %v13735 = vpop.f32.mrb[0].mxu0
  %v13736 = vadd.f32 %v13167, %v13735
  %v13737 = vpop.f32.mrb[0].mxu0
  %v13738 = vpop.f32.mrb[0].mxu0
  %v13739 = vadd.f32 %v13167, %v13738
  %v13740 = vpop.f32.mrb[0].mxu0
  %13741 = vmatprep.mubr.bf16.mxu0 0
  %13742 = vmatmul.mubr.bf16.gmra.mrb[0].mxu0 %v13251
  %v13743 = vpop.f32.mrb[0].mxu0
  %v13744 = vadd.f32 %v13167, %v13743
  %v13745 = vpop.f32.mrb[0].mxu0
  %v13746 = vpop.f32.mrb[0].mxu0
  %v13747 = vadd.f32 %v13167, %v13746
  %v13748 = vpop.f32.mrb[0].mxu0
  %13749 = vmatprep.mubr.bf16.mxu0 0
  %13750 = vmatmul.mubr.bf16.gmra.mrb[0].mxu0 %v13253
  %v13751 = vpop.f32.mrb[0].mxu0
  %v13752 = vadd.f32 %v13167, %v13751
  %v13753 = vpop.f32.mrb[0].mxu0
  %v13754 = vpop.f32.mrb[0].mxu0
  %v13755 = vadd.f32 %v13167, %v13754
  %v13756 = vpop.f32.mrb[0].mxu0
  %13757 = vmatprep.mubr.bf16.mxu0 0
  %13758 = vmatmul.mubr.bf16.gmra.mrb[0].mxu0 %v13255
  %v13759 = vpop.f32.mrb[0].mxu0
  %v13760 = vadd.f32 %v13167, %v13759
  %v13761 = vpop.f32.mrb[0].mxu0
  %v13762 = vpop.f32.mrb[0].mxu0
  %v13763 = vadd.f32 %v13167, %v13762
  %v13764 = vpop.f32.mrb[0].mxu0
  %13765 = vmatprep.mubr.bf16.mxu0 0
  %13766 = vmatmul.mubr.bf16.gmra.mrb[0].mxu0 %v13257
  %v13767 = vpop.f32.mrb[0].mxu0
  %v13768 = vadd.f32 %v13167, %v13767
  %v13769 = vpop.f32.mrb[0].mxu0
  %v13770 = vpop.f32.mrb[0].mxu0
  %v13771 = vadd.f32 %v13167, %v13770
  %v13772 = vpop.f32.mrb[0].mxu0
  %13773 = vmatprep.mubr.bf16.mxu0 0
  %13774 = vmatmul.mubr.bf16.gmra.mrb[0].mxu0 %v13259
  %v13775 = vpop.f32.mrb[0].mxu0
  %v13776 = vadd.f32 %v13167, %v13775
  %v13777 = vpop.f32.mrb[0].mxu0
  %v13778 = vpop.f32.mrb[0].mxu0
  %v13779 = vadd.f32 %v13167, %v13778
  %v13780 = vpop.f32.mrb[0].mxu0
  %13781 = vmatprep.mubr.bf16.mxu0 0
  %13782 = vmatmul.mubr.bf16.gmra.mrb[0].mxu0 %v13261
  %v13783 = vpop.f32.mrb[0].mxu0
  %v13784 = vadd.f32 %v13167, %v13783
  %v13785 = vpop.f32.mrb[0].mxu0
  %v13786 = vpop.f32.mrb[0].mxu0
  %v13787 = vadd.f32 %v13167, %v13786
  %v13788 = vpop.f32.mrb[0].mxu0
  %13789 = vmatprep.mubr.bf16.mxu0 0
  %13790 = vmatmul.mubr.bf16.gmra.mrb[0].mxu0 %v13263
  %v13791 = vpop.f32.mrb[0].mxu0
  %v13792 = vadd.f32 %v13167, %v13791
  %v13793 = vpop.f32.mrb[0].mxu0
  %v13794 = vpop.f32.mrb[0].mxu0
  %v13795 = vadd.f32 %v13167, %v13794
  %v13796 = vpop.f32.mrb[0].mxu0
  %13797 = vmatprep.mubr.bf16.mxu0 0
  %13798 = vmatmul.mubr.bf16.gmra.mrb[0].mxu0 %v13265
  %v13799 = vpop.f32.mrb[0].mxu0
  %v13800 = vadd.f32 %v13167, %v13799
  %v13801 = vpop.f32.mrb[0].mxu0
  %v13802 = vpop.f32.mrb[0].mxu0
  %v13803 = vadd.f32 %v13167, %v13802
  %v13804 = vpop.f32.mrb[0].mxu0
  %13805 = vmatprep.mubr.bf16.mxu0 0
  %13806 = vmatmul.mubr.bf16.gmra.mrb[0].mxu0 %v13267
  %v13807 = vpop.f32.mrb[0].mxu0
  %v13808 = vadd.f32 %v13167, %v13807
  %v13809 = vpop.f32.mrb[0].mxu0
  %v13810 = vpop.f32.mrb[0].mxu0
  %v13811 = vadd.f32 %v13167, %v13810
  %v13812 = vpop.f32.mrb[0].mxu0
  %13813 = vmatprep.mubr.bf16.mxu0 0
  %13814 = vmatmul.mubr.bf16.gmra.mrb[0].mxu0 %v13269
  %v13815 = vpop.f32.mrb[0].mxu0
  %v13816 = vadd.f32 %v13167, %v13815
  %v13817 = vpop.f32.mrb[0].mxu0
  %v13818 = vpop.f32.mrb[0].mxu0
  %v13819 = vadd.f32 %v13167, %v13818
  %v13820 = vpop.f32.mrb[0].mxu0
  %13821 = vmatprep.mubr.bf16.mxu0 0
  %13822 = vmatmul.mubr.bf16.gmra.mrb[0].mxu0 %v13271
  %v13823 = vpop.f32.mrb[0].mxu0
  %v13824 = vadd.f32 %v13167, %v13823
  %v13825 = vpop.f32.mrb[0].mxu0
  %v13826 = vpop.f32.mrb[0].mxu0
  %v13827 = vadd.f32 %v13167, %v13826
  %v13828 = vpop.f32.mrb[0].mxu0
  %13829 = vmatprep.mubr.bf16.mxu0 0
  %13830 = vmatmul.mubr.bf16.gmra.mrb[0].mxu0 %v13273
  %v13831 = vpop.f32.mrb[0].mxu0
  %v13832 = vadd.f32 %v13167, %v13831
  %v13833 = vpop.f32.mrb[0].mxu0
  %v13834 = vpop.f32.mrb[0].mxu0
  %v13835 = vadd.f32 %v13167, %v13834
  %v13836 = vpop.f32.mrb[0].mxu0
  %13837 = vmatprep.mubr.bf16.mxu0 0
  %13838 = vmatmul.mubr.bf16.gmra.mrb[0].mxu0 %v13275
  %v13839 = vpop.f32.mrb[0].mxu0
  %v13840 = vadd.f32 %v13167, %v13839
  %v13841 = vpop.f32.mrb[0].mxu0
  %v13842 = vpop.f32.mrb[0].mxu0
  %v13843 = vadd.f32 %v13167, %v13842
  %v13844 = vpop.f32.mrb[0].mxu0
  %13845 = vmatprep.mubr.bf16.mxu0 0
  %13846 = vmatmul.mubr.bf16.gmra.mrb[0].mxu0 %v13277
  %v13847 = vpop.f32.mrb[0].mxu0
  %v13848 = vadd.f32 %v13167, %v13847
  %v13849 = vpop.f32.mrb[0].mxu0
  %v13850 = vpop.f32.mrb[0].mxu0
  %v13851 = vadd.f32 %v13167, %v13850
  %v13852 = vpop.f32.mrb[0].mxu0
  %13853 = vmatprep.mubr.bf16.mxu0 0
  %13854 = vmatmul.mubr.bf16.gmra.mrb[0].mxu0 %v13279
  %v13855 = vpop.f32.mrb[0].mxu0
  %v13856 = vadd.f32 %v13167, %v13855
  %v13857 = vpop.f32.mrb[0].mxu0
  %v13858 = vpop.f32.mrb[0].mxu0
  %v13859 = vadd.f32 %v13167, %v13858
  %v13860 = vpop.f32.mrb[0].mxu0
  %13861 = vmatprep.mubr.bf16.mxu0 0
  %13862 = vmatmul.mubr.bf16.gmra.mrb[0].mxu0 %v13281
  %v13863 = vpop.f32.mrb[0].mxu0
  %v13864 = vadd.f32 %v13167, %v13863
  %v13865 = vpop.f32.mrb[0].mxu0
  %v13866 = vpop.f32.mrb[0].mxu0
  %v13867 = vadd.f32 %v13167, %v13866
  %v13868 = vpop.f32.mrb[0].mxu0
  %13869 = vmatprep.mubr.bf16.mxu0 0
  %13870 = vmatmul.mubr.bf16.gmra.mrb[0].mxu0 %v13283
  %v13871 = vpop.f32.mrb[0].mxu0
  %v13872 = vadd.f32 %v13167, %v13871
  %v13873 = vpop.f32.mrb[0].mxu0
  %v13874 = vpop.f32.mrb[0].mxu0
  %v13875 = vadd.f32 %v13167, %v13874
  %v13876 = vpop.f32.mrb[0].mxu0
  %13877 = vmatprep.mubr.bf16.mxu0 0
  %13878 = vmatmul.mubr.bf16.gmra.mrb[0].mxu0 %v13285
  %v13879 = vpop.f32.mrb[0].mxu0
  %v13880 = vadd.f32 %v13167, %v13879
  %v13881 = vpop.f32.mrb[0].mxu0
  %v13882 = vpop.f32.mrb[0].mxu0
  %v13883 = vadd.f32 %v13167, %v13882
  %v13884 = vpop.f32.mrb[0].mxu0
  %13885 = vmatprep.mubr.bf16.mxu0 0
  %13886 = vmatmul.mubr.bf16.gmra.mrb[0].mxu0 %v13287
  %v13887 = vpop.f32.mrb[0].mxu0
  %v13888 = vadd.f32 %v13167, %v13887
  %v13889 = vpop.f32.mrb[0].mxu0
  %v13890 = vpop.f32.mrb[0].mxu0
  %v13891 = vadd.f32 %v13167, %v13890
  %v13892 = vpop.f32.mrb[0].mxu0
  %13893 = vmatprep.mubr.bf16.mxu0 0
  %13894 = vmatmul.mubr.bf16.gmra.mrb[0].mxu0 %v13289
  %v13895 = vpop.f32.mrb[0].mxu0
  %v13896 = vadd.f32 %v13167, %v13895
  %v13897 = vpop.f32.mrb[0].mxu0
  %v13898 = vpop.f32.mrb[0].mxu0
  %v13899 = vadd.f32 %v13167, %v13898
  %v13900 = vpop.f32.mrb[0].mxu0
  %13901 = vmatprep.mubr.bf16.mxu0 0
  %13902 = vmatmul.mubr.bf16.gmra.mrb[0].mxu0 %v13291
  %v13903 = vpop.f32.mrb[0].mxu0
  %v13904 = vadd.f32 %v13167, %v13903
  %v13905 = vpop.f32.mrb[0].mxu0
  %v13906 = vpop.f32.mrb[0].mxu0
  %v13907 = vadd.f32 %v13167, %v13906
  %v13908 = vpop.f32.mrb[0].mxu0
  %13909 = vmatprep.mubr.bf16.mxu0 0
  %13910 = vmatmul.mubr.bf16.gmra.mrb[0].mxu0 %v13293
  %v13911 = vpop.f32.mrb[0].mxu0
  %v13912 = vadd.f32 %v13167, %v13911
  %v13913 = vpop.f32.mrb[0].mxu0
  %v13914 = vpop.f32.mrb[0].mxu0
  %v13915 = vadd.f32 %v13167, %v13914
  %v13916 = vpop.f32.mrb[0].mxu0
  %13917 = vmatprep.mubr.bf16.mxu0 0
  %13918 = vmatmul.mubr.bf16.gmra.mrb[0].mxu0 %v13295
  %v13919 = vpop.f32.mrb[0].mxu0
  %v13920 = vadd.f32 %v13167, %v13919
  %v13921 = vpop.f32.mrb[0].mxu0
  %v13922 = vpop.f32.mrb[0].mxu0
  %v13923 = vadd.f32 %v13167, %v13922
  %v13924 = vpop.f32.mrb[0].mxu0
  %13925 = vmatprep.mubr.bf16.mxu0 0
  %13926 = vmatmul.mubr.bf16.gmra.mrb[0].mxu0 %v13297
  %v13927 = vpop.f32.mrb[0].mxu0
  %v13928 = vadd.f32 %v13167, %v13927
  %v13929 = vpop.f32.mrb[0].mxu0
  %v13930 = vpop.f32.mrb[0].mxu0
  %v13931 = vadd.f32 %v13167, %v13930
  %v13932 = vpop.f32.mrb[0].mxu0
  %13933 = vmatprep.mubr.bf16.mxu0 0
  %13934 = vmatmul.mubr.bf16.gmra.mrb[0].mxu0 %v13299
  %v13935 = vpop.f32.mrb[0].mxu0
  %v13936 = vadd.f32 %v13167, %v13935
  %v13937 = vpop.f32.mrb[0].mxu0
  %v13938 = vpop.f32.mrb[0].mxu0
  %v13939 = vadd.f32 %v13167, %v13938
  %v13940 = vpop.f32.mrb[0].mxu0
  %13941 = vmatprep.mubr.bf16.mxu0 0
  %13942 = vmatmul.mubr.bf16.gmra.mrb[0].mxu0 %v13301
  %v13943 = vpop.f32.mrb[0].mxu0
  %v13944 = vadd.f32 %v13167, %v13943
  %v13945 = vpop.f32.mrb[0].mxu0
  %v13946 = vpop.f32.mrb[0].mxu0
  %v13947 = vadd.f32 %v13167, %v13946
  %v13948 = vpop.f32.mrb[0].mxu0
  %13949 = vmatprep.mubr.bf16.mxu0 0
  %13950 = vmatmul.mubr.bf16.gmra.mrb[0].mxu0 %v13303
  %v13951 = vpop.f32.mrb[0].mxu0
  %v13952 = vadd.f32 %v13167, %v13951
  %v13953 = vpop.f32.mrb[0].mxu0
  %v13954 = vpop.f32.mrb[0].mxu0
  %v13955 = vadd.f32 %v13167, %v13954
  %v13956 = vpop.f32.mrb[0].mxu0
  %13957 = vmatprep.mubr.bf16.mxu0 0
  %13958 = vmatmul.mubr.bf16.gmra.mrb[0].mxu0 %v13305
  %v13959 = vpop.f32.mrb[0].mxu0
  %v13960 = vadd.f32 %v13167, %v13959
  %v13961 = vpop.f32.mrb[0].mxu0
  %v13962 = vpop.f32.mrb[0].mxu0
  %v13963 = vadd.f32 %v13167, %v13962
  %v13964 = vpop.f32.mrb[0].mxu0
  %13965 = vmatprep.mubr.bf16.mxu0 0
  %13966 = vmatmul.mubr.bf16.gmra.mrb[0].mxu0 %v13307
  %v13967 = vpop.f32.mrb[0].mxu0
  %v13968 = vadd.f32 %v13167, %v13967
  %v13969 = vpop.f32.mrb[0].mxu0
  %v13970 = vpop.f32.mrb[0].mxu0
  %v13971 = vadd.f32 %v13167, %v13970
  %v13972 = vpop.f32.mrb[0].mxu0
  %13973 = vmatprep.mubr.bf16.mxu0 0
  %13974 = vmatmul.mubr.bf16.gmra.mrb[0].mxu0 %v13309
  %v13975 = vpop.f32.mrb[0].mxu0
  %v13976 = vadd.f32 %v13167, %v13975
  %v13977 = vpop.f32.mrb[0].mxu0
  %v13978 = vpop.f32.mrb[0].mxu0
  %v13979 = vadd.f32 %v13167, %v13978
  %v13980 = vpop.f32.mrb[0].mxu0
  %13981 = vmatprep.mubr.bf16.mxu0 0
  %13982 = vmatmul.mubr.bf16.gmra.mrb[0].mxu0 %v13311
  %v13983 = vpop.f32.mrb[0].mxu0
  %v13984 = vadd.f32 %v13167, %v13983
  %v13985 = vpop.f32.mrb[0].mxu0
  %v13986 = vpop.f32.mrb[0].mxu0
  %v13987 = vadd.f32 %v13167, %v13986
  %v13988 = vpop.f32.mrb[0].mxu0
  %13989 = vmatprep.mubr.bf16.mxu0 0
  %13990 = vmatmul.mubr.bf16.gmra.mrb[0].mxu0 %v13313
  %v13991 = vpop.f32.mrb[0].mxu0
  %v13992 = vadd.f32 %v13167, %v13991
  %v13993 = vpop.f32.mrb[0].mxu0
  %v13994 = vpop.f32.mrb[0].mxu0
  %v13995 = vadd.f32 %v13167, %v13994
  %v13996 = vpop.f32.mrb[0].mxu0
  %13997 = vmatprep.mubr.bf16.mxu0 0
  %13998 = vmatmul.mubr.bf16.gmra.mrb[0].mxu0 %v13315
  %v13999 = vpop.f32.mrb[0].mxu0
  %v14000 = vadd.f32 %v13167, %v13999
  %v14001 = vpop.f32.mrb[0].mxu0
  %v14002 = vpop.f32.mrb[0].mxu0
  %v14003 = vadd.f32 %v13167, %v14002
  %v14004 = vpop.f32.mrb[0].mxu0
  %14005 = vmatprep.mubr.bf16.mxu0 0
  %14006 = vmatmul.mubr.bf16.gmra.mrb[0].mxu0 %v13317
  %v14007 = vpop.f32.mrb[0].mxu0
  %v14008 = vadd.f32 %v13167, %v14007
  %v14009 = vpop.f32.mrb[0].mxu0
  %v14010 = vpop.f32.mrb[0].mxu0
  %v14011 = vadd.f32 %v13167, %v14010
  %v14012 = vpop.f32.mrb[0].mxu0
  %14013 = vmatprep.mubr.bf16.mxu0 0
  %14014 = vmatmul.mubr.bf16.gmra.mrb[0].mxu0 %v13319
  %v14015 = vpop.f32.mrb[0].mxu0
  %v14016 = vadd.f32 %v13167, %v14015
  %v14017 = vpop.f32.mrb[0].mxu0
  %v14018 = vpop.f32.mrb[0].mxu0
  %v14019 = vadd.f32 %v13167, %v14018
  %v14020 = vpop.f32.mrb[0].mxu0
  %14021 = vmatprep.mubr.bf16.mxu0 0
  %14022 = vmatmul.mubr.bf16.gmra.mrb[0].mxu0 %v13321
  %v14023 = vpop.f32.mrb[0].mxu0
  %v14024 = vadd.f32 %v13167, %v14023
  %v14025 = vpop.f32.mrb[0].mxu0
  %v14026 = vpop.f32.mrb[0].mxu0
  %v14027 = vadd.f32 %v13167, %v14026
  %v14028 = vpop.f32.mrb[0].mxu0
  %14029 = vmatprep.mubr.bf16.mxu0 0
  %14030 = vmatmul.mubr.bf16.gmra.mrb[0].mxu0 %v13323
  %v14031 = vpop.f32.mrb[0].mxu0
  %v14032 = vadd.f32 %v13167, %v14031
  %v14033 = vpop.f32.mrb[0].mxu0
  %v14034 = vpop.f32.mrb[0].mxu0
  %v14035 = vadd.f32 %v13167, %v14034
  %v14036 = vpop.f32.mrb[0].mxu0
  %14037 = vmatprep.mubr.bf16.mxu0 0
  %14038 = vmatmul.mubr.bf16.gmra.mrb[0].mxu0 %v13325
  %v14039 = vpop.f32.mrb[0].mxu0
  %v14040 = vadd.f32 %v13167, %v14039
  %v14041 = vpop.f32.mrb[0].mxu0
  %v14042 = vpop.f32.mrb[0].mxu0
  %v14043 = vadd.f32 %v13167, %v14042
  %v14044 = vpop.f32.mrb[0].mxu0
  %14045 = vmatprep.mubr.bf16.mxu0 0
  %14046 = vmatmul.mubr.bf16.gmra.mrb[0].mxu0 %v13327
  %v14047 = vpop.f32.mrb[0].mxu0
  %v14048 = vadd.f32 %v13167, %v14047
  %v14049 = vpop.f32.mrb[0].mxu0
  %v14050 = vpop.f32.mrb[0].mxu0
  %v14051 = vadd.f32 %v13167, %v14050
  %v14052 = vpop.f32.mrb[0].mxu0
  %14053 = vmatprep.mubr.bf16.mxu0 0
  %14054 = vmatmul.mubr.bf16.gmra.mrb[0].mxu0 %v13329
  %v14055 = vpop.f32.mrb[0].mxu0
  %v14056 = vadd.f32 %v13167, %v14055
  %v14057 = vpop.f32.mrb[0].mxu0
  %v14058 = vpop.f32.mrb[0].mxu0
  %v14059 = vadd.f32 %v13167, %v14058
  %v14060 = vpop.f32.mrb[0].mxu0
  %14061 = vmatprep.mubr.bf16.mxu0 0
  %14062 = vmatmul.mubr.bf16.gmra.mrb[0].mxu0 %v13331
  %v14063 = vpop.f32.mrb[0].mxu0
  %v14064 = vadd.f32 %v13167, %v14063
  %v14065 = vpop.f32.mrb[0].mxu0
  %v14066 = vpop.f32.mrb[0].mxu0
  %v14067 = vadd.f32 %v13167, %v14066
  %v14068 = vpop.f32.mrb[0].mxu0
  %14069 = vmatprep.mubr.bf16.mxu0 0
  %14070 = vmatmul.mubr.bf16.gmra.mrb[0].mxu0 %v13333
  %v14071 = vpop.f32.mrb[0].mxu0
  %v14072 = vadd.f32 %v13167, %v14071
  %v14073 = vpop.f32.mrb[0].mxu0
  %v14074 = vpop.f32.mrb[0].mxu0
  %v14075 = vadd.f32 %v13167, %v14074
  %v14076 = vpop.f32.mrb[0].mxu0
  %14077 = vmatprep.mubr.bf16.mxu0 0
  %14078 = vmatmul.mubr.bf16.gmra.mrb[0].mxu0 %v13335
  %v14079 = vpop.f32.mrb[0].mxu0
  %v14080 = vadd.f32 %v13167, %v14079
  %v14081 = vpop.f32.mrb[0].mxu0
  %v14082 = vpop.f32.mrb[0].mxu0
  %v14083 = vadd.f32 %v13167, %v14082
  %v14084 = vpop.f32.mrb[0].mxu0
  %14085 = vmatprep.mubr.bf16.mxu0 0
  %14086 = vmatmul.mubr.bf16.gmra.mrb[0].mxu0 %v13337
  %v14087 = vpop.f32.mrb[0].mxu0
  %v14088 = vadd.f32 %v13167, %v14087
  %v14089 = vpop.f32.mrb[0].mxu0
  %v14090 = vpop.f32.mrb[0].mxu0
  %v14091 = vadd.f32 %v13167, %v14090
  %v14092 = vpop.f32.mrb[0].mxu0
  %14093 = vmatprep.mubr.bf16.mxu0 0
  %14094 = vmatmul.mubr.bf16.gmra.mrb[0].mxu0 %v13339
  %v14095 = vpop.f32.mrb[0].mxu0
  %v14096 = vadd.f32 %v13167, %v14095
  %v14097 = vpop.f32.mrb[0].mxu0
  %v14098 = vpop.f32.mrb[0].mxu0
  %v14099 = vadd.f32 %v13167, %v14098
  %v14100 = vpop.f32.mrb[0].mxu0
  %14101 = vmatprep.mubr.bf16.mxu0 0
  %14102 = vmatmul.mubr.bf16.gmra.mrb[0].mxu0 %v13341
  %v14103 = vpop.f32.mrb[0].mxu0
  %v14104 = vadd.f32 %v13167, %v14103
  %v14105 = vpop.f32.mrb[0].mxu0
  %v14106 = vpop.f32.mrb[0].mxu0
  %v14107 = vadd.f32 %v13167, %v14106
  %v14108 = vpop.f32.mrb[0].mxu0
  %14109 = vmatprep.mubr.bf16.mxu0 0
  %14110 = vmatmul.mubr.bf16.gmra.mrb[0].mxu0 %v13343
  %v14111 = vpop.f32.mrb[0].mxu0
  %v14112 = vadd.f32 %v13167, %v14111
  %v14113 = vpop.f32.mrb[0].mxu0
  %v14114 = vpop.f32.mrb[0].mxu0
  %v14115 = vadd.f32 %v13167, %v14114
  %v14116 = vpop.f32.mrb[0].mxu0
  %14117 = vmatprep.mubr.bf16.mxu0 0
  %14118 = vmatmul.mubr.bf16.gmra.mrb[0].mxu0 %v13345
  %v14119 = vpop.f32.mrb[0].mxu0
  %v14120 = vadd.f32 %v13167, %v14119
  %v14121 = vpop.f32.mrb[0].mxu0
  %v14122 = vpop.f32.mrb[0].mxu0
  %v14123 = vadd.f32 %v13167, %v14122
  %v14124 = vpop.f32.mrb[0].mxu0
  %14125 = vmatprep.mubr.bf16.mxu0 0
  %14126 = vmatmul.mubr.bf16.gmra.mrb[0].mxu0 %v13347
  %v14127 = vpop.f32.mrb[0].mxu0
  %v14128 = vadd.f32 %v13167, %v14127
  %v14129 = vpop.f32.mrb[0].mxu0
  %v14130 = vpop.f32.mrb[0].mxu0
  %v14131 = vadd.f32 %v13167, %v14130
  %v14132 = vpop.f32.mrb[0].mxu0
  %14133 = vmatprep.mubr.bf16.mxu0 0
  %14134 = vmatmul.mubr.bf16.gmra.mrb[0].mxu0 %v13349
  %v14135 = vpop.f32.mrb[0].mxu0
  %v14136 = vadd.f32 %v13167, %v14135
  %v14137 = vpop.f32.mrb[0].mxu0
  %v14138 = vpop.f32.mrb[0].mxu0
  %v14139 = vadd.f32 %v13167, %v14138
  %v14140 = vpop.f32.mrb[0].mxu0
  %14141 = vmatprep.mubr.bf16.mxu0 0
  %14142 = vmatmul.mubr.bf16.gmra.mrb[0].mxu0 %v13351
  %v14143 = vpop.f32.mrb[0].mxu0
  %v14144 = vadd.f32 %v13167, %v14143
  %v14145 = vpop.f32.mrb[0].mxu0
  %v14146 = vpop.f32.mrb[0].mxu0
  %v14147 = vadd.f32 %v13167, %v14146
  %v14148 = vpop.f32.mrb[0].mxu0
  %14149 = vmatprep.mubr.bf16.mxu0 0
  %14150 = vmatmul.mubr.bf16.gmra.mrb[0].mxu0 %v13353
  %v14151 = vpop.f32.mrb[0].mxu0
  %v14152 = vadd.f32 %v13167, %v14151
  %v14153 = vpop.f32.mrb[0].mxu0
  %v14154 = vpop.f32.mrb[0].mxu0
  %v14155 = vadd.f32 %v13167, %v14154
  %v14156 = vpop.f32.mrb[0].mxu0
  %14157 = vmatprep.mubr.bf16.mxu0 0
  %14158 = vmatmul.mubr.bf16.gmra.mrb[0].mxu0 %v13355
  %v14159 = vpop.f32.mrb[0].mxu0
  %v14160 = vadd.f32 %v13167, %v14159
  %v14161 = vpop.f32.mrb[0].mxu0
  %v14162 = vpop.f32.mrb[0].mxu0
  %v14163 = vadd.f32 %v13167, %v14162
  %v14164 = vpop.f32.mrb[0].mxu0
  %14165 = vmatprep.mubr.bf16.mxu0 0
  %14166 = vmatmul.mubr.bf16.gmra.mrb[0].mxu0 %v13357
  %v14167 = vpop.f32.mrb[0].mxu0
  %v14168 = vadd.f32 %v13167, %v14167
  %v14169 = vpop.f32.mrb[0].mxu0
  %v14170 = vpop.f32.mrb[0].mxu0
  %v14171 = vadd.f32 %v13167, %v14170
  %v14172 = vpop.f32.mrb[0].mxu0
  %14173 = vmatprep.mubr.bf16.mxu0 0
  %14174 = vmatmul.mubr.bf16.gmra.mrb[0].mxu0 %v13359
  %v14175 = vpop.f32.mrb[0].mxu0
  %v14176 = vadd.f32 %v13167, %v14175
  %v14177 = vpop.f32.mrb[0].mxu0
  %v14178 = vpop.f32.mrb[0].mxu0
  %v14179 = vadd.f32 %v13167, %v14178
  %v14180 = vpop.f32.mrb[0].mxu0
  %14181 = vmatprep.mubr.bf16.mxu0 0
  %14182 = vmatmul.mubr.bf16.gmra.mrb[0].mxu0 %v13361
  %v14183 = vpop.f32.mrb[0].mxu0
  %v14184 = vadd.f32 %v13167, %v14183
  %v14185 = vpop.f32.mrb[0].mxu0
  %v14186 = vpop.f32.mrb[0].mxu0
  %v14187 = vadd.f32 %v13167, %v14186
  %v14188 = vpop.f32.mrb[0].mxu0
  %14189 = vmatprep.mubr.bf16.mxu0 0
  %14190 = vmatmul.mubr.bf16.gmra.mrb[0].mxu0 %v13363
  %v14191 = vpop.f32.mrb[0].mxu0
  %v14192 = vadd.f32 %v13167, %v14191
  %v14193 = vpop.f32.mrb[0].mxu0
  %v14194 = vpop.f32.mrb[0].mxu0
  %v14195 = vadd.f32 %v13167, %v14194
  %v14196 = vpop.f32.mrb[0].mxu0
  %14197 = vmatprep.mubr.bf16.mxu0 0
  %14198 = vmatmul.mubr.bf16.gmra.mrb[0].mxu0 %v13365
  %v14199 = vpop.f32.mrb[0].mxu0
  %v14200 = vadd.f32 %v13167, %v14199
  %v14201 = vpop.f32.mrb[0].mxu0
  %v14202 = vpop.f32.mrb[0].mxu0
  %v14203 = vadd.f32 %v13167, %v14202
  %v14204 = vpop.f32.mrb[0].mxu0
  %14205 = vmatprep.mubr.bf16.mxu0 0
  %14206 = vmatmul.mubr.bf16.gmra.mrb[0].mxu0 %v13367
  %v14207 = vpop.f32.mrb[0].mxu0
  %v14208 = vadd.f32 %v13167, %v14207
  %v14209 = vpop.f32.mrb[0].mxu0
  %v14210 = vpop.f32.mrb[0].mxu0
  %v14211 = vadd.f32 %v13167, %v14210
  %v14212 = vpop.f32.mrb[0].mxu0
  %14213 = vmatprep.mubr.bf16.mxu0 0
  %14214 = vmatmul.mubr.bf16.gmra.mrb[0].mxu0 %v13369
  %v14215 = vpop.f32.mrb[0].mxu0
  %v14216 = vadd.f32 %v13167, %v14215
  %v14217 = vpop.f32.mrb[0].mxu0
  %v14218 = vpop.f32.mrb[0].mxu0
  %v14219 = vadd.f32 %v13167, %v14218
  %v14220 = vpop.f32.mrb[0].mxu0
  %14221 = vmatprep.mubr.bf16.mxu0 0
  %14222 = vmatmul.mubr.bf16.gmra.mrb[0].mxu0 %v13371
  %v14223 = vpop.f32.mrb[0].mxu0
  %v14224 = vadd.f32 %v13167, %v14223
  %v14225 = vpop.f32.mrb[0].mxu0
  %v14226 = vpop.f32.mrb[0].mxu0
  %v14227 = vadd.f32 %v13167, %v14226
  %v14228 = vpop.f32.mrb[0].mxu0
  %14229 = vmatprep.mubr.bf16.mxu0 0
  %14230 = vmatmul.mubr.bf16.gmra.mrb[0].mxu0 %v13373
  %v14231 = vpop.f32.mrb[0].mxu0
  %v14232 = vadd.f32 %v13167, %v14231
  %v14233 = vpop.f32.mrb[0].mxu0
  %v14234 = vpop.f32.mrb[0].mxu0
  %v14235 = vadd.f32 %v13167, %v14234
  %v14236 = vpop.f32.mrb[0].mxu0
  %14237 = vmatprep.mubr.bf16.mxu0 0
  %14238 = vmatmul.mubr.bf16.gmra.mrb[0].mxu0 %v13375
  %v14239 = vpop.f32.mrb[0].mxu0
  %v14240 = vadd.f32 %v13167, %v14239
  %v14241 = vpop.f32.mrb[0].mxu0
  %v14242 = vpop.f32.mrb[0].mxu0
  %v14243 = vadd.f32 %v13167, %v14242
  %v14244 = vpop.f32.mrb[0].mxu0
  %14245 = vmatprep.mubr.bf16.mxu0 0
  %14246 = vmatmul.mubr.bf16.gmra.mrb[0].mxu0 %v13377
  %v14247 = vpop.f32.mrb[0].mxu0
  %v14248 = vadd.f32 %v13167, %v14247
  %v14249 = vpop.f32.mrb[0].mxu0
  %v14250 = vpop.f32.mrb[0].mxu0
  %v14251 = vadd.f32 %v13167, %v14250
  %v14252 = vpop.f32.mrb[0].mxu0
  %14253 = vmatprep.mubr.bf16.mxu0 0
  %14254 = vmatmul.mubr.bf16.gmra.mrb[0].mxu0 %v13379
  %v14255 = vpop.f32.mrb[0].mxu0
  %v14256 = vadd.f32 %v13167, %v14255
  %v14257 = vpop.f32.mrb[0].mxu0
  %v14258 = vpop.f32.mrb[0].mxu0
  %v14259 = vadd.f32 %v13167, %v14258
  %v14260 = vpop.f32.mrb[0].mxu0
  %14261 = vmatprep.mubr.bf16.mxu0 0
  %14262 = vmatmul.mubr.bf16.gmra.mrb[0].mxu0 %v13381
  %v14263 = vpop.f32.mrb[0].mxu0
  %v14264 = vadd.f32 %v13167, %v14263
  %v14265 = vpop.f32.mrb[0].mxu0
  %v14266 = vpop.f32.mrb[0].mxu0
  %v14267 = vadd.f32 %v13167, %v14266
  %v14268 = vpop.f32.mrb[0].mxu0
  %14269 = vmatprep.mubr.bf16.mxu0 0
  %14270 = vmatmul.mubr.bf16.gmra.mrb[0].mxu0 %v13383
  %v14271 = vpop.f32.mrb[0].mxu0
  %v14272 = vadd.f32 %v13167, %v14271
  %v14273 = vpop.f32.mrb[0].mxu0
  %v14274 = vpop.f32.mrb[0].mxu0
  %v14275 = vadd.f32 %v13167, %v14274
  %v14276 = vpop.f32.mrb[0].mxu0
  %14277 = vmatprep.mubr.bf16.mxu0 0
  %14278 = vmatmul.mubr.bf16.gmra.mrb[0].mxu0 %v13385
  %v14279 = vpop.f32.mrb[0].mxu0
  %v14280 = vadd.f32 %v13167, %v14279
  %v14281 = vpop.f32.mrb[0].mxu0
  %v14282 = vpop.f32.mrb[0].mxu0
  %v14283 = vadd.f32 %v13167, %v14282
  %v14284 = vpop.f32.mrb[0].mxu0
  %14285 = vmatprep.mubr.bf16.mxu0 0
  %14286 = vmatmul.mubr.bf16.gmra.mrb[0].mxu0 %v13387
  %v14287 = vpop.f32.mrb[0].mxu0
  %v14288 = vadd.f32 %v13167, %v14287
  %v14289 = vpop.f32.mrb[0].mxu0
  %v14290 = vpop.f32.mrb[0].mxu0
  %v14291 = vadd.f32 %v13167, %v14290
  %v14292 = vpop.f32.mrb[0].mxu0
  %14293 = vmatprep.mubr.bf16.mxu0 0
  %14294 = vmatmul.mubr.bf16.gmra.mrb[0].mxu0 %v13389
  %v14295 = vpop.f32.mrb[0].mxu0
  %v14296 = vadd.f32 %v13167, %v14295
  %v14297 = vpop.f32.mrb[0].mxu0
  %v14298 = vpop.f32.mrb[0].mxu0
  %v14299 = vadd.f32 %v13167, %v14298
  %v14300 = vpop.f32.mrb[0].mxu0
  %14301 = vmatprep.mubr.bf16.mxu0 0
  %14302 = vmatmul.mubr.bf16.gmra.mrb[0].mxu0 %v13391
  %v14303 = vpop.f32.mrb[0].mxu0
  %v14304 = vadd.f32 %v13167, %v14303
  %v14305 = vpop.f32.mrb[0].mxu0
  %v14306 = vpop.f32.mrb[0].mxu0
  %v14307 = vadd.f32 %v13167, %v14306
  %v14308 = vpop.f32.mrb[0].mxu0
  %14309 = vmatprep.mubr.bf16.mxu0 0
  %14310 = vmatmul.mubr.bf16.gmra.mrb[0].mxu0 %v13393
  %v14311 = vpop.f32.mrb[0].mxu0
  %v14312 = vadd.f32 %v13167, %v14311
  %v14313 = vpop.f32.mrb[0].mxu0
  %v14314 = vpop.f32.mrb[0].mxu0
  %v14315 = vadd.f32 %v13167, %v14314
  %v14316 = vpop.f32.mrb[0].mxu0
  %14317 = vmatprep.mubr.bf16.mxu0 0
  %14318 = vmatmul.mubr.bf16.gmra.mrb[0].mxu0 %v13395
  %v14319 = vpop.f32.mrb[0].mxu0
  %v14320 = vadd.f32 %v13167, %v14319
  %v14321 = vpop.f32.mrb[0].mxu0
  %v14322 = vpop.f32.mrb[0].mxu0
  %v14323 = vadd.f32 %v13167, %v14322
  %v14324 = vpop.f32.mrb[0].mxu0
  %14325 = vmatprep.mubr.bf16.mxu0 0
  %14326 = vmatmul.mubr.bf16.gmra.mrb[0].mxu0 %v13397
  %v14327 = vpop.f32.mrb[0].mxu0
  %v14328 = vadd.f32 %v13167, %v14327
  %v14329 = vpop.f32.mrb[0].mxu0
  %v14330 = vpop.f32.mrb[0].mxu0
  %v14331 = vadd.f32 %v13167, %v14330
  %v14332 = vpop.f32.mrb[0].mxu0
  %14333 = vmatprep.mubr.bf16.mxu0 0
  %14334 = vmatmul.mubr.bf16.gmra.mrb[0].mxu0 %v13399
  %v14335 = vpop.f32.mrb[0].mxu0
  %v14336 = vadd.f32 %v13167, %v14335
  %v14337 = vpop.f32.mrb[0].mxu0
  %v14338 = vpop.f32.mrb[0].mxu0
  %v14339 = vadd.f32 %v13167, %v14338
  %v14340 = vpop.f32.mrb[0].mxu0
  %14341 = vmatprep.mubr.bf16.mxu0 0
  %14342 = vmatmul.mubr.bf16.gmra.mrb[0].mxu0 %v13401
  %v14343 = vpop.f32.mrb[0].mxu0
  %v14344 = vadd.f32 %v13167, %v14343
  %v14345 = vpop.f32.mrb[0].mxu0
  %v14346 = vpop.f32.mrb[0].mxu0
  %v14347 = vadd.f32 %v13167, %v14346
  %v14348 = vpop.f32.mrb[0].mxu0
  %14349 = vmatprep.mubr.bf16.mxu0 0
  %14350 = vmatmul.mubr.bf16.gmra.mrb[0].mxu0 %v13403
  %v14351 = vpop.f32.mrb[0].mxu0
  %v14352 = vadd.f32 %v13167, %v14351
  %v14353 = vpop.f32.mrb[0].mxu0
  %v14354 = vpop.f32.mrb[0].mxu0
  %v14355 = vadd.f32 %v13167, %v14354
  %v14356 = vpop.f32.mrb[0].mxu0
  %14357 = vmatprep.mubr.bf16.mxu0 0
  %14358 = vmatmul.mubr.bf16.gmra.mrb[0].mxu0 %v13405
  %v14359 = vpop.f32.mrb[0].mxu0
  %v14360 = vadd.f32 %v13167, %v14359
  %v14361 = vpop.f32.mrb[0].mxu0
  %v14362 = vpop.f32.mrb[0].mxu0
  %v14363 = vadd.f32 %v13167, %v14362
  %v14364 = vpop.f32.mrb[0].mxu0
  %14365 = vmatprep.mubr.bf16.mxu0 0
  %14366 = vmatmul.mubr.bf16.gmra.mrb[0].mxu0 %v13407
  %v14367 = vpop.f32.mrb[0].mxu0
  %v14368 = vadd.f32 %v13167, %v14367
  %v14369 = vpop.f32.mrb[0].mxu0
  %v14370 = vpop.f32.mrb[0].mxu0
  %v14371 = vadd.f32 %v13167, %v14370
  %v14372 = vpop.f32.mrb[0].mxu0
  %14373 = vmatprep.mubr.bf16.mxu0 0
  %14374 = vmatmul.mubr.bf16.gmra.mrb[0].mxu0 %v13409
  %v14375 = vpop.f32.mrb[0].mxu0
  %v14376 = vadd.f32 %v13167, %v14375
  %v14377 = vpop.f32.mrb[0].mxu0
  %v14378 = vpop.f32.mrb[0].mxu0
  %v14379 = vadd.f32 %v13167, %v14378
  %v14380 = vpop.f32.mrb[0].mxu0
  %14381 = vmatprep.mubr.bf16.mxu0 0
  %14382 = vmatmul.mubr.bf16.gmra.mrb[0].mxu0 %v13411
  %v14383 = vpop.f32.mrb[0].mxu0
  %v14384 = vadd.f32 %v13167, %v14383
  %v14385 = vpop.f32.mrb[0].mxu0
  %v14386 = vpop.f32.mrb[0].mxu0
  %v14387 = vadd.f32 %v13167, %v14386
  %v14388 = vpop.f32.mrb[0].mxu0
  %14389 = vmatprep.mubr.bf16.mxu0 0
  %14390 = vmatmul.mubr.bf16.gmra.mrb[0].mxu0 %v13413
  %v14391 = vpop.f32.mrb[0].mxu0
  %v14392 = vadd.f32 %v13167, %v14391
  %v14393 = vpop.f32.mrb[0].mxu0
  %v14394 = vpop.f32.mrb[0].mxu0
  %v14395 = vadd.f32 %v13167, %v14394
  %v14396 = vpop.f32.mrb[0].mxu0
  %14397 = vmatprep.mubr.bf16.mxu0 0
  %14398 = vmatmul.mubr.bf16.gmra.mrb[0].mxu0 %v13415
  %v14399 = vpop.f32.mrb[0].mxu0
  %v14400 = vadd.f32 %v13167, %v14399
  %v14401 = vpop.f32.mrb[0].mxu0
  %v14402 = vpop.f32.mrb[0].mxu0
  %v14403 = vadd.f32 %v13167, %v14402
  %v14404 = vpop.f32.mrb[0].mxu0
  %14405 = vmatprep.mubr.bf16.mxu0 0
  %14406 = vmatmul.mubr.bf16.gmra.mrb[0].mxu0 %v13417
  %v14407 = vpop.f32.mrb[0].mxu0
  %v14408 = vadd.f32 %v13167, %v14407
  %v14409 = vpop.f32.mrb[0].mxu0
  %v14410 = vpop.f32.mrb[0].mxu0
  %v14411 = vadd.f32 %v13167, %v14410
  %v14412 = vpop.f32.mrb[0].mxu0
  %14413 = vmatprep.mubr.bf16.mxu0 0
  %14414 = vmatmul.mubr.bf16.gmra.mrb[0].mxu0 %v13419
  %v14415 = vpop.f32.mrb[0].mxu0
  %v14416 = vadd.f32 %v13167, %v14415
  %v14417 = vpop.f32.mrb[0].mxu0
  %v14418 = vpop.f32.mrb[0].mxu0
  %v14419 = vadd.f32 %v13167, %v14418
  %v14420 = vpop.f32.mrb[0].mxu0
  %14421 = vmatprep.mubr.bf16.mxu0 0
  %14422 = vmatmul.mubr.bf16.gmra.mrb[0].mxu0 %v13421
  %v14423 = vpop.f32.mrb[0].mxu0
  %v14424 = vadd.f32 %v13167, %v14423
  %v14425 = vpop.f32.mrb[0].mxu0
  %v14426 = vpop.f32.mrb[0].mxu0
  %v14427 = vadd.f32 %v13167, %v14426
  %v14428 = vpop.f32.mrb[0].mxu0
  %14429 = vmatprep.mubr.bf16.mxu0 0
  %14430 = vmatmul.mubr.bf16.gmra.mrb[0].mxu0 %v13423
  %v14431 = vpop.f32.mrb[0].mxu0
  %v14432 = vadd.f32 %v13167, %v14431
  %v14433 = vpop.f32.mrb[0].mxu0
  %v14434 = vpop.f32.mrb[0].mxu0
  %v14435 = vadd.f32 %v13167, %v14434
  %v14436 = vpop.f32.mrb[0].mxu0
  %14437 = vmatprep.mubr.bf16.mxu0 0
  %14438 = vmatmul.mubr.bf16.gmra.mrb[0].mxu0 %v13425
  %v14439 = vpop.f32.mrb[0].mxu0
  %v14440 = vadd.f32 %v13167, %v14439
  %v14441 = vpop.f32.mrb[0].mxu0
  %v14442 = vpop.f32.mrb[0].mxu0
  %v14443 = vadd.f32 %v13167, %v14442
  %v14444 = vpop.f32.mrb[0].mxu0
  %14445 = vmatprep.mubr.bf16.mxu0 0
  %14446 = vmatmul.mubr.bf16.gmra.mrb[0].mxu0 %v13427
  %v14447 = vpop.f32.mrb[0].mxu0
  %v14448 = vadd.f32 %v13167, %v14447
  %v14449 = vpop.f32.mrb[0].mxu0
  %v14450 = vpop.f32.mrb[0].mxu0
  %v14451 = vadd.f32 %v13167, %v14450
  %v14452 = vpop.f32.mrb[0].mxu0
  %14453 = vmatprep.mubr.bf16.mxu0 0
  %14454 = vmatmul.mubr.bf16.gmra.mrb[0].mxu0 %v13429
  %v14455 = vpop.f32.mrb[0].mxu0
  %v14456 = vadd.f32 %v13167, %v14455
  %v14457 = vpop.f32.mrb[0].mxu0
  %v14458 = vpop.f32.mrb[0].mxu0
  %v14459 = vadd.f32 %v13167, %v14458
  %v14460 = vpop.f32.mrb[0].mxu0
  %14461 = vmatprep.mubr.bf16.mxu0 0
  %14462 = vmatmul.mubr.bf16.gmra.mrb[0].mxu0 %v13431
  %v14463 = vpop.f32.mrb[0].mxu0
  %v14464 = vadd.f32 %v13167, %v14463
  %v14465 = vpop.f32.mrb[0].mxu0
  %v14466 = vpop.f32.mrb[0].mxu0
  %v14467 = vadd.f32 %v13167, %v14466
  %v14468 = vpop.f32.mrb[0].mxu0
  %14469 = vmatprep.mubr.bf16.mxu0 0
  %14470 = vmatmul.mubr.bf16.gmra.mrb[0].mxu0 %v13433
  %v14471 = vpop.f32.mrb[0].mxu0
  %v14472 = vadd.f32 %v13167, %v14471
  %v14473 = vpop.f32.mrb[0].mxu0
  %v14474 = vpop.f32.mrb[0].mxu0
  %v14475 = vadd.f32 %v13167, %v14474
  %v14476 = vpop.f32.mrb[0].mxu0
  %14477 = vmatprep.mubr.bf16.mxu0 0
  %14478 = vmatmul.mubr.bf16.gmra.mrb[0].mxu0 %v13435
  %v14479 = vpop.f32.mrb[0].mxu0
  %v14480 = vadd.f32 %v13167, %v14479
  %v14481 = vpop.f32.mrb[0].mxu0
  %v14482 = vpop.f32.mrb[0].mxu0
  %v14483 = vadd.f32 %v13167, %v14482
  %v14484 = vpop.f32.mrb[0].mxu0
  %14485 = vmatprep.mubr.bf16.mxu0 0
  %14486 = vmatmul.mubr.bf16.gmra.mrb[0].mxu0 %v13437
  %v14487 = vpop.f32.mrb[0].mxu0
  %v14488 = vadd.f32 %v13167, %v14487
  %v14489 = vpop.f32.mrb[0].mxu0
  %v14490 = vpop.f32.mrb[0].mxu0
  %v14491 = vadd.f32 %v13167, %v14490
  %v14492 = vpop.f32.mrb[0].mxu0
  %14493 = vmatprep.mubr.bf16.mxu0 0
  %14494 = vmatmul.mubr.bf16.gmra.mrb[0].mxu0 %v13439
  %v14495 = vpop.f32.mrb[0].mxu0
  %v14496 = vadd.f32 %v13167, %v14495
  %v14497 = vpop.f32.mrb[0].mxu0
  %v14498 = vpop.f32.mrb[0].mxu0
  %v14499 = vadd.f32 %v13167, %v14498
  %v14500 = vpop.f32.mrb[0].mxu0
  %14501 = vdwg.mxu0
  %v14502 = vmax.f32 %v13480, 0.0
  %v14503 = vmax.f32 %v13483, 0.0
  %v14504 = vmax.f32 %v13488, 0.0
  %v14505 = vmax.f32 %v13491, 0.0
  %v14506 = vmax.f32 %v13496, 0.0
  %v14507 = vmax.f32 %v13499, 0.0
  %v14508 = vmax.f32 %v13504, 0.0
  %v14509 = vmax.f32 %v13507, 0.0
  %v14510 = vmax.f32 %v13512, 0.0
  %v14511 = vmax.f32 %v13515, 0.0
  %v14512 = vmax.f32 %v13520, 0.0
  %v14513 = vmax.f32 %v13523, 0.0
  %v14514 = vmax.f32 %v13528, 0.0
  %v14515 = vmax.f32 %v13531, 0.0
  %v14516 = vmax.f32 %v13536, 0.0
  %v14517 = vmax.f32 %v13539, 0.0
  %v14518 = vmax.f32 %v13544, 0.0
  %v14519 = vmax.f32 %v13547, 0.0
  %v14520 = vmax.f32 %v13552, 0.0
  %v14521 = vmax.f32 %v13555, 0.0
  %v14522 = vmax.f32 %v13560, 0.0
  %v14523 = vmax.f32 %v13563, 0.0
  %v14524 = vmax.f32 %v13568, 0.0
  %v14525 = vmax.f32 %v13571, 0.0
  %v14526 = vmax.f32 %v13576, 0.0
  %v14527 = vmax.f32 %v13579, 0.0
  %v14528 = vmax.f32 %v13584, 0.0
  %v14529 = vmax.f32 %v13587, 0.0
  %v14530 = vmax.f32 %v13592, 0.0
  %v14531 = vmax.f32 %v13595, 0.0
  %v14532 = vmax.f32 %v13600, 0.0
  %v14533 = vmax.f32 %v13603, 0.0
  %v14534 = vmax.f32 %v13608, 0.0
  %v14535 = vmax.f32 %v13611, 0.0
  %v14536 = vmax.f32 %v13616, 0.0
  %v14537 = vmax.f32 %v13619, 0.0
  %v14538 = vmax.f32 %v13624, 0.0
  %v14539 = vmax.f32 %v13627, 0.0
  %v14540 = vmax.f32 %v13632, 0.0
  %v14541 = vmax.f32 %v13635, 0.0
  %v14542 = vmax.f32 %v13640, 0.0
  %v14543 = vmax.f32 %v13643, 0.0
  %v14544 = vmax.f32 %v13648, 0.0
  %v14545 = vmax.f32 %v13651, 0.0
  %v14546 = vmax.f32 %v13656, 0.0
  %v14547 = vmax.f32 %v13659, 0.0
  %v14548 = vmax.f32 %v13664, 0.0
  %v14549 = vmax.f32 %v13667, 0.0
  %v14550 = vmax.f32 %v13672, 0.0
  %v14551 = vmax.f32 %v13675, 0.0
  %v14552 = vmax.f32 %v13680, 0.0
  %v14553 = vmax.f32 %v13683, 0.0
  %v14554 = vmax.f32 %v13688, 0.0
  %v14555 = vmax.f32 %v13691, 0.0
  %v14556 = vmax.f32 %v13696, 0.0
  %v14557 = vmax.f32 %v13699, 0.0
  %v14558 = vmax.f32 %v13704, 0.0
  %v14559 = vmax.f32 %v13707, 0.0
  %v14560 = vmax.f32 %v13712, 0.0
  %v14561 = vmax.f32 %v13715, 0.0
  %v14562 = vmax.f32 %v13720, 0.0
  %v14563 = vmax.f32 %v13723, 0.0
  %v14564 = vmax.f32 %v13728, 0.0
  %v14565 = vmax.f32 %v13731, 0.0
  %v14566 = vmax.f32 %v13736, 0.0
  %v14567 = vmax.f32 %v13739, 0.0
  %v14568 = vmax.f32 %v13744, 0.0
  %v14569 = vmax.f32 %v13747, 0.0
  %v14570 = vmax.f32 %v13752, 0.0
  %v14571 = vmax.f32 %v13755, 0.0
  %v14572 = vmax.f32 %v13760, 0.0
  %v14573 = vmax.f32 %v13763, 0.0
  %v14574 = vmax.f32 %v13768, 0.0
  %v14575 = vmax.f32 %v13771, 0.0
  %v14576 = vmax.f32 %v13776, 0.0
  %v14577 = vmax.f32 %v13779, 0.0
  %v14578 = vmax.f32 %v13784, 0.0
  %v14579 = vmax.f32 %v13787, 0.0
  %v14580 = vmax.f32 %v13792, 0.0
  %v14581 = vmax.f32 %v13795, 0.0
  %v14582 = vmax.f32 %v13800, 0.0
  %v14583 = vmax.f32 %v13803, 0.0
  %v14584 = vmax.f32 %v13808, 0.0
  %v14585 = vmax.f32 %v13811, 0.0
  %v14586 = vmax.f32 %v13816, 0.0
  %v14587 = vmax.f32 %v13819, 0.0
  %v14588 = vmax.f32 %v13824, 0.0
  %v14589 = vmax.f32 %v13827, 0.0
  %v14590 = vmax.f32 %v13832, 0.0
  %v14591 = vmax.f32 %v13835, 0.0
  %v14592 = vmax.f32 %v13840, 0.0
  %v14593 = vmax.f32 %v13843, 0.0
  %v14594 = vmax.f32 %v13848, 0.0
  %v14595 = vmax.f32 %v13851, 0.0
  %v14596 = vmax.f32 %v13856, 0.0
  %v14597 = vmax.f32 %v13859, 0.0
  %v14598 = vmax.f32 %v13864, 0.0
  %v14599 = vmax.f32 %v13867, 0.0
  %v14600 = vmax.f32 %v13872, 0.0
  %v14601 = vmax.f32 %v13875, 0.0
  %v14602 = vmax.f32 %v13880, 0.0
  %v14603 = vmax.f32 %v13883, 0.0
  %v14604 = vmax.f32 %v13888, 0.0
  %v14605 = vmax.f32 %v13891, 0.0
  %v14606 = vmax.f32 %v13896, 0.0
  %v14607 = vmax.f32 %v13899, 0.0
  %v14608 = vmax.f32 %v13904, 0.0
  %v14609 = vmax.f32 %v13907, 0.0
  %v14610 = vmax.f32 %v13912, 0.0
  %v14611 = vmax.f32 %v13915, 0.0
  %v14612 = vmax.f32 %v13920, 0.0
  %v14613 = vmax.f32 %v13923, 0.0
  %v14614 = vmax.f32 %v13928, 0.0
  %v14615 = vmax.f32 %v13931, 0.0
  %v14616 = vmax.f32 %v13936, 0.0
  %v14617 = vmax.f32 %v13939, 0.0
  %v14618 = vmax.f32 %v13944, 0.0
  %v14619 = vmax.f32 %v13947, 0.0
  %v14620 = vmax.f32 %v13952, 0.0
  %v14621 = vmax.f32 %v13955, 0.0
  %v14622 = vmax.f32 %v13960, 0.0
  %v14623 = vmax.f32 %v13963, 0.0
  %v14624 = vmax.f32 %v13968, 0.0
  %v14625 = vmax.f32 %v13971, 0.0
  %v14626 = vmax.f32 %v13976, 0.0
  %v14627 = vmax.f32 %v13979, 0.0
  %v14628 = vmax.f32 %v13984, 0.0
  %v14629 = vmax.f32 %v13987, 0.0
  %v14630 = vmax.f32 %v13992, 0.0
  %v14631 = vmax.f32 %v13995, 0.0
  %v14632 = vmax.f32 %v14000, 0.0
  %v14633 = vmax.f32 %v14003, 0.0
  %v14634 = vmax.f32 %v14008, 0.0
  %v14635 = vmax.f32 %v14011, 0.0
  %v14636 = vmax.f32 %v14016, 0.0
  %v14637 = vmax.f32 %v14019, 0.0
  %v14638 = vmax.f32 %v14024, 0.0
  %v14639 = vmax.f32 %v14027, 0.0
  %v14640 = vmax.f32 %v14032, 0.0
  %v14641 = vmax.f32 %v14035, 0.0
  %v14642 = vmax.f32 %v14040, 0.0
  %v14643 = vmax.f32 %v14043, 0.0
  %v14644 = vmax.f32 %v14048, 0.0
  %v14645 = vmax.f32 %v14051, 0.0
  %v14646 = vmax.f32 %v14056, 0.0
  %v14647 = vmax.f32 %v14059, 0.0
  %v14648 = vmax.f32 %v14064, 0.0
  %v14649 = vmax.f32 %v14067, 0.0
  %v14650 = vmax.f32 %v14072, 0.0
  %v14651 = vmax.f32 %v14075, 0.0
  %v14652 = vmax.f32 %v14080, 0.0
  %v14653 = vmax.f32 %v14083, 0.0
  %v14654 = vmax.f32 %v14088, 0.0
  %v14655 = vmax.f32 %v14091, 0.0
  %v14656 = vmax.f32 %v14096, 0.0
  %v14657 = vmax.f32 %v14099, 0.0
  %v14658 = vmax.f32 %v14104, 0.0
  %v14659 = vmax.f32 %v14107, 0.0
  %v14660 = vmax.f32 %v14112, 0.0
  %v14661 = vmax.f32 %v14115, 0.0
  %v14662 = vmax.f32 %v14120, 0.0
  %v14663 = vmax.f32 %v14123, 0.0
  %v14664 = vmax.f32 %v14128, 0.0
  %v14665 = vmax.f32 %v14131, 0.0
  %v14666 = vmax.f32 %v14136, 0.0
  %v14667 = vmax.f32 %v14139, 0.0
  %v14668 = vmax.f32 %v14144, 0.0
  %v14669 = vmax.f32 %v14147, 0.0
  %v14670 = vmax.f32 %v14152, 0.0
  %v14671 = vmax.f32 %v14155, 0.0
  %v14672 = vmax.f32 %v14160, 0.0
  %v14673 = vmax.f32 %v14163, 0.0
  %v14674 = vmax.f32 %v14168, 0.0
  %v14675 = vmax.f32 %v14171, 0.0
  %v14676 = vmax.f32 %v14176, 0.0
  %v14677 = vmax.f32 %v14179, 0.0
  %v14678 = vmax.f32 %v14184, 0.0
  %v14679 = vmax.f32 %v14187, 0.0
  %v14680 = vmax.f32 %v14192, 0.0
  %v14681 = vmax.f32 %v14195, 0.0
  %v14682 = vmax.f32 %v14200, 0.0
  %v14683 = vmax.f32 %v14203, 0.0
  %v14684 = vmax.f32 %v14208, 0.0
  %v14685 = vmax.f32 %v14211, 0.0
  %v14686 = vmax.f32 %v14216, 0.0
  %v14687 = vmax.f32 %v14219, 0.0
  %v14688 = vmax.f32 %v14224, 0.0
  %v14689 = vmax.f32 %v14227, 0.0
  %v14690 = vmax.f32 %v14232, 0.0
  %v14691 = vmax.f32 %v14235, 0.0
  %v14692 = vmax.f32 %v14240, 0.0
  %v14693 = vmax.f32 %v14243, 0.0
  %v14694 = vmax.f32 %v14248, 0.0
  %v14695 = vmax.f32 %v14251, 0.0
  %v14696 = vmax.f32 %v14256, 0.0
  %v14697 = vmax.f32 %v14259, 0.0
  %v14698 = vmax.f32 %v14264, 0.0
  %v14699 = vmax.f32 %v14267, 0.0
  %v14700 = vmax.f32 %v14272, 0.0
  %v14701 = vmax.f32 %v14275, 0.0
  %v14702 = vmax.f32 %v14280, 0.0
  %v14703 = vmax.f32 %v14283, 0.0
  %v14704 = vmax.f32 %v14288, 0.0
  %v14705 = vmax.f32 %v14291, 0.0
  %v14706 = vmax.f32 %v14296, 0.0
  %v14707 = vmax.f32 %v14299, 0.0
  %v14708 = vmax.f32 %v14304, 0.0
  %v14709 = vmax.f32 %v14307, 0.0
  %v14710 = vmax.f32 %v14312, 0.0
  %v14711 = vmax.f32 %v14315, 0.0
  %v14712 = vmax.f32 %v14320, 0.0
  %v14713 = vmax.f32 %v14323, 0.0
  %v14714 = vmax.f32 %v14328, 0.0
  %v14715 = vmax.f32 %v14331, 0.0
  %v14716 = vmax.f32 %v14336, 0.0
  %v14717 = vmax.f32 %v14339, 0.0
  %v14718 = vmax.f32 %v14344, 0.0
  %v14719 = vmax.f32 %v14347, 0.0
  %v14720 = vmax.f32 %v14352, 0.0
  %v14721 = vmax.f32 %v14355, 0.0
  %v14722 = vmax.f32 %v14360, 0.0
  %v14723 = vmax.f32 %v14363, 0.0
  %v14724 = vmax.f32 %v14368, 0.0
  %v14725 = vmax.f32 %v14371, 0.0
  %v14726 = vmax.f32 %v14376, 0.0
  %v14727 = vmax.f32 %v14379, 0.0
  %v14728 = vmax.f32 %v14384, 0.0
  %v14729 = vmax.f32 %v14387, 0.0
  %v14730 = vmax.f32 %v14392, 0.0
  %v14731 = vmax.f32 %v14395, 0.0
  %v14732 = vmax.f32 %v14400, 0.0
  %v14733 = vmax.f32 %v14403, 0.0
  %v14734 = vmax.f32 %v14408, 0.0
  %v14735 = vmax.f32 %v14411, 0.0
  %v14736 = vmax.f32 %v14416, 0.0
  %v14737 = vmax.f32 %v14419, 0.0
  %v14738 = vmax.f32 %v14424, 0.0
  %v14739 = vmax.f32 %v14427, 0.0
  %v14740 = vmax.f32 %v14432, 0.0
  %v14741 = vmax.f32 %v14435, 0.0
  %v14742 = vmax.f32 %v14440, 0.0
  %v14743 = vmax.f32 %v14443, 0.0
  %v14744 = vmax.f32 %v14448, 0.0
  %v14745 = vmax.f32 %v14451, 0.0
  %v14746 = vmax.f32 %v14456, 0.0
  %v14747 = vmax.f32 %v14459, 0.0
  %v14748 = vmax.f32 %v14464, 0.0
  %v14749 = vmax.f32 %v14467, 0.0
  %v14750 = vmax.f32 %v14472, 0.0
  %v14751 = vmax.f32 %v14475, 0.0
  %v14752 = vmax.f32 %v14480, 0.0
  %v14753 = vmax.f32 %v14483, 0.0
  %v14754 = vmax.f32 %v14488, 0.0
  %v14755 = vmax.f32 %v14491, 0.0
  %v14756 = vmax.f32 %v14496, 0.0
  %v14757 = vmax.f32 %v14499, 0.0
  %14758 = vst.msk [vmem:[%s3] sm:$0xff] %vm11358, %v14502
  %14759 = vst.msk [vmem:[%s3 + $0x8] sm:$0xff] %vm11358, %v14503
  %14760 = vst.msk [vmem:[%s3 + $0x10] sm:$0xff] %vm11358, %v14504
  %14761 = vst.msk [vmem:[%s3 + $0x18] sm:$0xff] %vm11358, %v14505
  %14762 = vst.msk [vmem:[%s3 + $0x20] sm:$0xff] %vm11358, %v14506
  %14763 = vst.msk [vmem:[%s3 + $0x28] sm:$0xff] %vm11358, %v14507
  %14764 = vst.msk [vmem:[%s3 + $0x30] sm:$0xff] %vm11358, %v14508
  %14765 = vst.msk [vmem:[%s3 + $0x38] sm:$0xff] %vm11358, %v14509
  %14766 = vst.msk [vmem:[%s3 + $0x40] sm:$0xff] %vm11358, %v14510
  %14767 = vst.msk [vmem:[%s3 + $0x48] sm:$0xff] %vm11358, %v14511
  %14768 = vst.msk [vmem:[%s3 + $0x50] sm:$0xff] %vm11358, %v14512
  %14769 = vst.msk [vmem:[%s3 + $0x58] sm:$0xff] %vm11358, %v14513
  %14770 = vst.msk [vmem:[%s3 + $0x60] sm:$0xff] %vm11358, %v14514
  %14771 = vst.msk [vmem:[%s3 + $0x68] sm:$0xff] %vm11358, %v14515
  %14772 = vst.msk [vmem:[%s3 + $0x70] sm:$0xff] %vm11358, %v14516
  %14773 = vst.msk [vmem:[%s3 + $0x78] sm:$0xff] %vm11358, %v14517
  %14774 = vst.msk [vmem:[%s3 + $0x80] sm:$0xff] %vm11358, %v14518
  %14775 = vst.msk [vmem:[%s3 + $0x88] sm:$0xff] %vm11358, %v14519
  %14776 = vst.msk [vmem:[%s3 + $0x90] sm:$0xff] %vm11358, %v14520
  %14777 = vst.msk [vmem:[%s3 + $0x98] sm:$0xff] %vm11358, %v14521
  %14778 = vst.msk [vmem:[%s3 + $0xa0] sm:$0xff] %vm11358, %v14522
  %14779 = vst.msk [vmem:[%s3 + $0xa8] sm:$0xff] %vm11358, %v14523
  %14780 = vst.msk [vmem:[%s3 + $0xb0] sm:$0xff] %vm11358, %v14524
  %14781 = vst.msk [vmem:[%s3 + $0xb8] sm:$0xff] %vm11358, %v14525
  %14782 = vst.msk [vmem:[%s3 + $0xc0] sm:$0xff] %vm11358, %v14526
  %14783 = vst.msk [vmem:[%s3 + $0xc8] sm:$0xff] %vm11358, %v14527
  %14784 = vst.msk [vmem:[%s3 + $0xd0] sm:$0xff] %vm11358, %v14528
  %14785 = vst.msk [vmem:[%s3 + $0xd8] sm:$0xff] %vm11358, %v14529
  %14786 = vst.msk [vmem:[%s3 + $0xe0] sm:$0xff] %vm11358, %v14530
  %14787 = vst.msk [vmem:[%s3 + $0xe8] sm:$0xff] %vm11358, %v14531
  %14788 = vst.msk [vmem:[%s3 + $0xf0] sm:$0xff] %vm11358, %v14532
  %14789 = vst.msk [vmem:[%s3 + $0xf8] sm:$0xff] %vm11358, %v14533
  %14790 = vst.msk [vmem:[%s3 + $0x100] sm:$0xff] %vm11358, %v14534
  %14791 = vst.msk [vmem:[%s3 + $0x108] sm:$0xff] %vm11358, %v14535
  %14792 = vst.msk [vmem:[%s3 + $0x110] sm:$0xff] %vm11358, %v14536
  %14793 = vst.msk [vmem:[%s3 + $0x118] sm:$0xff] %vm11358, %v14537
  %14794 = vst.msk [vmem:[%s3 + $0x120] sm:$0xff] %vm11358, %v14538
  %14795 = vst.msk [vmem:[%s3 + $0x128] sm:$0xff] %vm11358, %v14539
  %14796 = vst.msk [vmem:[%s3 + $0x130] sm:$0xff] %vm11358, %v14540
  %14797 = vst.msk [vmem:[%s3 + $0x138] sm:$0xff] %vm11358, %v14541
  %14798 = vst.msk [vmem:[%s3 + $0x140] sm:$0xff] %vm11358, %v14542
  %14799 = vst.msk [vmem:[%s3 + $0x148] sm:$0xff] %vm11358, %v14543
  %14800 = vst.msk [vmem:[%s3 + $0x150] sm:$0xff] %vm11358, %v14544
  %14801 = vst.msk [vmem:[%s3 + $0x158] sm:$0xff] %vm11358, %v14545
  %14802 = vst.msk [vmem:[%s3 + $0x160] sm:$0xff] %vm11358, %v14546
  %14803 = vst.msk [vmem:[%s3 + $0x168] sm:$0xff] %vm11358, %v14547
  %14804 = vst.msk [vmem:[%s3 + $0x170] sm:$0xff] %vm11358, %v14548
  %14805 = vst.msk [vmem:[%s3 + $0x178] sm:$0xff] %vm11358, %v14549
  %14806 = vst.msk [vmem:[%s3 + $0x180] sm:$0xff] %vm11358, %v14550
  %14807 = vst.msk [vmem:[%s3 + $0x188] sm:$0xff] %vm11358, %v14551
  %14808 = vst.msk [vmem:[%s3 + $0x190] sm:$0xff] %vm11358, %v14552
  %14809 = vst.msk [vmem:[%s3 + $0x198] sm:$0xff] %vm11358, %v14553
  %14810 = vst.msk [vmem:[%s3 + $0x1a0] sm:$0xff] %vm11358, %v14554
  %14811 = vst.msk [vmem:[%s3 + $0x1a8] sm:$0xff] %vm11358, %v14555
  %14812 = vst.msk [vmem:[%s3 + $0x1b0] sm:$0xff] %vm11358, %v14556
  %14813 = vst.msk [vmem:[%s3 + $0x1b8] sm:$0xff] %vm11358, %v14557
  %14814 = vst.msk [vmem:[%s3 + $0x1c0] sm:$0xff] %vm11358, %v14558
  %14815 = vst.msk [vmem:[%s3 + $0x1c8] sm:$0xff] %vm11358, %v14559
  %14816 = vst.msk [vmem:[%s3 + $0x1d0] sm:$0xff] %vm11358, %v14560
  %14817 = vst.msk [vmem:[%s3 + $0x1d8] sm:$0xff] %vm11358, %v14561
  %14818 = vst.msk [vmem:[%s3 + $0x1e0] sm:$0xff] %vm11358, %v14562
  %14819 = vst.msk [vmem:[%s3 + $0x1e8] sm:$0xff] %vm11358, %v14563
  %14820 = vst.msk [vmem:[%s3 + $0x1f0] sm:$0xff] %vm11358, %v14564
  %14821 = vst.msk [vmem:[%s3 + $0x1f8] sm:$0xff] %vm11358, %v14565
  %14822 = vst.msk [vmem:[%s3 + $0x200] sm:$0xff] %vm11358, %v14566
  %14823 = vst.msk [vmem:[%s3 + $0x208] sm:$0xff] %vm11358, %v14567
  %14824 = vst.msk [vmem:[%s3 + $0x210] sm:$0xff] %vm11358, %v14568
  %14825 = vst.msk [vmem:[%s3 + $0x218] sm:$0xff] %vm11358, %v14569
  %14826 = vst.msk [vmem:[%s3 + $0x220] sm:$0xff] %vm11358, %v14570
  %14827 = vst.msk [vmem:[%s3 + $0x228] sm:$0xff] %vm11358, %v14571
  %14828 = vst.msk [vmem:[%s3 + $0x230] sm:$0xff] %vm11358, %v14572
  %14829 = vst.msk [vmem:[%s3 + $0x238] sm:$0xff] %vm11358, %v14573
  %14830 = vst.msk [vmem:[%s3 + $0x240] sm:$0xff] %vm11358, %v14574
  %14831 = vst.msk [vmem:[%s3 + $0x248] sm:$0xff] %vm11358, %v14575
  %14832 = vst.msk [vmem:[%s3 + $0x250] sm:$0xff] %vm11358, %v14576
  %14833 = vst.msk [vmem:[%s3 + $0x258] sm:$0xff] %vm11358, %v14577
  %14834 = vst.msk [vmem:[%s3 + $0x260] sm:$0xff] %vm11358, %v14578
  %14835 = vst.msk [vmem:[%s3 + $0x268] sm:$0xff] %vm11358, %v14579
  %14836 = vst.msk [vmem:[%s3 + $0x270] sm:$0xff] %vm11358, %v14580
  %14837 = vst.msk [vmem:[%s3 + $0x278] sm:$0xff] %vm11358, %v14581
  %14838 = vst.msk [vmem:[%s3 + $0x280] sm:$0xff] %vm11358, %v14582
  %14839 = vst.msk [vmem:[%s3 + $0x288] sm:$0xff] %vm11358, %v14583
  %14840 = vst.msk [vmem:[%s3 + $0x290] sm:$0xff] %vm11358, %v14584
  %14841 = vst.msk [vmem:[%s3 + $0x298] sm:$0xff] %vm11358, %v14585
  %14842 = vst.msk [vmem:[%s3 + $0x2a0] sm:$0xff] %vm11358, %v14586
  %14843 = vst.msk [vmem:[%s3 + $0x2a8] sm:$0xff] %vm11358, %v14587
  %14844 = vst.msk [vmem:[%s3 + $0x2b0] sm:$0xff] %vm11358, %v14588
  %14845 = vst.msk [vmem:[%s3 + $0x2b8] sm:$0xff] %vm11358, %v14589
  %14846 = vst.msk [vmem:[%s3 + $0x2c0] sm:$0xff] %vm11358, %v14590
  %14847 = vst.msk [vmem:[%s3 + $0x2c8] sm:$0xff] %vm11358, %v14591
  %14848 = vst.msk [vmem:[%s3 + $0x2d0] sm:$0xff] %vm11358, %v14592
  %14849 = vst.msk [vmem:[%s3 + $0x2d8] sm:$0xff] %vm11358, %v14593
  %14850 = vst.msk [vmem:[%s3 + $0x2e0] sm:$0xff] %vm11358, %v14594
  %14851 = vst.msk [vmem:[%s3 + $0x2e8] sm:$0xff] %vm11358, %v14595
  %14852 = vst.msk [vmem:[%s3 + $0x2f0] sm:$0xff] %vm11358, %v14596
  %14853 = vst.msk [vmem:[%s3 + $0x2f8] sm:$0xff] %vm11358, %v14597
  %14854 = vst.msk [vmem:[%s3 + $0x300] sm:$0xff] %vm11358, %v14598
  %14855 = vst.msk [vmem:[%s3 + $0x308] sm:$0xff] %vm11358, %v14599
  %14856 = vst.msk [vmem:[%s3 + $0x310] sm:$0xff] %vm11358, %v14600
  %14857 = vst.msk [vmem:[%s3 + $0x318] sm:$0xff] %vm11358, %v14601
  %14858 = vst.msk [vmem:[%s3 + $0x320] sm:$0xff] %vm11358, %v14602
  %14859 = vst.msk [vmem:[%s3 + $0x328] sm:$0xff] %vm11358, %v14603
  %14860 = vst.msk [vmem:[%s3 + $0x330] sm:$0xff] %vm11358, %v14604
  %14861 = vst.msk [vmem:[%s3 + $0x338] sm:$0xff] %vm11358, %v14605
  %14862 = vst.msk [vmem:[%s3 + $0x340] sm:$0xff] %vm11358, %v14606
  %14863 = vst.msk [vmem:[%s3 + $0x348] sm:$0xff] %vm11358, %v14607
  %14864 = vst.msk [vmem:[%s3 + $0x350] sm:$0xff] %vm11358, %v14608
  %14865 = vst.msk [vmem:[%s3 + $0x358] sm:$0xff] %vm11358, %v14609
  %14866 = vst.msk [vmem:[%s3 + $0x360] sm:$0xff] %vm11358, %v14610
  %14867 = vst.msk [vmem:[%s3 + $0x368] sm:$0xff] %vm11358, %v14611
  %14868 = vst.msk [vmem:[%s3 + $0x370] sm:$0xff] %vm11358, %v14612
  %14869 = vst.msk [vmem:[%s3 + $0x378] sm:$0xff] %vm11358, %v14613
  %14870 = vst.msk [vmem:[%s3 + $0x380] sm:$0xff] %vm11358, %v14614
  %14871 = vst.msk [vmem:[%s3 + $0x388] sm:$0xff] %vm11358, %v14615
  %14872 = vst.msk [vmem:[%s3 + $0x390] sm:$0xff] %vm11358, %v14616
  %14873 = vst.msk [vmem:[%s3 + $0x398] sm:$0xff] %vm11358, %v14617
  %14874 = vst.msk [vmem:[%s3 + $0x3a0] sm:$0xff] %vm11358, %v14618
  %14875 = vst.msk [vmem:[%s3 + $0x3a8] sm:$0xff] %vm11358, %v14619
  %14876 = vst.msk [vmem:[%s3 + $0x3b0] sm:$0xff] %vm11358, %v14620
  %14877 = vst.msk [vmem:[%s3 + $0x3b8] sm:$0xff] %vm11358, %v14621
  %14878 = vst.msk [vmem:[%s3 + $0x3c0] sm:$0xff] %vm11358, %v14622
  %14879 = vst.msk [vmem:[%s3 + $0x3c8] sm:$0xff] %vm11358, %v14623
  %14880 = vst.msk [vmem:[%s3 + $0x3d0] sm:$0xff] %vm11358, %v14624
  %14881 = vst.msk [vmem:[%s3 + $0x3d8] sm:$0xff] %vm11358, %v14625
  %14882 = vst.msk [vmem:[%s3 + $0x3e0] sm:$0xff] %vm11358, %v14626
  %14883 = vst.msk [vmem:[%s3 + $0x3e8] sm:$0xff] %vm11358, %v14627
  %14884 = vst.msk [vmem:[%s3 + $0x3f0] sm:$0xff] %vm11358, %v14628
  %14885 = vst.msk [vmem:[%s3 + $0x3f8] sm:$0xff] %vm11358, %v14629
  %14886 = vst.msk [vmem:[%s3 + $0x400] sm:$0xff] %vm11358, %v14630
  %14887 = vst.msk [vmem:[%s3 + $0x408] sm:$0xff] %vm11358, %v14631
  %14888 = vst.msk [vmem:[%s3 + $0x410] sm:$0xff] %vm11358, %v14632
  %14889 = vst.msk [vmem:[%s3 + $0x418] sm:$0xff] %vm11358, %v14633
  %14890 = vst.msk [vmem:[%s3 + $0x420] sm:$0xff] %vm11358, %v14634
  %14891 = vst.msk [vmem:[%s3 + $0x428] sm:$0xff] %vm11358, %v14635
  %14892 = vst.msk [vmem:[%s3 + $0x430] sm:$0xff] %vm11358, %v14636
  %14893 = vst.msk [vmem:[%s3 + $0x438] sm:$0xff] %vm11358, %v14637
  %14894 = vst.msk [vmem:[%s3 + $0x440] sm:$0xff] %vm11358, %v14638
  %14895 = vst.msk [vmem:[%s3 + $0x448] sm:$0xff] %vm11358, %v14639
  %14896 = vst.msk [vmem:[%s3 + $0x450] sm:$0xff] %vm11358, %v14640
  %14897 = vst.msk [vmem:[%s3 + $0x458] sm:$0xff] %vm11358, %v14641
  %14898 = vst.msk [vmem:[%s3 + $0x460] sm:$0xff] %vm11358, %v14642
  %14899 = vst.msk [vmem:[%s3 + $0x468] sm:$0xff] %vm11358, %v14643
  %14900 = vst.msk [vmem:[%s3 + $0x470] sm:$0xff] %vm11358, %v14644
  %14901 = vst.msk [vmem:[%s3 + $0x478] sm:$0xff] %vm11358, %v14645
  %14902 = vst.msk [vmem:[%s3 + $0x480] sm:$0xff] %vm11358, %v14646
  %14903 = vst.msk [vmem:[%s3 + $0x488] sm:$0xff] %vm11358, %v14647
  %14904 = vst.msk [vmem:[%s3 + $0x490] sm:$0xff] %vm11358, %v14648
  %14905 = vst.msk [vmem:[%s3 + $0x498] sm:$0xff] %vm11358, %v14649
  %14906 = vst.msk [vmem:[%s3 + $0x4a0] sm:$0xff] %vm11358, %v14650
  %14907 = vst.msk [vmem:[%s3 + $0x4a8] sm:$0xff] %vm11358, %v14651
  %14908 = vst.msk [vmem:[%s3 + $0x4b0] sm:$0xff] %vm11358, %v14652
  %14909 = vst.msk [vmem:[%s3 + $0x4b8] sm:$0xff] %vm11358, %v14653
  %14910 = vst.msk [vmem:[%s3 + $0x4c0] sm:$0xff] %vm11358, %v14654
  %14911 = vst.msk [vmem:[%s3 + $0x4c8] sm:$0xff] %vm11358, %v14655
  %14912 = vst.msk [vmem:[%s3 + $0x4d0] sm:$0xff] %vm11358, %v14656
  %14913 = vst.msk [vmem:[%s3 + $0x4d8] sm:$0xff] %vm11358, %v14657
  %14914 = vst.msk [vmem:[%s3 + $0x4e0] sm:$0xff] %vm11358, %v14658
  %14915 = vst.msk [vmem:[%s3 + $0x4e8] sm:$0xff] %vm11358, %v14659
  %14916 = vst.msk [vmem:[%s3 + $0x4f0] sm:$0xff] %vm11358, %v14660
  %14917 = vst.msk [vmem:[%s3 + $0x4f8] sm:$0xff] %vm11358, %v14661
  %14918 = vst.msk [vmem:[%s3 + $0x500] sm:$0xff] %vm11358, %v14662
  %14919 = vst.msk [vmem:[%s3 + $0x508] sm:$0xff] %vm11358, %v14663
  %14920 = vst.msk [vmem:[%s3 + $0x510] sm:$0xff] %vm11358, %v14664
  %14921 = vst.msk [vmem:[%s3 + $0x518] sm:$0xff] %vm11358, %v14665
  %14922 = vst.msk [vmem:[%s3 + $0x520] sm:$0xff] %vm11358, %v14666
  %14923 = vst.msk [vmem:[%s3 + $0x528] sm:$0xff] %vm11358, %v14667
  %14924 = vst.msk [vmem:[%s3 + $0x530] sm:$0xff] %vm11358, %v14668
  %14925 = vst.msk [vmem:[%s3 + $0x538] sm:$0xff] %vm11358, %v14669
  %14926 = vst.msk [vmem:[%s3 + $0x540] sm:$0xff] %vm11358, %v14670
  %14927 = vst.msk [vmem:[%s3 + $0x548] sm:$0xff] %vm11358, %v14671
  %14928 = vst.msk [vmem:[%s3 + $0x550] sm:$0xff] %vm11358, %v14672
  %14929 = vst.msk [vmem:[%s3 + $0x558] sm:$0xff] %vm11358, %v14673
  %14930 = vst.msk [vmem:[%s3 + $0x560] sm:$0xff] %vm11358, %v14674
  %14931 = vst.msk [vmem:[%s3 + $0x568] sm:$0xff] %vm11358, %v14675
  %14932 = vst.msk [vmem:[%s3 + $0x570] sm:$0xff] %vm11358, %v14676
  %14933 = vst.msk [vmem:[%s3 + $0x578] sm:$0xff] %vm11358, %v14677
  %14934 = vst.msk [vmem:[%s3 + $0x580] sm:$0xff] %vm11358, %v14678
  %14935 = vst.msk [vmem:[%s3 + $0x588] sm:$0xff] %vm11358, %v14679
  %14936 = vst.msk [vmem:[%s3 + $0x590] sm:$0xff] %vm11358, %v14680
  %14937 = vst.msk [vmem:[%s3 + $0x598] sm:$0xff] %vm11358, %v14681
  %14938 = vst.msk [vmem:[%s3 + $0x5a0] sm:$0xff] %vm11358, %v14682
  %14939 = vst.msk [vmem:[%s3 + $0x5a8] sm:$0xff] %vm11358, %v14683
  %14940 = vst.msk [vmem:[%s3 + $0x5b0] sm:$0xff] %vm11358, %v14684
  %14941 = vst.msk [vmem:[%s3 + $0x5b8] sm:$0xff] %vm11358, %v14685
  %14942 = vst.msk [vmem:[%s3 + $0x5c0] sm:$0xff] %vm11358, %v14686
  %14943 = vst.msk [vmem:[%s3 + $0x5c8] sm:$0xff] %vm11358, %v14687
  %14944 = vst.msk [vmem:[%s3 + $0x5d0] sm:$0xff] %vm11358, %v14688
  %14945 = vst.msk [vmem:[%s3 + $0x5d8] sm:$0xff] %vm11358, %v14689
  %14946 = vst.msk [vmem:[%s3 + $0x5e0] sm:$0xff] %vm11358, %v14690
  %14947 = vst.msk [vmem:[%s3 + $0x5e8] sm:$0xff] %vm11358, %v14691
  %14948 = vst.msk [vmem:[%s3 + $0x5f0] sm:$0xff] %vm11358, %v14692
  %14949 = vst.msk [vmem:[%s3 + $0x5f8] sm:$0xff] %vm11358, %v14693
  %14950 = vst.msk [vmem:[%s3 + $0x600] sm:$0xff] %vm11358, %v14694
  %14951 = vst.msk [vmem:[%s3 + $0x608] sm:$0xff] %vm11358, %v14695
  %14952 = vst.msk [vmem:[%s3 + $0x610] sm:$0xff] %vm11358, %v14696
  %14953 = vst.msk [vmem:[%s3 + $0x618] sm:$0xff] %vm11358, %v14697
  %14954 = vst.msk [vmem:[%s3 + $0x620] sm:$0xff] %vm11358, %v14698
  %14955 = vst.msk [vmem:[%s3 + $0x628] sm:$0xff] %vm11358, %v14699
  %14956 = vst.msk [vmem:[%s3 + $0x630] sm:$0xff] %vm11358, %v14700
  %14957 = vst.msk [vmem:[%s3 + $0x638] sm:$0xff] %vm11358, %v14701
  %14958 = vst.msk [vmem:[%s3 + $0x640] sm:$0xff] %vm11358, %v14702
  %14959 = vst.msk [vmem:[%s3 + $0x648] sm:$0xff] %vm11358, %v14703
  %14960 = vst.msk [vmem:[%s3 + $0x650] sm:$0xff] %vm11358, %v14704
  %14961 = vst.msk [vmem:[%s3 + $0x658] sm:$0xff] %vm11358, %v14705
  %14962 = vst.msk [vmem:[%s3 + $0x660] sm:$0xff] %vm11358, %v14706
  %14963 = vst.msk [vmem:[%s3 + $0x668] sm:$0xff] %vm11358, %v14707
  %14964 = vst.msk [vmem:[%s3 + $0x670] sm:$0xff] %vm11358, %v14708
  %14965 = vst.msk [vmem:[%s3 + $0x678] sm:$0xff] %vm11358, %v14709
  %14966 = vst.msk [vmem:[%s3 + $0x680] sm:$0xff] %vm11358, %v14710
  %14967 = vst.msk [vmem:[%s3 + $0x688] sm:$0xff] %vm11358, %v14711
  %14968 = vst.msk [vmem:[%s3 + $0x690] sm:$0xff] %vm11358, %v14712
  %14969 = vst.msk [vmem:[%s3 + $0x698] sm:$0xff] %vm11358, %v14713
  %14970 = vst.msk [vmem:[%s3 + $0x6a0] sm:$0xff] %vm11358, %v14714
  %14971 = vst.msk [vmem:[%s3 + $0x6a8] sm:$0xff] %vm11358, %v14715
  %14972 = vst.msk [vmem:[%s3 + $0x6b0] sm:$0xff] %vm11358, %v14716
  %14973 = vst.msk [vmem:[%s3 + $0x6b8] sm:$0xff] %vm11358, %v14717
  %14974 = vst.msk [vmem:[%s3 + $0x6c0] sm:$0xff] %vm11358, %v14718
  %14975 = vst.msk [vmem:[%s3 + $0x6c8] sm:$0xff] %vm11358, %v14719
  %14976 = vst.msk [vmem:[%s3 + $0x6d0] sm:$0xff] %vm11358, %v14720
  %14977 = vst.msk [vmem:[%s3 + $0x6d8] sm:$0xff] %vm11358, %v14721
  %14978 = vst.msk [vmem:[%s3 + $0x6e0] sm:$0xff] %vm11358, %v14722
  %14979 = vst.msk [vmem:[%s3 + $0x6e8] sm:$0xff] %vm11358, %v14723
  %14980 = vst.msk [vmem:[%s3 + $0x6f0] sm:$0xff] %vm11358, %v14724
  %14981 = vst.msk [vmem:[%s3 + $0x6f8] sm:$0xff] %vm11358, %v14725
  %14982 = vst.msk [vmem:[%s3 + $0x700] sm:$0xff] %vm11358, %v14726
  %14983 = vst.msk [vmem:[%s3 + $0x708] sm:$0xff] %vm11358, %v14727
  %14984 = vst.msk [vmem:[%s3 + $0x710] sm:$0xff] %vm11358, %v14728
  %14985 = vst.msk [vmem:[%s3 + $0x718] sm:$0xff] %vm11358, %v14729
  %14986 = vst.msk [vmem:[%s3 + $0x720] sm:$0xff] %vm11358, %v14730
  %14987 = vst.msk [vmem:[%s3 + $0x728] sm:$0xff] %vm11358, %v14731
  %14988 = vst.msk [vmem:[%s3 + $0x730] sm:$0xff] %vm11358, %v14732
  %14989 = vst.msk [vmem:[%s3 + $0x738] sm:$0xff] %vm11358, %v14733
  %14990 = vst.msk [vmem:[%s3 + $0x740] sm:$0xff] %vm11358, %v14734
  %14991 = vst.msk [vmem:[%s3 + $0x748] sm:$0xff] %vm11358, %v14735
  %14992 = vst.msk [vmem:[%s3 + $0x750] sm:$0xff] %vm11358, %v14736
  %14993 = vst.msk [vmem:[%s3 + $0x758] sm:$0xff] %vm11358, %v14737
  %14994 = vst.msk [vmem:[%s3 + $0x760] sm:$0xff] %vm11358, %v14738
  %14995 = vst.msk [vmem:[%s3 + $0x768] sm:$0xff] %vm11358, %v14739
  %14996 = vst.msk [vmem:[%s3 + $0x770] sm:$0xff] %vm11358, %v14740
  %14997 = vst.msk [vmem:[%s3 + $0x778] sm:$0xff] %vm11358, %v14741
  %14998 = vst.msk [vmem:[%s3 + $0x780] sm:$0xff] %vm11358, %v14742
  %14999 = vst.msk [vmem:[%s3 + $0x788] sm:$0xff] %vm11358, %v14743
  %15000 = vst.msk [vmem:[%s3 + $0x790] sm:$0xff] %vm11358, %v14744
  %15001 = vst.msk [vmem:[%s3 + $0x798] sm:$0xff] %vm11358, %v14745
  %15002 = vst.msk [vmem:[%s3 + $0x7a0] sm:$0xff] %vm11358, %v14746
  %15003 = vst.msk [vmem:[%s3 + $0x7a8] sm:$0xff] %vm11358, %v14747
  %15004 = vst.msk [vmem:[%s3 + $0x7b0] sm:$0xff] %vm11358, %v14748
  %15005 = vst.msk [vmem:[%s3 + $0x7b8] sm:$0xff] %vm11358, %v14749
  %15006 = vst.msk [vmem:[%s3 + $0x7c0] sm:$0xff] %vm11358, %v14750
  %15007 = vst.msk [vmem:[%s3 + $0x7c8] sm:$0xff] %vm11358, %v14751
  %15008 = vst.msk [vmem:[%s3 + $0x7d0] sm:$0xff] %vm11358, %v14752
  %15009 = vst.msk [vmem:[%s3 + $0x7d8] sm:$0xff] %vm11358, %v14753
  %15010 = vst.msk [vmem:[%s3 + $0x7e0] sm:$0xff] %vm11358, %v14754
  %15011 = vst.msk [vmem:[%s3 + $0x7e8] sm:$0xff] %vm11358, %v14755
  %15012 = vst.msk [vmem:[%s3 + $0x7f0] sm:$0xff] %vm11358, %v14756
  %15013 = vst.msk [vmem:[%s3 + $0x7f8] sm:$0xff] %vm11358, %v14757
  // Predicated region
  $region14: #{tpu_custom_call.1} parent=0 // pred_check
    _
  $region15: #{tpu_custom_call.1} parent=0 // pred_check_branch
    %15015 = sbr.rel (0) target = $region17
  $region16: #{tpu_custom_call.1} parent=0 // pred_region
    _
  $region17: #{tpu_custom_call.1} parent=0 // pred_fallthru
    _
  // Predicated region
  $region18: #{tpu_custom_call.1} parent=0 // pred_check
    _
  $region19: #{tpu_custom_call.1} parent=0 // pred_check_branch
    %15017 = sbr.rel (0) target = $region21
  $region20: #{tpu_custom_call.1} parent=0 // pred_region
    _
  $region21: #{tpu_custom_call.1} parent=0 // pred_fallthru
    _

</llo_original>
